<compile_context>
chip_gen: v7x
topology: tpu7x:2x2x1
jax: 0.10.0
libtpu: 0.0.40
codegen_flags: <defaults>
</compile_context>

<pallas_src>
import functools
import math

import jax
import jax.numpy as jnp
from jax import lax
from jax.experimental import pallas as pl
from jax.experimental.pallas import tpu as pltpu

EPS = 1e-12
# 48 MiB keeps double-buffered tiles inside v7x's 64 MiB VMEM; on v5e/v6e
# (128 MiB) this could be raised to 64 MiB with larger tile_m.
VMEM_LIMIT = 48 * 1024 * 1024


def _round_up(x, m):
    return (x + m - 1) // m * m


def _compiler_params():
    return pltpu.CompilerParams(dimension_semantics=("parallel",),
                                vmem_limit_bytes=VMEM_LIMIT)


# ----------------------------------------------------------------------------
# Pallas kernels (row-tiled, fused prologues / epilogues)
# ----------------------------------------------------------------------------

def _mm_bias_kernel(x_ref, w_ref, b_ref, o_ref):
    # x, w in bf16; accumulate + bias in f32.
    o_ref[...] = (jnp.dot(x_ref[...], w_ref[...],
                          preferred_element_type=jnp.float32) + b_ref[...])


def _mm_bias_prelu_in_kernel(x_ref, w_ref, b_ref, a_ref, o_ref):
    # PReLU prologue in f32, matmul operands in bf16.
    a = a_ref[0, 0]
    xf = x_ref[...].astype(jnp.float32)
    xf = jnp.where(xf >= 0.0, xf, a * xf)
    o_ref[...] = (jnp.dot(xf.astype(jnp.bfloat16), w_ref[...],
                          preferred_element_type=jnp.float32) + b_ref[...])


def _map_gtu_kernel(x_ref, mw_ref, mb_ref, giw_ref, gib_ref, ggw_ref, ggb_ref,
                    a_ref, o_ref):
    """Fused PReLU -> map (1x1 conv, per-source) -> GTU -> ReLU mask."""
    a = a_ref[0, 0]
    xf = x_ref[...].astype(jnp.float32)
    xf = jnp.where(xf >= 0.0, xf, a * xf)
    xb = xf.astype(jnp.bfloat16)
    n_src = mw_ref.shape[0]
    for s in range(n_src):
        mw_s = mw_ref[s].astype(jnp.bfloat16)                 # (N_in, N_out)
        m = (jnp.dot(xb, mw_s, preferred_element_type=jnp.float32)
             + mb_ref[s:s + 1, :])
        mb16 = m.astype(jnp.bfloat16)
        t = (jnp.dot(mb16, giw_ref[...], preferred_element_type=jnp.float32)
             + gib_ref[...])
        g = (jnp.dot(mb16, ggw_ref[...], preferred_element_type=jnp.float32)
             + ggb_ref[...])
        gate = pl.reciprocal(1.0 + jnp.exp(-g), approx=True)  # sigmoid via EUP
        y = jnp.tanh(t) * gate
        o_ref[:, s, :] = jnp.maximum(y, 0.0)                  # ReLU mask


def _involution_kernel(x_ref, w1_ref, w2_ref, a_ref, o_ref, *, kk, pad):
    """Fused involution: in-VMEM kernel generation + 7-tap window + PReLU.
    x_ref: (tbs, K+2*pad, C) f32 padded tile; w1: (C, Ch) bf16; w2: (Ch, kk)."""
    tbs, K, C = o_ref.shape
    xf = x_ref[...]                                           # f32
    # kernel generation (1x1 reduce -> ReLU -> 1x1 span), never leaves VMEM
    xm = xf[:, pad:pad + K, :].reshape(tbs * K, C).astype(jnp.bfloat16)
    h = jnp.dot(xm, w1_ref[...], preferred_element_type=jnp.float32)
    h = jnp.maximum(h, 0.0)
    ker = jnp.dot(h.astype(jnp.bfloat16), w2_ref[...],
                  preferred_element_type=jnp.float32)
    ker = ker.reshape(tbs, K, kk)
    # 7-tap weighted sum: shifted windows of the resident padded tile
    # TODO(synk): the shifted slices could be pltpu.roll(sublane) instead; kept
    #             as value slices (XLU shifts) for lowering robustness.
    acc = xf[:, 0:K, :] * ker[:, :, 0:1]
    for j in range(1, kk):
        acc = acc + xf[:, j:j + K, :] * ker[:, :, j:j + 1]
    a = a_ref[0, 0]
    o_ref[...] = jnp.where(acc >= 0.0, acc, a * acc)          # PReLU epilogue


def _chunk_proj_kernel(x_ref, w_ref, b_ref, o_ref):
    """Per (b,s) slab: out = w @ x + b, contracting the chunk axis in-kernel
    so the channel axis stays on lanes (no HBM transpose)."""
    w = w_ref[...]
    b = b_ref[...]
    for i in range(x_ref.shape[0]):
        xi = x_ref[i].astype(jnp.bfloat16)
        o_ref[i] = jnp.dot(w, xi, preferred_element_type=jnp.float32) + b


def _chunk_proj_res_kernel(x_ref, w_ref, b_ref, r_ref, o_ref):
    """Same as _chunk_proj_kernel with the residual add fused as an epilogue."""
    w = w_ref[...]
    b = b_ref[...]
    for i in range(x_ref.shape[0]):
        xi = x_ref[i].astype(jnp.bfloat16)
        o_ref[i] = (jnp.dot(w, xi, preferred_element_type=jnp.float32)
                    + b + r_ref[i])


def _attn_kernel(qkv_ref, o_ref, *, num_heads, scale):
    """qkv_ref: (1, S, Q, 3C); o_ref: (1, S, Q, C). Heads + Q batched in-kernel,
    fed straight from the row-major qkv blob (no HBM transposes)."""
    S = qkv_ref.shape[1]
    Qn = qkv_ref.shape[2]
    C = o_ref.shape[3]
    dh = C // num_heads
    blk = qkv_ref[0]                                          # (S, Q, 3C) f32
    for iq in range(Qn):
        outs = []
        for ih in range(num_heads):
            q = blk[:, iq, ih * dh:(ih + 1) * dh].astype(jnp.bfloat16)
            k = blk[:, iq, C + ih * dh:C + (ih + 1) * dh].astype(jnp.bfloat16)
            v = blk[:, iq, 2 * C + ih * dh:2 * C + (ih + 1) * dh]
            sc = lax.dot_general(q, k, (((1,), (1,)), ((), ())),
                                 preferred_element_type=jnp.float32) * scale
            sc = sc - jnp.max(sc, axis=-1, keepdims=True)
            p = jnp.exp(sc)
            p = p * pl.reciprocal(jnp.sum(p, axis=-1, keepdims=True),
                                  approx=True)
            outs.append(jnp.dot(p.astype(jnp.bfloat16),
                                v.astype(jnp.bfloat16),
                                preferred_element_type=jnp.float32))
        o_ref[0, :, iq, :] = jnp.concatenate(outs, axis=-1)


# ----------------------------------------------------------------------------
# Pallas wrappers (grids / BlockSpecs)
# ----------------------------------------------------------------------------

def _rowwise_call(kernel, x, consts, out_n, scalar=None, tile_m=1024):
    """Row-tiled pallas_call: x (M, K) tiled over M; consts passed whole;
    optional (1,1) scalar goes to SMEM."""
    M, K = x.shape
    tm = M if M <= tile_m else tile_m
    in_specs = [pl.BlockSpec((tm, K), lambda i: (i, 0))]
    args = [x]
    for c in consts:
        if c.ndim == 1:
            c = c.reshape(1, -1)
        in_specs.append(pl.BlockSpec(c.shape, lambda i: (0, 0)))
        args.append(c)
    if scalar is not None:
        in_specs.append(pl.BlockSpec(memory_space=pltpu.MemorySpace.SMEM))
        args.append(scalar)
    return pl.pallas_call(
        kernel,
        grid=(pl.cdiv(M, tm),),
        in_specs=in_specs,
        out_specs=pl.BlockSpec((tm, out_n), lambda i: (i, 0)),
        out_shape=jax.ShapeDtypeStruct((M, out_n), jnp.float32),
        compiler_params=_compiler_params(),
    )(*args)


def pallas_matmul(x, w, b, prelu_alpha=None, tile_m=1024):
    """x @ w + b with bf16 operands / f32 accumulation; optional fused PReLU
    prologue on x."""
    xb = x.astype(jnp.bfloat16)
    wb = jnp.asarray(w, jnp.bfloat16)
    bf = jnp.asarray(b, jnp.float32)
    if prelu_alpha is None:
        return _rowwise_call(_mm_bias_kernel, xb, [wb, bf], w.shape[1],
                             tile_m=tile_m)
    return _rowwise_call(_mm_bias_prelu_in_kernel, xb, [wb, bf], w.shape[1],
                         scalar=prelu_alpha.astype(jnp.float32), tile_m=tile_m)


def pallas_map_gtu(x, map_w, map_b, gtu_in_w, gtu_in_b, gtu_gate_w, gtu_gate_b,
                   alpha, n_src, tile_m=1024):
    """Fused PReLU -> map (N -> n_src*N) -> GTU -> ReLU. x: (M, N) rows."""
    M, N = x.shape
    tm = M if M <= tile_m else tile_m
    mw = map_w.reshape(n_src, N, N).transpose(0, 2, 1).astype(jnp.float32)
    mb = map_b.reshape(n_src, N).astype(jnp.float32)
    giw = gtu_in_w.T.astype(jnp.bfloat16)
    gib = gtu_in_b.reshape(1, -1).astype(jnp.float32)
    ggw = gtu_gate_w.T.astype(jnp.bfloat16)
    ggb = gtu_gate_b.reshape(1, -1).astype(jnp.float32)
    return pl.pallas_call(
        _map_gtu_kernel,
        grid=(pl.cdiv(M, tm),),
        in_specs=[pl.BlockSpec((tm, N), lambda i: (i, 0)),
                  pl.BlockSpec((n_src, N, N), lambda i: (0, 0, 0)),
                  pl.BlockSpec((n_src, N), lambda i: (0, 0)),
                  pl.BlockSpec((N, N), lambda i: (0, 0)),
                  pl.BlockSpec((1, N), lambda i: (0, 0)),
                  pl.BlockSpec((N, N), lambda i: (0, 0)),
                  pl.BlockSpec((1, N), lambda i: (0, 0)),
                  pl.BlockSpec(memory_space=pltpu.MemorySpace.SMEM)],
        out_specs=pl.BlockSpec((tm, n_src, N), lambda i: (i, 0, 0)),
        out_shape=jax.ShapeDtypeStruct((M, n_src, N), jnp.float32),
        compiler_params=_compiler_params(),
    )(x.astype(jnp.bfloat16), mw, mb, giw, gib, ggw, ggb,
      alpha.astype(jnp.float32))


def pallas_involution(x, w_reduce, w_span, alpha, pad=3, tile_bs=64):
    """Involution2d(kernel=(1,7), padding=(0,3)) with the kernel-generation,
    7-tap window and PReLU all fused in one kernel. x: (B, S, K, C)."""
    B, S, K, C = x.shape
    KK, Ch = w_span.shape
    BS = B * S
    tbs = min(tile_bs, BS)
    x_pad = jnp.pad(x.astype(jnp.float32),
                    ((0, 0), (0, 0), (pad, pad), (0, 0)))
    x_pad = x_pad.reshape(BS, K + 2 * pad, C)
    out = pl.pallas_call(
        functools.partial(_involution_kernel, kk=KK, pad=pad),
        grid=(pl.cdiv(BS, tbs),),
        in_specs=[pl.BlockSpec((tbs, K + 2 * pad, C), lambda i: (i, 0, 0)),
                  pl.BlockSpec((C, Ch), lambda i: (0, 0)),
                  pl.BlockSpec((Ch, KK), lambda i: (0, 0)),
                  pl.BlockSpec(memory_space=pltpu.MemorySpace.SMEM)],
        out_specs=pl.BlockSpec((tbs, K, C), lambda i: (i, 0, 0)),
        out_shape=jax.ShapeDtypeStruct((BS, K, C), jnp.float32),
        compiler_params=_compiler_params(),
    )(x_pad,
      w_reduce.T.astype(jnp.bfloat16),
      w_span.T.astype(jnp.bfloat16),
      alpha.astype(jnp.float32))
    return out.reshape(B, S, K, C)


def pallas_chunk_proj(x3, w, b, residual=None, tile_b=8):
    """Chunk-axis projection contracted in-kernel (channel axis stays on lanes).
    x3: (M, Kin, C); w: (Kout, Kin); b: (Kout,); optional fused residual add."""
    M, Kin, C = x3.shape
    Kout = w.shape[0]
    tb = min(tile_b, M)
    Mp = _round_up(M, tb)
    xf = x3.astype(jnp.float32)
    if Mp != M:
        xf = jnp.pad(xf, ((0, Mp - M), (0, 0), (0, 0)))
    args = [xf, w.astype(jnp.bfloat16),
            b.reshape(-1, 1).astype(jnp.float32)]
    in_specs = [pl.BlockSpec((tb, Kin, C), lambda i: (i, 0, 0)),
                pl.BlockSpec((Kout, Kin), lambda i: (0, 0)),
                pl.BlockSpec((Kout, 1), lambda i: (0, 0))]
    if residual is None:
        kernel = _chunk_proj_kernel
    else:
        r = residual.astype(jnp.float32)
        if Mp != M:
            r = jnp.pad(r, ((0, Mp - M), (0, 0), (0, 0)))
        args.append(r)
        in_specs.append(pl.BlockSpec((tb, Kout, C), lambda i: (i, 0, 0)))
        kernel = _chunk_proj_res_kernel
    out = pl.pallas_call(
        kernel,
        grid=(Mp // tb,),
        in_specs=in_specs,
        out_specs=pl.BlockSpec((tb, Kout, C), lambda i: (i, 0, 0)),
        out_shape=jax.ShapeDtypeStruct((Mp, Kout, C), jnp.float32),
        compiler_params=_compiler_params(),
    )(*args)
    return out[:M] if Mp != M else out


def pallas_attention(qkv, num_heads):
    """qkv: (B, S, Q, 3C) row-major from the in-projection matmul; attention
    over the segment axis S per (b, q, head). Returns (B, S, Q, C)."""
    B, S, Q, C3 = qkv.shape
    C = C3 // 3
    dh = C // num_heads
    scale = 1.0 / math.sqrt(dh)
    return pl.pallas_call(
        functools.partial(_attn_kernel, num_heads=num_heads, scale=scale),
        grid=(B,),
        in_specs=[pl.BlockSpec((1, S, Q, C3), lambda b: (b, 0, 0, 0))],
        out_specs=pl.BlockSpec((1, S, Q, C), lambda b: (b, 0, 0, 0)),
        out_shape=jax.ShapeDtypeStruct((B, S, Q, C), jnp.float32),
        compiler_params=_compiler_params(),
    )(qkv.astype(jnp.float32))


# ----------------------------------------------------------------------------
# JAX glue (norms, segmentation, overlap-add, GALR orchestration)
# ----------------------------------------------------------------------------

def cln(x, gamma, beta, channel_axis, eps=EPS):
    """Cumulative (causal) layer norm over channel_axis; remaining non-batch
    axes (in array order) are the causal time order."""
    B = x.shape[0]
    C = x.shape[channel_axis]
    step_sum = jnp.sum(x, axis=channel_axis)
    step_sq = jnp.sum(x * x, axis=channel_axis)
    t_shape = step_sum.shape[1:]
    T = math.prod(t_shape)
    cum_sum = jnp.cumsum(step_sum.reshape(B, T), axis=1)
    cum_sq = jnp.cumsum(step_sq.reshape(B, T), axis=1)
    cum_num = jnp.arange(1, T + 1, dtype=jnp.float32) * C
    cum_mean = cum_sum / cum_num
    cum_var = cum_sq / cum_num - cum_mean ** 2
    cum_mean = jnp.expand_dims(cum_mean.reshape((B,) + t_shape), channel_axis)
    cum_var = jnp.expand_dims(cum_var.reshape((B,) + t_shape), channel_axis)
    gshape = [1] * x.ndim
    gshape[channel_axis] = C
    denom = jnp.sqrt(jnp.maximum(cum_var, 0.0) + eps)
    return (x - cum_mean) / denom * gamma.reshape(gshape) + beta.reshape(gshape)


def gln(x, gamma, beta, eps=EPS):
    """Global layer norm over all non-batch axes; x channel-last (B, S, K, C)."""
    mean = x.mean(axis=(1, 2, 3), keepdims=True)
    var = ((x - mean) ** 2).mean(axis=(1, 2, 3), keepdims=True)
    return ((x - mean) / jnp.sqrt(var + eps) * gamma.reshape(1, 1, 1, -1)
            + beta.reshape(1, 1, 1, -1))


def segment1d_cl(x, chunk, hop):
    """(B, C, T) -> (B, S, chunk, C) channel-last segments."""
    B, C, T = x.shape
    S = (T - chunk) // hop + 1
    idx = jnp.arange(S)[:, None] * hop + jnp.arange(chunk)[None, :]
    return x.transpose(0, 2, 1)[:, idx, :], S


def overlap_add_cl(x, hop):
    """(B, S, K, C) -> (B, (S-1)*hop + K, C)."""
    B, S, K, C = x.shape
    T = (S - 1) * hop + K
    if K % hop == 0:
        R = K // hop
        xr = x.reshape(B, S, R, hop, C)
        out = jnp.zeros((B, S + R - 1, hop, C), jnp.float32)
        for r in range(R):
            out = out.at[:, r:r + S].add(xr[:, :, r])
        return out.reshape(B, (S + R - 1) * hop, C)[:, :T]
    idx = (jnp.arange(S)[:, None] * hop + jnp.arange(K)[None, :]).reshape(-1)
    return jnp.zeros((B, T, C), jnp.float32).at[:, idx, :].add(
        x.reshape(B, S * K, C))


def positional_encoding(length, d, base=10000.0):
    pos = jnp.arange(length, dtype=jnp.float32)[:, None]
    i = jnp.arange(d // 2, dtype=jnp.float32)[None, :]
    angle = pos / jnp.power(base, 2.0 * i / d)
    return jnp.stack([jnp.sin(angle), jnp.cos(angle)], axis=-1).reshape(length, d)


def intra_chunk_block(x, bl):
    """BiLSTM over the chunk axis + Linear + gLN + residual (channel-last)."""
    B, S, K, C = x.shape
    residual = x
    H = bl['lstm_fw_whh'].shape[1]
    # single matmul for both directions' input projections; b_hh folded in.
    w_cat = jnp.concatenate([bl['lstm_fw_wih'], bl['lstm_bw_wih']], axis=0).T
    b_cat = jnp.concatenate([bl['lstm_fw_bih'] + bl['lstm_fw_bhh'],
                             bl['lstm_bw_bih'] + bl['lstm_bw_bhh']])
    proj = pallas_matmul(x.reshape(B * S * K, C), w_cat, b_cat)
    proj = proj.reshape(B * S, K, 8 * H)
    proj_fw = proj[..., :4 * H]
    proj_bw = jnp.flip(proj[..., 4 * H:], axis=1)       # bw flipped in time
    p = jnp.stack([proj_fw, proj_bw], axis=1)           # (BS, 2, K, 4H)
    p_t = p.transpose(2, 1, 0, 3)                       # (K, 2, BS, 4H)
    whh = jnp.stack([bl['lstm_fw_whh'], bl['lstm_bw_whh']], axis=0)

    # TODO(synk): the LSTM recurrence is inherently sequential; fw and bw now
    # share ONE lax.scan (K serial steps total), only the projections use MXU.
    def step(carry, xp):
        h, c = carry                                    # (2, BS, H)
        gates = xp + jnp.einsum('dbh,dgh->dbg', h, whh)
        i, f, g, o = jnp.split(gates, 4, axis=-1)
        i = jax.nn.sigmoid(i)
        f = jax.nn.sigmoid(f)
        g = jnp.tanh(g)
        o = jax.nn.sigmoid(o)
        c = f * c + i * g
        h = o * jnp.tanh(c)
        return (h, c), h

    h0 = jnp.zeros((2, B * S, H), jnp.float32)
    _, hs = lax.scan(step, (h0, h0), p_t)               # (K, 2, BS, H)
    h_fw = hs[:, 0].transpose(1, 0, 2)                  # (BS, K, H)
    h_bw = jnp.flip(hs[:, 1], axis=0).transpose(1, 0, 2)
    h = jnp.concatenate([h_fw, h_bw], axis=-1)          # (BS, K, 2H)
    y = pallas_matmul(h.reshape(-1, 2 * H), bl['intra_fc_w'].T, bl['intra_fc_b'])
    y = gln(y.reshape(B, S, K, C), bl['intra_gamma'], bl['intra_beta'])
    return y + residual


def inter_chunk_block(x, bl, num_heads):
    """Chunk down-proj (K->Q contracted in-kernel), cLN, pos-enc, MHA over the
    segment axis, cLN, up-proj with fused residual. No HBM transposes."""
    B, S, K, C = x.shape
    Q = bl['fc_map_w'].shape[0]
    residual = x

    x_low = pallas_chunk_proj(x.reshape(B * S, K, C),
                              bl['fc_map_w'], bl['fc_map_b'])      # (B*S, Q, C)
    x_low = x_low.reshape(B, S, Q, C)
    x_low = cln(x_low, bl['norm_in_gamma'], bl['norm_in_beta'], channel_axis=3)
    x_low = x_low + positional_encoding(S, C)[None, :, None, :]
    attn_res = x_low                                                # (B, S, Q, C)

    qkv = pallas_matmul(x_low.reshape(B * S * Q, C),
                        bl['attn_in_w'].T, bl['attn_in_b'])         # (BSQ, 3C)
    o = pallas_attention(qkv.reshape(B, S, Q, 3 * C), num_heads)    # (B, S, Q, C)
    o = pallas_matmul(o.reshape(B * S * Q, C),
                      bl['attn_out_w'].T, bl['attn_out_b'])
    x_low = o.reshape(B, S, Q, C) + attn_res                        # dropout: eval no-op

    x_low = cln(x_low, bl['norm_out_gamma'], bl['norm_out_beta'], channel_axis=3)
    y = pallas_chunk_proj(x_low.reshape(B * S, Q, C),
                          bl['fc_inv_w'], bl['fc_inv_b'],
                          residual=residual.reshape(B * S, K, C))   # fused +res
    return y.reshape(B, S, K, C)


def galr_forward(x, blocks, num_heads):
    for bl in blocks:
        x = intra_chunk_block(x, bl)
        x = inter_chunk_block(x, bl, num_heads)
    return x


def separator_forward(params, x, cfg):
    N = cfg['num_features']
    n_src = cfg['n_sources']
    K = cfg['chunk_size']
    P = cfg['hop_size']
    B, _, T = x.shape
    alpha = params['prelu_a'].reshape(1, 1)

    padding = (P - (T - K) % P) % P
    pad_left = padding // 2
    pad_right = padding - pad_left
    xp = jnp.pad(x.astype(jnp.float32), ((0, 0), (0, 0), (pad_left, pad_right)))

    h, S = segment1d_cl(xp, K, P)                        # (B, S, K, N)
    # standalone PReLU stays in plain JAX so XLA fuses it into the cLN below
    # (no padded-slab Pallas round trip).
    h = jnp.where(h >= 0.0, h, params['prelu_a'] * h)
    h = cln(h, params['norm2d_gamma'], params['norm2d_beta'], channel_axis=3)
    # Involution2d: kernel-gen + 7-tap window + PReLU fused in one kernel.
    h = pallas_involution(h, params['inv_reduce_w'], params['inv_span_w'], alpha)
    h = galr_forward(h, params['galr'], cfg['num_heads'])

    # PReLU -> iconv2d (1x1 Conv2d Ch -> N); PReLU fused as kernel prologue.
    Ch = h.shape[-1]
    hf = pallas_matmul(h.reshape(B * S * K, Ch), params['iconv_w'].T,
                       params['iconv_b'], prelu_alpha=alpha)
    h = hf.reshape(B, S, K, N)

    h = overlap_add_cl(h, P)                             # (B, Tpad, N)
    Tpad = h.shape[1]
    h = h[:, pad_left:Tpad - pad_right, :]               # negative pad = crop

    # PReLU -> map (N -> n_src*N) -> GTU -> ReLU mask, fused in one kernel
    # (no intermediate (B, n_src, T, N) HBM pass / transpose).
    y = pallas_map_gtu(h.reshape(B * T, N),
                       params['map_w'], params['map_b'],
                       params['gtu_in_w'], params['gtu_in_b'],
                       params['gtu_gate_w'], params['gtu_gate_b'],
                       alpha, n_src)
    y = y.reshape(B, T, n_src, N).transpose(0, 2, 3, 1)  # (B, n_src, N, T)
    return y


# ----------------------------------------------------------------------------
# Deterministic parameter init (synthetic weights; shapes follow __init__)
# ----------------------------------------------------------------------------

def init_params(key, cfg):
    N = cfg['num_features']
    Hc = cfg['hidden_channels']
    Ch = Hc // 2
    K = cfg['chunk_size']
    Q = cfg['down_chunk_size']
    n_src = cfg['n_sources']
    H = Hc // 2  # per-direction LSTM hidden size (hidden_channels // 2 dirs)

    keys = iter(jax.random.split(key, 256))

    def nrm(shape, scale=0.2):
        return scale * jax.random.normal(next(keys), shape, dtype=jnp.float32)

    p = {
        'prelu_a': jnp.array(0.25, jnp.float32),          # shared nn.PReLU()
        'norm2d_gamma': jnp.ones((N,), jnp.float32),
        'norm2d_beta': jnp.zeros((N,), jnp.float32),
        'inv_reduce_w': nrm((Ch, N)),                     # 1x1, no bias
        'inv_span_w': nrm((7, Ch)),                       # 1x1, no bias
        'iconv_w': nrm((N, Ch)),
        'iconv_b': nrm((N,)),
        'map_w': nrm((n_src * N, N)),
        'map_b': nrm((n_src * N,)),
        'gtu_in_w': nrm((N, N)),
        'gtu_in_b': nrm((N,)),
        'gtu_gate_w': nrm((N, N)),
        'gtu_gate_b': nrm((N,)),
    }
    assert N == Ch, "this config uses Identity initial_mapping (in==out channels)"

    blocks = []
    for _ in range(cfg['num_blocks']):
        bl = {}
        for d in ('fw', 'bw'):
            bl[f'lstm_{d}_wih'] = nrm((4 * H, Ch))
            bl[f'lstm_{d}_whh'] = nrm((4 * H, H))
            bl[f'lstm_{d}_bih'] = nrm((4 * H,))
            bl[f'lstm_{d}_bhh'] = nrm((4 * H,))
        bl['intra_fc_w'] = nrm((Ch, Hc))
        bl['intra_fc_b'] = nrm((Ch,))
        bl['intra_gamma'] = jnp.ones((Ch,), jnp.float32)
        bl['intra_beta'] = jnp.zeros((Ch,), jnp.float32)
        bl['fc_map_w'] = nrm((Q, K))
        bl['fc_map_b'] = nrm((Q,))
        bl['fc_inv_w'] = nrm((K, Q))
        bl['fc_inv_b'] = nrm((K,))
        bl['norm_in_gamma'] = jnp.ones((Ch,), jnp.float32)
        bl['norm_in_beta'] = jnp.zeros((Ch,), jnp.float32)
        bl['norm_out_gamma'] = jnp.ones((Ch,), jnp.float32)
        bl['norm_out_beta'] = jnp.zeros((Ch,), jnp.float32)
        bl['attn_in_w'] = nrm((3 * Ch, Ch))
        bl['attn_in_b'] = nrm((3 * Ch,))
        bl['attn_out_w'] = nrm((Ch, Ch))
        bl['attn_out_b'] = nrm((Ch,))
        blocks.append(bl)
    p['galr'] = blocks
    return p


# ----------------------------------------------------------------------------

if __name__ == "__main__":
    cfg = dict(
        num_features=8,
        hidden_channels=16,
        chunk_size=8,
        hop_size=4,
        down_chunk_size=4,
        num_blocks=2,
        num_heads=2,
        n_sources=2,
    )

    key = jax.random.PRNGKey(0)
    k_params, k_input = jax.random.split(key)
    params = init_params(k_params, cfg)

    B, T = 2, 18
    x = jax.random.normal(k_input, (B, cfg['num_features'], T), dtype=jnp.float32)

    forward = jax.jit(lambda p, inp: separator_forward(p, inp, cfg))
    out = forward(params, x)
    out = jax.block_until_ready(out)

    assert out.shape == (B, cfg['n_sources'], cfg['num_features'], T), out.shape
    assert bool(jnp.all(jnp.isfinite(out)))
    print("KERNEL_OK")
</pallas_src>

<mosaic_0001>
module attributes {stable_mosaic.version = 11 : i64} {
  func.func @_mm_bias_kernel(%arg0: i32, %arg1: memref<64x8xbf16, #tpu.memory_space<vmem>>, %arg2: memref<8x64xbf16, #tpu.memory_space<vmem>>, %arg3: memref<1x64xf32, #tpu.memory_space<vmem>>, %arg4: memref<64x64xf32, #tpu.memory_space<vmem>>) attributes {dimension_semantics = [#tpu.dimension_semantics<parallel>], iteration_bounds = array<i64: 1>, scalar_prefetch = 0 : i64, scratch_operands = 0 : i64, tpu.core_type = #tpu.core_type<tc>, window_params = [{transform_indices = @transform_0, window_bounds = array<i64: 64, 8>}, {pipeline_mode = #tpu.pipeline_mode<synchronous>, transform_indices = @transform_1, window_bounds = array<i64: 8, 64>}, {pipeline_mode = #tpu.pipeline_mode<synchronous>, transform_indices = @transform_2, window_bounds = array<i64: 1, 64>}, {transform_indices = @transform_3, window_bounds = array<i64: 64, 64>}]} {
    %c0 = arith.constant 0 : index
    %c0_0 = arith.constant 0 : index
    %0 = vector.load %arg1[%c0, %c0_0] : memref<64x8xbf16, #tpu.memory_space<vmem>>, vector<64x8xbf16>
    %c0_1 = arith.constant 0 : index
    %c0_2 = arith.constant 0 : index
    %1 = vector.load %arg2[%c0_1, %c0_2] : memref<8x64xbf16, #tpu.memory_space<vmem>>, vector<8x64xbf16>
    %cst = arith.constant dense<0.000000e+00> : vector<64x64xf32>
    %2 = tpu.matmul %0, %1, %cst {dimension_numbers = #tpu.dot_dimension_numbers<[1], [0], [0], [1], [0, 0, 1, 1], [], []>} : vector<64x8xbf16>, vector<8x64xbf16>, vector<64x64xf32> -> vector<64x64xf32>
    %c0_3 = arith.constant 0 : index
    %c0_4 = arith.constant 0 : index
    %3 = vector.load %arg3[%c0_3, %c0_4] : memref<1x64xf32, #tpu.memory_space<vmem>>, vector<1x64xf32>
    %4 = vector.broadcast %3 : vector<1x64xf32> to vector<64x64xf32>
    %5 = arith.addf %2, %4 : vector<64x64xf32>
    %c0_5 = arith.constant 0 : index
    %c0_6 = arith.constant 0 : index
    %6 = vector.load %arg4[%c0_5, %c0_6] : memref<64x64xf32, #tpu.memory_space<vmem>>, vector<64x64xf32>
    tpu.vector_store %arg4[%c0_5, %c0_6], %5 {strides = array<i32>} : memref<64x64xf32, #tpu.memory_space<vmem>>, vector<64x64xf32>,
    return
  }
  func.func @transform_0(%arg0: i32) -> (i32, i32) {
    %c0_i32 = arith.constant 0 : i32
    %c0_i32_0 = arith.constant 0 : i32
    return %arg0, %c0_i32 : i32, i32
  }
  func.func @transform_1(%arg0: i32) -> (i32, i32) {
    %c0_i32 = arith.constant 0 : i32
    %c0_i32_0 = arith.constant 0 : i32
    %c0_i32_1 = arith.constant 0 : i32
    return %c0_i32, %c0_i32_0 : i32, i32
  }
  func.func @transform_2(%arg0: i32) -> (i32, i32) {
    %c0_i32 = arith.constant 0 : i32
    %c0_i32_0 = arith.constant 0 : i32
    %c0_i32_1 = arith.constant 0 : i32
    return %c0_i32, %c0_i32_0 : i32, i32
  }
  func.func @transform_3(%arg0: i32) -> (i32, i32) {
    %c0_i32 = arith.constant 0 : i32
    %c0_i32_0 = arith.constant 0 : i32
    return %arg0, %c0_i32 : i32, i32
  }
}

module attributes {stable_mosaic.version = 11 : i64} {
  func.func @_involution_kernel(%arg0: i32, %arg1: memref<8x14x8xf32, #tpu.memory_space<vmem>>, %arg2: memref<8x8xbf16, #tpu.memory_space<vmem>>, %arg3: memref<8x7xbf16, #tpu.memory_space<vmem>>, %arg4: memref<1x1xf32, #tpu.memory_space<smem>>, %arg5: memref<8x8x8xf32, #tpu.memory_space<vmem>>) attributes {dimension_semantics = [#tpu.dimension_semantics<parallel>], iteration_bounds = array<i64: 1>, scalar_prefetch = 0 : i64, scratch_operands = 0 : i64, tpu.core_type = #tpu.core_type<tc>, window_params = [{transform_indices = @transform_0, window_bounds = array<i64: 8, 14, 8>}, {pipeline_mode = #tpu.pipeline_mode<synchronous>, transform_indices = @transform_1, window_bounds = array<i64: 8, 8>}, {pipeline_mode = #tpu.pipeline_mode<synchronous>, transform_indices = @transform_2, window_bounds = array<i64: 8, 7>}, {transform_indices = @transform_3, window_bounds = array<i64: 1, 1>}, {transform_indices = @transform_4, window_bounds = array<i64: 8, 8, 8>}]} {
    %c0 = arith.constant 0 : index
    %c0_0 = arith.constant 0 : index
    %c0_1 = arith.constant 0 : index
    %0 = vector.load %arg1[%c0, %c0_0, %c0_1] : memref<8x14x8xf32, #tpu.memory_space<vmem>>, vector<8x14x8xf32>
    %1 = vector.extract_strided_slice %0 {offsets = [0, 3, 0], sizes = [8, 8, 8], strides = [1, 1, 1]} : vector<8x14x8xf32> to vector<8x8x8xf32>
    %2 = vector.shape_cast %1 : vector<8x8x8xf32> to vector<64x8xf32>
    %3 = arith.truncf %2 : vector<64x8xf32> to vector<64x8xbf16>
    %c0_2 = arith.constant 0 : index
    %c0_3 = arith.constant 0 : index
    %4 = vector.load %arg2[%c0_2, %c0_3] : memref<8x8xbf16, #tpu.memory_space<vmem>>, vector<8x8xbf16>
    %cst = arith.constant dense<0.000000e+00> : vector<64x8xf32>
    %5 = tpu.matmul %3, %4, %cst {dimension_numbers = #tpu.dot_dimension_numbers<[1], [0], [0], [1], [0, 0, 1, 1], [], []>} : vector<64x8xbf16>, vector<8x8xbf16>, vector<64x8xf32> -> vector<64x8xf32>
    %cst_4 = arith.constant 0.000000e+00 : f32
    %6 = vector.broadcast %cst_4 : f32 to vector<64x8xf32>
    %7 = arith.maximumf %5, %6 : vector<64x8xf32>
    %8 = arith.truncf %7 : vector<64x8xf32> to vector<64x8xbf16>
    %c0_5 = arith.constant 0 : index
    %c0_6 = arith.constant 0 : index
    %9 = vector.load %arg3[%c0_5, %c0_6] : memref<8x7xbf16, #tpu.memory_space<vmem>>, vector<8x7xbf16>
    %cst_7 = arith.constant dense<0.000000e+00> : vector<64x7xf32>
    %10 = tpu.matmul %8, %9, %cst_7 {dimension_numbers = #tpu.dot_dimension_numbers<[1], [0], [0], [1], [0, 0, 1, 1], [], []>} : vector<64x8xbf16>, vector<8x7xbf16>, vector<64x7xf32> -> vector<64x7xf32>
    %11 = vector.shape_cast %10 : vector<64x7xf32> to vector<8x8x7xf32>
    %12 = vector.extract_strided_slice %0 {offsets = [0, 0, 0], sizes = [8, 8, 8], strides = [1, 1, 1]} : vector<8x14x8xf32> to vector<8x8x8xf32>
    %13 = vector.extract_strided_slice %11 {offsets = [0, 0, 0], sizes = [8, 8, 1], strides = [1, 1, 1]} : vector<8x8x7xf32> to vector<8x8x1xf32>
    %14 = vector.broadcast %13 : vector<8x8x1xf32> to vector<8x8x8xf32>
    %15 = arith.mulf %12, %14 : vector<8x8x8xf32>
    %16 = vector.extract_strided_slice %0 {offsets = [0, 1, 0], sizes = [8, 8, 8], strides = [1, 1, 1]} : vector<8x14x8xf32> to vector<8x8x8xf32>
    %17 = vector.extract_strided_slice %11 {offsets = [0, 0, 1], sizes = [8, 8, 1], strides = [1, 1, 1]} : vector<8x8x7xf32> to vector<8x8x1xf32>
    %18 = vector.broadcast %17 : vector<8x8x1xf32> to vector<8x8x8xf32>
    %19 = arith.mulf %16, %18 : vector<8x8x8xf32>
    %20 = arith.addf %15, %19 : vector<8x8x8xf32>
    %21 = vector.extract_strided_slice %0 {offsets = [0, 2, 0], sizes = [8, 8, 8], strides = [1, 1, 1]} : vector<8x14x8xf32> to vector<8x8x8xf32>
    %22 = vector.extract_strided_slice %11 {offsets = [0, 0, 2], sizes = [8, 8, 1], strides = [1, 1, 1]} : vector<8x8x7xf32> to vector<8x8x1xf32>
    %23 = vector.broadcast %22 : vector<8x8x1xf32> to vector<8x8x8xf32>
    %24 = arith.mulf %21, %23 : vector<8x8x8xf32>
    %25 = arith.addf %20, %24 : vector<8x8x8xf32>
    %26 = vector.extract_strided_slice %0 {offsets = [0, 3, 0], sizes = [8, 8, 8], strides = [1, 1, 1]} : vector<8x14x8xf32> to vector<8x8x8xf32>
    %27 = vector.extract_strided_slice %11 {offsets = [0, 0, 3], sizes = [8, 8, 1], strides = [1, 1, 1]} : vector<8x8x7xf32> to vector<8x8x1xf32>
    %28 = vector.broadcast %27 : vector<8x8x1xf32> to vector<8x8x8xf32>
    %29 = arith.mulf %26, %28 : vector<8x8x8xf32>
    %30 = arith.addf %25, %29 : vector<8x8x8xf32>
    %31 = vector.extract_strided_slice %0 {offsets = [0, 4, 0], sizes = [8, 8, 8], strides = [1, 1, 1]} : vector<8x14x8xf32> to vector<8x8x8xf32>
    %32 = vector.extract_strided_slice %11 {offsets = [0, 0, 4], sizes = [8, 8, 1], strides = [1, 1, 1]} : vector<8x8x7xf32> to vector<8x8x1xf32>
    %33 = vector.broadcast %32 : vector<8x8x1xf32> to vector<8x8x8xf32>
    %34 = arith.mulf %31, %33 : vector<8x8x8xf32>
    %35 = arith.addf %30, %34 : vector<8x8x8xf32>
    %36 = vector.extract_strided_slice %0 {offsets = [0, 5, 0], sizes = [8, 8, 8], strides = [1, 1, 1]} : vector<8x14x8xf32> to vector<8x8x8xf32>
    %37 = vector.extract_strided_slice %11 {offsets = [0, 0, 5], sizes = [8, 8, 1], strides = [1, 1, 1]} : vector<8x8x7xf32> to vector<8x8x1xf32>
    %38 = vector.broadcast %37 : vector<8x8x1xf32> to vector<8x8x8xf32>
    %39 = arith.mulf %36, %38 : vector<8x8x8xf32>
    %40 = arith.addf %35, %39 : vector<8x8x8xf32>
    %41 = vector.extract_strided_slice %0 {offsets = [0, 6, 0], sizes = [8, 8, 8], strides = [1, 1, 1]} : vector<8x14x8xf32> to vector<8x8x8xf32>
    %42 = vector.extract_strided_slice %11 {offsets = [0, 0, 6], sizes = [8, 8, 1], strides = [1, 1, 1]} : vector<8x8x7xf32> to vector<8x8x1xf32>
    %43 = vector.broadcast %42 : vector<8x8x1xf32> to vector<8x8x8xf32>
    %44 = arith.mulf %41, %43 : vector<8x8x8xf32>
    %45 = arith.addf %40, %44 : vector<8x8x8xf32>
    %c0_8 = arith.constant 0 : index
    %c0_9 = arith.constant 0 : index
    %46 = memref.load %arg4[%c0_8, %c0_9] : memref<1x1xf32, #tpu.memory_space<smem>>
    %cst_10 = arith.constant 0.000000e+00 : f32
    %47 = vector.broadcast %cst_10 : f32 to vector<8x8x8xf32>
    %48 = arith.cmpf oge, %45, %47 : vector<8x8x8xf32>
    %49 = vector.broadcast %46 : f32 to vector<8x8x8xf32>
    %50 = arith.mulf %49, %45 : vector<8x8x8xf32>
    %51 = arith.select %48, %45, %50 : vector<8x8x8xi1>, vector<8x8x8xf32>
    %c0_11 = arith.constant 0 : index
    %c0_12 = arith.constant 0 : index
    %c0_13 = arith.constant 0 : index
    %52 = vector.load %arg5[%c0_11, %c0_12, %c0_13] : memref<8x8x8xf32, #tpu.memory_space<vmem>>, vector<8x8x8xf32>
    tpu.vector_store %arg5[%c0_11, %c0_12, %c0_13], %51 {strides = array<i32>} : memref<8x8x8xf32, #tpu.memory_space<vmem>>, vector<8x8x8xf32>,
    return
  }
  func.func @transform_0(%arg0: i32) -> (i32, i32, i32) {
    %c0_i32 = arith.constant 0 : i32
    %c0_i32_0 = arith.constant 0 : i32
    %c0_i32_1 = arith.constant 0 : i32
    return %arg0, %c0_i32, %c0_i32_0 : i32, i32, i32
  }
  func.func @transform_1(%arg0: i32) -> (i32, i32) {
    %c0_i32 = arith.constant 0 : i32
    %c0_i32_0 = arith.constant 0 : i32
    %c0_i32_1 = arith.constant 0 : i32
    return %c0_i32, %c0_i32_0 : i32, i32
  }
  func.func @transform_2(%arg0: i32) -> (i32, i32) {
    %c0_i32 = arith.constant 0 : i32
    %c0_i32_0 = arith.constant 0 : i32
    %c0_i32_1 = arith.constant 0 : i32
    return %c0_i32, %c0_i32_0 : i32, i32
  }
  func.func @transform_3(%arg0: i32) -> (i32, i32) {
    %c0_i32 = arith.constant 0 : i32
    %c0_i32_0 = arith.constant 0 : i32
    %c0_i32_1 = arith.constant 0 : i32
    return %c0_i32, %c0_i32_0 : i32, i32
  }
  func.func @transform_4(%arg0: i32) -> (i32, i32, i32) {
    %c0_i32 = arith.constant 0 : i32
    %c0_i32_0 = arith.constant 0 : i32
    %c0_i32_1 = arith.constant 0 : i32
    return %arg0, %c0_i32, %c0_i32_0 : i32, i32, i32
  }
}

module attributes {stable_mosaic.version = 11 : i64} {
  func.func @_mm_bias_kernel(%arg0: i32, %arg1: memref<64x16xbf16, #tpu.memory_space<vmem>>, %arg2: memref<16x8xbf16, #tpu.memory_space<vmem>>, %arg3: memref<1x8xf32, #tpu.memory_space<vmem>>, %arg4: memref<64x8xf32, #tpu.memory_space<vmem>>) attributes {dimension_semantics = [#tpu.dimension_semantics<parallel>], iteration_bounds = array<i64: 1>, scalar_prefetch = 0 : i64, scratch_operands = 0 : i64, tpu.core_type = #tpu.core_type<tc>, window_params = [{transform_indices = @transform_0, window_bounds = array<i64: 64, 16>}, {pipeline_mode = #tpu.pipeline_mode<synchronous>, transform_indices = @transform_1, window_bounds = array<i64: 16, 8>}, {pipeline_mode = #tpu.pipeline_mode<synchronous>, transform_indices = @transform_2, window_bounds = array<i64: 1, 8>}, {transform_indices = @transform_3, window_bounds = array<i64: 64, 8>}]} {
    %c0 = arith.constant 0 : index
    %c0_0 = arith.constant 0 : index
    %0 = vector.load %arg1[%c0, %c0_0] : memref<64x16xbf16, #tpu.memory_space<vmem>>, vector<64x16xbf16>
    %c0_1 = arith.constant 0 : index
    %c0_2 = arith.constant 0 : index
    %1 = vector.load %arg2[%c0_1, %c0_2] : memref<16x8xbf16, #tpu.memory_space<vmem>>, vector<16x8xbf16>
    %cst = arith.constant dense<0.000000e+00> : vector<64x8xf32>
    %2 = tpu.matmul %0, %1, %cst {dimension_numbers = #tpu.dot_dimension_numbers<[1], [0], [0], [1], [0, 0, 1, 1], [], []>} : vector<64x16xbf16>, vector<16x8xbf16>, vector<64x8xf32> -> vector<64x8xf32>
    %c0_3 = arith.constant 0 : index
    %c0_4 = arith.constant 0 : index
    %3 = vector.load %arg3[%c0_3, %c0_4] : memref<1x8xf32, #tpu.memory_space<vmem>>, vector<1x8xf32>
    %4 = vector.broadcast %3 : vector<1x8xf32> to vector<64x8xf32>
    %5 = arith.addf %2, %4 : vector<64x8xf32>
    %c0_5 = arith.constant 0 : index
    %c0_6 = arith.constant 0 : index
    %6 = vector.load %arg4[%c0_5, %c0_6] : memref<64x8xf32, #tpu.memory_space<vmem>>, vector<64x8xf32>
    tpu.vector_store %arg4[%c0_5, %c0_6], %5 {strides = array<i32>} : memref<64x8xf32, #tpu.memory_space<vmem>>, vector<64x8xf32>,
    return
  }
  func.func @transform_0(%arg0: i32) -> (i32, i32) {
    %c0_i32 = arith.constant 0 : i32
    %c0_i32_0 = arith.constant 0 : i32
    return %arg0, %c0_i32 : i32, i32
  }
  func.func @transform_1(%arg0: i32) -> (i32, i32) {
    %c0_i32 = arith.constant 0 : i32
    %c0_i32_0 = arith.constant 0 : i32
    %c0_i32_1 = arith.constant 0 : i32
    return %c0_i32, %c0_i32_0 : i32, i32
  }
  func.func @transform_2(%arg0: i32) -> (i32, i32) {
    %c0_i32 = arith.constant 0 : i32
    %c0_i32_0 = arith.constant 0 : i32
    %c0_i32_1 = arith.constant 0 : i32
    return %c0_i32, %c0_i32_0 : i32, i32
  }
  func.func @transform_3(%arg0: i32) -> (i32, i32) {
    %c0_i32 = arith.constant 0 : i32
    %c0_i32_0 = arith.constant 0 : i32
    return %arg0, %c0_i32 : i32, i32
  }
}

module attributes {stable_mosaic.version = 11 : i64} {
  func.func @_chunk_proj_kernel(%arg0: i32, %arg1: memref<8x8x8xf32, #tpu.memory_space<vmem>>, %arg2: memref<4x8xbf16, #tpu.memory_space<vmem>>, %arg3: memref<4x1xf32, #tpu.memory_space<vmem>>, %arg4: memref<8x4x8xf32, #tpu.memory_space<vmem>>) attributes {dimension_semantics = [#tpu.dimension_semantics<parallel>], iteration_bounds = array<i64: 1>, scalar_prefetch = 0 : i64, scratch_operands = 0 : i64, tpu.core_type = #tpu.core_type<tc>, window_params = [{transform_indices = @transform_0, window_bounds = array<i64: 8, 8, 8>}, {pipeline_mode = #tpu.pipeline_mode<synchronous>, transform_indices = @transform_1, window_bounds = array<i64: 4, 8>}, {pipeline_mode = #tpu.pipeline_mode<synchronous>, transform_indices = @transform_2, window_bounds = array<i64: 4, 1>}, {transform_indices = @transform_3, window_bounds = array<i64: 8, 4, 8>}]} {
    %c0 = arith.constant 0 : index
    %c0_0 = arith.constant 0 : index
    %0 = vector.load %arg2[%c0, %c0_0] : memref<4x8xbf16, #tpu.memory_space<vmem>>, vector<4x8xbf16>
    %c0_1 = arith.constant 0 : index
    %c0_2 = arith.constant 0 : index
    %1 = vector.load %arg3[%c0_1, %c0_2] : memref<4x1xf32, #tpu.memory_space<vmem>>, vector<4x1xf32>
    %c0_3 = arith.constant 0 : index
    %c0_4 = arith.constant 0 : index
    %c0_5 = arith.constant 0 : index
    %2 = vector.load %arg1[%c0_3, %c0_4, %c0_5] : memref<8x8x8xf32, #tpu.memory_space<vmem>>, vector<1x8x8xf32>
    %3 = vector.shape_cast %2 : vector<1x8x8xf32> to vector<8x8xf32>
    %4 = arith.truncf %3 : vector<8x8xf32> to vector<8x8xbf16>
    %cst = arith.constant dense<0.000000e+00> : vector<4x8xf32>
    %5 = tpu.matmul %0, %4, %cst {dimension_numbers = #tpu.dot_dimension_numbers<[1], [0], [0], [1], [0, 0, 1, 1], [], []>} : vector<4x8xbf16>, vector<8x8xbf16>, vector<4x8xf32> -> vector<4x8xf32>
    %6 = vector.broadcast %1 : vector<4x1xf32> to vector<4x8xf32>
    %7 = arith.addf %5, %6 : vector<4x8xf32>
    %c0_6 = arith.constant 0 : index
    %c0_7 = arith.constant 0 : index
    %c0_8 = arith.constant 0 : index
    %8 = vector.load %arg4[%c0_6, %c0_7, %c0_8] : memref<8x4x8xf32, #tpu.memory_space<vmem>>, vector<1x4x8xf32>
    %9 = vector.shape_cast %8 : vector<1x4x8xf32> to vector<4x8xf32>
    %10 = vector.shape_cast %7 : vector<4x8xf32> to vector<1x4x8xf32>
    tpu.vector_store %arg4[%c0_6, %c0_7, %c0_8], %10 {strides = array<i32>} : memref<8x4x8xf32, #tpu.memory_space<vmem>>, vector<1x4x8xf32>,
    %c1 = arith.constant 1 : index
    %c0_9 = arith.constant 0 : index
    %c0_10 = arith.constant 0 : index
    %11 = vector.load %arg1[%c1, %c0_9, %c0_10] : memref<8x8x8xf32, #tpu.memory_space<vmem>>, vector<1x8x8xf32>
    %12 = vector.shape_cast %11 : vector<1x8x8xf32> to vector<8x8xf32>
    %13 = arith.truncf %12 : vector<8x8xf32> to vector<8x8xbf16>
    %cst_11 = arith.constant dense<0.000000e+00> : vector<4x8xf32>
    %14 = tpu.matmul %0, %13, %cst_11 {dimension_numbers = #tpu.dot_dimension_numbers<[1], [0], [0], [1], [0, 0, 1, 1], [], []>} : vector<4x8xbf16>, vector<8x8xbf16>, vector<4x8xf32> -> vector<4x8xf32>
    %15 = vector.broadcast %1 : vector<4x1xf32> to vector<4x8xf32>
    %16 = arith.addf %14, %15 : vector<4x8xf32>
    %c1_12 = arith.constant 1 : index
    %c0_13 = arith.constant 0 : index
    %c0_14 = arith.constant 0 : index
    %17 = vector.load %arg4[%c1_12, %c0_13, %c0_14] : memref<8x4x8xf32, #tpu.memory_space<vmem>>, vector<1x4x8xf32>
    %18 = vector.shape_cast %17 : vector<1x4x8xf32> to vector<4x8xf32>
    %19 = vector.shape_cast %16 : vector<4x8xf32> to vector<1x4x8xf32>
    tpu.vector_store %arg4[%c1_12, %c0_13, %c0_14], %19 {strides = array<i32>} : memref<8x4x8xf32, #tpu.memory_space<vmem>>, vector<1x4x8xf32>,
    %c2 = arith.constant 2 : index
    %c0_15 = arith.constant 0 : index
    %c0_16 = arith.constant 0 : index
    %20 = vector.load %arg1[%c2, %c0_15, %c0_16] : memref<8x8x8xf32, #tpu.memory_space<vmem>>, vector<1x8x8xf32>
    %21 = vector.shape_cast %20 : vector<1x8x8xf32> to vector<8x8xf32>
    %22 = arith.truncf %21 : vector<8x8xf32> to vector<8x8xbf16>
    %cst_17 = arith.constant dense<0.000000e+00> : vector<4x8xf32>
    %23 = tpu.matmul %0, %22, %cst_17 {dimension_numbers = #tpu.dot_dimension_numbers<[1], [0], [0], [1], [0, 0, 1, 1], [], []>} : vector<4x8xbf16>, vector<8x8xbf16>, vector<4x8xf32> -> vector<4x8xf32>
    %24 = vector.broadcast %1 : vector<4x1xf32> to vector<4x8xf32>
    %25 = arith.addf %23, %24 : vector<4x8xf32>
    %c2_18 = arith.constant 2 : index
    %c0_19 = arith.constant 0 : index
    %c0_20 = arith.constant 0 : index
    %26 = vector.load %arg4[%c2_18, %c0_19, %c0_20] : memref<8x4x8xf32, #tpu.memory_space<vmem>>, vector<1x4x8xf32>
    %27 = vector.shape_cast %26 : vector<1x4x8xf32> to vector<4x8xf32>
    %28 = vector.shape_cast %25 : vector<4x8xf32> to vector<1x4x8xf32>
    tpu.vector_store %arg4[%c2_18, %c0_19, %c0_20], %28 {strides = array<i32>} : memref<8x4x8xf32, #tpu.memory_space<vmem>>, vector<1x4x8xf32>,
    %c3 = arith.constant 3 : index
    %c0_21 = arith.constant 0 : index
    %c0_22 = arith.constant 0 : index
    %29 = vector.load %arg1[%c3, %c0_21, %c0_22] : memref<8x8x8xf32, #tpu.memory_space<vmem>>, vector<1x8x8xf32>
    %30 = vector.shape_cast %29 : vector<1x8x8xf32> to vector<8x8xf32>
    %31 = arith.truncf %30 : vector<8x8xf32> to vector<8x8xbf16>
    %cst_23 = arith.constant dense<0.000000e+00> : vector<4x8xf32>
    %32 = tpu.matmul %0, %31, %cst_23 {dimension_numbers = #tpu.dot_dimension_numbers<[1], [0], [0], [1], [0, 0, 1, 1], [], []>} : vector<4x8xbf16>, vector<8x8xbf16>, vector<4x8xf32> -> vector<4x8xf32>
    %33 = vector.broadcast %1 : vector<4x1xf32> to vector<4x8xf32>
    %34 = arith.addf %32, %33 : vector<4x8xf32>
    %c3_24 = arith.constant 3 : index
    %c0_25 = arith.constant 0 : index
    %c0_26 = arith.constant 0 : index
    %35 = vector.load %arg4[%c3_24, %c0_25, %c0_26] : memref<8x4x8xf32, #tpu.memory_space<vmem>>, vector<1x4x8xf32>
    %36 = vector.shape_cast %35 : vector<1x4x8xf32> to vector<4x8xf32>
    %37 = vector.shape_cast %34 : vector<4x8xf32> to vector<1x4x8xf32>
    tpu.vector_store %arg4[%c3_24, %c0_25, %c0_26], %37 {strides = array<i32>} : memref<8x4x8xf32, #tpu.memory_space<vmem>>, vector<1x4x8xf32>,
    %c4 = arith.constant 4 : index
    %c0_27 = arith.constant 0 : index
    %c0_28 = arith.constant 0 : index
    %38 = vector.load %arg1[%c4, %c0_27, %c0_28] : memref<8x8x8xf32, #tpu.memory_space<vmem>>, vector<1x8x8xf32>
    %39 = vector.shape_cast %38 : vector<1x8x8xf32> to vector<8x8xf32>
    %40 = arith.truncf %39 : vector<8x8xf32> to vector<8x8xbf16>
    %cst_29 = arith.constant dense<0.000000e+00> : vector<4x8xf32>
    %41 = tpu.matmul %0, %40, %cst_29 {dimension_numbers = #tpu.dot_dimension_numbers<[1], [0], [0], [1], [0, 0, 1, 1], [], []>} : vector<4x8xbf16>, vector<8x8xbf16>, vector<4x8xf32> -> vector<4x8xf32>
    %42 = vector.broadcast %1 : vector<4x1xf32> to vector<4x8xf32>
    %43 = arith.addf %41, %42 : vector<4x8xf32>
    %c4_30 = arith.constant 4 : index
    %c0_31 = arith.constant 0 : index
    %c0_32 = arith.constant 0 : index
    %44 = vector.load %arg4[%c4_30, %c0_31, %c0_32] : memref<8x4x8xf32, #tpu.memory_space<vmem>>, vector<1x4x8xf32>
    %45 = vector.shape_cast %44 : vector<1x4x8xf32> to vector<4x8xf32>
    %46 = vector.shape_cast %43 : vector<4x8xf32> to vector<1x4x8xf32>
    tpu.vector_store %arg4[%c4_30, %c0_31, %c0_32], %46 {strides = array<i32>} : memref<8x4x8xf32, #tpu.memory_space<vmem>>, vector<1x4x8xf32>,
    %c5 = arith.constant 5 : index
    %c0_33 = arith.constant 0 : index
    %c0_34 = arith.constant 0 : index
    %47 = vector.load %arg1[%c5, %c0_33, %c0_34] : memref<8x8x8xf32, #tpu.memory_space<vmem>>, vector<1x8x8xf32>
    %48 = vector.shape_cast %47 : vector<1x8x8xf32> to vector<8x8xf32>
    %49 = arith.truncf %48 : vector<8x8xf32> to vector<8x8xbf16>
    %cst_35 = arith.constant dense<0.000000e+00> : vector<4x8xf32>
    %50 = tpu.matmul %0, %49, %cst_35 {dimension_numbers = #tpu.dot_dimension_numbers<[1], [0], [0], [1], [0, 0, 1, 1], [], []>} : vector<4x8xbf16>, vector<8x8xbf16>, vector<4x8xf32> -> vector<4x8xf32>
    %51 = vector.broadcast %1 : vector<4x1xf32> to vector<4x8xf32>
    %52 = arith.addf %50, %51 : vector<4x8xf32>
    %c5_36 = arith.constant 5 : index
    %c0_37 = arith.constant 0 : index
    %c0_38 = arith.constant 0 : index
    %53 = vector.load %arg4[%c5_36, %c0_37, %c0_38] : memref<8x4x8xf32, #tpu.memory_space<vmem>>, vector<1x4x8xf32>
    %54 = vector.shape_cast %53 : vector<1x4x8xf32> to vector<4x8xf32>
    %55 = vector.shape_cast %52 : vector<4x8xf32> to vector<1x4x8xf32>
    tpu.vector_store %arg4[%c5_36, %c0_37, %c0_38], %55 {strides = array<i32>} : memref<8x4x8xf32, #tpu.memory_space<vmem>>, vector<1x4x8xf32>,
    %c6 = arith.constant 6 : index
    %c0_39 = arith.constant 0 : index
    %c0_40 = arith.constant 0 : index
    %56 = vector.load %arg1[%c6, %c0_39, %c0_40] : memref<8x8x8xf32, #tpu.memory_space<vmem>>, vector<1x8x8xf32>
    %57 = vector.shape_cast %56 : vector<1x8x8xf32> to vector<8x8xf32>
    %58 = arith.truncf %57 : vector<8x8xf32> to vector<8x8xbf16>
    %cst_41 = arith.constant dense<0.000000e+00> : vector<4x8xf32>
    %59 = tpu.matmul %0, %58, %cst_41 {dimension_numbers = #tpu.dot_dimension_numbers<[1], [0], [0], [1], [0, 0, 1, 1], [], []>} : vector<4x8xbf16>, vector<8x8xbf16>, vector<4x8xf32> -> vector<4x8xf32>
    %60 = vector.broadcast %1 : vector<4x1xf32> to vector<4x8xf32>
    %61 = arith.addf %59, %60 : vector<4x8xf32>
    %c6_42 = arith.constant 6 : index
    %c0_43 = arith.constant 0 : index
    %c0_44 = arith.constant 0 : index
    %62 = vector.load %arg4[%c6_42, %c0_43, %c0_44] : memref<8x4x8xf32, #tpu.memory_space<vmem>>, vector<1x4x8xf32>
    %63 = vector.shape_cast %62 : vector<1x4x8xf32> to vector<4x8xf32>
    %64 = vector.shape_cast %61 : vector<4x8xf32> to vector<1x4x8xf32>
    tpu.vector_store %arg4[%c6_42, %c0_43, %c0_44], %64 {strides = array<i32>} : memref<8x4x8xf32, #tpu.memory_space<vmem>>, vector<1x4x8xf32>,
    %c7 = arith.constant 7 : index
    %c0_45 = arith.constant 0 : index
    %c0_46 = arith.constant 0 : index
    %65 = vector.load %arg1[%c7, %c0_45, %c0_46] : memref<8x8x8xf32, #tpu.memory_space<vmem>>, vector<1x8x8xf32>
    %66 = vector.shape_cast %65 : vector<1x8x8xf32> to vector<8x8xf32>
    %67 = arith.truncf %66 : vector<8x8xf32> to vector<8x8xbf16>
    %cst_47 = arith.constant dense<0.000000e+00> : vector<4x8xf32>
    %68 = tpu.matmul %0, %67, %cst_47 {dimension_numbers = #tpu.dot_dimension_numbers<[1], [0], [0], [1], [0, 0, 1, 1], [], []>} : vector<4x8xbf16>, vector<8x8xbf16>, vector<4x8xf32> -> vector<4x8xf32>
    %69 = vector.broadcast %1 : vector<4x1xf32> to vector<4x8xf32>
    %70 = arith.addf %68, %69 : vector<4x8xf32>
    %c7_48 = arith.constant 7 : index
    %c0_49 = arith.constant 0 : index
    %c0_50 = arith.constant 0 : index
    %71 = vector.load %arg4[%c7_48, %c0_49, %c0_50] : memref<8x4x8xf32, #tpu.memory_space<vmem>>, vector<1x4x8xf32>
    %72 = vector.shape_cast %71 : vector<1x4x8xf32> to vector<4x8xf32>
    %73 = vector.shape_cast %70 : vector<4x8xf32> to vector<1x4x8xf32>
    tpu.vector_store %arg4[%c7_48, %c0_49, %c0_50], %73 {strides = array<i32>} : memref<8x4x8xf32, #tpu.memory_space<vmem>>, vector<1x4x8xf32>,
    return
  }
  func.func @transform_0(%arg0: i32) -> (i32, i32, i32) {
    %c0_i32 = arith.constant 0 : i32
    %c0_i32_0 = arith.constant 0 : i32
    %c0_i32_1 = arith.constant 0 : i32
    return %arg0, %c0_i32, %c0_i32_0 : i32, i32, i32
  }
  func.func @transform_1(%arg0: i32) -> (i32, i32) {
    %c0_i32 = arith.constant 0 : i32
    %c0_i32_0 = arith.constant 0 : i32
    %c0_i32_1 = arith.constant 0 : i32
    return %c0_i32, %c0_i32_0 : i32, i32
  }
  func.func @transform_2(%arg0: i32) -> (i32, i32) {
    %c0_i32 = arith.constant 0 : i32
    %c0_i32_0 = arith.constant 0 : i32
    %c0_i32_1 = arith.constant 0 : i32
    return %c0_i32, %c0_i32_0 : i32, i32
  }
  func.func @transform_3(%arg0: i32) -> (i32, i32, i32) {
    %c0_i32 = arith.constant 0 : i32
    %c0_i32_0 = arith.constant 0 : i32
    %c0_i32_1 = arith.constant 0 : i32
    return %arg0, %c0_i32, %c0_i32_0 : i32, i32, i32
  }
}

module attributes {stable_mosaic.version = 11 : i64} {
  func.func @_mm_bias_kernel(%arg0: i32, %arg1: memref<32x8xbf16, #tpu.memory_space<vmem>>, %arg2: memref<8x24xbf16, #tpu.memory_space<vmem>>, %arg3: memref<1x24xf32, #tpu.memory_space<vmem>>, %arg4: memref<32x24xf32, #tpu.memory_space<vmem>>) attributes {dimension_semantics = [#tpu.dimension_semantics<parallel>], iteration_bounds = array<i64: 1>, scalar_prefetch = 0 : i64, scratch_operands = 0 : i64, tpu.core_type = #tpu.core_type<tc>, window_params = [{transform_indices = @transform_0, window_bounds = array<i64: 32, 8>}, {pipeline_mode = #tpu.pipeline_mode<synchronous>, transform_indices = @transform_1, window_bounds = array<i64: 8, 24>}, {pipeline_mode = #tpu.pipeline_mode<synchronous>, transform_indices = @transform_2, window_bounds = array<i64: 1, 24>}, {transform_indices = @transform_3, window_bounds = array<i64: 32, 24>}]} {
    %c0 = arith.constant 0 : index
    %c0_0 = arith.constant 0 : index
    %0 = vector.load %arg1[%c0, %c0_0] : memref<32x8xbf16, #tpu.memory_space<vmem>>, vector<32x8xbf16>
    %c0_1 = arith.constant 0 : index
    %c0_2 = arith.constant 0 : index
    %1 = vector.load %arg2[%c0_1, %c0_2] : memref<8x24xbf16, #tpu.memory_space<vmem>>, vector<8x24xbf16>
    %cst = arith.constant dense<0.000000e+00> : vector<32x24xf32>
    %2 = tpu.matmul %0, %1, %cst {dimension_numbers = #tpu.dot_dimension_numbers<[1], [0], [0], [1], [0, 0, 1, 1], [], []>} : vector<32x8xbf16>, vector<8x24xbf16>, vector<32x24xf32> -> vector<32x24xf32>
    %c0_3 = arith.constant 0 : index
    %c0_4 = arith.constant 0 : index
    %3 = vector.load %arg3[%c0_3, %c0_4] : memref<1x24xf32, #tpu.memory_space<vmem>>, vector<1x24xf32>
    %4 = vector.broadcast %3 : vector<1x24xf32> to vector<32x24xf32>
    %5 = arith.addf %2, %4 : vector<32x24xf32>
    %c0_5 = arith.constant 0 : index
    %c0_6 = arith.constant 0 : index
    %6 = vector.load %arg4[%c0_5, %c0_6] : memref<32x24xf32, #tpu.memory_space<vmem>>, vector<32x24xf32>
    tpu.vector_store %arg4[%c0_5, %c0_6], %5 {strides = array<i32>} : memref<32x24xf32, #tpu.memory_space<vmem>>, vector<32x24xf32>,
    return
  }
  func.func @transform_0(%arg0: i32) -> (i32, i32) {
    %c0_i32 = arith.constant 0 : i32
    %c0_i32_0 = arith.constant 0 : i32
    return %arg0, %c0_i32 : i32, i32
  }
  func.func @transform_1(%arg0: i32) -> (i32, i32) {
    %c0_i32 = arith.constant 0 : i32
    %c0_i32_0 = arith.constant 0 : i32
    %c0_i32_1 = arith.constant 0 : i32
    return %c0_i32, %c0_i32_0 : i32, i32
  }
  func.func @transform_2(%arg0: i32) -> (i32, i32) {
    %c0_i32 = arith.constant 0 : i32
    %c0_i32_0 = arith.constant 0 : i32
    %c0_i32_1 = arith.constant 0 : i32
    return %c0_i32, %c0_i32_0 : i32, i32
  }
  func.func @transform_3(%arg0: i32) -> (i32, i32) {
    %c0_i32 = arith.constant 0 : i32
    %c0_i32_0 = arith.constant 0 : i32
    return %arg0, %c0_i32 : i32, i32
  }
}

module attributes {stable_mosaic.version = 11 : i64} {
  func.func @_mm_bias_kernel(%arg0: i32, %arg1: memref<32x8xbf16, #tpu.memory_space<vmem>>, %arg2: memref<8x8xbf16, #tpu.memory_space<vmem>>, %arg3: memref<1x8xf32, #tpu.memory_space<vmem>>, %arg4: memref<32x8xf32, #tpu.memory_space<vmem>>) attributes {dimension_semantics = [#tpu.dimension_semantics<parallel>], iteration_bounds = array<i64: 1>, scalar_prefetch = 0 : i64, scratch_operands = 0 : i64, tpu.core_type = #tpu.core_type<tc>, window_params = [{transform_indices = @transform_0, window_bounds = array<i64: 32, 8>}, {pipeline_mode = #tpu.pipeline_mode<synchronous>, transform_indices = @transform_1, window_bounds = array<i64: 8, 8>}, {pipeline_mode = #tpu.pipeline_mode<synchronous>, transform_indices = @transform_2, window_bounds = array<i64: 1, 8>}, {transform_indices = @transform_3, window_bounds = array<i64: 32, 8>}]} {
    %c0 = arith.constant 0 : index
    %c0_0 = arith.constant 0 : index
    %0 = vector.load %arg1[%c0, %c0_0] : memref<32x8xbf16, #tpu.memory_space<vmem>>, vector<32x8xbf16>
    %c0_1 = arith.constant 0 : index
    %c0_2 = arith.constant 0 : index
    %1 = vector.load %arg2[%c0_1, %c0_2] : memref<8x8xbf16, #tpu.memory_space<vmem>>, vector<8x8xbf16>
    %cst = arith.constant dense<0.000000e+00> : vector<32x8xf32>
    %2 = tpu.matmul %0, %1, %cst {dimension_numbers = #tpu.dot_dimension_numbers<[1], [0], [0], [1], [0, 0, 1, 1], [], []>} : vector<32x8xbf16>, vector<8x8xbf16>, vector<32x8xf32> -> vector<32x8xf32>
    %c0_3 = arith.constant 0 : index
    %c0_4 = arith.constant 0 : index
    %3 = vector.load %arg3[%c0_3, %c0_4] : memref<1x8xf32, #tpu.memory_space<vmem>>, vector<1x8xf32>
    %4 = vector.broadcast %3 : vector<1x8xf32> to vector<32x8xf32>
    %5 = arith.addf %2, %4 : vector<32x8xf32>
    %c0_5 = arith.constant 0 : index
    %c0_6 = arith.constant 0 : index
    %6 = vector.load %arg4[%c0_5, %c0_6] : memref<32x8xf32, #tpu.memory_space<vmem>>, vector<32x8xf32>
    tpu.vector_store %arg4[%c0_5, %c0_6], %5 {strides = array<i32>} : memref<32x8xf32, #tpu.memory_space<vmem>>, vector<32x8xf32>,
    return
  }
  func.func @transform_0(%arg0: i32) -> (i32, i32) {
    %c0_i32 = arith.constant 0 : i32
    %c0_i32_0 = arith.constant 0 : i32
    return %arg0, %c0_i32 : i32, i32
  }
  func.func @transform_1(%arg0: i32) -> (i32, i32) {
    %c0_i32 = arith.constant 0 : i32
    %c0_i32_0 = arith.constant 0 : i32
    %c0_i32_1 = arith.constant 0 : i32
    return %c0_i32, %c0_i32_0 : i32, i32
  }
  func.func @transform_2(%arg0: i32) -> (i32, i32) {
    %c0_i32 = arith.constant 0 : i32
    %c0_i32_0 = arith.constant 0 : i32
    %c0_i32_1 = arith.constant 0 : i32
    return %c0_i32, %c0_i32_0 : i32, i32
  }
  func.func @transform_3(%arg0: i32) -> (i32, i32) {
    %c0_i32 = arith.constant 0 : i32
    %c0_i32_0 = arith.constant 0 : i32
    return %arg0, %c0_i32 : i32, i32
  }
}

module attributes {stable_mosaic.version = 11 : i64} {
  func.func @_attn_kernel(%arg0: i32, %arg1: memref<1x4x4x24xf32, #tpu.memory_space<vmem>>, %arg2: memref<1x4x4x8xf32, #tpu.memory_space<vmem>>) attributes {dimension_semantics = [#tpu.dimension_semantics<parallel>], iteration_bounds = array<i64: 2>, scalar_prefetch = 0 : i64, scratch_operands = 0 : i64, tpu.core_type = #tpu.core_type<tc>, window_params = [{transform_indices = @transform_0, window_bounds = array<i64: 1, 4, 4, 24>}, {transform_indices = @transform_1, window_bounds = array<i64: 1, 4, 4, 8>}]} {
    %c0 = arith.constant 0 : index
    %c0_0 = arith.constant 0 : index
    %c0_1 = arith.constant 0 : index
    %c0_2 = arith.constant 0 : index
    %0 = vector.load %arg1[%c0, %c0_0, %c0_1, %c0_2] : memref<1x4x4x24xf32, #tpu.memory_space<vmem>>, vector<1x4x4x24xf32>
    %1 = vector.shape_cast %0 : vector<1x4x4x24xf32> to vector<4x4x24xf32>
    %2 = vector.extract_strided_slice %1 {offsets = [0, 0, 0], sizes = [4, 1, 4], strides = [1, 1, 1]} : vector<4x4x24xf32> to vector<4x1x4xf32>
    %3 = vector.shape_cast %2 : vector<4x1x4xf32> to vector<4x4xf32>
    %4 = arith.truncf %3 : vector<4x4xf32> to vector<4x4xbf16>
    %5 = vector.extract_strided_slice %1 {offsets = [0, 0, 8], sizes = [4, 1, 4], strides = [1, 1, 1]} : vector<4x4x24xf32> to vector<4x1x4xf32>
    %6 = vector.shape_cast %5 : vector<4x1x4xf32> to vector<4x4xf32>
    %7 = arith.truncf %6 : vector<4x4xf32> to vector<4x4xbf16>
    %8 = vector.extract_strided_slice %1 {offsets = [0, 0, 16], sizes = [4, 1, 4], strides = [1, 1, 1]} : vector<4x4x24xf32> to vector<4x1x4xf32>
    %9 = vector.shape_cast %8 : vector<4x1x4xf32> to vector<4x4xf32>
    %cst = arith.constant dense<0.000000e+00> : vector<4x4xf32>
    %10 = tpu.matmul %4, %7, %cst {dimension_numbers = #tpu.dot_dimension_numbers<[1], [1], [0], [0], [0, 0, 1, 0], [], []>} : vector<4x4xbf16>, vector<4x4xbf16>, vector<4x4xf32> -> vector<4x4xf32>
    %cst_3 = arith.constant 5.000000e-01 : f32
    %11 = vector.broadcast %cst_3 : f32 to vector<4x4xf32>
    %12 = arith.mulf %10, %11 : vector<4x4xf32>
    %cst_4 = arith.constant dense<0xFF800000> : vector<4xf32>
    %13 = vector.multi_reduction <maximumf>, %12, %cst_4 [1] : vector<4x4xf32> to vector<4xf32>
    %14 = vector.shape_cast %13 : vector<4xf32> to vector<4x1xf32>
    %15 = vector.broadcast %14 : vector<4x1xf32> to vector<4x4xf32>
    %16 = arith.subf %12, %15 : vector<4x4xf32>
    %17 = math.exp %16 : vector<4x4xf32>
    %cst_5 = arith.constant dense<0.000000e+00> : vector<4xf32>
    %18 = vector.multi_reduction <add>, %17, %cst_5 [1] : vector<4x4xf32> to vector<4xf32>
    %19 = vector.shape_cast %18 : vector<4xf32> to vector<4x1xf32>
    %20 = tpu.reciprocal %19 {approx = true} : vector<4x1xf32> -> vector<4x1xf32>
    %21 = vector.broadcast %20 : vector<4x1xf32> to vector<4x4xf32>
    %22 = arith.mulf %17, %21 : vector<4x4xf32>
    %23 = arith.truncf %22 : vector<4x4xf32> to vector<4x4xbf16>
    %24 = arith.truncf %9 : vector<4x4xf32> to vector<4x4xbf16>
    %cst_6 = arith.constant dense<0.000000e+00> : vector<4x4xf32>
    %25 = tpu.matmul %23, %24, %cst_6 {dimension_numbers = #tpu.dot_dimension_numbers<[1], [0], [0], [1], [0, 0, 1, 1], [], []>} : vector<4x4xbf16>, vector<4x4xbf16>, vector<4x4xf32> -> vector<4x4xf32>
    %26 = vector.extract_strided_slice %1 {offsets = [0, 0, 4], sizes = [4, 1, 4], strides = [1, 1, 1]} : vector<4x4x24xf32> to vector<4x1x4xf32>
    %27 = vector.shape_cast %26 : vector<4x1x4xf32> to vector<4x4xf32>
    %28 = arith.truncf %27 : vector<4x4xf32> to vector<4x4xbf16>
    %29 = vector.extract_strided_slice %1 {offsets = [0, 0, 12], sizes = [4, 1, 4], strides = [1, 1, 1]} : vector<4x4x24xf32> to vector<4x1x4xf32>
    %30 = vector.shape_cast %29 : vector<4x1x4xf32> to vector<4x4xf32>
    %31 = arith.truncf %30 : vector<4x4xf32> to vector<4x4xbf16>
    %32 = vector.extract_strided_slice %1 {offsets = [0, 0, 20], sizes = [4, 1, 4], strides = [1, 1, 1]} : vector<4x4x24xf32> to vector<4x1x4xf32>
    %33 = vector.shape_cast %32 : vector<4x1x4xf32> to vector<4x4xf32>
    %cst_7 = arith.constant dense<0.000000e+00> : vector<4x4xf32>
    %34 = tpu.matmul %28, %31, %cst_7 {dimension_numbers = #tpu.dot_dimension_numbers<[1], [1], [0], [0], [0, 0, 1, 0], [], []>} : vector<4x4xbf16>, vector<4x4xbf16>, vector<4x4xf32> -> vector<4x4xf32>
    %cst_8 = arith.constant 5.000000e-01 : f32
    %35 = vector.broadcast %cst_8 : f32 to vector<4x4xf32>
    %36 = arith.mulf %34, %35 : vector<4x4xf32>
    %cst_9 = arith.constant dense<0xFF800000> : vector<4xf32>
    %37 = vector.multi_reduction <maximumf>, %36, %cst_9 [1] : vector<4x4xf32> to vector<4xf32>
    %38 = vector.shape_cast %37 : vector<4xf32> to vector<4x1xf32>
    %39 = vector.broadcast %38 : vector<4x1xf32> to vector<4x4xf32>
    %40 = arith.subf %36, %39 : vector<4x4xf32>
    %41 = math.exp %40 : vector<4x4xf32>
    %cst_10 = arith.constant dense<0.000000e+00> : vector<4xf32>
    %42 = vector.multi_reduction <add>, %41, %cst_10 [1] : vector<4x4xf32> to vector<4xf32>
    %43 = vector.shape_cast %42 : vector<4xf32> to vector<4x1xf32>
    %44 = tpu.reciprocal %43 {approx = true} : vector<4x1xf32> -> vector<4x1xf32>
    %45 = vector.broadcast %44 : vector<4x1xf32> to vector<4x4xf32>
    %46 = arith.mulf %41, %45 : vector<4x4xf32>
    %47 = arith.truncf %46 : vector<4x4xf32> to vector<4x4xbf16>
    %48 = arith.truncf %33 : vector<4x4xf32> to vector<4x4xbf16>
    %cst_11 = arith.constant dense<0.000000e+00> : vector<4x4xf32>
    %49 = tpu.matmul %47, %48, %cst_11 {dimension_numbers = #tpu.dot_dimension_numbers<[1], [0], [0], [1], [0, 0, 1, 1], [], []>} : vector<4x4xbf16>, vector<4x4xbf16>, vector<4x4xf32> -> vector<4x4xf32>
    %50 = tpu.concatenate %25, %49 in 1 : vector<4x4xf32>, vector<4x4xf32> -> vector<4x8xf32>
    %c0_12 = arith.constant 0 : index
    %c0_13 = arith.constant 0 : index
    %c0_14 = arith.constant 0 : index
    %c0_15 = arith.constant 0 : index
    %51 = vector.load %arg2[%c0_12, %c0_13, %c0_14, %c0_15] : memref<1x4x4x8xf32, #tpu.memory_space<vmem>>, vector<1x4x1x8xf32>
    %52 = vector.shape_cast %51 : vector<1x4x1x8xf32> to vector<4x8xf32>
    %53 = vector.shape_cast %50 : vector<4x8xf32> to vector<1x4x1x8xf32>
    tpu.vector_store %arg2[%c0_12, %c0_13, %c0_14, %c0_15], %53 {strides = array<i32>} : memref<1x4x4x8xf32, #tpu.memory_space<vmem>>, vector<1x4x1x8xf32>,
    %54 = vector.extract_strided_slice %1 {offsets = [0, 1, 0], sizes = [4, 1, 4], strides = [1, 1, 1]} : vector<4x4x24xf32> to vector<4x1x4xf32>
    %55 = vector.shape_cast %54 : vector<4x1x4xf32> to vector<4x4xf32>
    %56 = arith.truncf %55 : vector<4x4xf32> to vector<4x4xbf16>
    %57 = vector.extract_strided_slice %1 {offsets = [0, 1, 8], sizes = [4, 1, 4], strides = [1, 1, 1]} : vector<4x4x24xf32> to vector<4x1x4xf32>
    %58 = vector.shape_cast %57 : vector<4x1x4xf32> to vector<4x4xf32>
    %59 = arith.truncf %58 : vector<4x4xf32> to vector<4x4xbf16>
    %60 = vector.extract_strided_slice %1 {offsets = [0, 1, 16], sizes = [4, 1, 4], strides = [1, 1, 1]} : vector<4x4x24xf32> to vector<4x1x4xf32>
    %61 = vector.shape_cast %60 : vector<4x1x4xf32> to vector<4x4xf32>
    %cst_16 = arith.constant dense<0.000000e+00> : vector<4x4xf32>
    %62 = tpu.matmul %56, %59, %cst_16 {dimension_numbers = #tpu.dot_dimension_numbers<[1], [1], [0], [0], [0, 0, 1, 0], [], []>} : vector<4x4xbf16>, vector<4x4xbf16>, vector<4x4xf32> -> vector<4x4xf32>
    %cst_17 = arith.constant 5.000000e-01 : f32
    %63 = vector.broadcast %cst_17 : f32 to vector<4x4xf32>
    %64 = arith.mulf %62, %63 : vector<4x4xf32>
    %cst_18 = arith.constant dense<0xFF800000> : vector<4xf32>
    %65 = vector.multi_reduction <maximumf>, %64, %cst_18 [1] : vector<4x4xf32> to vector<4xf32>
    %66 = vector.shape_cast %65 : vector<4xf32> to vector<4x1xf32>
    %67 = vector.broadcast %66 : vector<4x1xf32> to vector<4x4xf32>
    %68 = arith.subf %64, %67 : vector<4x4xf32>
    %69 = math.exp %68 : vector<4x4xf32>
    %cst_19 = arith.constant dense<0.000000e+00> : vector<4xf32>
    %70 = vector.multi_reduction <add>, %69, %cst_19 [1] : vector<4x4xf32> to vector<4xf32>
    %71 = vector.shape_cast %70 : vector<4xf32> to vector<4x1xf32>
    %72 = tpu.reciprocal %71 {approx = true} : vector<4x1xf32> -> vector<4x1xf32>
    %73 = vector.broadcast %72 : vector<4x1xf32> to vector<4x4xf32>
    %74 = arith.mulf %69, %73 : vector<4x4xf32>
    %75 = arith.truncf %74 : vector<4x4xf32> to vector<4x4xbf16>
    %76 = arith.truncf %61 : vector<4x4xf32> to vector<4x4xbf16>
    %cst_20 = arith.constant dense<0.000000e+00> : vector<4x4xf32>
    %77 = tpu.matmul %75, %76, %cst_20 {dimension_numbers = #tpu.dot_dimension_numbers<[1], [0], [0], [1], [0, 0, 1, 1], [], []>} : vector<4x4xbf16>, vector<4x4xbf16>, vector<4x4xf32> -> vector<4x4xf32>
    %78 = vector.extract_strided_slice %1 {offsets = [0, 1, 4], sizes = [4, 1, 4], strides = [1, 1, 1]} : vector<4x4x24xf32> to vector<4x1x4xf32>
    %79 = vector.shape_cast %78 : vector<4x1x4xf32> to vector<4x4xf32>
    %80 = arith.truncf %79 : vector<4x4xf32> to vector<4x4xbf16>
    %81 = vector.extract_strided_slice %1 {offsets = [0, 1, 12], sizes = [4, 1, 4], strides = [1, 1, 1]} : vector<4x4x24xf32> to vector<4x1x4xf32>
    %82 = vector.shape_cast %81 : vector<4x1x4xf32> to vector<4x4xf32>
    %83 = arith.truncf %82 : vector<4x4xf32> to vector<4x4xbf16>
    %84 = vector.extract_strided_slice %1 {offsets = [0, 1, 20], sizes = [4, 1, 4], strides = [1, 1, 1]} : vector<4x4x24xf32> to vector<4x1x4xf32>
    %85 = vector.shape_cast %84 : vector<4x1x4xf32> to vector<4x4xf32>
    %cst_21 = arith.constant dense<0.000000e+00> : vector<4x4xf32>
    %86 = tpu.matmul %80, %83, %cst_21 {dimension_numbers = #tpu.dot_dimension_numbers<[1], [1], [0], [0], [0, 0, 1, 0], [], []>} : vector<4x4xbf16>, vector<4x4xbf16>, vector<4x4xf32> -> vector<4x4xf32>
    %cst_22 = arith.constant 5.000000e-01 : f32
    %87 = vector.broadcast %cst_22 : f32 to vector<4x4xf32>
    %88 = arith.mulf %86, %87 : vector<4x4xf32>
    %cst_23 = arith.constant dense<0xFF800000> : vector<4xf32>
    %89 = vector.multi_reduction <maximumf>, %88, %cst_23 [1] : vector<4x4xf32> to vector<4xf32>
    %90 = vector.shape_cast %89 : vector<4xf32> to vector<4x1xf32>
    %91 = vector.broadcast %90 : vector<4x1xf32> to vector<4x4xf32>
    %92 = arith.subf %88, %91 : vector<4x4xf32>
    %93 = math.exp %92 : vector<4x4xf32>
    %cst_24 = arith.constant dense<0.000000e+00> : vector<4xf32>
    %94 = vector.multi_reduction <add>, %93, %cst_24 [1] : vector<4x4xf32> to vector<4xf32>
    %95 = vector.shape_cast %94 : vector<4xf32> to vector<4x1xf32>
    %96 = tpu.reciprocal %95 {approx = true} : vector<4x1xf32> -> vector<4x1xf32>
    %97 = vector.broadcast %96 : vector<4x1xf32> to vector<4x4xf32>
    %98 = arith.mulf %93, %97 : vector<4x4xf32>
    %99 = arith.truncf %98 : vector<4x4xf32> to vector<4x4xbf16>
    %100 = arith.truncf %85 : vector<4x4xf32> to vector<4x4xbf16>
    %cst_25 = arith.constant dense<0.000000e+00> : vector<4x4xf32>
    %101 = tpu.matmul %99, %100, %cst_25 {dimension_numbers = #tpu.dot_dimension_numbers<[1], [0], [0], [1], [0, 0, 1, 1], [], []>} : vector<4x4xbf16>, vector<4x4xbf16>, vector<4x4xf32> -> vector<4x4xf32>
    %102 = tpu.concatenate %77, %101 in 1 : vector<4x4xf32>, vector<4x4xf32> -> vector<4x8xf32>
    %c0_26 = arith.constant 0 : index
    %c0_27 = arith.constant 0 : index
    %c1 = arith.constant 1 : index
    %c0_28 = arith.constant 0 : index
    %103 = vector.load %arg2[%c0_26, %c0_27, %c1, %c0_28] : memref<1x4x4x8xf32, #tpu.memory_space<vmem>>, vector<1x4x1x8xf32>
    %104 = vector.shape_cast %103 : vector<1x4x1x8xf32> to vector<4x8xf32>
    %105 = vector.shape_cast %102 : vector<4x8xf32> to vector<1x4x1x8xf32>
    tpu.vector_store %arg2[%c0_26, %c0_27, %c1, %c0_28], %105 {strides = array<i32>} : memref<1x4x4x8xf32, #tpu.memory_space<vmem>>, vector<1x4x1x8xf32>,
    %106 = vector.extract_strided_slice %1 {offsets = [0, 2, 0], sizes = [4, 1, 4], strides = [1, 1, 1]} : vector<4x4x24xf32> to vector<4x1x4xf32>
    %107 = vector.shape_cast %106 : vector<4x1x4xf32> to vector<4x4xf32>
    %108 = arith.truncf %107 : vector<4x4xf32> to vector<4x4xbf16>
    %109 = vector.extract_strided_slice %1 {offsets = [0, 2, 8], sizes = [4, 1, 4], strides = [1, 1, 1]} : vector<4x4x24xf32> to vector<4x1x4xf32>
    %110 = vector.shape_cast %109 : vector<4x1x4xf32> to vector<4x4xf32>
    %111 = arith.truncf %110 : vector<4x4xf32> to vector<4x4xbf16>
    %112 = vector.extract_strided_slice %1 {offsets = [0, 2, 16], sizes = [4, 1, 4], strides = [1, 1, 1]} : vector<4x4x24xf32> to vector<4x1x4xf32>
    %113 = vector.shape_cast %112 : vector<4x1x4xf32> to vector<4x4xf32>
    %cst_29 = arith.constant dense<0.000000e+00> : vector<4x4xf32>
    %114 = tpu.matmul %108, %111, %cst_29 {dimension_numbers = #tpu.dot_dimension_numbers<[1], [1], [0], [0], [0, 0, 1, 0], [], []>} : vector<4x4xbf16>, vector<4x4xbf16>, vector<4x4xf32> -> vector<4x4xf32>
    %cst_30 = arith.constant 5.000000e-01 : f32
    %115 = vector.broadcast %cst_30 : f32 to vector<4x4xf32>
    %116 = arith.mulf %114, %115 : vector<4x4xf32>
    %cst_31 = arith.constant dense<0xFF800000> : vector<4xf32>
    %117 = vector.multi_reduction <maximumf>, %116, %cst_31 [1] : vector<4x4xf32> to vector<4xf32>
    %118 = vector.shape_cast %117 : vector<4xf32> to vector<4x1xf32>
    %119 = vector.broadcast %118 : vector<4x1xf32> to vector<4x4xf32>
    %120 = arith.subf %116, %119 : vector<4x4xf32>
    %121 = math.exp %120 : vector<4x4xf32>
    %cst_32 = arith.constant dense<0.000000e+00> : vector<4xf32>
    %122 = vector.multi_reduction <add>, %121, %cst_32 [1] : vector<4x4xf32> to vector<4xf32>
    %123 = vector.shape_cast %122 : vector<4xf32> to vector<4x1xf32>
    %124 = tpu.reciprocal %123 {approx = true} : vector<4x1xf32> -> vector<4x1xf32>
    %125 = vector.broadcast %124 : vector<4x1xf32> to vector<4x4xf32>
    %126 = arith.mulf %121, %125 : vector<4x4xf32>
    %127 = arith.truncf %126 : vector<4x4xf32> to vector<4x4xbf16>
    %128 = arith.truncf %113 : vector<4x4xf32> to vector<4x4xbf16>
    %cst_33 = arith.constant dense<0.000000e+00> : vector<4x4xf32>
    %129 = tpu.matmul %127, %128, %cst_33 {dimension_numbers = #tpu.dot_dimension_numbers<[1], [0], [0], [1], [0, 0, 1, 1], [], []>} : vector<4x4xbf16>, vector<4x4xbf16>, vector<4x4xf32> -> vector<4x4xf32>
    %130 = vector.extract_strided_slice %1 {offsets = [0, 2, 4], sizes = [4, 1, 4], strides = [1, 1, 1]} : vector<4x4x24xf32> to vector<4x1x4xf32>
    %131 = vector.shape_cast %130 : vector<4x1x4xf32> to vector<4x4xf32>
    %132 = arith.truncf %131 : vector<4x4xf32> to vector<4x4xbf16>
    %133 = vector.extract_strided_slice %1 {offsets = [0, 2, 12], sizes = [4, 1, 4], strides = [1, 1, 1]} : vector<4x4x24xf32> to vector<4x1x4xf32>
    %134 = vector.shape_cast %133 : vector<4x1x4xf32> to vector<4x4xf32>
    %135 = arith.truncf %134 : vector<4x4xf32> to vector<4x4xbf16>
    %136 = vector.extract_strided_slice %1 {offsets = [0, 2, 20], sizes = [4, 1, 4], strides = [1, 1, 1]} : vector<4x4x24xf32> to vector<4x1x4xf32>
    %137 = vector.shape_cast %136 : vector<4x1x4xf32> to vector<4x4xf32>
    %cst_34 = arith.constant dense<0.000000e+00> : vector<4x4xf32>
    %138 = tpu.matmul %132, %135, %cst_34 {dimension_numbers = #tpu.dot_dimension_numbers<[1], [1], [0], [0], [0, 0, 1, 0], [], []>} : vector<4x4xbf16>, vector<4x4xbf16>, vector<4x4xf32> -> vector<4x4xf32>
    %cst_35 = arith.constant 5.000000e-01 : f32
    %139 = vector.broadcast %cst_35 : f32 to vector<4x4xf32>
    %140 = arith.mulf %138, %139 : vector<4x4xf32>
    %cst_36 = arith.constant dense<0xFF800000> : vector<4xf32>
    %141 = vector.multi_reduction <maximumf>, %140, %cst_36 [1] : vector<4x4xf32> to vector<4xf32>
    %142 = vector.shape_cast %141 : vector<4xf32> to vector<4x1xf32>
    %143 = vector.broadcast %142 : vector<4x1xf32> to vector<4x4xf32>
    %144 = arith.subf %140, %143 : vector<4x4xf32>
    %145 = math.exp %144 : vector<4x4xf32>
    %cst_37 = arith.constant dense<0.000000e+00> : vector<4xf32>
    %146 = vector.multi_reduction <add>, %145, %cst_37 [1] : vector<4x4xf32> to vector<4xf32>
    %147 = vector.shape_cast %146 : vector<4xf32> to vector<4x1xf32>
    %148 = tpu.reciprocal %147 {approx = true} : vector<4x1xf32> -> vector<4x1xf32>
    %149 = vector.broadcast %148 : vector<4x1xf32> to vector<4x4xf32>
    %150 = arith.mulf %145, %149 : vector<4x4xf32>
    %151 = arith.truncf %150 : vector<4x4xf32> to vector<4x4xbf16>
    %152 = arith.truncf %137 : vector<4x4xf32> to vector<4x4xbf16>
    %cst_38 = arith.constant dense<0.000000e+00> : vector<4x4xf32>
    %153 = tpu.matmul %151, %152, %cst_38 {dimension_numbers = #tpu.dot_dimension_numbers<[1], [0], [0], [1], [0, 0, 1, 1], [], []>} : vector<4x4xbf16>, vector<4x4xbf16>, vector<4x4xf32> -> vector<4x4xf32>
    %154 = tpu.concatenate %129, %153 in 1 : vector<4x4xf32>, vector<4x4xf32> -> vector<4x8xf32>
    %c0_39 = arith.constant 0 : index
    %c0_40 = arith.constant 0 : index
    %c2 = arith.constant 2 : index
    %c0_41 = arith.constant 0 : index
    %155 = vector.load %arg2[%c0_39, %c0_40, %c2, %c0_41] : memref<1x4x4x8xf32, #tpu.memory_space<vmem>>, vector<1x4x1x8xf32>
    %156 = vector.shape_cast %155 : vector<1x4x1x8xf32> to vector<4x8xf32>
    %157 = vector.shape_cast %154 : vector<4x8xf32> to vector<1x4x1x8xf32>
    tpu.vector_store %arg2[%c0_39, %c0_40, %c2, %c0_41], %157 {strides = array<i32>} : memref<1x4x4x8xf32, #tpu.memory_space<vmem>>, vector<1x4x1x8xf32>,
    %158 = vector.extract_strided_slice %1 {offsets = [0, 3, 0], sizes = [4, 1, 4], strides = [1, 1, 1]} : vector<4x4x24xf32> to vector<4x1x4xf32>
    %159 = vector.shape_cast %158 : vector<4x1x4xf32> to vector<4x4xf32>
    %160 = arith.truncf %159 : vector<4x4xf32> to vector<4x4xbf16>
    %161 = vector.extract_strided_slice %1 {offsets = [0, 3, 8], sizes = [4, 1, 4], strides = [1, 1, 1]} : vector<4x4x24xf32> to vector<4x1x4xf32>
    %162 = vector.shape_cast %161 : vector<4x1x4xf32> to vector<4x4xf32>
    %163 = arith.truncf %162 : vector<4x4xf32> to vector<4x4xbf16>
    %164 = vector.extract_strided_slice %1 {offsets = [0, 3, 16], sizes = [4, 1, 4], strides = [1, 1, 1]} : vector<4x4x24xf32> to vector<4x1x4xf32>
    %165 = vector.shape_cast %164 : vector<4x1x4xf32> to vector<4x4xf32>
    %cst_42 = arith.constant dense<0.000000e+00> : vector<4x4xf32>
    %166 = tpu.matmul %160, %163, %cst_42 {dimension_numbers = #tpu.dot_dimension_numbers<[1], [1], [0], [0], [0, 0, 1, 0], [], []>} : vector<4x4xbf16>, vector<4x4xbf16>, vector<4x4xf32> -> vector<4x4xf32>
    %cst_43 = arith.constant 5.000000e-01 : f32
    %167 = vector.broadcast %cst_43 : f32 to vector<4x4xf32>
    %168 = arith.mulf %166, %167 : vector<4x4xf32>
    %cst_44 = arith.constant dense<0xFF800000> : vector<4xf32>
    %169 = vector.multi_reduction <maximumf>, %168, %cst_44 [1] : vector<4x4xf32> to vector<4xf32>
    %170 = vector.shape_cast %169 : vector<4xf32> to vector<4x1xf32>
    %171 = vector.broadcast %170 : vector<4x1xf32> to vector<4x4xf32>
    %172 = arith.subf %168, %171 : vector<4x4xf32>
    %173 = math.exp %172 : vector<4x4xf32>
    %cst_45 = arith.constant dense<0.000000e+00> : vector<4xf32>
    %174 = vector.multi_reduction <add>, %173, %cst_45 [1] : vector<4x4xf32> to vector<4xf32>
    %175 = vector.shape_cast %174 : vector<4xf32> to vector<4x1xf32>
    %176 = tpu.reciprocal %175 {approx = true} : vector<4x1xf32> -> vector<4x1xf32>
    %177 = vector.broadcast %176 : vector<4x1xf32> to vector<4x4xf32>
    %178 = arith.mulf %173, %177 : vector<4x4xf32>
    %179 = arith.truncf %178 : vector<4x4xf32> to vector<4x4xbf16>
    %180 = arith.truncf %165 : vector<4x4xf32> to vector<4x4xbf16>
    %cst_46 = arith.constant dense<0.000000e+00> : vector<4x4xf32>
    %181 = tpu.matmul %179, %180, %cst_46 {dimension_numbers = #tpu.dot_dimension_numbers<[1], [0], [0], [1], [0, 0, 1, 1], [], []>} : vector<4x4xbf16>, vector<4x4xbf16>, vector<4x4xf32> -> vector<4x4xf32>
    %182 = vector.extract_strided_slice %1 {offsets = [0, 3, 4], sizes = [4, 1, 4], strides = [1, 1, 1]} : vector<4x4x24xf32> to vector<4x1x4xf32>
    %183 = vector.shape_cast %182 : vector<4x1x4xf32> to vector<4x4xf32>
    %184 = arith.truncf %183 : vector<4x4xf32> to vector<4x4xbf16>
    %185 = vector.extract_strided_slice %1 {offsets = [0, 3, 12], sizes = [4, 1, 4], strides = [1, 1, 1]} : vector<4x4x24xf32> to vector<4x1x4xf32>
    %186 = vector.shape_cast %185 : vector<4x1x4xf32> to vector<4x4xf32>
    %187 = arith.truncf %186 : vector<4x4xf32> to vector<4x4xbf16>
    %188 = vector.extract_strided_slice %1 {offsets = [0, 3, 20], sizes = [4, 1, 4], strides = [1, 1, 1]} : vector<4x4x24xf32> to vector<4x1x4xf32>
    %189 = vector.shape_cast %188 : vector<4x1x4xf32> to vector<4x4xf32>
    %cst_47 = arith.constant dense<0.000000e+00> : vector<4x4xf32>
    %190 = tpu.matmul %184, %187, %cst_47 {dimension_numbers = #tpu.dot_dimension_numbers<[1], [1], [0], [0], [0, 0, 1, 0], [], []>} : vector<4x4xbf16>, vector<4x4xbf16>, vector<4x4xf32> -> vector<4x4xf32>
    %cst_48 = arith.constant 5.000000e-01 : f32
    %191 = vector.broadcast %cst_48 : f32 to vector<4x4xf32>
    %192 = arith.mulf %190, %191 : vector<4x4xf32>
    %cst_49 = arith.constant dense<0xFF800000> : vector<4xf32>
    %193 = vector.multi_reduction <maximumf>, %192, %cst_49 [1] : vector<4x4xf32> to vector<4xf32>
    %194 = vector.shape_cast %193 : vector<4xf32> to vector<4x1xf32>
    %195 = vector.broadcast %194 : vector<4x1xf32> to vector<4x4xf32>
    %196 = arith.subf %192, %195 : vector<4x4xf32>
    %197 = math.exp %196 : vector<4x4xf32>
    %cst_50 = arith.constant dense<0.000000e+00> : vector<4xf32>
    %198 = vector.multi_reduction <add>, %197, %cst_50 [1] : vector<4x4xf32> to vector<4xf32>
    %199 = vector.shape_cast %198 : vector<4xf32> to vector<4x1xf32>
    %200 = tpu.reciprocal %199 {approx = true} : vector<4x1xf32> -> vector<4x1xf32>
    %201 = vector.broadcast %200 : vector<4x1xf32> to vector<4x4xf32>
    %202 = arith.mulf %197, %201 : vector<4x4xf32>
    %203 = arith.truncf %202 : vector<4x4xf32> to vector<4x4xbf16>
    %204 = arith.truncf %189 : vector<4x4xf32> to vector<4x4xbf16>
    %cst_51 = arith.constant dense<0.000000e+00> : vector<4x4xf32>
    %205 = tpu.matmul %203, %204, %cst_51 {dimension_numbers = #tpu.dot_dimension_numbers<[1], [0], [0], [1], [0, 0, 1, 1], [], []>} : vector<4x4xbf16>, vector<4x4xbf16>, vector<4x4xf32> -> vector<4x4xf32>
    %206 = tpu.concatenate %181, %205 in 1 : vector<4x4xf32>, vector<4x4xf32> -> vector<4x8xf32>
    %c0_52 = arith.constant 0 : index
    %c0_53 = arith.constant 0 : index
    %c3 = arith.constant 3 : index
    %c0_54 = arith.constant 0 : index
    %207 = vector.load %arg2[%c0_52, %c0_53, %c3, %c0_54] : memref<1x4x4x8xf32, #tpu.memory_space<vmem>>, vector<1x4x1x8xf32>
    %208 = vector.shape_cast %207 : vector<1x4x1x8xf32> to vector<4x8xf32>
    %209 = vector.shape_cast %206 : vector<4x8xf32> to vector<1x4x1x8xf32>
    tpu.vector_store %arg2[%c0_52, %c0_53, %c3, %c0_54], %209 {strides = array<i32>} : memref<1x4x4x8xf32, #tpu.memory_space<vmem>>, vector<1x4x1x8xf32>,
    return
  }
  func.func @transform_0(%arg0: i32) -> (i32, i32, i32, i32) {
    %c0_i32 = arith.constant 0 : i32
    %c0_i32_0 = arith.constant 0 : i32
    %c0_i32_1 = arith.constant 0 : i32
    %c0_i32_2 = arith.constant 0 : i32
    return %arg0, %c0_i32, %c0_i32_0, %c0_i32_1 : i32, i32, i32, i32
  }
  func.func @transform_1(%arg0: i32) -> (i32, i32, i32, i32) {
    %c0_i32 = arith.constant 0 : i32
    %c0_i32_0 = arith.constant 0 : i32
    %c0_i32_1 = arith.constant 0 : i32
    %c0_i32_2 = arith.constant 0 : i32
    return %arg0, %c0_i32, %c0_i32_0, %c0_i32_1 : i32, i32, i32, i32
  }
}

module attributes {stable_mosaic.version = 11 : i64} {
  func.func @_chunk_proj_res_kernel(%arg0: i32, %arg1: memref<8x4x8xf32, #tpu.memory_space<vmem>>, %arg2: memref<8x4xbf16, #tpu.memory_space<vmem>>, %arg3: memref<8x1xf32, #tpu.memory_space<vmem>>, %arg4: memref<8x8x8xf32, #tpu.memory_space<vmem>>, %arg5: memref<8x8x8xf32, #tpu.memory_space<vmem>>) attributes {dimension_semantics = [#tpu.dimension_semantics<parallel>], iteration_bounds = array<i64: 1>, scalar_prefetch = 0 : i64, scratch_operands = 0 : i64, tpu.core_type = #tpu.core_type<tc>, window_params = [{transform_indices = @transform_0, window_bounds = array<i64: 8, 4, 8>}, {pipeline_mode = #tpu.pipeline_mode<synchronous>, transform_indices = @transform_1, window_bounds = array<i64: 8, 4>}, {pipeline_mode = #tpu.pipeline_mode<synchronous>, transform_indices = @transform_2, window_bounds = array<i64: 8, 1>}, {transform_indices = @transform_3, window_bounds = array<i64: 8, 8, 8>}, {transform_indices = @transform_4, window_bounds = array<i64: 8, 8, 8>}]} {
    %c0 = arith.constant 0 : index
    %c0_0 = arith.constant 0 : index
    %0 = vector.load %arg2[%c0, %c0_0] : memref<8x4xbf16, #tpu.memory_space<vmem>>, vector<8x4xbf16>
    %c0_1 = arith.constant 0 : index
    %c0_2 = arith.constant 0 : index
    %1 = vector.load %arg3[%c0_1, %c0_2] : memref<8x1xf32, #tpu.memory_space<vmem>>, vector<8x1xf32>
    %c0_3 = arith.constant 0 : index
    %c0_4 = arith.constant 0 : index
    %c0_5 = arith.constant 0 : index
    %2 = vector.load %arg1[%c0_3, %c0_4, %c0_5] : memref<8x4x8xf32, #tpu.memory_space<vmem>>, vector<1x4x8xf32>
    %3 = vector.shape_cast %2 : vector<1x4x8xf32> to vector<4x8xf32>
    %4 = arith.truncf %3 : vector<4x8xf32> to vector<4x8xbf16>
    %cst = arith.constant dense<0.000000e+00> : vector<8x8xf32>
    %5 = tpu.matmul %0, %4, %cst {dimension_numbers = #tpu.dot_dimension_numbers<[1], [0], [0], [1], [0, 0, 1, 1], [], []>} : vector<8x4xbf16>, vector<4x8xbf16>, vector<8x8xf32> -> vector<8x8xf32>
    %6 = vector.broadcast %1 : vector<8x1xf32> to vector<8x8xf32>
    %7 = arith.addf %5, %6 : vector<8x8xf32>
    %c0_6 = arith.constant 0 : index
    %c0_7 = arith.constant 0 : index
    %c0_8 = arith.constant 0 : index
    %8 = vector.load %arg4[%c0_6, %c0_7, %c0_8] : memref<8x8x8xf32, #tpu.memory_space<vmem>>, vector<1x8x8xf32>
    %9 = vector.shape_cast %8 : vector<1x8x8xf32> to vector<8x8xf32>
    %10 = arith.addf %7, %9 : vector<8x8xf32>
    %c0_9 = arith.constant 0 : index
    %c0_10 = arith.constant 0 : index
    %c0_11 = arith.constant 0 : index
    %11 = vector.load %arg5[%c0_9, %c0_10, %c0_11] : memref<8x8x8xf32, #tpu.memory_space<vmem>>, vector<1x8x8xf32>
    %12 = vector.shape_cast %11 : vector<1x8x8xf32> to vector<8x8xf32>
    %13 = vector.shape_cast %10 : vector<8x8xf32> to vector<1x8x8xf32>
    tpu.vector_store %arg5[%c0_9, %c0_10, %c0_11], %13 {strides = array<i32>} : memref<8x8x8xf32, #tpu.memory_space<vmem>>, vector<1x8x8xf32>,
    %c1 = arith.constant 1 : index
    %c0_12 = arith.constant 0 : index
    %c0_13 = arith.constant 0 : index
    %14 = vector.load %arg1[%c1, %c0_12, %c0_13] : memref<8x4x8xf32, #tpu.memory_space<vmem>>, vector<1x4x8xf32>
    %15 = vector.shape_cast %14 : vector<1x4x8xf32> to vector<4x8xf32>
    %16 = arith.truncf %15 : vector<4x8xf32> to vector<4x8xbf16>
    %cst_14 = arith.constant dense<0.000000e+00> : vector<8x8xf32>
    %17 = tpu.matmul %0, %16, %cst_14 {dimension_numbers = #tpu.dot_dimension_numbers<[1], [0], [0], [1], [0, 0, 1, 1], [], []>} : vector<8x4xbf16>, vector<4x8xbf16>, vector<8x8xf32> -> vector<8x8xf32>
    %18 = vector.broadcast %1 : vector<8x1xf32> to vector<8x8xf32>
    %19 = arith.addf %17, %18 : vector<8x8xf32>
    %c1_15 = arith.constant 1 : index
    %c0_16 = arith.constant 0 : index
    %c0_17 = arith.constant 0 : index
    %20 = vector.load %arg4[%c1_15, %c0_16, %c0_17] : memref<8x8x8xf32, #tpu.memory_space<vmem>>, vector<1x8x8xf32>
    %21 = vector.shape_cast %20 : vector<1x8x8xf32> to vector<8x8xf32>
    %22 = arith.addf %19, %21 : vector<8x8xf32>
    %c1_18 = arith.constant 1 : index
    %c0_19 = arith.constant 0 : index
    %c0_20 = arith.constant 0 : index
    %23 = vector.load %arg5[%c1_18, %c0_19, %c0_20] : memref<8x8x8xf32, #tpu.memory_space<vmem>>, vector<1x8x8xf32>
    %24 = vector.shape_cast %23 : vector<1x8x8xf32> to vector<8x8xf32>
    %25 = vector.shape_cast %22 : vector<8x8xf32> to vector<1x8x8xf32>
    tpu.vector_store %arg5[%c1_18, %c0_19, %c0_20], %25 {strides = array<i32>} : memref<8x8x8xf32, #tpu.memory_space<vmem>>, vector<1x8x8xf32>,
    %c2 = arith.constant 2 : index
    %c0_21 = arith.constant 0 : index
    %c0_22 = arith.constant 0 : index
    %26 = vector.load %arg1[%c2, %c0_21, %c0_22] : memref<8x4x8xf32, #tpu.memory_space<vmem>>, vector<1x4x8xf32>
    %27 = vector.shape_cast %26 : vector<1x4x8xf32> to vector<4x8xf32>
    %28 = arith.truncf %27 : vector<4x8xf32> to vector<4x8xbf16>
    %cst_23 = arith.constant dense<0.000000e+00> : vector<8x8xf32>
    %29 = tpu.matmul %0, %28, %cst_23 {dimension_numbers = #tpu.dot_dimension_numbers<[1], [0], [0], [1], [0, 0, 1, 1], [], []>} : vector<8x4xbf16>, vector<4x8xbf16>, vector<8x8xf32> -> vector<8x8xf32>
    %30 = vector.broadcast %1 : vector<8x1xf32> to vector<8x8xf32>
    %31 = arith.addf %29, %30 : vector<8x8xf32>
    %c2_24 = arith.constant 2 : index
    %c0_25 = arith.constant 0 : index
    %c0_26 = arith.constant 0 : index
    %32 = vector.load %arg4[%c2_24, %c0_25, %c0_26] : memref<8x8x8xf32, #tpu.memory_space<vmem>>, vector<1x8x8xf32>
    %33 = vector.shape_cast %32 : vector<1x8x8xf32> to vector<8x8xf32>
    %34 = arith.addf %31, %33 : vector<8x8xf32>
    %c2_27 = arith.constant 2 : index
    %c0_28 = arith.constant 0 : index
    %c0_29 = arith.constant 0 : index
    %35 = vector.load %arg5[%c2_27, %c0_28, %c0_29] : memref<8x8x8xf32, #tpu.memory_space<vmem>>, vector<1x8x8xf32>
    %36 = vector.shape_cast %35 : vector<1x8x8xf32> to vector<8x8xf32>
    %37 = vector.shape_cast %34 : vector<8x8xf32> to vector<1x8x8xf32>
    tpu.vector_store %arg5[%c2_27, %c0_28, %c0_29], %37 {strides = array<i32>} : memref<8x8x8xf32, #tpu.memory_space<vmem>>, vector<1x8x8xf32>,
    %c3 = arith.constant 3 : index
    %c0_30 = arith.constant 0 : index
    %c0_31 = arith.constant 0 : index
    %38 = vector.load %arg1[%c3, %c0_30, %c0_31] : memref<8x4x8xf32, #tpu.memory_space<vmem>>, vector<1x4x8xf32>
    %39 = vector.shape_cast %38 : vector<1x4x8xf32> to vector<4x8xf32>
    %40 = arith.truncf %39 : vector<4x8xf32> to vector<4x8xbf16>
    %cst_32 = arith.constant dense<0.000000e+00> : vector<8x8xf32>
    %41 = tpu.matmul %0, %40, %cst_32 {dimension_numbers = #tpu.dot_dimension_numbers<[1], [0], [0], [1], [0, 0, 1, 1], [], []>} : vector<8x4xbf16>, vector<4x8xbf16>, vector<8x8xf32> -> vector<8x8xf32>
    %42 = vector.broadcast %1 : vector<8x1xf32> to vector<8x8xf32>
    %43 = arith.addf %41, %42 : vector<8x8xf32>
    %c3_33 = arith.constant 3 : index
    %c0_34 = arith.constant 0 : index
    %c0_35 = arith.constant 0 : index
    %44 = vector.load %arg4[%c3_33, %c0_34, %c0_35] : memref<8x8x8xf32, #tpu.memory_space<vmem>>, vector<1x8x8xf32>
    %45 = vector.shape_cast %44 : vector<1x8x8xf32> to vector<8x8xf32>
    %46 = arith.addf %43, %45 : vector<8x8xf32>
    %c3_36 = arith.constant 3 : index
    %c0_37 = arith.constant 0 : index
    %c0_38 = arith.constant 0 : index
    %47 = vector.load %arg5[%c3_36, %c0_37, %c0_38] : memref<8x8x8xf32, #tpu.memory_space<vmem>>, vector<1x8x8xf32>
    %48 = vector.shape_cast %47 : vector<1x8x8xf32> to vector<8x8xf32>
    %49 = vector.shape_cast %46 : vector<8x8xf32> to vector<1x8x8xf32>
    tpu.vector_store %arg5[%c3_36, %c0_37, %c0_38], %49 {strides = array<i32>} : memref<8x8x8xf32, #tpu.memory_space<vmem>>, vector<1x8x8xf32>,
    %c4 = arith.constant 4 : index
    %c0_39 = arith.constant 0 : index
    %c0_40 = arith.constant 0 : index
    %50 = vector.load %arg1[%c4, %c0_39, %c0_40] : memref<8x4x8xf32, #tpu.memory_space<vmem>>, vector<1x4x8xf32>
    %51 = vector.shape_cast %50 : vector<1x4x8xf32> to vector<4x8xf32>
    %52 = arith.truncf %51 : vector<4x8xf32> to vector<4x8xbf16>
    %cst_41 = arith.constant dense<0.000000e+00> : vector<8x8xf32>
    %53 = tpu.matmul %0, %52, %cst_41 {dimension_numbers = #tpu.dot_dimension_numbers<[1], [0], [0], [1], [0, 0, 1, 1], [], []>} : vector<8x4xbf16>, vector<4x8xbf16>, vector<8x8xf32> -> vector<8x8xf32>
    %54 = vector.broadcast %1 : vector<8x1xf32> to vector<8x8xf32>
    %55 = arith.addf %53, %54 : vector<8x8xf32>
    %c4_42 = arith.constant 4 : index
    %c0_43 = arith.constant 0 : index
    %c0_44 = arith.constant 0 : index
    %56 = vector.load %arg4[%c4_42, %c0_43, %c0_44] : memref<8x8x8xf32, #tpu.memory_space<vmem>>, vector<1x8x8xf32>
    %57 = vector.shape_cast %56 : vector<1x8x8xf32> to vector<8x8xf32>
    %58 = arith.addf %55, %57 : vector<8x8xf32>
    %c4_45 = arith.constant 4 : index
    %c0_46 = arith.constant 0 : index
    %c0_47 = arith.constant 0 : index
    %59 = vector.load %arg5[%c4_45, %c0_46, %c0_47] : memref<8x8x8xf32, #tpu.memory_space<vmem>>, vector<1x8x8xf32>
    %60 = vector.shape_cast %59 : vector<1x8x8xf32> to vector<8x8xf32>
    %61 = vector.shape_cast %58 : vector<8x8xf32> to vector<1x8x8xf32>
    tpu.vector_store %arg5[%c4_45, %c0_46, %c0_47], %61 {strides = array<i32>} : memref<8x8x8xf32, #tpu.memory_space<vmem>>, vector<1x8x8xf32>,
    %c5 = arith.constant 5 : index
    %c0_48 = arith.constant 0 : index
    %c0_49 = arith.constant 0 : index
    %62 = vector.load %arg1[%c5, %c0_48, %c0_49] : memref<8x4x8xf32, #tpu.memory_space<vmem>>, vector<1x4x8xf32>
    %63 = vector.shape_cast %62 : vector<1x4x8xf32> to vector<4x8xf32>
    %64 = arith.truncf %63 : vector<4x8xf32> to vector<4x8xbf16>
    %cst_50 = arith.constant dense<0.000000e+00> : vector<8x8xf32>
    %65 = tpu.matmul %0, %64, %cst_50 {dimension_numbers = #tpu.dot_dimension_numbers<[1], [0], [0], [1], [0, 0, 1, 1], [], []>} : vector<8x4xbf16>, vector<4x8xbf16>, vector<8x8xf32> -> vector<8x8xf32>
    %66 = vector.broadcast %1 : vector<8x1xf32> to vector<8x8xf32>
    %67 = arith.addf %65, %66 : vector<8x8xf32>
    %c5_51 = arith.constant 5 : index
    %c0_52 = arith.constant 0 : index
    %c0_53 = arith.constant 0 : index
    %68 = vector.load %arg4[%c5_51, %c0_52, %c0_53] : memref<8x8x8xf32, #tpu.memory_space<vmem>>, vector<1x8x8xf32>
    %69 = vector.shape_cast %68 : vector<1x8x8xf32> to vector<8x8xf32>
    %70 = arith.addf %67, %69 : vector<8x8xf32>
    %c5_54 = arith.constant 5 : index
    %c0_55 = arith.constant 0 : index
    %c0_56 = arith.constant 0 : index
    %71 = vector.load %arg5[%c5_54, %c0_55, %c0_56] : memref<8x8x8xf32, #tpu.memory_space<vmem>>, vector<1x8x8xf32>
    %72 = vector.shape_cast %71 : vector<1x8x8xf32> to vector<8x8xf32>
    %73 = vector.shape_cast %70 : vector<8x8xf32> to vector<1x8x8xf32>
    tpu.vector_store %arg5[%c5_54, %c0_55, %c0_56], %73 {strides = array<i32>} : memref<8x8x8xf32, #tpu.memory_space<vmem>>, vector<1x8x8xf32>,
    %c6 = arith.constant 6 : index
    %c0_57 = arith.constant 0 : index
    %c0_58 = arith.constant 0 : index
    %74 = vector.load %arg1[%c6, %c0_57, %c0_58] : memref<8x4x8xf32, #tpu.memory_space<vmem>>, vector<1x4x8xf32>
    %75 = vector.shape_cast %74 : vector<1x4x8xf32> to vector<4x8xf32>
    %76 = arith.truncf %75 : vector<4x8xf32> to vector<4x8xbf16>
    %cst_59 = arith.constant dense<0.000000e+00> : vector<8x8xf32>
    %77 = tpu.matmul %0, %76, %cst_59 {dimension_numbers = #tpu.dot_dimension_numbers<[1], [0], [0], [1], [0, 0, 1, 1], [], []>} : vector<8x4xbf16>, vector<4x8xbf16>, vector<8x8xf32> -> vector<8x8xf32>
    %78 = vector.broadcast %1 : vector<8x1xf32> to vector<8x8xf32>
    %79 = arith.addf %77, %78 : vector<8x8xf32>
    %c6_60 = arith.constant 6 : index
    %c0_61 = arith.constant 0 : index
    %c0_62 = arith.constant 0 : index
    %80 = vector.load %arg4[%c6_60, %c0_61, %c0_62] : memref<8x8x8xf32, #tpu.memory_space<vmem>>, vector<1x8x8xf32>
    %81 = vector.shape_cast %80 : vector<1x8x8xf32> to vector<8x8xf32>
    %82 = arith.addf %79, %81 : vector<8x8xf32>
    %c6_63 = arith.constant 6 : index
    %c0_64 = arith.constant 0 : index
    %c0_65 = arith.constant 0 : index
    %83 = vector.load %arg5[%c6_63, %c0_64, %c0_65] : memref<8x8x8xf32, #tpu.memory_space<vmem>>, vector<1x8x8xf32>
    %84 = vector.shape_cast %83 : vector<1x8x8xf32> to vector<8x8xf32>
    %85 = vector.shape_cast %82 : vector<8x8xf32> to vector<1x8x8xf32>
    tpu.vector_store %arg5[%c6_63, %c0_64, %c0_65], %85 {strides = array<i32>} : memref<8x8x8xf32, #tpu.memory_space<vmem>>, vector<1x8x8xf32>,
    %c7 = arith.constant 7 : index
    %c0_66 = arith.constant 0 : index
    %c0_67 = arith.constant 0 : index
    %86 = vector.load %arg1[%c7, %c0_66, %c0_67] : memref<8x4x8xf32, #tpu.memory_space<vmem>>, vector<1x4x8xf32>
    %87 = vector.shape_cast %86 : vector<1x4x8xf32> to vector<4x8xf32>
    %88 = arith.truncf %87 : vector<4x8xf32> to vector<4x8xbf16>
    %cst_68 = arith.constant dense<0.000000e+00> : vector<8x8xf32>
    %89 = tpu.matmul %0, %88, %cst_68 {dimension_numbers = #tpu.dot_dimension_numbers<[1], [0], [0], [1], [0, 0, 1, 1], [], []>} : vector<8x4xbf16>, vector<4x8xbf16>, vector<8x8xf32> -> vector<8x8xf32>
    %90 = vector.broadcast %1 : vector<8x1xf32> to vector<8x8xf32>
    %91 = arith.addf %89, %90 : vector<8x8xf32>
    %c7_69 = arith.constant 7 : index
    %c0_70 = arith.constant 0 : index
    %c0_71 = arith.constant 0 : index
    %92 = vector.load %arg4[%c7_69, %c0_70, %c0_71] : memref<8x8x8xf32, #tpu.memory_space<vmem>>, vector<1x8x8xf32>
    %93 = vector.shape_cast %92 : vector<1x8x8xf32> to vector<8x8xf32>
    %94 = arith.addf %91, %93 : vector<8x8xf32>
    %c7_72 = arith.constant 7 : index
    %c0_73 = arith.constant 0 : index
    %c0_74 = arith.constant 0 : index
    %95 = vector.load %arg5[%c7_72, %c0_73, %c0_74] : memref<8x8x8xf32, #tpu.memory_space<vmem>>, vector<1x8x8xf32>
    %96 = vector.shape_cast %95 : vector<1x8x8xf32> to vector<8x8xf32>
    %97 = vector.shape_cast %94 : vector<8x8xf32> to vector<1x8x8xf32>
    tpu.vector_store %arg5[%c7_72, %c0_73, %c0_74], %97 {strides = array<i32>} : memref<8x8x8xf32, #tpu.memory_space<vmem>>, vector<1x8x8xf32>,
    return
  }
  func.func @transform_0(%arg0: i32) -> (i32, i32, i32) {
    %c0_i32 = arith.constant 0 : i32
    %c0_i32_0 = arith.constant 0 : i32
    %c0_i32_1 = arith.constant 0 : i32
    return %arg0, %c0_i32, %c0_i32_0 : i32, i32, i32
  }
  func.func @transform_1(%arg0: i32) -> (i32, i32) {
    %c0_i32 = arith.constant 0 : i32
    %c0_i32_0 = arith.constant 0 : i32
    %c0_i32_1 = arith.constant 0 : i32
    return %c0_i32, %c0_i32_0 : i32, i32
  }
  func.func @transform_2(%arg0: i32) -> (i32, i32) {
    %c0_i32 = arith.constant 0 : i32
    %c0_i32_0 = arith.constant 0 : i32
    %c0_i32_1 = arith.constant 0 : i32
    return %c0_i32, %c0_i32_0 : i32, i32
  }
  func.func @transform_3(%arg0: i32) -> (i32, i32, i32) {
    %c0_i32 = arith.constant 0 : i32
    %c0_i32_0 = arith.constant 0 : i32
    %c0_i32_1 = arith.constant 0 : i32
    return %arg0, %c0_i32, %c0_i32_0 : i32, i32, i32
  }
  func.func @transform_4(%arg0: i32) -> (i32, i32, i32) {
    %c0_i32 = arith.constant 0 : i32
    %c0_i32_0 = arith.constant 0 : i32
    %c0_i32_1 = arith.constant 0 : i32
    return %arg0, %c0_i32, %c0_i32_0 : i32, i32, i32
  }
}

module attributes {stable_mosaic.version = 11 : i64} {
  func.func @_mm_bias_prelu_in_kernel(%arg0: i32, %arg1: memref<64x8xbf16, #tpu.memory_space<vmem>>, %arg2: memref<8x8xbf16, #tpu.memory_space<vmem>>, %arg3: memref<1x8xf32, #tpu.memory_space<vmem>>, %arg4: memref<1x1xf32, #tpu.memory_space<smem>>, %arg5: memref<64x8xf32, #tpu.memory_space<vmem>>) attributes {dimension_semantics = [#tpu.dimension_semantics<parallel>], iteration_bounds = array<i64: 1>, scalar_prefetch = 0 : i64, scratch_operands = 0 : i64, tpu.core_type = #tpu.core_type<tc>, window_params = [{transform_indices = @transform_0, window_bounds = array<i64: 64, 8>}, {pipeline_mode = #tpu.pipeline_mode<synchronous>, transform_indices = @transform_1, window_bounds = array<i64: 8, 8>}, {pipeline_mode = #tpu.pipeline_mode<synchronous>, transform_indices = @transform_2, window_bounds = array<i64: 1, 8>}, {transform_indices = @transform_3, window_bounds = array<i64: 1, 1>}, {transform_indices = @transform_4, window_bounds = array<i64: 64, 8>}]} {
    %c0 = arith.constant 0 : index
    %c0_0 = arith.constant 0 : index
    %0 = memref.load %arg4[%c0, %c0_0] : memref<1x1xf32, #tpu.memory_space<smem>>
    %c0_1 = arith.constant 0 : index
    %c0_2 = arith.constant 0 : index
    %1 = vector.load %arg1[%c0_1, %c0_2] : memref<64x8xbf16, #tpu.memory_space<vmem>>, vector<64x8xbf16>
    %2 = arith.extf %1 : vector<64x8xbf16> to vector<64x8xf32>
    %cst = arith.constant 0.000000e+00 : f32
    %3 = vector.broadcast %cst : f32 to vector<64x8xf32>
    %4 = arith.cmpf oge, %2, %3 : vector<64x8xf32>
    %5 = vector.broadcast %0 : f32 to vector<64x8xf32>
    %6 = arith.mulf %5, %2 : vector<64x8xf32>
    %7 = arith.select %4, %2, %6 : vector<64x8xi1>, vector<64x8xf32>
    %8 = arith.truncf %7 : vector<64x8xf32> to vector<64x8xbf16>
    %c0_3 = arith.constant 0 : index
    %c0_4 = arith.constant 0 : index
    %9 = vector.load %arg2[%c0_3, %c0_4] : memref<8x8xbf16, #tpu.memory_space<vmem>>, vector<8x8xbf16>
    %cst_5 = arith.constant dense<0.000000e+00> : vector<64x8xf32>
    %10 = tpu.matmul %8, %9, %cst_5 {dimension_numbers = #tpu.dot_dimension_numbers<[1], [0], [0], [1], [0, 0, 1, 1], [], []>} : vector<64x8xbf16>, vector<8x8xbf16>, vector<64x8xf32> -> vector<64x8xf32>
    %c0_6 = arith.constant 0 : index
    %c0_7 = arith.constant 0 : index
    %11 = vector.load %arg3[%c0_6, %c0_7] : memref<1x8xf32, #tpu.memory_space<vmem>>, vector<1x8xf32>
    %12 = vector.broadcast %11 : vector<1x8xf32> to vector<64x8xf32>
    %13 = arith.addf %10, %12 : vector<64x8xf32>
    %c0_8 = arith.constant 0 : index
    %c0_9 = arith.constant 0 : index
    %14 = vector.load %arg5[%c0_8, %c0_9] : memref<64x8xf32, #tpu.memory_space<vmem>>, vector<64x8xf32>
    tpu.vector_store %arg5[%c0_8, %c0_9], %13 {strides = array<i32>} : memref<64x8xf32, #tpu.memory_space<vmem>>, vector<64x8xf32>,
    return
  }
  func.func @transform_0(%arg0: i32) -> (i32, i32) {
    %c0_i32 = arith.constant 0 : i32
    %c0_i32_0 = arith.constant 0 : i32
    return %arg0, %c0_i32 : i32, i32
  }
  func.func @transform_1(%arg0: i32) -> (i32, i32) {
    %c0_i32 = arith.constant 0 : i32
    %c0_i32_0 = arith.constant 0 : i32
    %c0_i32_1 = arith.constant 0 : i32
    return %c0_i32, %c0_i32_0 : i32, i32
  }
  func.func @transform_2(%arg0: i32) -> (i32, i32) {
    %c0_i32 = arith.constant 0 : i32
    %c0_i32_0 = arith.constant 0 : i32
    %c0_i32_1 = arith.constant 0 : i32
    return %c0_i32, %c0_i32_0 : i32, i32
  }
  func.func @transform_3(%arg0: i32) -> (i32, i32) {
    %c0_i32 = arith.constant 0 : i32
    %c0_i32_0 = arith.constant 0 : i32
    %c0_i32_1 = arith.constant 0 : i32
    return %c0_i32, %c0_i32_0 : i32, i32
  }
  func.func @transform_4(%arg0: i32) -> (i32, i32) {
    %c0_i32 = arith.constant 0 : i32
    %c0_i32_0 = arith.constant 0 : i32
    return %arg0, %c0_i32 : i32, i32
  }
}

module attributes {stable_mosaic.version = 11 : i64} {
  func.func @_map_gtu_kernel(%arg0: i32, %arg1: memref<36x8xbf16, #tpu.memory_space<vmem>>, %arg2: memref<2x8x8xf32, #tpu.memory_space<vmem>>, %arg3: memref<2x8xf32, #tpu.memory_space<vmem>>, %arg4: memref<8x8xbf16, #tpu.memory_space<vmem>>, %arg5: memref<1x8xf32, #tpu.memory_space<vmem>>, %arg6: memref<8x8xbf16, #tpu.memory_space<vmem>>, %arg7: memref<1x8xf32, #tpu.memory_space<vmem>>, %arg8: memref<1x1xf32, #tpu.memory_space<smem>>, %arg9: memref<36x2x8xf32, #tpu.memory_space<vmem>>) attributes {dimension_semantics = [#tpu.dimension_semantics<parallel>], iteration_bounds = array<i64: 1>, scalar_prefetch = 0 : i64, scratch_operands = 0 : i64, tpu.core_type = #tpu.core_type<tc>, window_params = [{transform_indices = @transform_0, window_bounds = array<i64: 36, 8>}, {pipeline_mode = #tpu.pipeline_mode<synchronous>, transform_indices = @transform_1, window_bounds = array<i64: 2, 8, 8>}, {pipeline_mode = #tpu.pipeline_mode<synchronous>, transform_indices = @transform_2, window_bounds = array<i64: 2, 8>}, {pipeline_mode = #tpu.pipeline_mode<synchronous>, transform_indices = @transform_3, window_bounds = array<i64: 8, 8>}, {pipeline_mode = #tpu.pipeline_mode<synchronous>, transform_indices = @transform_4, window_bounds = array<i64: 1, 8>}, {pipeline_mode = #tpu.pipeline_mode<synchronous>, transform_indices = @transform_5, window_bounds = array<i64: 8, 8>}, {pipeline_mode = #tpu.pipeline_mode<synchronous>, transform_indices = @transform_6, window_bounds = array<i64: 1, 8>}, {transform_indices = @transform_7, window_bounds = array<i64: 1, 1>}, {transform_indices = @transform_8, window_bounds = array<i64: 36, 2, 8>}]} {
    %c0 = arith.constant 0 : index
    %c0_0 = arith.constant 0 : index
    %0 = memref.load %arg8[%c0, %c0_0] : memref<1x1xf32, #tpu.memory_space<smem>>
    %c0_1 = arith.constant 0 : index
    %c0_2 = arith.constant 0 : index
    %1 = vector.load %arg1[%c0_1, %c0_2] : memref<36x8xbf16, #tpu.memory_space<vmem>>, vector<36x8xbf16>
    %2 = arith.extf %1 : vector<36x8xbf16> to vector<36x8xf32>
    %cst = arith.constant 0.000000e+00 : f32
    %3 = vector.broadcast %cst : f32 to vector<36x8xf32>
    %4 = arith.cmpf oge, %2, %3 : vector<36x8xf32>
    %5 = vector.broadcast %0 : f32 to vector<36x8xf32>
    %6 = arith.mulf %5, %2 : vector<36x8xf32>
    %7 = arith.select %4, %2, %6 : vector<36x8xi1>, vector<36x8xf32>
    %8 = arith.truncf %7 : vector<36x8xf32> to vector<36x8xbf16>
    %c0_3 = arith.constant 0 : index
    %c0_4 = arith.constant 0 : index
    %c0_5 = arith.constant 0 : index
    %9 = vector.load %arg2[%c0_3, %c0_4, %c0_5] : memref<2x8x8xf32, #tpu.memory_space<vmem>>, vector<1x8x8xf32>
    %10 = vector.shape_cast %9 : vector<1x8x8xf32> to vector<8x8xf32>
    %11 = arith.truncf %10 : vector<8x8xf32> to vector<8x8xbf16>
    %cst_6 = arith.constant dense<0.000000e+00> : vector<36x8xf32>
    %12 = tpu.matmul %8, %11, %cst_6 {dimension_numbers = #tpu.dot_dimension_numbers<[1], [0], [0], [1], [0, 0, 1, 1], [], []>} : vector<36x8xbf16>, vector<8x8xbf16>, vector<36x8xf32> -> vector<36x8xf32>
    %c0_7 = arith.constant 0 : index
    %c0_8 = arith.constant 0 : index
    %13 = vector.load %arg3[%c0_7, %c0_8] : memref<2x8xf32, #tpu.memory_space<vmem>>, vector<1x8xf32>
    %14 = vector.broadcast %13 : vector<1x8xf32> to vector<36x8xf32>
    %15 = arith.addf %12, %14 : vector<36x8xf32>
    %16 = arith.truncf %15 : vector<36x8xf32> to vector<36x8xbf16>
    %c0_9 = arith.constant 0 : index
    %c0_10 = arith.constant 0 : index
    %17 = vector.load %arg4[%c0_9, %c0_10] : memref<8x8xbf16, #tpu.memory_space<vmem>>, vector<8x8xbf16>
    %cst_11 = arith.constant dense<0.000000e+00> : vector<36x8xf32>
    %18 = tpu.matmul %16, %17, %cst_11 {dimension_numbers = #tpu.dot_dimension_numbers<[1], [0], [0], [1], [0, 0, 1, 1], [], []>} : vector<36x8xbf16>, vector<8x8xbf16>, vector<36x8xf32> -> vector<36x8xf32>
    %c0_12 = arith.constant 0 : index
    %c0_13 = arith.constant 0 : index
    %19 = vector.load %arg5[%c0_12, %c0_13] : memref<1x8xf32, #tpu.memory_space<vmem>>, vector<1x8xf32>
    %20 = vector.broadcast %19 : vector<1x8xf32> to vector<36x8xf32>
    %21 = arith.addf %18, %20 : vector<36x8xf32>
    %c0_14 = arith.constant 0 : index
    %c0_15 = arith.constant 0 : index
    %22 = vector.load %arg6[%c0_14, %c0_15] : memref<8x8xbf16, #tpu.memory_space<vmem>>, vector<8x8xbf16>
    %cst_16 = arith.constant dense<0.000000e+00> : vector<36x8xf32>
    %23 = tpu.matmul %16, %22, %cst_16 {dimension_numbers = #tpu.dot_dimension_numbers<[1], [0], [0], [1], [0, 0, 1, 1], [], []>} : vector<36x8xbf16>, vector<8x8xbf16>, vector<36x8xf32> -> vector<36x8xf32>
    %c0_17 = arith.constant 0 : index
    %c0_18 = arith.constant 0 : index
    %24 = vector.load %arg7[%c0_17, %c0_18] : memref<1x8xf32, #tpu.memory_space<vmem>>, vector<1x8xf32>
    %25 = vector.broadcast %24 : vector<1x8xf32> to vector<36x8xf32>
    %26 = arith.addf %23, %25 : vector<36x8xf32>
    %cst_19 = arith.constant 0.000000e+00 : f32
    %27 = vector.broadcast %cst_19 : f32 to vector<36x8xf32>
    %28 = arith.subf %27, %26 : vector<36x8xf32>
    %29 = math.exp %28 : vector<36x8xf32>
    %cst_20 = arith.constant 1.000000e+00 : f32
    %30 = vector.broadcast %cst_20 : f32 to vector<36x8xf32>
    %31 = arith.addf %30, %29 : vector<36x8xf32>
    %32 = tpu.reciprocal %31 {approx = true} : vector<36x8xf32> -> vector<36x8xf32>
    %33 = math.tanh %21 : vector<36x8xf32>
    %34 = arith.mulf %33, %32 : vector<36x8xf32>
    %cst_21 = arith.constant 0.000000e+00 : f32
    %35 = vector.broadcast %cst_21 : f32 to vector<36x8xf32>
    %36 = arith.maximumf %34, %35 : vector<36x8xf32>
    %c0_22 = arith.constant 0 : index
    %c0_23 = arith.constant 0 : index
    %c0_24 = arith.constant 0 : index
    %37 = vector.load %arg9[%c0_22, %c0_23, %c0_24] : memref<36x2x8xf32, #tpu.memory_space<vmem>>, vector<36x1x8xf32>
    %38 = vector.shape_cast %37 : vector<36x1x8xf32> to vector<36x8xf32>
    %39 = vector.shape_cast %36 : vector<36x8xf32> to vector<36x1x8xf32>
    tpu.vector_store %arg9[%c0_22, %c0_23, %c0_24], %39 {strides = array<i32>} : memref<36x2x8xf32, #tpu.memory_space<vmem>>, vector<36x1x8xf32>,
    %c1 = arith.constant 1 : index
    %c0_25 = arith.constant 0 : index
    %c0_26 = arith.constant 0 : index
    %40 = vector.load %arg2[%c1, %c0_25, %c0_26] : memref<2x8x8xf32, #tpu.memory_space<vmem>>, vector<1x8x8xf32>
    %41 = vector.shape_cast %40 : vector<1x8x8xf32> to vector<8x8xf32>
    %42 = arith.truncf %41 : vector<8x8xf32> to vector<8x8xbf16>
    %cst_27 = arith.constant dense<0.000000e+00> : vector<36x8xf32>
    %43 = tpu.matmul %8, %42, %cst_27 {dimension_numbers = #tpu.dot_dimension_numbers<[1], [0], [0], [1], [0, 0, 1, 1], [], []>} : vector<36x8xbf16>, vector<8x8xbf16>, vector<36x8xf32> -> vector<36x8xf32>
    %c1_28 = arith.constant 1 : index
    %c0_29 = arith.constant 0 : index
    %44 = vector.load %arg3[%c1_28, %c0_29] : memref<2x8xf32, #tpu.memory_space<vmem>>, vector<1x8xf32>
    %45 = vector.broadcast %44 : vector<1x8xf32> to vector<36x8xf32>
    %46 = arith.addf %43, %45 : vector<36x8xf32>
    %47 = arith.truncf %46 : vector<36x8xf32> to vector<36x8xbf16>
    %c0_30 = arith.constant 0 : index
    %c0_31 = arith.constant 0 : index
    %48 = vector.load %arg4[%c0_30, %c0_31] : memref<8x8xbf16, #tpu.memory_space<vmem>>, vector<8x8xbf16>
    %cst_32 = arith.constant dense<0.000000e+00> : vector<36x8xf32>
    %49 = tpu.matmul %47, %48, %cst_32 {dimension_numbers = #tpu.dot_dimension_numbers<[1], [0], [0], [1], [0, 0, 1, 1], [], []>} : vector<36x8xbf16>, vector<8x8xbf16>, vector<36x8xf32> -> vector<36x8xf32>
    %c0_33 = arith.constant 0 : index
    %c0_34 = arith.constant 0 : index
    %50 = vector.load %arg5[%c0_33, %c0_34] : memref<1x8xf32, #tpu.memory_space<vmem>>, vector<1x8xf32>
    %51 = vector.broadcast %50 : vector<1x8xf32> to vector<36x8xf32>
    %52 = arith.addf %49, %51 : vector<36x8xf32>
    %c0_35 = arith.constant 0 : index
    %c0_36 = arith.constant 0 : index
    %53 = vector.load %arg6[%c0_35, %c0_36] : memref<8x8xbf16, #tpu.memory_space<vmem>>, vector<8x8xbf16>
    %cst_37 = arith.constant dense<0.000000e+00> : vector<36x8xf32>
    %54 = tpu.matmul %47, %53, %cst_37 {dimension_numbers = #tpu.dot_dimension_numbers<[1], [0], [0], [1], [0, 0, 1, 1], [], []>} : vector<36x8xbf16>, vector<8x8xbf16>, vector<36x8xf32> -> vector<36x8xf32>
    %c0_38 = arith.constant 0 : index
    %c0_39 = arith.constant 0 : index
    %55 = vector.load %arg7[%c0_38, %c0_39] : memref<1x8xf32, #tpu.memory_space<vmem>>, vector<1x8xf32>
    %56 = vector.broadcast %55 : vector<1x8xf32> to vector<36x8xf32>
    %57 = arith.addf %54, %56 : vector<36x8xf32>
    %cst_40 = arith.constant 0.000000e+00 : f32
    %58 = vector.broadcast %cst_40 : f32 to vector<36x8xf32>
    %59 = arith.subf %58, %57 : vector<36x8xf32>
    %60 = math.exp %59 : vector<36x8xf32>
    %cst_41 = arith.constant 1.000000e+00 : f32
    %61 = vector.broadcast %cst_41 : f32 to vector<36x8xf32>
    %62 = arith.addf %61, %60 : vector<36x8xf32>
    %63 = tpu.reciprocal %62 {approx = true} : vector<36x8xf32> -> vector<36x8xf32>
    %64 = math.tanh %52 : vector<36x8xf32>
    %65 = arith.mulf %64, %63 : vector<36x8xf32>
    %cst_42 = arith.constant 0.000000e+00 : f32
    %66 = vector.broadcast %cst_42 : f32 to vector<36x8xf32>
    %67 = arith.maximumf %65, %66 : vector<36x8xf32>
    %c0_43 = arith.constant 0 : index
    %c1_44 = arith.constant 1 : index
    %c0_45 = arith.constant 0 : index
    %68 = vector.load %arg9[%c0_43, %c1_44, %c0_45] : memref<36x2x8xf32, #tpu.memory_space<vmem>>, vector<36x1x8xf32>
    %69 = vector.shape_cast %68 : vector<36x1x8xf32> to vector<36x8xf32>
    %70 = vector.shape_cast %67 : vector<36x8xf32> to vector<36x1x8xf32>
    tpu.vector_store %arg9[%c0_43, %c1_44, %c0_45], %70 {strides = array<i32>} : memref<36x2x8xf32, #tpu.memory_space<vmem>>, vector<36x1x8xf32>,
    return
  }
  func.func @transform_0(%arg0: i32) -> (i32, i32) {
    %c0_i32 = arith.constant 0 : i32
    %c0_i32_0 = arith.constant 0 : i32
    return %arg0, %c0_i32 : i32, i32
  }
  func.func @transform_1(%arg0: i32) -> (i32, i32, i32) {
    %c0_i32 = arith.constant 0 : i32
    %c0_i32_0 = arith.constant 0 : i32
    %c0_i32_1 = arith.constant 0 : i32
    %c0_i32_2 = arith.constant 0 : i32
    return %c0_i32, %c0_i32_0, %c0_i32_1 : i32, i32, i32
  }
  func.func @transform_2(%arg0: i32) -> (i32, i32) {
    %c0_i32 = arith.constant 0 : i32
    %c0_i32_0 = arith.constant 0 : i32
    %c0_i32_1 = arith.constant 0 : i32
    return %c0_i32, %c0_i32_0 : i32, i32
  }
  func.func @transform_3(%arg0: i32) -> (i32, i32) {
    %c0_i32 = arith.constant 0 : i32
    %c0_i32_0 = arith.constant 0 : i32
    %c0_i32_1 = arith.constant 0 : i32
    return %c0_i32, %c0_i32_0 : i32, i32
  }
  func.func @transform_4(%arg0: i32) -> (i32, i32) {
    %c0_i32 = arith.constant 0 : i32
    %c0_i32_0 = arith.constant 0 : i32
    %c0_i32_1 = arith.constant 0 : i32
    return %c0_i32, %c0_i32_0 : i32, i32
  }
  func.func @transform_5(%arg0: i32) -> (i32, i32) {
    %c0_i32 = arith.constant 0 : i32
    %c0_i32_0 = arith.constant 0 : i32
    %c0_i32_1 = arith.constant 0 : i32
    return %c0_i32, %c0_i32_0 : i32, i32
  }
  func.func @transform_6(%arg0: i32) -> (i32, i32) {
    %c0_i32 = arith.constant 0 : i32
    %c0_i32_0 = arith.constant 0 : i32
    %c0_i32_1 = arith.constant 0 : i32
    return %c0_i32, %c0_i32_0 : i32, i32
  }
  func.func @transform_7(%arg0: i32) -> (i32, i32) {
    %c0_i32 = arith.constant 0 : i32
    %c0_i32_0 = arith.constant 0 : i32
    %c0_i32_1 = arith.constant 0 : i32
    return %c0_i32, %c0_i32_0 : i32, i32
  }
  func.func @transform_8(%arg0: i32) -> (i32, i32, i32) {
    %c0_i32 = arith.constant 0 : i32
    %c0_i32_0 = arith.constant 0 : i32
    %c0_i32_1 = arith.constant 0 : i32
    return %arg0, %c0_i32, %c0_i32_0 : i32, i32, i32
  }
}

</mosaic_0001>

<llo_original>
// kernel: custom-call.1
$region0: #{custom-call.1}
  %s0 = inlined_call_operand.vmem [shape: f32[2,8,8], index: 0, kind: output, shape index: {}]

// kernel: custom-call
$region0: #{custom-call}
  %s0 = inlined_call_operand.vmem [shape: bf16[2,8,8], index: 0, kind: output, shape index: {}]

// kernel: _lambda_.19
$region0: #{_lambda_.19}
  #allocation0 [shape = 'u32[]', space=smem, size = 0x4, offset = 0x4, fixed_abs, tag = 'smem constant byte address 0x4 - core index']
  #allocation1 [shape = 'u32[144,128]{1,0:T(1,128)}', space=vmem, size = 0x12000, scoped, tag = 'internal scratch']
  %s0 = inlined_call_operand.vmem [shape: bf16[64,16], index: 0, kind: input, shape index: {}]
  %s1 = inlined_call_operand.vmem [shape: bf16[16,8], index: 1, kind: input, shape index: {}]
  %s2 = inlined_call_operand.vmem [shape: f32[1,8], index: 2, kind: input, shape index: {}]
  %s3 = inlined_call_operand.vmem [shape: f32[64,8], index: 3, kind: output, shape index: {}]
  %s4 = sld [smem:[#allocation0]]
  $region22: #{_lambda_.19} parent=0
    _
  %s6 = ssub.s32 1, %s4
  %s7 = scalar_select 0, %s6, %s4
  // Predicated region
  $region2: #{_lambda_.19} parent=0 // pred_check
    _
  $region3: #{_lambda_.19} parent=0 // pred_check_branch
    %9 = sbr.rel (0) target = $region5
  $region4: #{_lambda_.19} parent=0 // pred_region
    _
  $region5: #{_lambda_.19} parent=0 // pred_fallthru
    _
  // Predicated region
  $region6: #{_lambda_.19} parent=0 // pred_check
    _
  $region7: #{_lambda_.19} parent=0 // pred_check_branch
    %11 = sbr.rel (0) target = $region9
  $region8: #{_lambda_.19} parent=0 // pred_region
    _
  $region9: #{_lambda_.19} parent=0 // pred_fallthru
    _
  // Predicated region
  $region10: #{_lambda_.19} parent=0 // pred_check
    _
  $region11: #{_lambda_.19} parent=0 // pred_check_branch
    %13 = sbr.rel (0) target = $region13
  $region12: #{_lambda_.19} parent=0 // pred_region
    _
  $region13: #{_lambda_.19} parent=0 // pred_fallthru
    _
  %v15 = vld [vmem:[%s0] sm:$0xf]
  %v16 = vld [vmem:[%s0 + $0x4] sm:$0xf]
  %v17 = vld [vmem:[%s0 + $0x8] sm:$0xf]
  %v18 = vld [vmem:[%s0 + $0xc] sm:$0xf]
  %v19 = vld [vmem:[%s0 + $0x10] sm:$0xf]
  %v20 = vld [vmem:[%s0 + $0x14] sm:$0xf]
  %v21 = vld [vmem:[%s0 + $0x18] sm:$0xf]
  %v22 = vld [vmem:[%s0 + $0x1c] sm:$0xf]
  %v23 = vld [vmem:[%s1] sm:$0xf]
  %v24 = vld [vmem:[%s1 + $0x4] sm:$0xf]
  %v25 = vld [vmem:[%s2] sm:$0x1]
  %v27 = vlaneseq
  %v28 = vshrl.u32 %v27, 7
  %v29 = vsub.s32 0, %v28
  %v30 = vrot.slane %v25, %v29
  %v40 = vunpack.c.l.b16 %v15
  %v41 = vunpack.c.l.b16 %v16
  %v42 = vunpack.c.l.b16 %v17
  %v43 = vunpack.c.l.b16 %v18
  %v44 = vunpack.c.l.b16 %v19
  %v45 = vunpack.c.l.b16 %v20
  %v46 = vunpack.c.l.b16 %v21
  %v47 = vunpack.c.l.b16 %v22
  %v48 = vpack.c.b16 %v41, %v40
  %v49 = vpack.c.b16 %v43, %v42
  %v50 = vpack.c.b16 %v45, %v44
  %v51 = vpack.c.b16 %v47, %v46
  %v54 = vunpack.c.l.b16 %v23
  %v55 = vunpack.c.l.b16 %v24
  %v56 = vpack.c.b16 %v55, %v54
  %vm58 = vcmask 130048
  %v60 = vsel %vm58, %v48, 0
  %v63 = vsel %vm58, %v49, 0
  %v66 = vsel %vm58, %v50, 0
  %v69 = vsel %vm58, %v51, 0
  %71 = vmatprep.subr.bf16.mxu0 0
  %72 = vmatpush1.bf16.msra.mxu0 %v56
  %73 = vmatprep.subr.bf16.mxu0 0
  %74 = vmatpush1.bf16.msra.mxu0 0
  %75 = vmatprep.subr.bf16.mxu0 0
  %76 = vmatpush1.bf16.msra.mxu0 0
  %77 = vmatprep.subr.bf16.mxu0 0
  %78 = vmatpush1.bf16.msra.mxu0 0
  %79 = vmatprep.subr.bf16.mxu0 0
  %80 = vmatpush1.bf16.msra.mxu0 0
  %81 = vmatprep.subr.bf16.mxu0 0
  %82 = vmatpush1.bf16.msra.mxu0 0
  %83 = vmatprep.subr.bf16.mxu0 0
  %84 = vmatpush1.bf16.msra.mxu0 0
  %85 = vmatprep.subr.bf16.mxu0 0
  %86 = vmatpush1.bf16.msra.mxu0 0
  %87 = vmatprep.subr.bf16.mxu0 0
  %88 = vmatpush1.bf16.msra.mxu0 0
  %89 = vmatprep.subr.bf16.mxu0 0
  %90 = vmatpush1.bf16.msra.mxu0 0
  %91 = vmatprep.subr.bf16.mxu0 0
  %92 = vmatpush1.bf16.msra.mxu0 0
  %93 = vmatprep.subr.bf16.mxu0 0
  %94 = vmatpush1.bf16.msra.mxu0 0
  %95 = vmatprep.subr.bf16.mxu0 0
  %96 = vmatpush1.bf16.msra.mxu0 0
  %97 = vmatprep.subr.bf16.mxu0 0
  %98 = vmatpush1.bf16.msra.mxu0 0
  %99 = vmatprep.subr.bf16.mxu0 0
  %100 = vmatpush1.bf16.msra.mxu0 0
  %101 = vmatprep.subr.bf16.mxu0 0
  %102 = vmatpush1.bf16.msra.mxu0 0
  %103 = vmatprep.mubr.bf16.mxu0 0
  %104 = vmatmul.mubr.bf16.gmra.mrb[0].mxu0 %v60
  %v105 = vpop.f32.mrb[0].mxu0
  %v106 = vadd.f32 %v30, %v105
  %v107 = vpop.f32.mrb[0].mxu0
  %v108 = vpop.f32.mrb[0].mxu0
  %v109 = vadd.f32 %v30, %v108
  %v110 = vpop.f32.mrb[0].mxu0
  %111 = vmatprep.mubr.bf16.mxu0 0
  %112 = vmatmul.mubr.bf16.gmra.mrb[0].mxu0 %v63
  %v113 = vpop.f32.mrb[0].mxu0
  %v114 = vadd.f32 %v30, %v113
  %v115 = vpop.f32.mrb[0].mxu0
  %v116 = vpop.f32.mrb[0].mxu0
  %v117 = vadd.f32 %v30, %v116
  %v118 = vpop.f32.mrb[0].mxu0
  %119 = vmatprep.mubr.bf16.mxu0 0
  %120 = vmatmul.mubr.bf16.gmra.mrb[0].mxu0 %v66
  %v121 = vpop.f32.mrb[0].mxu0
  %v122 = vadd.f32 %v30, %v121
  %v123 = vpop.f32.mrb[0].mxu0
  %v124 = vpop.f32.mrb[0].mxu0
  %v125 = vadd.f32 %v30, %v124
  %v126 = vpop.f32.mrb[0].mxu0
  %127 = vmatprep.mubr.bf16.mxu0 0
  %128 = vmatmul.mubr.bf16.gmra.mrb[0].mxu0 %v69
  %v129 = vpop.f32.mrb[0].mxu0
  %v130 = vadd.f32 %v30, %v129
  %v131 = vpop.f32.mrb[0].mxu0
  %v132 = vpop.f32.mrb[0].mxu0
  %v133 = vadd.f32 %v30, %v132
  %v134 = vpop.f32.mrb[0].mxu0
  %135 = vdwg.mxu0
  %vm136 = vcmask 64512
  %137 = vst.msk [vmem:[%s3] sm:$0xff] %vm136, %v106
  %138 = vst.msk [vmem:[%s3 + $0x8] sm:$0xff] %vm136, %v109
  %139 = vst.msk [vmem:[%s3 + $0x10] sm:$0xff] %vm136, %v114
  %140 = vst.msk [vmem:[%s3 + $0x18] sm:$0xff] %vm136, %v117
  %141 = vst.msk [vmem:[%s3 + $0x20] sm:$0xff] %vm136, %v122
  %142 = vst.msk [vmem:[%s3 + $0x28] sm:$0xff] %vm136, %v125
  %143 = vst.msk [vmem:[%s3 + $0x30] sm:$0xff] %vm136, %v130
  %144 = vst.msk [vmem:[%s3 + $0x38] sm:$0xff] %vm136, %v133
  // Predicated region
  $region14: #{_lambda_.19} parent=0 // pred_check
    _
  $region15: #{_lambda_.19} parent=0 // pred_check_branch
    %146 = sbr.rel (0) target = $region17
  $region16: #{_lambda_.19} parent=0 // pred_region
    _
  $region17: #{_lambda_.19} parent=0 // pred_fallthru
    _
  // Predicated region
  $region18: #{_lambda_.19} parent=0 // pred_check
    _
  $region19: #{_lambda_.19} parent=0 // pred_check_branch
    %148 = sbr.rel (0) target = $region21
  $region20: #{_lambda_.19} parent=0 // pred_region
    _
  $region21: #{_lambda_.19} parent=0 // pred_fallthru
    _

// kernel: _lambda_.18
$region0: #{_lambda_.18}
  #allocation0 [shape = 'u32[]', space=smem, size = 0x4, offset = 0x4, fixed_abs, tag = 'smem constant byte address 0x4 - core index']
  #allocation1 [shape = 'u32[144,128]{1,0:T(1,128)}', space=vmem, size = 0x12000, scoped, tag = 'internal scratch']
  %s0 = inlined_call_operand.vmem [shape: bf16[64,8], index: 0, kind: input, shape index: {}]
  %s1 = inlined_call_operand.vmem [shape: bf16[8,64], index: 1, kind: input, shape index: {}]
  %s2 = inlined_call_operand.vmem [shape: f32[1,64], index: 2, kind: input, shape index: {}]
  %s3 = inlined_call_operand.vmem [shape: f32[64,64], index: 3, kind: output, shape index: {}]
  %s4 = sld [smem:[#allocation0]]
  $region22: #{_lambda_.18} parent=0
    _
  %s6 = ssub.s32 1, %s4
  %s7 = scalar_select 0, %s6, %s4
  // Predicated region
  $region2: #{_lambda_.18} parent=0 // pred_check
    _
  $region3: #{_lambda_.18} parent=0 // pred_check_branch
    %9 = sbr.rel (0) target = $region5
  $region4: #{_lambda_.18} parent=0 // pred_region
    _
  $region5: #{_lambda_.18} parent=0 // pred_fallthru
    _
  // Predicated region
  $region6: #{_lambda_.18} parent=0 // pred_check
    _
  $region7: #{_lambda_.18} parent=0 // pred_check_branch
    %11 = sbr.rel (0) target = $region9
  $region8: #{_lambda_.18} parent=0 // pred_region
    _
  $region9: #{_lambda_.18} parent=0 // pred_fallthru
    _
  // Predicated region
  $region10: #{_lambda_.18} parent=0 // pred_check
    _
  $region11: #{_lambda_.18} parent=0 // pred_check_branch
    %13 = sbr.rel (0) target = $region13
  $region12: #{_lambda_.18} parent=0 // pred_region
    _
  $region13: #{_lambda_.18} parent=0 // pred_fallthru
    _
  %v15 = vld [vmem:[%s0] sm:$0xf]
  %v16 = vld [vmem:[%s0 + $0x4] sm:$0xf]
  %v17 = vld [vmem:[%s0 + $0x8] sm:$0xf]
  %v18 = vld [vmem:[%s0 + $0xc] sm:$0xf]
  %v19 = vld [vmem:[%s0 + $0x10] sm:$0xf]
  %v20 = vld [vmem:[%s0 + $0x14] sm:$0xf]
  %v21 = vld [vmem:[%s0 + $0x18] sm:$0xf]
  %v22 = vld [vmem:[%s0 + $0x1c] sm:$0xf]
  %v23 = vld [vmem:[%s1] sm:$0xf]
  %v24 = vld [vmem:[%s2] sm:$0x1]
  %v26 = vlaneseq
  %v27 = vshrl.u32 %v26, 7
  %v28 = vsub.s32 0, %v27
  %v29 = vrot.slane %v24, %v28
  %v39 = vunpack.c.l.b16 %v15
  %v40 = vunpack.c.l.b16 %v16
  %v41 = vunpack.c.l.b16 %v17
  %v42 = vunpack.c.l.b16 %v18
  %v43 = vunpack.c.l.b16 %v19
  %v44 = vunpack.c.l.b16 %v20
  %v45 = vunpack.c.l.b16 %v21
  %v46 = vunpack.c.l.b16 %v22
  %v47 = vpack.c.b16 %v40, %v39
  %v48 = vpack.c.b16 %v42, %v41
  %v49 = vpack.c.b16 %v44, %v43
  %v50 = vpack.c.b16 %v46, %v45
  %vm51 = vcmask 64512
  %v53 = vsel %vm51, %v47, 0
  %v56 = vsel %vm51, %v48, 0
  %v59 = vsel %vm51, %v49, 0
  %v62 = vsel %vm51, %v50, 0
  %vm64 = vcmask 1043456
  %v66 = vsel %vm64, %v23, 0
  %68 = vmatprep.subr.bf16.mxu0 0
  %69 = vmatpush1.bf16.msra.mxu0 %v66
  %70 = vmatprep.subr.bf16.mxu0 0
  %71 = vmatpush1.bf16.msra.mxu0 0
  %72 = vmatprep.subr.bf16.mxu0 0
  %73 = vmatpush1.bf16.msra.mxu0 0
  %74 = vmatprep.subr.bf16.mxu0 0
  %75 = vmatpush1.bf16.msra.mxu0 0
  %76 = vmatprep.subr.bf16.mxu0 0
  %77 = vmatpush1.bf16.msra.mxu0 0
  %78 = vmatprep.subr.bf16.mxu0 0
  %79 = vmatpush1.bf16.msra.mxu0 0
  %80 = vmatprep.subr.bf16.mxu0 0
  %81 = vmatpush1.bf16.msra.mxu0 0
  %82 = vmatprep.subr.bf16.mxu0 0
  %83 = vmatpush1.bf16.msra.mxu0 0
  %84 = vmatprep.subr.bf16.mxu0 0
  %85 = vmatpush1.bf16.msra.mxu0 0
  %86 = vmatprep.subr.bf16.mxu0 0
  %87 = vmatpush1.bf16.msra.mxu0 0
  %88 = vmatprep.subr.bf16.mxu0 0
  %89 = vmatpush1.bf16.msra.mxu0 0
  %90 = vmatprep.subr.bf16.mxu0 0
  %91 = vmatpush1.bf16.msra.mxu0 0
  %92 = vmatprep.subr.bf16.mxu0 0
  %93 = vmatpush1.bf16.msra.mxu0 0
  %94 = vmatprep.subr.bf16.mxu0 0
  %95 = vmatpush1.bf16.msra.mxu0 0
  %96 = vmatprep.subr.bf16.mxu0 0
  %97 = vmatpush1.bf16.msra.mxu0 0
  %98 = vmatprep.subr.bf16.mxu0 0
  %99 = vmatpush1.bf16.msra.mxu0 0
  %100 = vmatprep.mubr.bf16.mxu0 0
  %101 = vmatmul.mubr.bf16.gmra.mrb[0].mxu0 %v53
  %v102 = vpop.f32.mrb[0].mxu0
  %v103 = vadd.f32 %v29, %v102
  %v104 = vpop.f32.mrb[0].mxu0
  %v105 = vpop.f32.mrb[0].mxu0
  %v106 = vadd.f32 %v29, %v105
  %v107 = vpop.f32.mrb[0].mxu0
  %108 = vmatprep.mubr.bf16.mxu0 0
  %109 = vmatmul.mubr.bf16.gmra.mrb[0].mxu0 %v56
  %v110 = vpop.f32.mrb[0].mxu0
  %v111 = vadd.f32 %v29, %v110
  %v112 = vpop.f32.mrb[0].mxu0
  %v113 = vpop.f32.mrb[0].mxu0
  %v114 = vadd.f32 %v29, %v113
  %v115 = vpop.f32.mrb[0].mxu0
  %116 = vmatprep.mubr.bf16.mxu0 0
  %117 = vmatmul.mubr.bf16.gmra.mrb[0].mxu0 %v59
  %v118 = vpop.f32.mrb[0].mxu0
  %v119 = vadd.f32 %v29, %v118
  %v120 = vpop.f32.mrb[0].mxu0
  %v121 = vpop.f32.mrb[0].mxu0
  %v122 = vadd.f32 %v29, %v121
  %v123 = vpop.f32.mrb[0].mxu0
  %124 = vmatprep.mubr.bf16.mxu0 0
  %125 = vmatmul.mubr.bf16.gmra.mrb[0].mxu0 %v62
  %v126 = vpop.f32.mrb[0].mxu0
  %v127 = vadd.f32 %v29, %v126
  %v128 = vpop.f32.mrb[0].mxu0
  %v129 = vpop.f32.mrb[0].mxu0
  %v130 = vadd.f32 %v29, %v129
  %v131 = vpop.f32.mrb[0].mxu0
  %132 = vdwg.mxu0
  %vm133 = vcmask 523264
  %134 = vst.msk [vmem:[%s3] sm:$0xff] %vm133, %v103
  %135 = vst.msk [vmem:[%s3 + $0x8] sm:$0xff] %vm133, %v106
  %136 = vst.msk [vmem:[%s3 + $0x10] sm:$0xff] %vm133, %v111
  %137 = vst.msk [vmem:[%s3 + $0x18] sm:$0xff] %vm133, %v114
  %138 = vst.msk [vmem:[%s3 + $0x20] sm:$0xff] %vm133, %v119
  %139 = vst.msk [vmem:[%s3 + $0x28] sm:$0xff] %vm133, %v122
  %140 = vst.msk [vmem:[%s3 + $0x30] sm:$0xff] %vm133, %v127
  %141 = vst.msk [vmem:[%s3 + $0x38] sm:$0xff] %vm133, %v130
  // Predicated region
  $region14: #{_lambda_.18} parent=0 // pred_check
    _
  $region15: #{_lambda_.18} parent=0 // pred_check_branch
    %143 = sbr.rel (0) target = $region17
  $region16: #{_lambda_.18} parent=0 // pred_region
    _
  $region17: #{_lambda_.18} parent=0 // pred_fallthru
    _
  // Predicated region
  $region18: #{_lambda_.18} parent=0 // pred_check
    _
  $region19: #{_lambda_.18} parent=0 // pred_check_branch
    %145 = sbr.rel (0) target = $region21
  $region20: #{_lambda_.18} parent=0 // pred_region
    _
  $region21: #{_lambda_.18} parent=0 // pred_fallthru
    _

// kernel: _lambda_.17
$region0: #{_lambda_.17}
  #allocation0 [shape = 'u32[]', space=smem, size = 0x4, offset = 0x4, fixed_abs, tag = 'smem constant byte address 0x4 - core index']
  #allocation1 [shape = 'u32[144,128]{1,0:T(1,128)}', space=vmem, size = 0x12000, scoped, tag = 'internal scratch']
  #allocation2 [shape = 'f32[1,1]{1,0:T(1,128)S(6)}', space=smem, size = 0x200, scoped, tag = 'scoped memory for _lambda_.17']
  %s0 = inlined_call_operand.vmem [shape: f32[8,14,8], index: 0, kind: input, shape index: {}]
  %s1 = inlined_call_operand.vmem [shape: bf16[8,8], index: 1, kind: input, shape index: {}]
  %s2 = inlined_call_operand.vmem [shape: bf16[8,7], index: 2, kind: input, shape index: {}]
  %s3 = inlined_call_operand.<no memory space> [shape: f32[1,1], index: 3, kind: input, shape index: {}]
  %s4 = inlined_call_operand.vmem [shape: f32[8,8,8], index: 4, kind: output, shape index: {}]
  %s5 = sld [smem:[#allocation0]]
  $region26: #{_lambda_.17} parent=0
    _
  %s7 = ssub.s32 1, %s5
  %s8 = scalar_select 0, %s7, %s5
  %9 = sst [smem:[#allocation2]] %s3
  // Predicated region
  $region2: #{_lambda_.17} parent=0 // pred_check
    _
  $region3: #{_lambda_.17} parent=0 // pred_check_branch
    %11 = sbr.rel (0) target = $region5
  $region4: #{_lambda_.17} parent=0 // pred_region
    _
  $region5: #{_lambda_.17} parent=0 // pred_fallthru
    _
  // Predicated region
  $region6: #{_lambda_.17} parent=0 // pred_check
    _
  $region7: #{_lambda_.17} parent=0 // pred_check_branch
    %13 = sbr.rel (0) target = $region9
  $region8: #{_lambda_.17} parent=0 // pred_region
    _
  $region9: #{_lambda_.17} parent=0 // pred_fallthru
    _
  // Predicated region
  $region10: #{_lambda_.17} parent=0 // pred_check
    _
  $region11: #{_lambda_.17} parent=0 // pred_check_branch
    %15 = sbr.rel (0) target = $region13
  $region12: #{_lambda_.17} parent=0 // pred_region
    _
  $region13: #{_lambda_.17} parent=0 // pred_fallthru
    _
  // Predicated region
  $region14: #{_lambda_.17} parent=0 // pred_check
    _
  $region15: #{_lambda_.17} parent=0 // pred_check_branch
    %17 = sbr.rel (0) target = $region17
  $region16: #{_lambda_.17} parent=0 // pred_region
    _
  $region17: #{_lambda_.17} parent=0 // pred_fallthru
    _
  %v19 = vld [vmem:[%s0] sm:$0xff]
  %v20 = vld [vmem:[%s0 + $0x8] sm:$0x3f]
  %v21 = vld [vmem:[%s0 + $0x10] sm:$0xff]
  %v22 = vld [vmem:[%s0 + $0x18] sm:$0x3f]
  %v23 = vld [vmem:[%s0 + $0x20] sm:$0xff]
  %v24 = vld [vmem:[%s0 + $0x28] sm:$0x3f]
  %v25 = vld [vmem:[%s0 + $0x30] sm:$0xff]
  %v26 = vld [vmem:[%s0 + $0x38] sm:$0x3f]
  %v27 = vld [vmem:[%s0 + $0x40] sm:$0xff]
  %v28 = vld [vmem:[%s0 + $0x48] sm:$0x3f]
  %v29 = vld [vmem:[%s0 + $0x50] sm:$0xff]
  %v30 = vld [vmem:[%s0 + $0x58] sm:$0x3f]
  %v31 = vld [vmem:[%s0 + $0x60] sm:$0xff]
  %v32 = vld [vmem:[%s0 + $0x68] sm:$0x3f]
  %v33 = vld [vmem:[%s0 + $0x70] sm:$0xff]
  %v34 = vld [vmem:[%s0 + $0x78] sm:$0x3f]
  %vm51 = vcmask 1044480
  %v52 = vrot.slane %v19, 3
  %v53 = vrot.slane %v20, 3
  %v54 = vsel %vm51, %v52, %v53
  %v55 = vrot.slane %v21, 3
  %v56 = vrot.slane %v22, 3
  %v57 = vsel %vm51, %v55, %v56
  %v58 = vrot.slane %v23, 3
  %v59 = vrot.slane %v24, 3
  %v60 = vsel %vm51, %v58, %v59
  %v61 = vrot.slane %v25, 3
  %v62 = vrot.slane %v26, 3
  %v63 = vsel %vm51, %v61, %v62
  %v64 = vrot.slane %v27, 3
  %v65 = vrot.slane %v28, 3
  %v66 = vsel %vm51, %v64, %v65
  %v67 = vrot.slane %v29, 3
  %v68 = vrot.slane %v30, 3
  %v69 = vsel %vm51, %v67, %v68
  %v70 = vrot.slane %v31, 3
  %v71 = vrot.slane %v32, 3
  %v72 = vsel %vm51, %v70, %v71
  %v73 = vrot.slane %v33, 3
  %v74 = vrot.slane %v34, 3
  %v75 = vsel %vm51, %v73, %v74
  %v84 = vpack.c.bf16 %v57, %v54
  %v85 = vpack.c.bf16 %v63, %v60
  %v86 = vpack.c.bf16 %v69, %v66
  %v87 = vpack.c.bf16 %v75, %v72
  %v88 = vld [vmem:[%s1] sm:$0xf]
  %vm89 = vcmask 64512
  %v91 = vsel %vm89, %v84, 0
  %v94 = vsel %vm89, %v85, 0
  %v97 = vsel %vm89, %v86, 0
  %v100 = vsel %vm89, %v87, 0
  %vm102 = vcmask 1043456
  %v104 = vsel %vm102, %v88, 0
  %106 = vmatprep.subr.bf16.mxu0 0
  %107 = vmatpush1.bf16.msra.mxu0 %v104
  %108 = vmatprep.subr.bf16.mxu0 0
  %109 = vmatpush1.bf16.msra.mxu0 0
  %110 = vmatprep.subr.bf16.mxu0 0
  %111 = vmatpush1.bf16.msra.mxu0 0
  %112 = vmatprep.subr.bf16.mxu0 0
  %113 = vmatpush1.bf16.msra.mxu0 0
  %114 = vmatprep.subr.bf16.mxu0 0
  %115 = vmatpush1.bf16.msra.mxu0 0
  %116 = vmatprep.subr.bf16.mxu0 0
  %117 = vmatpush1.bf16.msra.mxu0 0
  %118 = vmatprep.subr.bf16.mxu0 0
  %119 = vmatpush1.bf16.msra.mxu0 0
  %120 = vmatprep.subr.bf16.mxu0 0
  %121 = vmatpush1.bf16.msra.mxu0 0
  %122 = vmatprep.subr.bf16.mxu0 0
  %123 = vmatpush1.bf16.msra.mxu0 0
  %124 = vmatprep.subr.bf16.mxu0 0
  %125 = vmatpush1.bf16.msra.mxu0 0
  %126 = vmatprep.subr.bf16.mxu0 0
  %127 = vmatpush1.bf16.msra.mxu0 0
  %128 = vmatprep.subr.bf16.mxu0 0
  %129 = vmatpush1.bf16.msra.mxu0 0
  %130 = vmatprep.subr.bf16.mxu0 0
  %131 = vmatpush1.bf16.msra.mxu0 0
  %132 = vmatprep.subr.bf16.mxu0 0
  %133 = vmatpush1.bf16.msra.mxu0 0
  %134 = vmatprep.subr.bf16.mxu0 0
  %135 = vmatpush1.bf16.msra.mxu0 0
  %136 = vmatprep.subr.bf16.mxu0 0
  %137 = vmatpush1.bf16.msra.mxu0 0
  %138 = vmatprep.mubr.bf16.mxu0 0
  %139 = vmatmul.mubr.bf16.gmra.mrb[0].mxu0 %v91
  %v140 = vpop.f32.mrb[0].mxu0
  %v141 = vadd.f32 0.0, %v140
  %v142 = vpop.f32.mrb[0].mxu0
  %v143 = vpop.f32.mrb[0].mxu0
  %v144 = vadd.f32 0.0, %v143
  %v145 = vpop.f32.mrb[0].mxu0
  %146 = vmatprep.mubr.bf16.mxu0 0
  %147 = vmatmul.mubr.bf16.gmra.mrb[0].mxu0 %v94
  %v148 = vpop.f32.mrb[0].mxu0
  %v149 = vadd.f32 0.0, %v148
  %v150 = vpop.f32.mrb[0].mxu0
  %v151 = vpop.f32.mrb[0].mxu0
  %v152 = vadd.f32 0.0, %v151
  %v153 = vpop.f32.mrb[0].mxu0
  %154 = vmatprep.mubr.bf16.mxu0 0
  %155 = vmatmul.mubr.bf16.gmra.mrb[0].mxu0 %v97
  %v156 = vpop.f32.mrb[0].mxu0
  %v157 = vadd.f32 0.0, %v156
  %v158 = vpop.f32.mrb[0].mxu0
  %v159 = vpop.f32.mrb[0].mxu0
  %v160 = vadd.f32 0.0, %v159
  %v161 = vpop.f32.mrb[0].mxu0
  %162 = vmatprep.mubr.bf16.mxu0 0
  %163 = vmatmul.mubr.bf16.gmra.mrb[0].mxu0 %v100
  %v164 = vpop.f32.mrb[0].mxu0
  %v165 = vadd.f32 0.0, %v164
  %v166 = vpop.f32.mrb[0].mxu0
  %v167 = vpop.f32.mrb[0].mxu0
  %v168 = vadd.f32 0.0, %v167
  %v169 = vpop.f32.mrb[0].mxu0
  %170 = vdwg.mxu0
  %v171 = vmax.f32 %v141, 0.0
  %v172 = vmax.f32 %v144, 0.0
  %v173 = vmax.f32 %v149, 0.0
  %v174 = vmax.f32 %v152, 0.0
  %v175 = vmax.f32 %v157, 0.0
  %v176 = vmax.f32 %v160, 0.0
  %v177 = vmax.f32 %v165, 0.0
  %v178 = vmax.f32 %v168, 0.0
  %v179 = vpack.c.bf16 %v172, %v171
  %v180 = vpack.c.bf16 %v174, %v173
  %v181 = vpack.c.bf16 %v176, %v175
  %v182 = vpack.c.bf16 %v178, %v177
  %v183 = vld [vmem:[%s2] sm:$0xf]
  %v185 = vsel %vm89, %v179, 0
  %v188 = vsel %vm89, %v180, 0
  %v191 = vsel %vm89, %v181, 0
  %v194 = vsel %vm89, %v182, 0
  %v197 = vsel %vm102, %v183, 0
  %199 = vmatprep.subr.bf16.mxu0 0
  %200 = vmatpush1.bf16.msra.mxu0 %v197
  %201 = vmatprep.subr.bf16.mxu0 0
  %202 = vmatpush1.bf16.msra.mxu0 0
  %203 = vmatprep.subr.bf16.mxu0 0
  %204 = vmatpush1.bf16.msra.mxu0 0
  %205 = vmatprep.subr.bf16.mxu0 0
  %206 = vmatpush1.bf16.msra.mxu0 0
  %207 = vmatprep.subr.bf16.mxu0 0
  %208 = vmatpush1.bf16.msra.mxu0 0
  %209 = vmatprep.subr.bf16.mxu0 0
  %210 = vmatpush1.bf16.msra.mxu0 0
  %211 = vmatprep.subr.bf16.mxu0 0
  %212 = vmatpush1.bf16.msra.mxu0 0
  %213 = vmatprep.subr.bf16.mxu0 0
  %214 = vmatpush1.bf16.msra.mxu0 0
  %215 = vmatprep.subr.bf16.mxu0 0
  %216 = vmatpush1.bf16.msra.mxu0 0
  %217 = vmatprep.subr.bf16.mxu0 0
  %218 = vmatpush1.bf16.msra.mxu0 0
  %219 = vmatprep.subr.bf16.mxu0 0
  %220 = vmatpush1.bf16.msra.mxu0 0
  %221 = vmatprep.subr.bf16.mxu0 0
  %222 = vmatpush1.bf16.msra.mxu0 0
  %223 = vmatprep.subr.bf16.mxu0 0
  %224 = vmatpush1.bf16.msra.mxu0 0
  %225 = vmatprep.subr.bf16.mxu0 0
  %226 = vmatpush1.bf16.msra.mxu0 0
  %227 = vmatprep.subr.bf16.mxu0 0
  %228 = vmatpush1.bf16.msra.mxu0 0
  %229 = vmatprep.subr.bf16.mxu0 0
  %230 = vmatpush1.bf16.msra.mxu0 0
  %231 = vmatprep.mubr.bf16.mxu0 0
  %232 = vmatmul.mubr.bf16.gmra.mrb[0].mxu0 %v185
  %v233 = vpop.f32.mrb[0].mxu0
  %v234 = vadd.f32 0.0, %v233
  %v235 = vpop.f32.mrb[0].mxu0
  %v236 = vpop.f32.mrb[0].mxu0
  %v237 = vadd.f32 0.0, %v236
  %v238 = vpop.f32.mrb[0].mxu0
  %239 = vmatprep.mubr.bf16.mxu0 0
  %240 = vmatmul.mubr.bf16.gmra.mrb[0].mxu0 %v188
  %v241 = vpop.f32.mrb[0].mxu0
  %v242 = vadd.f32 0.0, %v241
  %v243 = vpop.f32.mrb[0].mxu0
  %v244 = vpop.f32.mrb[0].mxu0
  %v245 = vadd.f32 0.0, %v244
  %v246 = vpop.f32.mrb[0].mxu0
  %247 = vmatprep.mubr.bf16.mxu0 0
  %248 = vmatmul.mubr.bf16.gmra.mrb[0].mxu0 %v191
  %v249 = vpop.f32.mrb[0].mxu0
  %v250 = vadd.f32 0.0, %v249
  %v251 = vpop.f32.mrb[0].mxu0
  %v252 = vpop.f32.mrb[0].mxu0
  %v253 = vadd.f32 0.0, %v252
  %v254 = vpop.f32.mrb[0].mxu0
  %255 = vmatprep.mubr.bf16.mxu0 0
  %256 = vmatmul.mubr.bf16.gmra.mrb[0].mxu0 %v194
  %v257 = vpop.f32.mrb[0].mxu0
  %v258 = vadd.f32 0.0, %v257
  %v259 = vpop.f32.mrb[0].mxu0
  %v260 = vpop.f32.mrb[0].mxu0
  %v261 = vadd.f32 0.0, %v260
  %v262 = vpop.f32.mrb[0].mxu0
  %263 = vdwg.mxu0
  %265 = vset.pattern.permute.xlu0 0
  %266 = vperm.xlu0 %265, %v234
  %v267 = vpop.permute.xlu0 %266
  %270 = vset.pattern.permute.xlu0 0
  %271 = vperm.xlu0 %270, %v237
  %v272 = vpop.permute.xlu0 %271
  %275 = vset.pattern.permute.xlu0 0
  %276 = vperm.xlu0 %275, %v242
  %v277 = vpop.permute.xlu0 %276
  %280 = vset.pattern.permute.xlu0 0
  %281 = vperm.xlu0 %280, %v245
  %v282 = vpop.permute.xlu0 %281
  %285 = vset.pattern.permute.xlu0 0
  %286 = vperm.xlu0 %285, %v250
  %v287 = vpop.permute.xlu0 %286
  %290 = vset.pattern.permute.xlu0 0
  %291 = vperm.xlu0 %290, %v253
  %v292 = vpop.permute.xlu0 %291
  %295 = vset.pattern.permute.xlu0 0
  %296 = vperm.xlu0 %295, %v258
  %v297 = vpop.permute.xlu0 %296
  %300 = vset.pattern.permute.xlu0 0
  %301 = vperm.xlu0 %300, %v261
  %v302 = vpop.permute.xlu0 %301
  %v304 = vmul.f32 %v19, %v267
  %v305 = vmul.f32 %v21, %v272
  %v306 = vmul.f32 %v23, %v277
  %v307 = vmul.f32 %v25, %v282
  %v308 = vmul.f32 %v27, %v287
  %v309 = vmul.f32 %v29, %v292
  %v310 = vmul.f32 %v31, %v297
  %v311 = vmul.f32 %v33, %v302
  %312 = vset.pattern.permute.xlu0 1
  %313 = vperm.xlu0 %312, %v234
  %v314 = vpop.permute.xlu0 %313
  %315 = vset.pattern.permute.xlu0 1
  %316 = vperm.xlu0 %315, %v237
  %v317 = vpop.permute.xlu0 %316
  %318 = vset.pattern.permute.xlu0 1
  %319 = vperm.xlu0 %318, %v242
  %v320 = vpop.permute.xlu0 %319
  %321 = vset.pattern.permute.xlu0 1
  %322 = vperm.xlu0 %321, %v245
  %v323 = vpop.permute.xlu0 %322
  %324 = vset.pattern.permute.xlu0 1
  %325 = vperm.xlu0 %324, %v250
  %v326 = vpop.permute.xlu0 %325
  %327 = vset.pattern.permute.xlu0 1
  %328 = vperm.xlu0 %327, %v253
  %v329 = vpop.permute.xlu0 %328
  %330 = vset.pattern.permute.xlu0 1
  %331 = vperm.xlu0 %330, %v258
  %v332 = vpop.permute.xlu0 %331
  %333 = vset.pattern.permute.xlu0 1
  %334 = vperm.xlu0 %333, %v261
  %v335 = vpop.permute.xlu0 %334
  %v336 = vrot.slane %v314, 7
  %v337 = vrot.slane %v317, 7
  %v338 = vrot.slane %v320, 7
  %v339 = vrot.slane %v323, 7
  %v340 = vrot.slane %v326, 7
  %v341 = vrot.slane %v329, 7
  %v342 = vrot.slane %v332, 7
  %v343 = vrot.slane %v335, 7
  %v352 = vmul.f32 %v19, %v336
  %v353 = vmul.f32 %v20, %v336
  %v354 = vmul.f32 %v21, %v337
  %v355 = vmul.f32 %v22, %v337
  %v356 = vmul.f32 %v23, %v338
  %v357 = vmul.f32 %v24, %v338
  %v358 = vmul.f32 %v25, %v339
  %v359 = vmul.f32 %v26, %v339
  %v360 = vmul.f32 %v27, %v340
  %v361 = vmul.f32 %v28, %v340
  %v362 = vmul.f32 %v29, %v341
  %v363 = vmul.f32 %v30, %v341
  %v364 = vmul.f32 %v31, %v342
  %v365 = vmul.f32 %v32, %v342
  %v366 = vmul.f32 %v33, %v343
  %v367 = vmul.f32 %v34, %v343
  %vm384 = vcmask 1046528
  %v385 = vrot.slane %v352, 1
  %v386 = vrot.slane %v353, 1
  %v387 = vsel %vm384, %v385, %v386
  %v388 = vrot.slane %v354, 1
  %v389 = vrot.slane %v355, 1
  %v390 = vsel %vm384, %v388, %v389
  %v391 = vrot.slane %v356, 1
  %v392 = vrot.slane %v357, 1
  %v393 = vsel %vm384, %v391, %v392
  %v394 = vrot.slane %v358, 1
  %v395 = vrot.slane %v359, 1
  %v396 = vsel %vm384, %v394, %v395
  %v397 = vrot.slane %v360, 1
  %v398 = vrot.slane %v361, 1
  %v399 = vsel %vm384, %v397, %v398
  %v400 = vrot.slane %v362, 1
  %v401 = vrot.slane %v363, 1
  %v402 = vsel %vm384, %v400, %v401
  %v403 = vrot.slane %v364, 1
  %v404 = vrot.slane %v365, 1
  %v405 = vsel %vm384, %v403, %v404
  %v406 = vrot.slane %v366, 1
  %v407 = vrot.slane %v367, 1
  %v408 = vsel %vm384, %v406, %v407
  %v417 = vadd.f32 %v304, %v387
  %v418 = vadd.f32 %v305, %v390
  %v419 = vadd.f32 %v306, %v393
  %v420 = vadd.f32 %v307, %v396
  %v421 = vadd.f32 %v308, %v399
  %v422 = vadd.f32 %v309, %v402
  %v423 = vadd.f32 %v310, %v405
  %v424 = vadd.f32 %v311, %v408
  %425 = vset.pattern.permute.xlu0 2
  %426 = vperm.xlu0 %425, %v234
  %v427 = vpop.permute.xlu0 %426
  %428 = vset.pattern.permute.xlu0 2
  %429 = vperm.xlu0 %428, %v237
  %v430 = vpop.permute.xlu0 %429
  %431 = vset.pattern.permute.xlu0 2
  %432 = vperm.xlu0 %431, %v242
  %v433 = vpop.permute.xlu0 %432
  %434 = vset.pattern.permute.xlu0 2
  %435 = vperm.xlu0 %434, %v245
  %v436 = vpop.permute.xlu0 %435
  %437 = vset.pattern.permute.xlu0 2
  %438 = vperm.xlu0 %437, %v250
  %v439 = vpop.permute.xlu0 %438
  %440 = vset.pattern.permute.xlu0 2
  %441 = vperm.xlu0 %440, %v253
  %v442 = vpop.permute.xlu0 %441
  %443 = vset.pattern.permute.xlu0 2
  %444 = vperm.xlu0 %443, %v258
  %v445 = vpop.permute.xlu0 %444
  %446 = vset.pattern.permute.xlu0 2
  %447 = vperm.xlu0 %446, %v261
  %v448 = vpop.permute.xlu0 %447
  %v449 = vrot.slane %v427, 6
  %v450 = vrot.slane %v430, 6
  %v451 = vrot.slane %v433, 6
  %v452 = vrot.slane %v436, 6
  %v453 = vrot.slane %v439, 6
  %v454 = vrot.slane %v442, 6
  %v455 = vrot.slane %v445, 6
  %v456 = vrot.slane %v448, 6
  %v465 = vmul.f32 %v19, %v449
  %v466 = vmul.f32 %v20, %v449
  %v467 = vmul.f32 %v21, %v450
  %v468 = vmul.f32 %v22, %v450
  %v469 = vmul.f32 %v23, %v451
  %v470 = vmul.f32 %v24, %v451
  %v471 = vmul.f32 %v25, %v452
  %v472 = vmul.f32 %v26, %v452
  %v473 = vmul.f32 %v27, %v453
  %v474 = vmul.f32 %v28, %v453
  %v475 = vmul.f32 %v29, %v454
  %v476 = vmul.f32 %v30, %v454
  %v477 = vmul.f32 %v31, %v455
  %v478 = vmul.f32 %v32, %v455
  %v479 = vmul.f32 %v33, %v456
  %v480 = vmul.f32 %v34, %v456
  %vm497 = vcmask 1045504
  %v498 = vrot.slane %v465, 2
  %v499 = vrot.slane %v466, 2
  %v500 = vsel %vm497, %v498, %v499
  %v501 = vrot.slane %v467, 2
  %v502 = vrot.slane %v468, 2
  %v503 = vsel %vm497, %v501, %v502
  %v504 = vrot.slane %v469, 2
  %v505 = vrot.slane %v470, 2
  %v506 = vsel %vm497, %v504, %v505
  %v507 = vrot.slane %v471, 2
  %v508 = vrot.slane %v472, 2
  %v509 = vsel %vm497, %v507, %v508
  %v510 = vrot.slane %v473, 2
  %v511 = vrot.slane %v474, 2
  %v512 = vsel %vm497, %v510, %v511
  %v513 = vrot.slane %v475, 2
  %v514 = vrot.slane %v476, 2
  %v515 = vsel %vm497, %v513, %v514
  %v516 = vrot.slane %v477, 2
  %v517 = vrot.slane %v478, 2
  %v518 = vsel %vm497, %v516, %v517
  %v519 = vrot.slane %v479, 2
  %v520 = vrot.slane %v480, 2
  %v521 = vsel %vm497, %v519, %v520
  %v530 = vadd.f32 %v417, %v500
  %v531 = vadd.f32 %v418, %v503
  %v532 = vadd.f32 %v419, %v506
  %v533 = vadd.f32 %v420, %v509
  %v534 = vadd.f32 %v421, %v512
  %v535 = vadd.f32 %v422, %v515
  %v536 = vadd.f32 %v423, %v518
  %v537 = vadd.f32 %v424, %v521
  %538 = vset.pattern.permute.xlu0 3
  %539 = vperm.xlu0 %538, %v234
  %v540 = vpop.permute.xlu0 %539
  %541 = vset.pattern.permute.xlu0 3
  %542 = vperm.xlu0 %541, %v237
  %v543 = vpop.permute.xlu0 %542
  %544 = vset.pattern.permute.xlu0 3
  %545 = vperm.xlu0 %544, %v242
  %v546 = vpop.permute.xlu0 %545
  %547 = vset.pattern.permute.xlu0 3
  %548 = vperm.xlu0 %547, %v245
  %v549 = vpop.permute.xlu0 %548
  %550 = vset.pattern.permute.xlu0 3
  %551 = vperm.xlu0 %550, %v250
  %v552 = vpop.permute.xlu0 %551
  %553 = vset.pattern.permute.xlu0 3
  %554 = vperm.xlu0 %553, %v253
  %v555 = vpop.permute.xlu0 %554
  %556 = vset.pattern.permute.xlu0 3
  %557 = vperm.xlu0 %556, %v258
  %v558 = vpop.permute.xlu0 %557
  %559 = vset.pattern.permute.xlu0 3
  %560 = vperm.xlu0 %559, %v261
  %v561 = vpop.permute.xlu0 %560
  %v562 = vrot.slane %v540, 5
  %v563 = vrot.slane %v543, 5
  %v564 = vrot.slane %v546, 5
  %v565 = vrot.slane %v549, 5
  %v566 = vrot.slane %v552, 5
  %v567 = vrot.slane %v555, 5
  %v568 = vrot.slane %v558, 5
  %v569 = vrot.slane %v561, 5
  %v578 = vmul.f32 %v19, %v562
  %v579 = vmul.f32 %v20, %v562
  %v580 = vmul.f32 %v21, %v563
  %v581 = vmul.f32 %v22, %v563
  %v582 = vmul.f32 %v23, %v564
  %v583 = vmul.f32 %v24, %v564
  %v584 = vmul.f32 %v25, %v565
  %v585 = vmul.f32 %v26, %v565
  %v586 = vmul.f32 %v27, %v566
  %v587 = vmul.f32 %v28, %v566
  %v588 = vmul.f32 %v29, %v567
  %v589 = vmul.f32 %v30, %v567
  %v590 = vmul.f32 %v31, %v568
  %v591 = vmul.f32 %v32, %v568
  %v592 = vmul.f32 %v33, %v569
  %v593 = vmul.f32 %v34, %v569
  %v610 = vrot.slane %v578, 3
  %v611 = vrot.slane %v579, 3
  %v612 = vsel %vm51, %v610, %v611
  %v613 = vrot.slane %v580, 3
  %v614 = vrot.slane %v581, 3
  %v615 = vsel %vm51, %v613, %v614
  %v616 = vrot.slane %v582, 3
  %v617 = vrot.slane %v583, 3
  %v618 = vsel %vm51, %v616, %v617
  %v619 = vrot.slane %v584, 3
  %v620 = vrot.slane %v585, 3
  %v621 = vsel %vm51, %v619, %v620
  %v622 = vrot.slane %v586, 3
  %v623 = vrot.slane %v587, 3
  %v624 = vsel %vm51, %v622, %v623
  %v625 = vrot.slane %v588, 3
  %v626 = vrot.slane %v589, 3
  %v627 = vsel %vm51, %v625, %v626
  %v628 = vrot.slane %v590, 3
  %v629 = vrot.slane %v591, 3
  %v630 = vsel %vm51, %v628, %v629
  %v631 = vrot.slane %v592, 3
  %v632 = vrot.slane %v593, 3
  %v633 = vsel %vm51, %v631, %v632
  %v642 = vadd.f32 %v530, %v612
  %v643 = vadd.f32 %v531, %v615
  %v644 = vadd.f32 %v532, %v618
  %v645 = vadd.f32 %v533, %v621
  %v646 = vadd.f32 %v534, %v624
  %v647 = vadd.f32 %v535, %v627
  %v648 = vadd.f32 %v536, %v630
  %v649 = vadd.f32 %v537, %v633
  %650 = vset.pattern.permute.xlu0 4
  %651 = vperm.xlu0 %650, %v234
  %v652 = vpop.permute.xlu0 %651
  %653 = vset.pattern.permute.xlu0 4
  %654 = vperm.xlu0 %653, %v237
  %v655 = vpop.permute.xlu0 %654
  %656 = vset.pattern.permute.xlu0 4
  %657 = vperm.xlu0 %656, %v242
  %v658 = vpop.permute.xlu0 %657
  %659 = vset.pattern.permute.xlu0 4
  %660 = vperm.xlu0 %659, %v245
  %v661 = vpop.permute.xlu0 %660
  %662 = vset.pattern.permute.xlu0 4
  %663 = vperm.xlu0 %662, %v250
  %v664 = vpop.permute.xlu0 %663
  %665 = vset.pattern.permute.xlu0 4
  %666 = vperm.xlu0 %665, %v253
  %v667 = vpop.permute.xlu0 %666
  %668 = vset.pattern.permute.xlu0 4
  %669 = vperm.xlu0 %668, %v258
  %v670 = vpop.permute.xlu0 %669
  %671 = vset.pattern.permute.xlu0 4
  %672 = vperm.xlu0 %671, %v261
  %v673 = vpop.permute.xlu0 %672
  %v674 = vrot.slane %v652, 4
  %v675 = vrot.slane %v655, 4
  %v676 = vrot.slane %v658, 4
  %v677 = vrot.slane %v661, 4
  %v678 = vrot.slane %v664, 4
  %v679 = vrot.slane %v667, 4
  %v680 = vrot.slane %v670, 4
  %v681 = vrot.slane %v673, 4
  %v690 = vmul.f32 %v19, %v674
  %v691 = vmul.f32 %v20, %v674
  %v692 = vmul.f32 %v21, %v675
  %v693 = vmul.f32 %v22, %v675
  %v694 = vmul.f32 %v23, %v676
  %v695 = vmul.f32 %v24, %v676
  %v696 = vmul.f32 %v25, %v677
  %v697 = vmul.f32 %v26, %v677
  %v698 = vmul.f32 %v27, %v678
  %v699 = vmul.f32 %v28, %v678
  %v700 = vmul.f32 %v29, %v679
  %v701 = vmul.f32 %v30, %v679
  %v702 = vmul.f32 %v31, %v680
  %v703 = vmul.f32 %v32, %v680
  %v704 = vmul.f32 %v33, %v681
  %v705 = vmul.f32 %v34, %v681
  %v722 = vrot.slane %v690, 4
  %v723 = vrot.slane %v691, 4
  %v724 = vsel %vm102, %v722, %v723
  %v725 = vrot.slane %v692, 4
  %v726 = vrot.slane %v693, 4
  %v727 = vsel %vm102, %v725, %v726
  %v728 = vrot.slane %v694, 4
  %v729 = vrot.slane %v695, 4
  %v730 = vsel %vm102, %v728, %v729
  %v731 = vrot.slane %v696, 4
  %v732 = vrot.slane %v697, 4
  %v733 = vsel %vm102, %v731, %v732
  %v734 = vrot.slane %v698, 4
  %v735 = vrot.slane %v699, 4
  %v736 = vsel %vm102, %v734, %v735
  %v737 = vrot.slane %v700, 4
  %v738 = vrot.slane %v701, 4
  %v739 = vsel %vm102, %v737, %v738
  %v740 = vrot.slane %v702, 4
  %v741 = vrot.slane %v703, 4
  %v742 = vsel %vm102, %v740, %v741
  %v743 = vrot.slane %v704, 4
  %v744 = vrot.slane %v705, 4
  %v745 = vsel %vm102, %v743, %v744
  %v754 = vadd.f32 %v642, %v724
  %v755 = vadd.f32 %v643, %v727
  %v756 = vadd.f32 %v644, %v730
  %v757 = vadd.f32 %v645, %v733
  %v758 = vadd.f32 %v646, %v736
  %v759 = vadd.f32 %v647, %v739
  %v760 = vadd.f32 %v648, %v742
  %v761 = vadd.f32 %v649, %v745
  %762 = vset.pattern.permute.xlu0 5
  %763 = vperm.xlu0 %762, %v234
  %v764 = vpop.permute.xlu0 %763
  %765 = vset.pattern.permute.xlu0 5
  %766 = vperm.xlu0 %765, %v237
  %v767 = vpop.permute.xlu0 %766
  %768 = vset.pattern.permute.xlu0 5
  %769 = vperm.xlu0 %768, %v242
  %v770 = vpop.permute.xlu0 %769
  %771 = vset.pattern.permute.xlu0 5
  %772 = vperm.xlu0 %771, %v245
  %v773 = vpop.permute.xlu0 %772
  %774 = vset.pattern.permute.xlu0 5
  %775 = vperm.xlu0 %774, %v250
  %v776 = vpop.permute.xlu0 %775
  %777 = vset.pattern.permute.xlu0 5
  %778 = vperm.xlu0 %777, %v253
  %v779 = vpop.permute.xlu0 %778
  %780 = vset.pattern.permute.xlu0 5
  %781 = vperm.xlu0 %780, %v258
  %v782 = vpop.permute.xlu0 %781
  %783 = vset.pattern.permute.xlu0 5
  %784 = vperm.xlu0 %783, %v261
  %v785 = vpop.permute.xlu0 %784
  %v786 = vrot.slane %v764, 3
  %v787 = vrot.slane %v767, 3
  %v788 = vrot.slane %v770, 3
  %v789 = vrot.slane %v773, 3
  %v790 = vrot.slane %v776, 3
  %v791 = vrot.slane %v779, 3
  %v792 = vrot.slane %v782, 3
  %v793 = vrot.slane %v785, 3
  %v802 = vmul.f32 %v19, %v786
  %v803 = vmul.f32 %v20, %v786
  %v804 = vmul.f32 %v21, %v787
  %v805 = vmul.f32 %v22, %v787
  %v806 = vmul.f32 %v23, %v788
  %v807 = vmul.f32 %v24, %v788
  %v808 = vmul.f32 %v25, %v789
  %v809 = vmul.f32 %v26, %v789
  %v810 = vmul.f32 %v27, %v790
  %v811 = vmul.f32 %v28, %v790
  %v812 = vmul.f32 %v29, %v791
  %v813 = vmul.f32 %v30, %v791
  %v814 = vmul.f32 %v31, %v792
  %v815 = vmul.f32 %v32, %v792
  %v816 = vmul.f32 %v33, %v793
  %v817 = vmul.f32 %v34, %v793
  %vm834 = vcmask 1042432
  %v835 = vrot.slane %v802, 5
  %v836 = vrot.slane %v803, 5
  %v837 = vsel %vm834, %v835, %v836
  %v838 = vrot.slane %v804, 5
  %v839 = vrot.slane %v805, 5
  %v840 = vsel %vm834, %v838, %v839
  %v841 = vrot.slane %v806, 5
  %v842 = vrot.slane %v807, 5
  %v843 = vsel %vm834, %v841, %v842
  %v844 = vrot.slane %v808, 5
  %v845 = vrot.slane %v809, 5
  %v846 = vsel %vm834, %v844, %v845
  %v847 = vrot.slane %v810, 5
  %v848 = vrot.slane %v811, 5
  %v849 = vsel %vm834, %v847, %v848
  %v850 = vrot.slane %v812, 5
  %v851 = vrot.slane %v813, 5
  %v852 = vsel %vm834, %v850, %v851
  %v853 = vrot.slane %v814, 5
  %v854 = vrot.slane %v815, 5
  %v855 = vsel %vm834, %v853, %v854
  %v856 = vrot.slane %v816, 5
  %v857 = vrot.slane %v817, 5
  %v858 = vsel %vm834, %v856, %v857
  %v867 = vadd.f32 %v754, %v837
  %v868 = vadd.f32 %v755, %v840
  %v869 = vadd.f32 %v756, %v843
  %v870 = vadd.f32 %v757, %v846
  %v871 = vadd.f32 %v758, %v849
  %v872 = vadd.f32 %v759, %v852
  %v873 = vadd.f32 %v760, %v855
  %v874 = vadd.f32 %v761, %v858
  %875 = vset.pattern.permute.xlu0 6
  %876 = vperm.xlu0 %875, %v234
  %v877 = vpop.permute.xlu0 %876
  %878 = vset.pattern.permute.xlu0 6
  %879 = vperm.xlu0 %878, %v237
  %v880 = vpop.permute.xlu0 %879
  %881 = vset.pattern.permute.xlu0 6
  %882 = vperm.xlu0 %881, %v242
  %v883 = vpop.permute.xlu0 %882
  %884 = vset.pattern.permute.xlu0 6
  %885 = vperm.xlu0 %884, %v245
  %v886 = vpop.permute.xlu0 %885
  %887 = vset.pattern.permute.xlu0 6
  %888 = vperm.xlu0 %887, %v250
  %v889 = vpop.permute.xlu0 %888
  %890 = vset.pattern.permute.xlu0 6
  %891 = vperm.xlu0 %890, %v253
  %v892 = vpop.permute.xlu0 %891
  %893 = vset.pattern.permute.xlu0 6
  %894 = vperm.xlu0 %893, %v258
  %v895 = vpop.permute.xlu0 %894
  %896 = vset.pattern.permute.xlu0 6
  %897 = vperm.xlu0 %896, %v261
  %v898 = vpop.permute.xlu0 %897
  %v899 = vrot.slane %v877, 2
  %v900 = vrot.slane %v880, 2
  %v901 = vrot.slane %v883, 2
  %v902 = vrot.slane %v886, 2
  %v903 = vrot.slane %v889, 2
  %v904 = vrot.slane %v892, 2
  %v905 = vrot.slane %v895, 2
  %v906 = vrot.slane %v898, 2
  %v915 = vmul.f32 %v19, %v899
  %v916 = vmul.f32 %v20, %v899
  %v917 = vmul.f32 %v21, %v900
  %v918 = vmul.f32 %v22, %v900
  %v919 = vmul.f32 %v23, %v901
  %v920 = vmul.f32 %v24, %v901
  %v921 = vmul.f32 %v25, %v902
  %v922 = vmul.f32 %v26, %v902
  %v923 = vmul.f32 %v27, %v903
  %v924 = vmul.f32 %v28, %v903
  %v925 = vmul.f32 %v29, %v904
  %v926 = vmul.f32 %v30, %v904
  %v927 = vmul.f32 %v31, %v905
  %v928 = vmul.f32 %v32, %v905
  %v929 = vmul.f32 %v33, %v906
  %v930 = vmul.f32 %v34, %v906
  %vm947 = vcmask 1041408
  %v948 = vrot.slane %v915, 6
  %v949 = vrot.slane %v916, 6
  %v950 = vsel %vm947, %v948, %v949
  %v951 = vrot.slane %v917, 6
  %v952 = vrot.slane %v918, 6
  %v953 = vsel %vm947, %v951, %v952
  %v954 = vrot.slane %v919, 6
  %v955 = vrot.slane %v920, 6
  %v956 = vsel %vm947, %v954, %v955
  %v957 = vrot.slane %v921, 6
  %v958 = vrot.slane %v922, 6
  %v959 = vsel %vm947, %v957, %v958
  %v960 = vrot.slane %v923, 6
  %v961 = vrot.slane %v924, 6
  %v962 = vsel %vm947, %v960, %v961
  %v963 = vrot.slane %v925, 6
  %v964 = vrot.slane %v926, 6
  %v965 = vsel %vm947, %v963, %v964
  %v966 = vrot.slane %v927, 6
  %v967 = vrot.slane %v928, 6
  %v968 = vsel %vm947, %v966, %v967
  %v969 = vrot.slane %v929, 6
  %v970 = vrot.slane %v930, 6
  %v971 = vsel %vm947, %v969, %v970
  %v980 = vadd.f32 %v867, %v950
  %v981 = vadd.f32 %v868, %v953
  %v982 = vadd.f32 %v869, %v956
  %v983 = vadd.f32 %v870, %v959
  %v984 = vadd.f32 %v871, %v962
  %v985 = vadd.f32 %v872, %v965
  %v986 = vadd.f32 %v873, %v968
  %v987 = vadd.f32 %v874, %v971
  %s988 = sld [smem:[#allocation2]]
  %vm989 = vcmp.ge.f32.partialorder %v980, 0.0
  %vm990 = vcmp.ge.f32.partialorder %v981, 0.0
  %vm991 = vcmp.ge.f32.partialorder %v982, 0.0
  %vm992 = vcmp.ge.f32.partialorder %v983, 0.0
  %vm993 = vcmp.ge.f32.partialorder %v984, 0.0
  %vm994 = vcmp.ge.f32.partialorder %v985, 0.0
  %vm995 = vcmp.ge.f32.partialorder %v986, 0.0
  %vm996 = vcmp.ge.f32.partialorder %v987, 0.0
  %v997 = vstv %s988
  %v998 = vmul.f32 %v997, %v980
  %v999 = vmul.f32 %v997, %v981
  %v1000 = vmul.f32 %v997, %v982
  %v1001 = vmul.f32 %v997, %v983
  %v1002 = vmul.f32 %v997, %v984
  %v1003 = vmul.f32 %v997, %v985
  %v1004 = vmul.f32 %v997, %v986
  %v1005 = vmul.f32 %v997, %v987
  %v1006 = vsel %vm989, %v980, %v998
  %v1007 = vsel %vm990, %v981, %v999
  %v1008 = vsel %vm991, %v982, %v1000
  %v1009 = vsel %vm992, %v983, %v1001
  %v1010 = vsel %vm993, %v984, %v1002
  %v1011 = vsel %vm994, %v985, %v1003
  %v1012 = vsel %vm995, %v986, %v1004
  %v1013 = vsel %vm996, %v987, %v1005
  %1014 = vst.msk [vmem:[%s4] sm:$0xff] %vm89, %v1006
  %1015 = vst.msk [vmem:[%s4 + $0x8] sm:$0xff] %vm89, %v1007
  %1016 = vst.msk [vmem:[%s4 + $0x10] sm:$0xff] %vm89, %v1008
  %1017 = vst.msk [vmem:[%s4 + $0x18] sm:$0xff] %vm89, %v1009
  %1018 = vst.msk [vmem:[%s4 + $0x20] sm:$0xff] %vm89, %v1010
  %1019 = vst.msk [vmem:[%s4 + $0x28] sm:$0xff] %vm89, %v1011
  %1020 = vst.msk [vmem:[%s4 + $0x30] sm:$0xff] %vm89, %v1012
  %1021 = vst.msk [vmem:[%s4 + $0x38] sm:$0xff] %vm89, %v1013
  // Predicated region
  $region18: #{_lambda_.17} parent=0 // pred_check
    _
  $region19: #{_lambda_.17} parent=0 // pred_check_branch
    %1023 = sbr.rel (0) target = $region21
  $region20: #{_lambda_.17} parent=0 // pred_region
    _
  $region21: #{_lambda_.17} parent=0 // pred_fallthru
    _
  // Predicated region
  $region22: #{_lambda_.17} parent=0 // pred_check
    _
  $region23: #{_lambda_.17} parent=0 // pred_check_branch
    %1025 = sbr.rel (0) target = $region25
  $region24: #{_lambda_.17} parent=0 // pred_region
    _
  $region25: #{_lambda_.17} parent=0 // pred_fallthru
    _

// kernel: _lambda_.20
$region0: #{_lambda_.20}
  #allocation0 [shape = 'u32[]', space=smem, size = 0x4, offset = 0x4, fixed_abs, tag = 'smem constant byte address 0x4 - core index']
  #allocation1 [shape = 'u32[144,128]{1,0:T(1,128)}', space=vmem, size = 0x12000, scoped, tag = 'internal scratch']
  %s0 = inlined_call_operand.vmem [shape: f32[8,8,8], index: 0, kind: input, shape index: {}]
  %s1 = inlined_call_operand.vmem [shape: bf16[4,8], index: 1, kind: input, shape index: {}]
  %s2 = inlined_call_operand.vmem [shape: f32[4,1], index: 2, kind: input, shape index: {}]
  %s3 = inlined_call_operand.vmem [shape: f32[8,4,8], index: 3, kind: output, shape index: {}]
  %s4 = sld [smem:[#allocation0]]
  $region22: #{_lambda_.20} parent=0
    _
  %s6 = ssub.s32 1, %s4
  %s7 = scalar_select 0, %s6, %s4
  // Predicated region
  $region2: #{_lambda_.20} parent=0 // pred_check
    _
  $region3: #{_lambda_.20} parent=0 // pred_check_branch
    %9 = sbr.rel (0) target = $region5
  $region4: #{_lambda_.20} parent=0 // pred_region
    _
  $region5: #{_lambda_.20} parent=0 // pred_fallthru
    _
  // Predicated region
  $region6: #{_lambda_.20} parent=0 // pred_check
    _
  $region7: #{_lambda_.20} parent=0 // pred_check_branch
    %11 = sbr.rel (0) target = $region9
  $region8: #{_lambda_.20} parent=0 // pred_region
    _
  $region9: #{_lambda_.20} parent=0 // pred_fallthru
    _
  // Predicated region
  $region10: #{_lambda_.20} parent=0 // pred_check
    _
  $region11: #{_lambda_.20} parent=0 // pred_check_branch
    %13 = sbr.rel (0) target = $region13
  $region12: #{_lambda_.20} parent=0 // pred_region
    _
  $region13: #{_lambda_.20} parent=0 // pred_fallthru
    _
  %v15 = vld [vmem:[%s1] sm:$0x3]
  %v16 = vld [vmem:[%s2] sm:$0xf]
  %v17 = vld [vmem:[%s0] sm:$0xff]
  %v18 = vpack.c.bf16 %v17, %v17
  %20 = vset.pattern.permute.xlu0 0
  %21 = vperm.xlu0 %20, %v16
  %v22 = vpop.permute.xlu0 %21
  %vm24 = vcmask 64512
  %v26 = vsel %vm24, %v15, 0
  %vm28 = vcmask 1043456
  %v30 = vsel %vm28, %v18, 0
  %32 = vmatprep.subr.bf16.mxu0 0
  %33 = vmatpush1.bf16.msra.mxu0 %v30
  %34 = vmatprep.subr.bf16.mxu0 0
  %35 = vmatpush1.bf16.msra.mxu0 0
  %36 = vmatprep.subr.bf16.mxu0 0
  %37 = vmatpush1.bf16.msra.mxu0 0
  %38 = vmatprep.subr.bf16.mxu0 0
  %39 = vmatpush1.bf16.msra.mxu0 0
  %40 = vmatprep.subr.bf16.mxu0 0
  %41 = vmatpush1.bf16.msra.mxu0 0
  %42 = vmatprep.subr.bf16.mxu0 0
  %43 = vmatpush1.bf16.msra.mxu0 0
  %44 = vmatprep.subr.bf16.mxu0 0
  %45 = vmatpush1.bf16.msra.mxu0 0
  %46 = vmatprep.subr.bf16.mxu0 0
  %47 = vmatpush1.bf16.msra.mxu0 0
  %48 = vmatprep.subr.bf16.mxu0 0
  %49 = vmatpush1.bf16.msra.mxu0 0
  %50 = vmatprep.subr.bf16.mxu0 0
  %51 = vmatpush1.bf16.msra.mxu0 0
  %52 = vmatprep.subr.bf16.mxu0 0
  %53 = vmatpush1.bf16.msra.mxu0 0
  %54 = vmatprep.subr.bf16.mxu0 0
  %55 = vmatpush1.bf16.msra.mxu0 0
  %56 = vmatprep.subr.bf16.mxu0 0
  %57 = vmatpush1.bf16.msra.mxu0 0
  %58 = vmatprep.subr.bf16.mxu0 0
  %59 = vmatpush1.bf16.msra.mxu0 0
  %60 = vmatprep.subr.bf16.mxu0 0
  %61 = vmatpush1.bf16.msra.mxu0 0
  %62 = vmatprep.subr.bf16.mxu0 0
  %63 = vmatpush1.bf16.msra.mxu0 0
  %64 = vmatprep.mubr.bf16.mxu0 0
  %65 = vmatmul.mubr.bf16.gmra.mrb[0].mxu0 %v26
  %v66 = vpop.f32.mrb[0].mxu0
  %v67 = vadd.f32 %v22, %v66
  %v68 = vpop.f32.mrb[0].mxu0
  %v69 = vpop.f32.mrb[0].mxu0
  %v70 = vpop.f32.mrb[0].mxu0
  %71 = vdwg.mxu0
  %vm72 = vcmask 60416
  %73 = vst.msk [vmem:[%s3] sm:$0xf] %vm72, %v67
  %s74 = scalar_lea.vmem %s0, 8
  %v75 = vld [vmem:[%s74] sm:$0xff]
  %v76 = vpack.c.bf16 %v75, %v75
  %v78 = vsel %vm28, %v76, 0
  %80 = vmatprep.subr.bf16.mxu0 0
  %81 = vmatpush1.bf16.msra.mxu0 %v78
  %82 = vmatprep.subr.bf16.mxu0 0
  %83 = vmatpush1.bf16.msra.mxu0 0
  %84 = vmatprep.subr.bf16.mxu0 0
  %85 = vmatpush1.bf16.msra.mxu0 0
  %86 = vmatprep.subr.bf16.mxu0 0
  %87 = vmatpush1.bf16.msra.mxu0 0
  %88 = vmatprep.subr.bf16.mxu0 0
  %89 = vmatpush1.bf16.msra.mxu0 0
  %90 = vmatprep.subr.bf16.mxu0 0
  %91 = vmatpush1.bf16.msra.mxu0 0
  %92 = vmatprep.subr.bf16.mxu0 0
  %93 = vmatpush1.bf16.msra.mxu0 0
  %94 = vmatprep.subr.bf16.mxu0 0
  %95 = vmatpush1.bf16.msra.mxu0 0
  %96 = vmatprep.subr.bf16.mxu0 0
  %97 = vmatpush1.bf16.msra.mxu0 0
  %98 = vmatprep.subr.bf16.mxu0 0
  %99 = vmatpush1.bf16.msra.mxu0 0
  %100 = vmatprep.subr.bf16.mxu0 0
  %101 = vmatpush1.bf16.msra.mxu0 0
  %102 = vmatprep.subr.bf16.mxu0 0
  %103 = vmatpush1.bf16.msra.mxu0 0
  %104 = vmatprep.subr.bf16.mxu0 0
  %105 = vmatpush1.bf16.msra.mxu0 0
  %106 = vmatprep.subr.bf16.mxu0 0
  %107 = vmatpush1.bf16.msra.mxu0 0
  %108 = vmatprep.subr.bf16.mxu0 0
  %109 = vmatpush1.bf16.msra.mxu0 0
  %110 = vmatprep.subr.bf16.mxu0 0
  %111 = vmatpush1.bf16.msra.mxu0 0
  %112 = vmatprep.mubr.bf16.mxu0 0
  %113 = vmatmul.mubr.bf16.gmra.mrb[0].mxu0 %v26
  %v114 = vpop.f32.mrb[0].mxu0
  %v115 = vadd.f32 %v22, %v114
  %v116 = vpop.f32.mrb[0].mxu0
  %v117 = vpop.f32.mrb[0].mxu0
  %v118 = vpop.f32.mrb[0].mxu0
  %119 = vdwg.mxu0
  %s120 = scalar_lea.vmem %s3, 4
  %121 = vst.msk [vmem:[%s120] sm:$0xf] %vm72, %v115
  %s122 = scalar_lea.vmem %s0, 16
  %v123 = vld [vmem:[%s122] sm:$0xff]
  %v124 = vpack.c.bf16 %v123, %v123
  %v126 = vsel %vm28, %v124, 0
  %128 = vmatprep.subr.bf16.mxu0 0
  %129 = vmatpush1.bf16.msra.mxu0 %v126
  %130 = vmatprep.subr.bf16.mxu0 0
  %131 = vmatpush1.bf16.msra.mxu0 0
  %132 = vmatprep.subr.bf16.mxu0 0
  %133 = vmatpush1.bf16.msra.mxu0 0
  %134 = vmatprep.subr.bf16.mxu0 0
  %135 = vmatpush1.bf16.msra.mxu0 0
  %136 = vmatprep.subr.bf16.mxu0 0
  %137 = vmatpush1.bf16.msra.mxu0 0
  %138 = vmatprep.subr.bf16.mxu0 0
  %139 = vmatpush1.bf16.msra.mxu0 0
  %140 = vmatprep.subr.bf16.mxu0 0
  %141 = vmatpush1.bf16.msra.mxu0 0
  %142 = vmatprep.subr.bf16.mxu0 0
  %143 = vmatpush1.bf16.msra.mxu0 0
  %144 = vmatprep.subr.bf16.mxu0 0
  %145 = vmatpush1.bf16.msra.mxu0 0
  %146 = vmatprep.subr.bf16.mxu0 0
  %147 = vmatpush1.bf16.msra.mxu0 0
  %148 = vmatprep.subr.bf16.mxu0 0
  %149 = vmatpush1.bf16.msra.mxu0 0
  %150 = vmatprep.subr.bf16.mxu0 0
  %151 = vmatpush1.bf16.msra.mxu0 0
  %152 = vmatprep.subr.bf16.mxu0 0
  %153 = vmatpush1.bf16.msra.mxu0 0
  %154 = vmatprep.subr.bf16.mxu0 0
  %155 = vmatpush1.bf16.msra.mxu0 0
  %156 = vmatprep.subr.bf16.mxu0 0
  %157 = vmatpush1.bf16.msra.mxu0 0
  %158 = vmatprep.subr.bf16.mxu0 0
  %159 = vmatpush1.bf16.msra.mxu0 0
  %160 = vmatprep.mubr.bf16.mxu0 0
  %161 = vmatmul.mubr.bf16.gmra.mrb[0].mxu0 %v26
  %v162 = vpop.f32.mrb[0].mxu0
  %v163 = vadd.f32 %v22, %v162
  %v164 = vpop.f32.mrb[0].mxu0
  %v165 = vpop.f32.mrb[0].mxu0
  %v166 = vpop.f32.mrb[0].mxu0
  %167 = vdwg.mxu0
  %s168 = scalar_lea.vmem %s3, 8
  %169 = vst.msk [vmem:[%s168] sm:$0xf] %vm72, %v163
  %s170 = scalar_lea.vmem %s0, 24
  %v171 = vld [vmem:[%s170] sm:$0xff]
  %v172 = vpack.c.bf16 %v171, %v171
  %v174 = vsel %vm28, %v172, 0
  %176 = vmatprep.subr.bf16.mxu0 0
  %177 = vmatpush1.bf16.msra.mxu0 %v174
  %178 = vmatprep.subr.bf16.mxu0 0
  %179 = vmatpush1.bf16.msra.mxu0 0
  %180 = vmatprep.subr.bf16.mxu0 0
  %181 = vmatpush1.bf16.msra.mxu0 0
  %182 = vmatprep.subr.bf16.mxu0 0
  %183 = vmatpush1.bf16.msra.mxu0 0
  %184 = vmatprep.subr.bf16.mxu0 0
  %185 = vmatpush1.bf16.msra.mxu0 0
  %186 = vmatprep.subr.bf16.mxu0 0
  %187 = vmatpush1.bf16.msra.mxu0 0
  %188 = vmatprep.subr.bf16.mxu0 0
  %189 = vmatpush1.bf16.msra.mxu0 0
  %190 = vmatprep.subr.bf16.mxu0 0
  %191 = vmatpush1.bf16.msra.mxu0 0
  %192 = vmatprep.subr.bf16.mxu0 0
  %193 = vmatpush1.bf16.msra.mxu0 0
  %194 = vmatprep.subr.bf16.mxu0 0
  %195 = vmatpush1.bf16.msra.mxu0 0
  %196 = vmatprep.subr.bf16.mxu0 0
  %197 = vmatpush1.bf16.msra.mxu0 0
  %198 = vmatprep.subr.bf16.mxu0 0
  %199 = vmatpush1.bf16.msra.mxu0 0
  %200 = vmatprep.subr.bf16.mxu0 0
  %201 = vmatpush1.bf16.msra.mxu0 0
  %202 = vmatprep.subr.bf16.mxu0 0
  %203 = vmatpush1.bf16.msra.mxu0 0
  %204 = vmatprep.subr.bf16.mxu0 0
  %205 = vmatpush1.bf16.msra.mxu0 0
  %206 = vmatprep.subr.bf16.mxu0 0
  %207 = vmatpush1.bf16.msra.mxu0 0
  %208 = vmatprep.mubr.bf16.mxu0 0
  %209 = vmatmul.mubr.bf16.gmra.mrb[0].mxu0 %v26
  %v210 = vpop.f32.mrb[0].mxu0
  %v211 = vadd.f32 %v22, %v210
  %v212 = vpop.f32.mrb[0].mxu0
  %v213 = vpop.f32.mrb[0].mxu0
  %v214 = vpop.f32.mrb[0].mxu0
  %215 = vdwg.mxu0
  %s216 = scalar_lea.vmem %s3, 12
  %217 = vst.msk [vmem:[%s216] sm:$0xf] %vm72, %v211
  %s218 = scalar_lea.vmem %s0, 32
  %v219 = vld [vmem:[%s218] sm:$0xff]
  %v220 = vpack.c.bf16 %v219, %v219
  %v222 = vsel %vm28, %v220, 0
  %224 = vmatprep.subr.bf16.mxu0 0
  %225 = vmatpush1.bf16.msra.mxu0 %v222
  %226 = vmatprep.subr.bf16.mxu0 0
  %227 = vmatpush1.bf16.msra.mxu0 0
  %228 = vmatprep.subr.bf16.mxu0 0
  %229 = vmatpush1.bf16.msra.mxu0 0
  %230 = vmatprep.subr.bf16.mxu0 0
  %231 = vmatpush1.bf16.msra.mxu0 0
  %232 = vmatprep.subr.bf16.mxu0 0
  %233 = vmatpush1.bf16.msra.mxu0 0
  %234 = vmatprep.subr.bf16.mxu0 0
  %235 = vmatpush1.bf16.msra.mxu0 0
  %236 = vmatprep.subr.bf16.mxu0 0
  %237 = vmatpush1.bf16.msra.mxu0 0
  %238 = vmatprep.subr.bf16.mxu0 0
  %239 = vmatpush1.bf16.msra.mxu0 0
  %240 = vmatprep.subr.bf16.mxu0 0
  %241 = vmatpush1.bf16.msra.mxu0 0
  %242 = vmatprep.subr.bf16.mxu0 0
  %243 = vmatpush1.bf16.msra.mxu0 0
  %244 = vmatprep.subr.bf16.mxu0 0
  %245 = vmatpush1.bf16.msra.mxu0 0
  %246 = vmatprep.subr.bf16.mxu0 0
  %247 = vmatpush1.bf16.msra.mxu0 0
  %248 = vmatprep.subr.bf16.mxu0 0
  %249 = vmatpush1.bf16.msra.mxu0 0
  %250 = vmatprep.subr.bf16.mxu0 0
  %251 = vmatpush1.bf16.msra.mxu0 0
  %252 = vmatprep.subr.bf16.mxu0 0
  %253 = vmatpush1.bf16.msra.mxu0 0
  %254 = vmatprep.subr.bf16.mxu0 0
  %255 = vmatpush1.bf16.msra.mxu0 0
  %256 = vmatprep.mubr.bf16.mxu0 0
  %257 = vmatmul.mubr.bf16.gmra.mrb[0].mxu0 %v26
  %v258 = vpop.f32.mrb[0].mxu0
  %v259 = vadd.f32 %v22, %v258
  %v260 = vpop.f32.mrb[0].mxu0
  %v261 = vpop.f32.mrb[0].mxu0
  %v262 = vpop.f32.mrb[0].mxu0
  %263 = vdwg.mxu0
  %s264 = scalar_lea.vmem %s3, 16
  %265 = vst.msk [vmem:[%s264] sm:$0xf] %vm72, %v259
  %s266 = scalar_lea.vmem %s0, 40
  %v267 = vld [vmem:[%s266] sm:$0xff]
  %v268 = vpack.c.bf16 %v267, %v267
  %v270 = vsel %vm28, %v268, 0
  %272 = vmatprep.subr.bf16.mxu0 0
  %273 = vmatpush1.bf16.msra.mxu0 %v270
  %274 = vmatprep.subr.bf16.mxu0 0
  %275 = vmatpush1.bf16.msra.mxu0 0
  %276 = vmatprep.subr.bf16.mxu0 0
  %277 = vmatpush1.bf16.msra.mxu0 0
  %278 = vmatprep.subr.bf16.mxu0 0
  %279 = vmatpush1.bf16.msra.mxu0 0
  %280 = vmatprep.subr.bf16.mxu0 0
  %281 = vmatpush1.bf16.msra.mxu0 0
  %282 = vmatprep.subr.bf16.mxu0 0
  %283 = vmatpush1.bf16.msra.mxu0 0
  %284 = vmatprep.subr.bf16.mxu0 0
  %285 = vmatpush1.bf16.msra.mxu0 0
  %286 = vmatprep.subr.bf16.mxu0 0
  %287 = vmatpush1.bf16.msra.mxu0 0
  %288 = vmatprep.subr.bf16.mxu0 0
  %289 = vmatpush1.bf16.msra.mxu0 0
  %290 = vmatprep.subr.bf16.mxu0 0
  %291 = vmatpush1.bf16.msra.mxu0 0
  %292 = vmatprep.subr.bf16.mxu0 0
  %293 = vmatpush1.bf16.msra.mxu0 0
  %294 = vmatprep.subr.bf16.mxu0 0
  %295 = vmatpush1.bf16.msra.mxu0 0
  %296 = vmatprep.subr.bf16.mxu0 0
  %297 = vmatpush1.bf16.msra.mxu0 0
  %298 = vmatprep.subr.bf16.mxu0 0
  %299 = vmatpush1.bf16.msra.mxu0 0
  %300 = vmatprep.subr.bf16.mxu0 0
  %301 = vmatpush1.bf16.msra.mxu0 0
  %302 = vmatprep.subr.bf16.mxu0 0
  %303 = vmatpush1.bf16.msra.mxu0 0
  %304 = vmatprep.mubr.bf16.mxu0 0
  %305 = vmatmul.mubr.bf16.gmra.mrb[0].mxu0 %v26
  %v306 = vpop.f32.mrb[0].mxu0
  %v307 = vadd.f32 %v22, %v306
  %v308 = vpop.f32.mrb[0].mxu0
  %v309 = vpop.f32.mrb[0].mxu0
  %v310 = vpop.f32.mrb[0].mxu0
  %311 = vdwg.mxu0
  %s312 = scalar_lea.vmem %s3, 20
  %313 = vst.msk [vmem:[%s312] sm:$0xf] %vm72, %v307
  %s314 = scalar_lea.vmem %s0, 48
  %v315 = vld [vmem:[%s314] sm:$0xff]
  %v316 = vpack.c.bf16 %v315, %v315
  %v318 = vsel %vm28, %v316, 0
  %320 = vmatprep.subr.bf16.mxu0 0
  %321 = vmatpush1.bf16.msra.mxu0 %v318
  %322 = vmatprep.subr.bf16.mxu0 0
  %323 = vmatpush1.bf16.msra.mxu0 0
  %324 = vmatprep.subr.bf16.mxu0 0
  %325 = vmatpush1.bf16.msra.mxu0 0
  %326 = vmatprep.subr.bf16.mxu0 0
  %327 = vmatpush1.bf16.msra.mxu0 0
  %328 = vmatprep.subr.bf16.mxu0 0
  %329 = vmatpush1.bf16.msra.mxu0 0
  %330 = vmatprep.subr.bf16.mxu0 0
  %331 = vmatpush1.bf16.msra.mxu0 0
  %332 = vmatprep.subr.bf16.mxu0 0
  %333 = vmatpush1.bf16.msra.mxu0 0
  %334 = vmatprep.subr.bf16.mxu0 0
  %335 = vmatpush1.bf16.msra.mxu0 0
  %336 = vmatprep.subr.bf16.mxu0 0
  %337 = vmatpush1.bf16.msra.mxu0 0
  %338 = vmatprep.subr.bf16.mxu0 0
  %339 = vmatpush1.bf16.msra.mxu0 0
  %340 = vmatprep.subr.bf16.mxu0 0
  %341 = vmatpush1.bf16.msra.mxu0 0
  %342 = vmatprep.subr.bf16.mxu0 0
  %343 = vmatpush1.bf16.msra.mxu0 0
  %344 = vmatprep.subr.bf16.mxu0 0
  %345 = vmatpush1.bf16.msra.mxu0 0
  %346 = vmatprep.subr.bf16.mxu0 0
  %347 = vmatpush1.bf16.msra.mxu0 0
  %348 = vmatprep.subr.bf16.mxu0 0
  %349 = vmatpush1.bf16.msra.mxu0 0
  %350 = vmatprep.subr.bf16.mxu0 0
  %351 = vmatpush1.bf16.msra.mxu0 0
  %352 = vmatprep.mubr.bf16.mxu0 0
  %353 = vmatmul.mubr.bf16.gmra.mrb[0].mxu0 %v26
  %v354 = vpop.f32.mrb[0].mxu0
  %v355 = vadd.f32 %v22, %v354
  %v356 = vpop.f32.mrb[0].mxu0
  %v357 = vpop.f32.mrb[0].mxu0
  %v358 = vpop.f32.mrb[0].mxu0
  %359 = vdwg.mxu0
  %s360 = scalar_lea.vmem %s3, 24
  %361 = vst.msk [vmem:[%s360] sm:$0xf] %vm72, %v355
  %s362 = scalar_lea.vmem %s0, 56
  %v363 = vld [vmem:[%s362] sm:$0xff]
  %v364 = vpack.c.bf16 %v363, %v363
  %v366 = vsel %vm28, %v364, 0
  %368 = vmatprep.subr.bf16.mxu0 0
  %369 = vmatpush1.bf16.msra.mxu0 %v366
  %370 = vmatprep.subr.bf16.mxu0 0
  %371 = vmatpush1.bf16.msra.mxu0 0
  %372 = vmatprep.subr.bf16.mxu0 0
  %373 = vmatpush1.bf16.msra.mxu0 0
  %374 = vmatprep.subr.bf16.mxu0 0
  %375 = vmatpush1.bf16.msra.mxu0 0
  %376 = vmatprep.subr.bf16.mxu0 0
  %377 = vmatpush1.bf16.msra.mxu0 0
  %378 = vmatprep.subr.bf16.mxu0 0
  %379 = vmatpush1.bf16.msra.mxu0 0
  %380 = vmatprep.subr.bf16.mxu0 0
  %381 = vmatpush1.bf16.msra.mxu0 0
  %382 = vmatprep.subr.bf16.mxu0 0
  %383 = vmatpush1.bf16.msra.mxu0 0
  %384 = vmatprep.subr.bf16.mxu0 0
  %385 = vmatpush1.bf16.msra.mxu0 0
  %386 = vmatprep.subr.bf16.mxu0 0
  %387 = vmatpush1.bf16.msra.mxu0 0
  %388 = vmatprep.subr.bf16.mxu0 0
  %389 = vmatpush1.bf16.msra.mxu0 0
  %390 = vmatprep.subr.bf16.mxu0 0
  %391 = vmatpush1.bf16.msra.mxu0 0
  %392 = vmatprep.subr.bf16.mxu0 0
  %393 = vmatpush1.bf16.msra.mxu0 0
  %394 = vmatprep.subr.bf16.mxu0 0
  %395 = vmatpush1.bf16.msra.mxu0 0
  %396 = vmatprep.subr.bf16.mxu0 0
  %397 = vmatpush1.bf16.msra.mxu0 0
  %398 = vmatprep.subr.bf16.mxu0 0
  %399 = vmatpush1.bf16.msra.mxu0 0
  %400 = vmatprep.mubr.bf16.mxu0 0
  %401 = vmatmul.mubr.bf16.gmra.mrb[0].mxu0 %v26
  %v402 = vpop.f32.mrb[0].mxu0
  %v403 = vadd.f32 %v22, %v402
  %v404 = vpop.f32.mrb[0].mxu0
  %v405 = vpop.f32.mrb[0].mxu0
  %v406 = vpop.f32.mrb[0].mxu0
  %407 = vdwg.mxu0
  %s408 = scalar_lea.vmem %s3, 28
  %409 = vst.msk [vmem:[%s408] sm:$0xf] %vm72, %v403
  // Predicated region
  $region14: #{_lambda_.20} parent=0 // pred_check
    _
  $region15: #{_lambda_.20} parent=0 // pred_check_branch
    %411 = sbr.rel (0) target = $region17
  $region16: #{_lambda_.20} parent=0 // pred_region
    _
  $region17: #{_lambda_.20} parent=0 // pred_fallthru
    _
  // Predicated region
  $region18: #{_lambda_.20} parent=0 // pred_check
    _
  $region19: #{_lambda_.20} parent=0 // pred_check_branch
    %413 = sbr.rel (0) target = $region21
  $region20: #{_lambda_.20} parent=0 // pred_region
    _
  $region21: #{_lambda_.20} parent=0 // pred_fallthru
    _

// kernel: _lambda_.21
$region0: #{_lambda_.21}
  #allocation0 [shape = 'u32[]', space=smem, size = 0x4, offset = 0x4, fixed_abs, tag = 'smem constant byte address 0x4 - core index']
  #allocation1 [shape = 'u32[144,128]{1,0:T(1,128)}', space=vmem, size = 0x12000, scoped, tag = 'internal scratch']
  %s0 = inlined_call_operand.vmem [shape: bf16[32,8], index: 0, kind: input, shape index: {}]
  %s1 = inlined_call_operand.vmem [shape: bf16[8,24], index: 1, kind: input, shape index: {}]
  %s2 = inlined_call_operand.vmem [shape: f32[1,24], index: 2, kind: input, shape index: {}]
  %s3 = inlined_call_operand.vmem [shape: f32[32,24], index: 3, kind: output, shape index: {}]
  %s4 = sld [smem:[#allocation0]]
  $region22: #{_lambda_.21} parent=0
    _
  %s6 = ssub.s32 1, %s4
  %s7 = scalar_select 0, %s6, %s4
  // Predicated region
  $region2: #{_lambda_.21} parent=0 // pred_check
    _
  $region3: #{_lambda_.21} parent=0 // pred_check_branch
    %9 = sbr.rel (0) target = $region5
  $region4: #{_lambda_.21} parent=0 // pred_region
    _
  $region5: #{_lambda_.21} parent=0 // pred_fallthru
    _
  // Predicated region
  $region6: #{_lambda_.21} parent=0 // pred_check
    _
  $region7: #{_lambda_.21} parent=0 // pred_check_branch
    %11 = sbr.rel (0) target = $region9
  $region8: #{_lambda_.21} parent=0 // pred_region
    _
  $region9: #{_lambda_.21} parent=0 // pred_fallthru
    _
  // Predicated region
  $region10: #{_lambda_.21} parent=0 // pred_check
    _
  $region11: #{_lambda_.21} parent=0 // pred_check_branch
    %13 = sbr.rel (0) target = $region13
  $region12: #{_lambda_.21} parent=0 // pred_region
    _
  $region13: #{_lambda_.21} parent=0 // pred_fallthru
    _
  %v15 = vld [vmem:[%s0] sm:$0xf]
  %v16 = vld [vmem:[%s0 + $0x4] sm:$0xf]
  %v17 = vld [vmem:[%s0 + $0x8] sm:$0xf]
  %v18 = vld [vmem:[%s0 + $0xc] sm:$0xf]
  %v19 = vld [vmem:[%s1] sm:$0xf]
  %v20 = vld [vmem:[%s2] sm:$0x1]
  %v22 = vlaneseq
  %v23 = vshrl.u32 %v22, 7
  %v24 = vsub.s32 0, %v23
  %v25 = vrot.slane %v20, %v24
  %v31 = vunpack.c.l.b16 %v15
  %v32 = vunpack.c.l.b16 %v16
  %v33 = vunpack.c.l.b16 %v17
  %v34 = vunpack.c.l.b16 %v18
  %v35 = vpack.c.b16 %v32, %v31
  %v36 = vpack.c.b16 %v34, %v33
  %vm37 = vcmask 64512
  %v39 = vsel %vm37, %v35, 0
  %v42 = vsel %vm37, %v36, 0
  %vm44 = vcmask 1043456
  %v46 = vsel %vm44, %v19, 0
  %48 = vmatprep.subr.bf16.mxu0 0
  %49 = vmatpush1.bf16.msra.mxu0 %v46
  %50 = vmatprep.subr.bf16.mxu0 0
  %51 = vmatpush1.bf16.msra.mxu0 0
  %52 = vmatprep.subr.bf16.mxu0 0
  %53 = vmatpush1.bf16.msra.mxu0 0
  %54 = vmatprep.subr.bf16.mxu0 0
  %55 = vmatpush1.bf16.msra.mxu0 0
  %56 = vmatprep.subr.bf16.mxu0 0
  %57 = vmatpush1.bf16.msra.mxu0 0
  %58 = vmatprep.subr.bf16.mxu0 0
  %59 = vmatpush1.bf16.msra.mxu0 0
  %60 = vmatprep.subr.bf16.mxu0 0
  %61 = vmatpush1.bf16.msra.mxu0 0
  %62 = vmatprep.subr.bf16.mxu0 0
  %63 = vmatpush1.bf16.msra.mxu0 0
  %64 = vmatprep.subr.bf16.mxu0 0
  %65 = vmatpush1.bf16.msra.mxu0 0
  %66 = vmatprep.subr.bf16.mxu0 0
  %67 = vmatpush1.bf16.msra.mxu0 0
  %68 = vmatprep.subr.bf16.mxu0 0
  %69 = vmatpush1.bf16.msra.mxu0 0
  %70 = vmatprep.subr.bf16.mxu0 0
  %71 = vmatpush1.bf16.msra.mxu0 0
  %72 = vmatprep.subr.bf16.mxu0 0
  %73 = vmatpush1.bf16.msra.mxu0 0
  %74 = vmatprep.subr.bf16.mxu0 0
  %75 = vmatpush1.bf16.msra.mxu0 0
  %76 = vmatprep.subr.bf16.mxu0 0
  %77 = vmatpush1.bf16.msra.mxu0 0
  %78 = vmatprep.subr.bf16.mxu0 0
  %79 = vmatpush1.bf16.msra.mxu0 0
  %80 = vmatprep.mubr.bf16.mxu0 0
  %81 = vmatmul.mubr.bf16.gmra.mrb[0].mxu0 %v39
  %v82 = vpop.f32.mrb[0].mxu0
  %v83 = vadd.f32 %v25, %v82
  %v84 = vpop.f32.mrb[0].mxu0
  %v85 = vpop.f32.mrb[0].mxu0
  %v86 = vadd.f32 %v25, %v85
  %v87 = vpop.f32.mrb[0].mxu0
  %88 = vmatprep.mubr.bf16.mxu0 0
  %89 = vmatmul.mubr.bf16.gmra.mrb[0].mxu0 %v42
  %v90 = vpop.f32.mrb[0].mxu0
  %v91 = vadd.f32 %v25, %v90
  %v92 = vpop.f32.mrb[0].mxu0
  %v93 = vpop.f32.mrb[0].mxu0
  %v94 = vadd.f32 %v25, %v93
  %v95 = vpop.f32.mrb[0].mxu0
  %96 = vdwg.mxu0
  %vm97 = vcmask 195584
  %98 = vst.msk [vmem:[%s3] sm:$0xff] %vm97, %v83
  %99 = vst.msk [vmem:[%s3 + $0x8] sm:$0xff] %vm97, %v86
  %100 = vst.msk [vmem:[%s3 + $0x10] sm:$0xff] %vm97, %v91
  %101 = vst.msk [vmem:[%s3 + $0x18] sm:$0xff] %vm97, %v94
  // Predicated region
  $region14: #{_lambda_.21} parent=0 // pred_check
    _
  $region15: #{_lambda_.21} parent=0 // pred_check_branch
    %103 = sbr.rel (0) target = $region17
  $region16: #{_lambda_.21} parent=0 // pred_region
    _
  $region17: #{_lambda_.21} parent=0 // pred_fallthru
    _
  // Predicated region
  $region18: #{_lambda_.21} parent=0 // pred_check
    _
  $region19: #{_lambda_.21} parent=0 // pred_check_branch
    %105 = sbr.rel (0) target = $region21
  $region20: #{_lambda_.21} parent=0 // pred_region
    _
  $region21: #{_lambda_.21} parent=0 // pred_fallthru
    _

// kernel: _lambda_.23
$region0: #{_lambda_.23}
  #allocation0 [shape = 'u32[]', space=smem, size = 0x4, offset = 0x4, fixed_abs, tag = 'smem constant byte address 0x4 - core index']
  #allocation1 [shape = 'u32[144,128]{1,0:T(1,128)}', space=vmem, size = 0x12000, scoped, tag = 'internal scratch']
  %s0 = inlined_call_operand.vmem [shape: bf16[32,8], index: 0, kind: input, shape index: {}]
  %s1 = inlined_call_operand.vmem [shape: bf16[8,8], index: 1, kind: input, shape index: {}]
  %s2 = inlined_call_operand.vmem [shape: f32[1,8], index: 2, kind: input, shape index: {}]
  %s3 = inlined_call_operand.vmem [shape: f32[32,8], index: 3, kind: output, shape index: {}]
  %s4 = sld [smem:[#allocation0]]
  $region22: #{_lambda_.23} parent=0
    _
  %s6 = ssub.s32 1, %s4
  %s7 = scalar_select 0, %s6, %s4
  // Predicated region
  $region2: #{_lambda_.23} parent=0 // pred_check
    _
  $region3: #{_lambda_.23} parent=0 // pred_check_branch
    %9 = sbr.rel (0) target = $region5
  $region4: #{_lambda_.23} parent=0 // pred_region
    _
  $region5: #{_lambda_.23} parent=0 // pred_fallthru
    _
  // Predicated region
  $region6: #{_lambda_.23} parent=0 // pred_check
    _
  $region7: #{_lambda_.23} parent=0 // pred_check_branch
    %11 = sbr.rel (0) target = $region9
  $region8: #{_lambda_.23} parent=0 // pred_region
    _
  $region9: #{_lambda_.23} parent=0 // pred_fallthru
    _
  // Predicated region
  $region10: #{_lambda_.23} parent=0 // pred_check
    _
  $region11: #{_lambda_.23} parent=0 // pred_check_branch
    %13 = sbr.rel (0) target = $region13
  $region12: #{_lambda_.23} parent=0 // pred_region
    _
  $region13: #{_lambda_.23} parent=0 // pred_fallthru
    _
  %v15 = vld [vmem:[%s0] sm:$0xf]
  %v16 = vld [vmem:[%s0 + $0x4] sm:$0xf]
  %v17 = vld [vmem:[%s0 + $0x8] sm:$0xf]
  %v18 = vld [vmem:[%s0 + $0xc] sm:$0xf]
  %v19 = vld [vmem:[%s1] sm:$0xf]
  %v20 = vld [vmem:[%s2] sm:$0x1]
  %v22 = vlaneseq
  %v23 = vshrl.u32 %v22, 7
  %v24 = vsub.s32 0, %v23
  %v25 = vrot.slane %v20, %v24
  %v31 = vunpack.c.l.b16 %v15
  %v32 = vunpack.c.l.b16 %v16
  %v33 = vunpack.c.l.b16 %v17
  %v34 = vunpack.c.l.b16 %v18
  %v35 = vpack.c.b16 %v32, %v31
  %v36 = vpack.c.b16 %v34, %v33
  %vm37 = vcmask 64512
  %v39 = vsel %vm37, %v35, 0
  %v42 = vsel %vm37, %v36, 0
  %vm44 = vcmask 1043456
  %v46 = vsel %vm44, %v19, 0
  %48 = vmatprep.subr.bf16.mxu0 0
  %49 = vmatpush1.bf16.msra.mxu0 %v46
  %50 = vmatprep.subr.bf16.mxu0 0
  %51 = vmatpush1.bf16.msra.mxu0 0
  %52 = vmatprep.subr.bf16.mxu0 0
  %53 = vmatpush1.bf16.msra.mxu0 0
  %54 = vmatprep.subr.bf16.mxu0 0
  %55 = vmatpush1.bf16.msra.mxu0 0
  %56 = vmatprep.subr.bf16.mxu0 0
  %57 = vmatpush1.bf16.msra.mxu0 0
  %58 = vmatprep.subr.bf16.mxu0 0
  %59 = vmatpush1.bf16.msra.mxu0 0
  %60 = vmatprep.subr.bf16.mxu0 0
  %61 = vmatpush1.bf16.msra.mxu0 0
  %62 = vmatprep.subr.bf16.mxu0 0
  %63 = vmatpush1.bf16.msra.mxu0 0
  %64 = vmatprep.subr.bf16.mxu0 0
  %65 = vmatpush1.bf16.msra.mxu0 0
  %66 = vmatprep.subr.bf16.mxu0 0
  %67 = vmatpush1.bf16.msra.mxu0 0
  %68 = vmatprep.subr.bf16.mxu0 0
  %69 = vmatpush1.bf16.msra.mxu0 0
  %70 = vmatprep.subr.bf16.mxu0 0
  %71 = vmatpush1.bf16.msra.mxu0 0
  %72 = vmatprep.subr.bf16.mxu0 0
  %73 = vmatpush1.bf16.msra.mxu0 0
  %74 = vmatprep.subr.bf16.mxu0 0
  %75 = vmatpush1.bf16.msra.mxu0 0
  %76 = vmatprep.subr.bf16.mxu0 0
  %77 = vmatpush1.bf16.msra.mxu0 0
  %78 = vmatprep.subr.bf16.mxu0 0
  %79 = vmatpush1.bf16.msra.mxu0 0
  %80 = vmatprep.mubr.bf16.mxu0 0
  %81 = vmatmul.mubr.bf16.gmra.mrb[0].mxu0 %v39
  %v82 = vpop.f32.mrb[0].mxu0
  %v83 = vadd.f32 %v25, %v82
  %v84 = vpop.f32.mrb[0].mxu0
  %v85 = vpop.f32.mrb[0].mxu0
  %v86 = vadd.f32 %v25, %v85
  %v87 = vpop.f32.mrb[0].mxu0
  %88 = vmatprep.mubr.bf16.mxu0 0
  %89 = vmatmul.mubr.bf16.gmra.mrb[0].mxu0 %v42
  %v90 = vpop.f32.mrb[0].mxu0
  %v91 = vadd.f32 %v25, %v90
  %v92 = vpop.f32.mrb[0].mxu0
  %v93 = vpop.f32.mrb[0].mxu0
  %v94 = vadd.f32 %v25, %v93
  %v95 = vpop.f32.mrb[0].mxu0
  %96 = vdwg.mxu0
  %97 = vst.msk [vmem:[%s3] sm:$0xff] %vm37, %v83
  %98 = vst.msk [vmem:[%s3 + $0x8] sm:$0xff] %vm37, %v86
  %99 = vst.msk [vmem:[%s3 + $0x10] sm:$0xff] %vm37, %v91
  %100 = vst.msk [vmem:[%s3 + $0x18] sm:$0xff] %vm37, %v94
  // Predicated region
  $region14: #{_lambda_.23} parent=0 // pred_check
    _
  $region15: #{_lambda_.23} parent=0 // pred_check_branch
    %102 = sbr.rel (0) target = $region17
  $region16: #{_lambda_.23} parent=0 // pred_region
    _
  $region17: #{_lambda_.23} parent=0 // pred_fallthru
    _
  // Predicated region
  $region18: #{_lambda_.23} parent=0 // pred_check
    _
  $region19: #{_lambda_.23} parent=0 // pred_check_branch
    %104 = sbr.rel (0) target = $region21
  $region20: #{_lambda_.23} parent=0 // pred_region
    _
  $region21: #{_lambda_.23} parent=0 // pred_fallthru
    _

// kernel: _lambda_.32
$region0: #{_lambda_.32}
  #allocation0 [shape = 'u32[]', space=smem, size = 0x4, offset = 0x4, fixed_abs, tag = 'smem constant byte address 0x4 - core index']
  #allocation1 [shape = 'u32[144,128]{1,0:T(1,128)}', space=vmem, size = 0x12000, scoped, tag = 'internal scratch']
  #allocation2 [shape = 'f32[1,1]{1,0:T(1,128)S(6)}', space=smem, size = 0x200, scoped, tag = 'scoped memory for _lambda_.32']
  %s0 = inlined_call_operand.vmem [shape: bf16[64,8], index: 0, kind: input, shape index: {}]
  %s1 = inlined_call_operand.vmem [shape: bf16[8,8], index: 1, kind: input, shape index: {}]
  %s2 = inlined_call_operand.vmem [shape: f32[1,8], index: 2, kind: input, shape index: {}]
  %s3 = inlined_call_operand.<no memory space> [shape: f32[1,1], index: 3, kind: input, shape index: {}]
  %s4 = inlined_call_operand.vmem [shape: f32[64,8], index: 4, kind: output, shape index: {}]
  %s5 = sld [smem:[#allocation0]]
  $region26: #{_lambda_.32} parent=0
    _
  %s7 = ssub.s32 1, %s5
  %s8 = scalar_select 0, %s7, %s5
  %9 = sst [smem:[#allocation2]] %s3
  // Predicated region
  $region2: #{_lambda_.32} parent=0 // pred_check
    _
  $region3: #{_lambda_.32} parent=0 // pred_check_branch
    %11 = sbr.rel (0) target = $region5
  $region4: #{_lambda_.32} parent=0 // pred_region
    _
  $region5: #{_lambda_.32} parent=0 // pred_fallthru
    _
  // Predicated region
  $region6: #{_lambda_.32} parent=0 // pred_check
    _
  $region7: #{_lambda_.32} parent=0 // pred_check_branch
    %13 = sbr.rel (0) target = $region9
  $region8: #{_lambda_.32} parent=0 // pred_region
    _
  $region9: #{_lambda_.32} parent=0 // pred_fallthru
    _
  // Predicated region
  $region10: #{_lambda_.32} parent=0 // pred_check
    _
  $region11: #{_lambda_.32} parent=0 // pred_check_branch
    %15 = sbr.rel (0) target = $region13
  $region12: #{_lambda_.32} parent=0 // pred_region
    _
  $region13: #{_lambda_.32} parent=0 // pred_fallthru
    _
  // Predicated region
  $region14: #{_lambda_.32} parent=0 // pred_check
    _
  $region15: #{_lambda_.32} parent=0 // pred_check_branch
    %17 = sbr.rel (0) target = $region17
  $region16: #{_lambda_.32} parent=0 // pred_region
    _
  $region17: #{_lambda_.32} parent=0 // pred_fallthru
    _
  %s19 = sld [smem:[#allocation2]]
  %v20 = vld [vmem:[%s0] sm:$0xf]
  %v21 = vld [vmem:[%s0 + $0x4] sm:$0xf]
  %v22 = vld [vmem:[%s0 + $0x8] sm:$0xf]
  %v23 = vld [vmem:[%s0 + $0xc] sm:$0xf]
  %v24 = vld [vmem:[%s0 + $0x10] sm:$0xf]
  %v25 = vld [vmem:[%s0 + $0x14] sm:$0xf]
  %v26 = vld [vmem:[%s0 + $0x18] sm:$0xf]
  %v27 = vld [vmem:[%s0 + $0x1c] sm:$0xf]
  %v28 = vunpack.c.l.bf16 %v20
  %v29 = vunpack.c.l.bf16 %v21
  %v30 = vunpack.c.l.bf16 %v22
  %v31 = vunpack.c.l.bf16 %v23
  %v32 = vunpack.c.l.bf16 %v24
  %v33 = vunpack.c.l.bf16 %v25
  %v34 = vunpack.c.l.bf16 %v26
  %v35 = vunpack.c.l.bf16 %v27
  %vm36 = vcmp.ge.f32.partialorder %v28, 0.0
  %vm37 = vcmp.ge.f32.partialorder %v29, 0.0
  %vm38 = vcmp.ge.f32.partialorder %v30, 0.0
  %vm39 = vcmp.ge.f32.partialorder %v31, 0.0
  %vm40 = vcmp.ge.f32.partialorder %v32, 0.0
  %vm41 = vcmp.ge.f32.partialorder %v33, 0.0
  %vm42 = vcmp.ge.f32.partialorder %v34, 0.0
  %vm43 = vcmp.ge.f32.partialorder %v35, 0.0
  %v44 = vstv %s19
  %v45 = vmul.f32 %v44, %v28
  %v46 = vmul.f32 %v44, %v29
  %v47 = vmul.f32 %v44, %v30
  %v48 = vmul.f32 %v44, %v31
  %v49 = vmul.f32 %v44, %v32
  %v50 = vmul.f32 %v44, %v33
  %v51 = vmul.f32 %v44, %v34
  %v52 = vmul.f32 %v44, %v35
  %v53 = vsel %vm36, %v28, %v45
  %v54 = vsel %vm37, %v29, %v46
  %v55 = vsel %vm38, %v30, %v47
  %v56 = vsel %vm39, %v31, %v48
  %v57 = vsel %vm40, %v32, %v49
  %v58 = vsel %vm41, %v33, %v50
  %v59 = vsel %vm42, %v34, %v51
  %v60 = vsel %vm43, %v35, %v52
  %v61 = vpack.c.bf16 %v54, %v53
  %v62 = vpack.c.bf16 %v56, %v55
  %v63 = vpack.c.bf16 %v58, %v57
  %v64 = vpack.c.bf16 %v60, %v59
  %v65 = vld [vmem:[%s1] sm:$0xf]
  %v66 = vld [vmem:[%s2] sm:$0x1]
  %v68 = vlaneseq
  %v69 = vshrl.u32 %v68, 7
  %v70 = vsub.s32 0, %v69
  %v71 = vrot.slane %v66, %v70
  %vm73 = vcmask 64512
  %v75 = vsel %vm73, %v61, 0
  %v78 = vsel %vm73, %v62, 0
  %v81 = vsel %vm73, %v63, 0
  %v84 = vsel %vm73, %v64, 0
  %vm86 = vcmask 1043456
  %v88 = vsel %vm86, %v65, 0
  %90 = vmatprep.subr.bf16.mxu0 0
  %91 = vmatpush1.bf16.msra.mxu0 %v88
  %92 = vmatprep.subr.bf16.mxu0 0
  %93 = vmatpush1.bf16.msra.mxu0 0
  %94 = vmatprep.subr.bf16.mxu0 0
  %95 = vmatpush1.bf16.msra.mxu0 0
  %96 = vmatprep.subr.bf16.mxu0 0
  %97 = vmatpush1.bf16.msra.mxu0 0
  %98 = vmatprep.subr.bf16.mxu0 0
  %99 = vmatpush1.bf16.msra.mxu0 0
  %100 = vmatprep.subr.bf16.mxu0 0
  %101 = vmatpush1.bf16.msra.mxu0 0
  %102 = vmatprep.subr.bf16.mxu0 0
  %103 = vmatpush1.bf16.msra.mxu0 0
  %104 = vmatprep.subr.bf16.mxu0 0
  %105 = vmatpush1.bf16.msra.mxu0 0
  %106 = vmatprep.subr.bf16.mxu0 0
  %107 = vmatpush1.bf16.msra.mxu0 0
  %108 = vmatprep.subr.bf16.mxu0 0
  %109 = vmatpush1.bf16.msra.mxu0 0
  %110 = vmatprep.subr.bf16.mxu0 0
  %111 = vmatpush1.bf16.msra.mxu0 0
  %112 = vmatprep.subr.bf16.mxu0 0
  %113 = vmatpush1.bf16.msra.mxu0 0
  %114 = vmatprep.subr.bf16.mxu0 0
  %115 = vmatpush1.bf16.msra.mxu0 0
  %116 = vmatprep.subr.bf16.mxu0 0
  %117 = vmatpush1.bf16.msra.mxu0 0
  %118 = vmatprep.subr.bf16.mxu0 0
  %119 = vmatpush1.bf16.msra.mxu0 0
  %120 = vmatprep.subr.bf16.mxu0 0
  %121 = vmatpush1.bf16.msra.mxu0 0
  %122 = vmatprep.mubr.bf16.mxu0 0
  %123 = vmatmul.mubr.bf16.gmra.mrb[0].mxu0 %v75
  %v124 = vpop.f32.mrb[0].mxu0
  %v125 = vadd.f32 %v71, %v124
  %v126 = vpop.f32.mrb[0].mxu0
  %v127 = vpop.f32.mrb[0].mxu0
  %v128 = vadd.f32 %v71, %v127
  %v129 = vpop.f32.mrb[0].mxu0
  %130 = vmatprep.mubr.bf16.mxu0 0
  %131 = vmatmul.mubr.bf16.gmra.mrb[0].mxu0 %v78
  %v132 = vpop.f32.mrb[0].mxu0
  %v133 = vadd.f32 %v71, %v132
  %v134 = vpop.f32.mrb[0].mxu0
  %v135 = vpop.f32.mrb[0].mxu0
  %v136 = vadd.f32 %v71, %v135
  %v137 = vpop.f32.mrb[0].mxu0
  %138 = vmatprep.mubr.bf16.mxu0 0
  %139 = vmatmul.mubr.bf16.gmra.mrb[0].mxu0 %v81
  %v140 = vpop.f32.mrb[0].mxu0
  %v141 = vadd.f32 %v71, %v140
  %v142 = vpop.f32.mrb[0].mxu0
  %v143 = vpop.f32.mrb[0].mxu0
  %v144 = vadd.f32 %v71, %v143
  %v145 = vpop.f32.mrb[0].mxu0
  %146 = vmatprep.mubr.bf16.mxu0 0
  %147 = vmatmul.mubr.bf16.gmra.mrb[0].mxu0 %v84
  %v148 = vpop.f32.mrb[0].mxu0
  %v149 = vadd.f32 %v71, %v148
  %v150 = vpop.f32.mrb[0].mxu0
  %v151 = vpop.f32.mrb[0].mxu0
  %v152 = vadd.f32 %v71, %v151
  %v153 = vpop.f32.mrb[0].mxu0
  %154 = vdwg.mxu0
  %155 = vst.msk [vmem:[%s4] sm:$0xff] %vm73, %v125
  %156 = vst.msk [vmem:[%s4 + $0x8] sm:$0xff] %vm73, %v128
  %157 = vst.msk [vmem:[%s4 + $0x10] sm:$0xff] %vm73, %v133
  %158 = vst.msk [vmem:[%s4 + $0x18] sm:$0xff] %vm73, %v136
  %159 = vst.msk [vmem:[%s4 + $0x20] sm:$0xff] %vm73, %v141
  %160 = vst.msk [vmem:[%s4 + $0x28] sm:$0xff] %vm73, %v144
  %161 = vst.msk [vmem:[%s4 + $0x30] sm:$0xff] %vm73, %v149
  %162 = vst.msk [vmem:[%s4 + $0x38] sm:$0xff] %vm73, %v152
  // Predicated region
  $region18: #{_lambda_.32} parent=0 // pred_check
    _
  $region19: #{_lambda_.32} parent=0 // pred_check_branch
    %164 = sbr.rel (0) target = $region21
  $region20: #{_lambda_.32} parent=0 // pred_region
    _
  $region21: #{_lambda_.32} parent=0 // pred_fallthru
    _
  // Predicated region
  $region22: #{_lambda_.32} parent=0 // pred_check
    _
  $region23: #{_lambda_.32} parent=0 // pred_check_branch
    %166 = sbr.rel (0) target = $region25
  $region24: #{_lambda_.32} parent=0 // pred_region
    _
  $region25: #{_lambda_.32} parent=0 // pred_fallthru
    _

// kernel: _lambda_.24
$region0: #{_lambda_.24}
  #allocation0 [shape = 'u32[]', space=smem, size = 0x4, offset = 0x4, fixed_abs, tag = 'smem constant byte address 0x4 - core index']
  #allocation1 [shape = 'u32[144,128]{1,0:T(1,128)}', space=vmem, size = 0x12000, scoped, tag = 'internal scratch']
  %s0 = inlined_call_operand.vmem [shape: f32[8,4,8], index: 0, kind: input, shape index: {}]
  %s1 = inlined_call_operand.vmem [shape: bf16[8,4], index: 1, kind: input, shape index: {}]
  %s2 = inlined_call_operand.vmem [shape: f32[8,1], index: 2, kind: input, shape index: {}]
  %s3 = inlined_call_operand.vmem [shape: f32[8,8,8], index: 3, kind: input, shape index: {}]
  %s4 = inlined_call_operand.vmem [shape: f32[8,8,8], index: 4, kind: output, shape index: {}]
  %s5 = sld [smem:[#allocation0]]
  $region26: #{_lambda_.24} parent=0
    _
  %s7 = ssub.s32 1, %s5
  %s8 = scalar_select 0, %s7, %s5
  // Predicated region
  $region2: #{_lambda_.24} parent=0 // pred_check
    _
  $region3: #{_lambda_.24} parent=0 // pred_check_branch
    %10 = sbr.rel (0) target = $region5
  $region4: #{_lambda_.24} parent=0 // pred_region
    _
  $region5: #{_lambda_.24} parent=0 // pred_fallthru
    _
  // Predicated region
  $region6: #{_lambda_.24} parent=0 // pred_check
    _
  $region7: #{_lambda_.24} parent=0 // pred_check_branch
    %12 = sbr.rel (0) target = $region9
  $region8: #{_lambda_.24} parent=0 // pred_region
    _
  $region9: #{_lambda_.24} parent=0 // pred_fallthru
    _
  // Predicated region
  $region10: #{_lambda_.24} parent=0 // pred_check
    _
  $region11: #{_lambda_.24} parent=0 // pred_check_branch
    %14 = sbr.rel (0) target = $region13
  $region12: #{_lambda_.24} parent=0 // pred_region
    _
  $region13: #{_lambda_.24} parent=0 // pred_fallthru
    _
  // Predicated region
  $region14: #{_lambda_.24} parent=0 // pred_check
    _
  $region15: #{_lambda_.24} parent=0 // pred_check_branch
    %16 = sbr.rel (0) target = $region17
  $region16: #{_lambda_.24} parent=0 // pred_region
    _
  $region17: #{_lambda_.24} parent=0 // pred_fallthru
    _
  %v18 = vld [vmem:[%s1] sm:$0xf]
  %v19 = vld [vmem:[%s2] sm:$0xff]
  %v20 = vld [vmem:[%s0] sm:$0xf]
  %v21 = vpack.c.bf16 %v20, %v20
  %23 = vset.pattern.permute.xlu0 0
  %24 = vperm.xlu0 %23, %v19
  %v25 = vpop.permute.xlu0 %24
  %vm27 = vcmask 31744
  %v29 = vsel %vm27, %v18, 0
  %vm31 = vcmask 1041408
  %v33 = vsel %vm31, %v21, 0
  %35 = vmatprep.subr.bf16.mxu0 0
  %36 = vmatpush1.bf16.msra.mxu0 %v33
  %37 = vmatprep.subr.bf16.mxu0 0
  %38 = vmatpush1.bf16.msra.mxu0 0
  %39 = vmatprep.subr.bf16.mxu0 0
  %40 = vmatpush1.bf16.msra.mxu0 0
  %41 = vmatprep.subr.bf16.mxu0 0
  %42 = vmatpush1.bf16.msra.mxu0 0
  %43 = vmatprep.subr.bf16.mxu0 0
  %44 = vmatpush1.bf16.msra.mxu0 0
  %45 = vmatprep.subr.bf16.mxu0 0
  %46 = vmatpush1.bf16.msra.mxu0 0
  %47 = vmatprep.subr.bf16.mxu0 0
  %48 = vmatpush1.bf16.msra.mxu0 0
  %49 = vmatprep.subr.bf16.mxu0 0
  %50 = vmatpush1.bf16.msra.mxu0 0
  %51 = vmatprep.subr.bf16.mxu0 0
  %52 = vmatpush1.bf16.msra.mxu0 0
  %53 = vmatprep.subr.bf16.mxu0 0
  %54 = vmatpush1.bf16.msra.mxu0 0
  %55 = vmatprep.subr.bf16.mxu0 0
  %56 = vmatpush1.bf16.msra.mxu0 0
  %57 = vmatprep.subr.bf16.mxu0 0
  %58 = vmatpush1.bf16.msra.mxu0 0
  %59 = vmatprep.subr.bf16.mxu0 0
  %60 = vmatpush1.bf16.msra.mxu0 0
  %61 = vmatprep.subr.bf16.mxu0 0
  %62 = vmatpush1.bf16.msra.mxu0 0
  %63 = vmatprep.subr.bf16.mxu0 0
  %64 = vmatpush1.bf16.msra.mxu0 0
  %65 = vmatprep.subr.bf16.mxu0 0
  %66 = vmatpush1.bf16.msra.mxu0 0
  %67 = vmatprep.mubr.bf16.mxu0 0
  %68 = vmatmul.mubr.bf16.gmra.mrb[0].mxu0 %v29
  %v69 = vpop.f32.mrb[0].mxu0
  %v70 = vadd.f32 %v25, %v69
  %v71 = vpop.f32.mrb[0].mxu0
  %v72 = vpop.f32.mrb[0].mxu0
  %v73 = vpop.f32.mrb[0].mxu0
  %74 = vdwg.mxu0
  %v75 = vld [vmem:[%s3] sm:$0xff]
  %v76 = vadd.f32 %v70, %v75
  %vm77 = vcmask 64512
  %78 = vst.msk [vmem:[%s4] sm:$0xff] %vm77, %v76
  %s79 = scalar_lea.vmem %s0, 4
  %v80 = vld [vmem:[%s79] sm:$0xf]
  %v81 = vpack.c.bf16 %v80, %v80
  %v83 = vsel %vm31, %v81, 0
  %85 = vmatprep.subr.bf16.mxu0 0
  %86 = vmatpush1.bf16.msra.mxu0 %v83
  %87 = vmatprep.subr.bf16.mxu0 0
  %88 = vmatpush1.bf16.msra.mxu0 0
  %89 = vmatprep.subr.bf16.mxu0 0
  %90 = vmatpush1.bf16.msra.mxu0 0
  %91 = vmatprep.subr.bf16.mxu0 0
  %92 = vmatpush1.bf16.msra.mxu0 0
  %93 = vmatprep.subr.bf16.mxu0 0
  %94 = vmatpush1.bf16.msra.mxu0 0
  %95 = vmatprep.subr.bf16.mxu0 0
  %96 = vmatpush1.bf16.msra.mxu0 0
  %97 = vmatprep.subr.bf16.mxu0 0
  %98 = vmatpush1.bf16.msra.mxu0 0
  %99 = vmatprep.subr.bf16.mxu0 0
  %100 = vmatpush1.bf16.msra.mxu0 0
  %101 = vmatprep.subr.bf16.mxu0 0
  %102 = vmatpush1.bf16.msra.mxu0 0
  %103 = vmatprep.subr.bf16.mxu0 0
  %104 = vmatpush1.bf16.msra.mxu0 0
  %105 = vmatprep.subr.bf16.mxu0 0
  %106 = vmatpush1.bf16.msra.mxu0 0
  %107 = vmatprep.subr.bf16.mxu0 0
  %108 = vmatpush1.bf16.msra.mxu0 0
  %109 = vmatprep.subr.bf16.mxu0 0
  %110 = vmatpush1.bf16.msra.mxu0 0
  %111 = vmatprep.subr.bf16.mxu0 0
  %112 = vmatpush1.bf16.msra.mxu0 0
  %113 = vmatprep.subr.bf16.mxu0 0
  %114 = vmatpush1.bf16.msra.mxu0 0
  %115 = vmatprep.subr.bf16.mxu0 0
  %116 = vmatpush1.bf16.msra.mxu0 0
  %117 = vmatprep.mubr.bf16.mxu0 0
  %118 = vmatmul.mubr.bf16.gmra.mrb[0].mxu0 %v29
  %v119 = vpop.f32.mrb[0].mxu0
  %v120 = vadd.f32 %v25, %v119
  %v121 = vpop.f32.mrb[0].mxu0
  %v122 = vpop.f32.mrb[0].mxu0
  %v123 = vpop.f32.mrb[0].mxu0
  %124 = vdwg.mxu0
  %s125 = scalar_lea.vmem %s3, 8
  %v126 = vld [vmem:[%s125] sm:$0xff]
  %v127 = vadd.f32 %v120, %v126
  %s128 = scalar_lea.vmem %s4, 8
  %129 = vst.msk [vmem:[%s128] sm:$0xff] %vm77, %v127
  %s130 = scalar_lea.vmem %s0, 8
  %v131 = vld [vmem:[%s130] sm:$0xf]
  %v132 = vpack.c.bf16 %v131, %v131
  %v134 = vsel %vm31, %v132, 0
  %136 = vmatprep.subr.bf16.mxu0 0
  %137 = vmatpush1.bf16.msra.mxu0 %v134
  %138 = vmatprep.subr.bf16.mxu0 0
  %139 = vmatpush1.bf16.msra.mxu0 0
  %140 = vmatprep.subr.bf16.mxu0 0
  %141 = vmatpush1.bf16.msra.mxu0 0
  %142 = vmatprep.subr.bf16.mxu0 0
  %143 = vmatpush1.bf16.msra.mxu0 0
  %144 = vmatprep.subr.bf16.mxu0 0
  %145 = vmatpush1.bf16.msra.mxu0 0
  %146 = vmatprep.subr.bf16.mxu0 0
  %147 = vmatpush1.bf16.msra.mxu0 0
  %148 = vmatprep.subr.bf16.mxu0 0
  %149 = vmatpush1.bf16.msra.mxu0 0
  %150 = vmatprep.subr.bf16.mxu0 0
  %151 = vmatpush1.bf16.msra.mxu0 0
  %152 = vmatprep.subr.bf16.mxu0 0
  %153 = vmatpush1.bf16.msra.mxu0 0
  %154 = vmatprep.subr.bf16.mxu0 0
  %155 = vmatpush1.bf16.msra.mxu0 0
  %156 = vmatprep.subr.bf16.mxu0 0
  %157 = vmatpush1.bf16.msra.mxu0 0
  %158 = vmatprep.subr.bf16.mxu0 0
  %159 = vmatpush1.bf16.msra.mxu0 0
  %160 = vmatprep.subr.bf16.mxu0 0
  %161 = vmatpush1.bf16.msra.mxu0 0
  %162 = vmatprep.subr.bf16.mxu0 0
  %163 = vmatpush1.bf16.msra.mxu0 0
  %164 = vmatprep.subr.bf16.mxu0 0
  %165 = vmatpush1.bf16.msra.mxu0 0
  %166 = vmatprep.subr.bf16.mxu0 0
  %167 = vmatpush1.bf16.msra.mxu0 0
  %168 = vmatprep.mubr.bf16.mxu0 0
  %169 = vmatmul.mubr.bf16.gmra.mrb[0].mxu0 %v29
  %v170 = vpop.f32.mrb[0].mxu0
  %v171 = vadd.f32 %v25, %v170
  %v172 = vpop.f32.mrb[0].mxu0
  %v173 = vpop.f32.mrb[0].mxu0
  %v174 = vpop.f32.mrb[0].mxu0
  %175 = vdwg.mxu0
  %s176 = scalar_lea.vmem %s3, 16
  %v177 = vld [vmem:[%s176] sm:$0xff]
  %v178 = vadd.f32 %v171, %v177
  %s179 = scalar_lea.vmem %s4, 16
  %180 = vst.msk [vmem:[%s179] sm:$0xff] %vm77, %v178
  %s181 = scalar_lea.vmem %s0, 12
  %v182 = vld [vmem:[%s181] sm:$0xf]
  %v183 = vpack.c.bf16 %v182, %v182
  %v185 = vsel %vm31, %v183, 0
  %187 = vmatprep.subr.bf16.mxu0 0
  %188 = vmatpush1.bf16.msra.mxu0 %v185
  %189 = vmatprep.subr.bf16.mxu0 0
  %190 = vmatpush1.bf16.msra.mxu0 0
  %191 = vmatprep.subr.bf16.mxu0 0
  %192 = vmatpush1.bf16.msra.mxu0 0
  %193 = vmatprep.subr.bf16.mxu0 0
  %194 = vmatpush1.bf16.msra.mxu0 0
  %195 = vmatprep.subr.bf16.mxu0 0
  %196 = vmatpush1.bf16.msra.mxu0 0
  %197 = vmatprep.subr.bf16.mxu0 0
  %198 = vmatpush1.bf16.msra.mxu0 0
  %199 = vmatprep.subr.bf16.mxu0 0
  %200 = vmatpush1.bf16.msra.mxu0 0
  %201 = vmatprep.subr.bf16.mxu0 0
  %202 = vmatpush1.bf16.msra.mxu0 0
  %203 = vmatprep.subr.bf16.mxu0 0
  %204 = vmatpush1.bf16.msra.mxu0 0
  %205 = vmatprep.subr.bf16.mxu0 0
  %206 = vmatpush1.bf16.msra.mxu0 0
  %207 = vmatprep.subr.bf16.mxu0 0
  %208 = vmatpush1.bf16.msra.mxu0 0
  %209 = vmatprep.subr.bf16.mxu0 0
  %210 = vmatpush1.bf16.msra.mxu0 0
  %211 = vmatprep.subr.bf16.mxu0 0
  %212 = vmatpush1.bf16.msra.mxu0 0
  %213 = vmatprep.subr.bf16.mxu0 0
  %214 = vmatpush1.bf16.msra.mxu0 0
  %215 = vmatprep.subr.bf16.mxu0 0
  %216 = vmatpush1.bf16.msra.mxu0 0
  %217 = vmatprep.subr.bf16.mxu0 0
  %218 = vmatpush1.bf16.msra.mxu0 0
  %219 = vmatprep.mubr.bf16.mxu0 0
  %220 = vmatmul.mubr.bf16.gmra.mrb[0].mxu0 %v29
  %v221 = vpop.f32.mrb[0].mxu0
  %v222 = vadd.f32 %v25, %v221
  %v223 = vpop.f32.mrb[0].mxu0
  %v224 = vpop.f32.mrb[0].mxu0
  %v225 = vpop.f32.mrb[0].mxu0
  %226 = vdwg.mxu0
  %s227 = scalar_lea.vmem %s3, 24
  %v228 = vld [vmem:[%s227] sm:$0xff]
  %v229 = vadd.f32 %v222, %v228
  %s230 = scalar_lea.vmem %s4, 24
  %231 = vst.msk [vmem:[%s230] sm:$0xff] %vm77, %v229
  %s232 = scalar_lea.vmem %s0, 16
  %v233 = vld [vmem:[%s232] sm:$0xf]
  %v234 = vpack.c.bf16 %v233, %v233
  %v236 = vsel %vm31, %v234, 0
  %238 = vmatprep.subr.bf16.mxu0 0
  %239 = vmatpush1.bf16.msra.mxu0 %v236
  %240 = vmatprep.subr.bf16.mxu0 0
  %241 = vmatpush1.bf16.msra.mxu0 0
  %242 = vmatprep.subr.bf16.mxu0 0
  %243 = vmatpush1.bf16.msra.mxu0 0
  %244 = vmatprep.subr.bf16.mxu0 0
  %245 = vmatpush1.bf16.msra.mxu0 0
  %246 = vmatprep.subr.bf16.mxu0 0
  %247 = vmatpush1.bf16.msra.mxu0 0
  %248 = vmatprep.subr.bf16.mxu0 0
  %249 = vmatpush1.bf16.msra.mxu0 0
  %250 = vmatprep.subr.bf16.mxu0 0
  %251 = vmatpush1.bf16.msra.mxu0 0
  %252 = vmatprep.subr.bf16.mxu0 0
  %253 = vmatpush1.bf16.msra.mxu0 0
  %254 = vmatprep.subr.bf16.mxu0 0
  %255 = vmatpush1.bf16.msra.mxu0 0
  %256 = vmatprep.subr.bf16.mxu0 0
  %257 = vmatpush1.bf16.msra.mxu0 0
  %258 = vmatprep.subr.bf16.mxu0 0
  %259 = vmatpush1.bf16.msra.mxu0 0
  %260 = vmatprep.subr.bf16.mxu0 0
  %261 = vmatpush1.bf16.msra.mxu0 0
  %262 = vmatprep.subr.bf16.mxu0 0
  %263 = vmatpush1.bf16.msra.mxu0 0
  %264 = vmatprep.subr.bf16.mxu0 0
  %265 = vmatpush1.bf16.msra.mxu0 0
  %266 = vmatprep.subr.bf16.mxu0 0
  %267 = vmatpush1.bf16.msra.mxu0 0
  %268 = vmatprep.subr.bf16.mxu0 0
  %269 = vmatpush1.bf16.msra.mxu0 0
  %270 = vmatprep.mubr.bf16.mxu0 0
  %271 = vmatmul.mubr.bf16.gmra.mrb[0].mxu0 %v29
  %v272 = vpop.f32.mrb[0].mxu0
  %v273 = vadd.f32 %v25, %v272
  %v274 = vpop.f32.mrb[0].mxu0
  %v275 = vpop.f32.mrb[0].mxu0
  %v276 = vpop.f32.mrb[0].mxu0
  %277 = vdwg.mxu0
  %s278 = scalar_lea.vmem %s3, 32
  %v279 = vld [vmem:[%s278] sm:$0xff]
  %v280 = vadd.f32 %v273, %v279
  %s281 = scalar_lea.vmem %s4, 32
  %282 = vst.msk [vmem:[%s281] sm:$0xff] %vm77, %v280
  %s283 = scalar_lea.vmem %s0, 20
  %v284 = vld [vmem:[%s283] sm:$0xf]
  %v285 = vpack.c.bf16 %v284, %v284
  %v287 = vsel %vm31, %v285, 0
  %289 = vmatprep.subr.bf16.mxu0 0
  %290 = vmatpush1.bf16.msra.mxu0 %v287
  %291 = vmatprep.subr.bf16.mxu0 0
  %292 = vmatpush1.bf16.msra.mxu0 0
  %293 = vmatprep.subr.bf16.mxu0 0
  %294 = vmatpush1.bf16.msra.mxu0 0
  %295 = vmatprep.subr.bf16.mxu0 0
  %296 = vmatpush1.bf16.msra.mxu0 0
  %297 = vmatprep.subr.bf16.mxu0 0
  %298 = vmatpush1.bf16.msra.mxu0 0
  %299 = vmatprep.subr.bf16.mxu0 0
  %300 = vmatpush1.bf16.msra.mxu0 0
  %301 = vmatprep.subr.bf16.mxu0 0
  %302 = vmatpush1.bf16.msra.mxu0 0
  %303 = vmatprep.subr.bf16.mxu0 0
  %304 = vmatpush1.bf16.msra.mxu0 0
  %305 = vmatprep.subr.bf16.mxu0 0
  %306 = vmatpush1.bf16.msra.mxu0 0
  %307 = vmatprep.subr.bf16.mxu0 0
  %308 = vmatpush1.bf16.msra.mxu0 0
  %309 = vmatprep.subr.bf16.mxu0 0
  %310 = vmatpush1.bf16.msra.mxu0 0
  %311 = vmatprep.subr.bf16.mxu0 0
  %312 = vmatpush1.bf16.msra.mxu0 0
  %313 = vmatprep.subr.bf16.mxu0 0
  %314 = vmatpush1.bf16.msra.mxu0 0
  %315 = vmatprep.subr.bf16.mxu0 0
  %316 = vmatpush1.bf16.msra.mxu0 0
  %317 = vmatprep.subr.bf16.mxu0 0
  %318 = vmatpush1.bf16.msra.mxu0 0
  %319 = vmatprep.subr.bf16.mxu0 0
  %320 = vmatpush1.bf16.msra.mxu0 0
  %321 = vmatprep.mubr.bf16.mxu0 0
  %322 = vmatmul.mubr.bf16.gmra.mrb[0].mxu0 %v29
  %v323 = vpop.f32.mrb[0].mxu0
  %v324 = vadd.f32 %v25, %v323
  %v325 = vpop.f32.mrb[0].mxu0
  %v326 = vpop.f32.mrb[0].mxu0
  %v327 = vpop.f32.mrb[0].mxu0
  %328 = vdwg.mxu0
  %s329 = scalar_lea.vmem %s3, 40
  %v330 = vld [vmem:[%s329] sm:$0xff]
  %v331 = vadd.f32 %v324, %v330
  %s332 = scalar_lea.vmem %s4, 40
  %333 = vst.msk [vmem:[%s332] sm:$0xff] %vm77, %v331
  %s334 = scalar_lea.vmem %s0, 24
  %v335 = vld [vmem:[%s334] sm:$0xf]
  %v336 = vpack.c.bf16 %v335, %v335
  %v338 = vsel %vm31, %v336, 0
  %340 = vmatprep.subr.bf16.mxu0 0
  %341 = vmatpush1.bf16.msra.mxu0 %v338
  %342 = vmatprep.subr.bf16.mxu0 0
  %343 = vmatpush1.bf16.msra.mxu0 0
  %344 = vmatprep.subr.bf16.mxu0 0
  %345 = vmatpush1.bf16.msra.mxu0 0
  %346 = vmatprep.subr.bf16.mxu0 0
  %347 = vmatpush1.bf16.msra.mxu0 0
  %348 = vmatprep.subr.bf16.mxu0 0
  %349 = vmatpush1.bf16.msra.mxu0 0
  %350 = vmatprep.subr.bf16.mxu0 0
  %351 = vmatpush1.bf16.msra.mxu0 0
  %352 = vmatprep.subr.bf16.mxu0 0
  %353 = vmatpush1.bf16.msra.mxu0 0
  %354 = vmatprep.subr.bf16.mxu0 0
  %355 = vmatpush1.bf16.msra.mxu0 0
  %356 = vmatprep.subr.bf16.mxu0 0
  %357 = vmatpush1.bf16.msra.mxu0 0
  %358 = vmatprep.subr.bf16.mxu0 0
  %359 = vmatpush1.bf16.msra.mxu0 0
  %360 = vmatprep.subr.bf16.mxu0 0
  %361 = vmatpush1.bf16.msra.mxu0 0
  %362 = vmatprep.subr.bf16.mxu0 0
  %363 = vmatpush1.bf16.msra.mxu0 0
  %364 = vmatprep.subr.bf16.mxu0 0
  %365 = vmatpush1.bf16.msra.mxu0 0
  %366 = vmatprep.subr.bf16.mxu0 0
  %367 = vmatpush1.bf16.msra.mxu0 0
  %368 = vmatprep.subr.bf16.mxu0 0
  %369 = vmatpush1.bf16.msra.mxu0 0
  %370 = vmatprep.subr.bf16.mxu0 0
  %371 = vmatpush1.bf16.msra.mxu0 0
  %372 = vmatprep.mubr.bf16.mxu0 0
  %373 = vmatmul.mubr.bf16.gmra.mrb[0].mxu0 %v29
  %v374 = vpop.f32.mrb[0].mxu0
  %v375 = vadd.f32 %v25, %v374
  %v376 = vpop.f32.mrb[0].mxu0
  %v377 = vpop.f32.mrb[0].mxu0
  %v378 = vpop.f32.mrb[0].mxu0
  %379 = vdwg.mxu0
  %s380 = scalar_lea.vmem %s3, 48
  %v381 = vld [vmem:[%s380] sm:$0xff]
  %v382 = vadd.f32 %v375, %v381
  %s383 = scalar_lea.vmem %s4, 48
  %384 = vst.msk [vmem:[%s383] sm:$0xff] %vm77, %v382
  %s385 = scalar_lea.vmem %s0, 28
  %v386 = vld [vmem:[%s385] sm:$0xf]
  %v387 = vpack.c.bf16 %v386, %v386
  %v389 = vsel %vm31, %v387, 0
  %391 = vmatprep.subr.bf16.mxu0 0
  %392 = vmatpush1.bf16.msra.mxu0 %v389
  %393 = vmatprep.subr.bf16.mxu0 0
  %394 = vmatpush1.bf16.msra.mxu0 0
  %395 = vmatprep.subr.bf16.mxu0 0
  %396 = vmatpush1.bf16.msra.mxu0 0
  %397 = vmatprep.subr.bf16.mxu0 0
  %398 = vmatpush1.bf16.msra.mxu0 0
  %399 = vmatprep.subr.bf16.mxu0 0
  %400 = vmatpush1.bf16.msra.mxu0 0
  %401 = vmatprep.subr.bf16.mxu0 0
  %402 = vmatpush1.bf16.msra.mxu0 0
  %403 = vmatprep.subr.bf16.mxu0 0
  %404 = vmatpush1.bf16.msra.mxu0 0
  %405 = vmatprep.subr.bf16.mxu0 0
  %406 = vmatpush1.bf16.msra.mxu0 0
  %407 = vmatprep.subr.bf16.mxu0 0
  %408 = vmatpush1.bf16.msra.mxu0 0
  %409 = vmatprep.subr.bf16.mxu0 0
  %410 = vmatpush1.bf16.msra.mxu0 0
  %411 = vmatprep.subr.bf16.mxu0 0
  %412 = vmatpush1.bf16.msra.mxu0 0
  %413 = vmatprep.subr.bf16.mxu0 0
  %414 = vmatpush1.bf16.msra.mxu0 0
  %415 = vmatprep.subr.bf16.mxu0 0
  %416 = vmatpush1.bf16.msra.mxu0 0
  %417 = vmatprep.subr.bf16.mxu0 0
  %418 = vmatpush1.bf16.msra.mxu0 0
  %419 = vmatprep.subr.bf16.mxu0 0
  %420 = vmatpush1.bf16.msra.mxu0 0
  %421 = vmatprep.subr.bf16.mxu0 0
  %422 = vmatpush1.bf16.msra.mxu0 0
  %423 = vmatprep.mubr.bf16.mxu0 0
  %424 = vmatmul.mubr.bf16.gmra.mrb[0].mxu0 %v29
  %v425 = vpop.f32.mrb[0].mxu0
  %v426 = vadd.f32 %v25, %v425
  %v427 = vpop.f32.mrb[0].mxu0
  %v428 = vpop.f32.mrb[0].mxu0
  %v429 = vpop.f32.mrb[0].mxu0
  %430 = vdwg.mxu0
  %s431 = scalar_lea.vmem %s3, 56
  %v432 = vld [vmem:[%s431] sm:$0xff]
  %v433 = vadd.f32 %v426, %v432
  %s434 = scalar_lea.vmem %s4, 56
  %435 = vst.msk [vmem:[%s434] sm:$0xff] %vm77, %v433
  // Predicated region
  $region18: #{_lambda_.24} parent=0 // pred_check
    _
  $region19: #{_lambda_.24} parent=0 // pred_check_branch
    %437 = sbr.rel (0) target = $region21
  $region20: #{_lambda_.24} parent=0 // pred_region
    _
  $region21: #{_lambda_.24} parent=0 // pred_fallthru
    _
  // Predicated region
  $region22: #{_lambda_.24} parent=0 // pred_check
    _
  $region23: #{_lambda_.24} parent=0 // pred_check_branch
    %439 = sbr.rel (0) target = $region25
  $region24: #{_lambda_.24} parent=0 // pred_region
    _
  $region25: #{_lambda_.24} parent=0 // pred_fallthru
    _

// kernel: _lambda_.22
$region0: #{_lambda_.22}
  #allocation0 [shape = 'u32[]', space=smem, size = 0x4, offset = 0x4, fixed_abs, tag = 'smem constant byte address 0x4 - core index']
  #allocation1 [shape = 'u32[144,128]{1,0:T(1,128)}', space=vmem, size = 0x12000, scoped, tag = 'internal scratch']
  %s0 = inlined_call_operand.vmem [shape: f32[2,4,4,24], index: 0, kind: input, shape index: {}]
  %s1 = inlined_call_operand.vmem [shape: f32[2,4,4,8], index: 1, kind: output, shape index: {}]
  %s2 = sld [smem:[#allocation0]]
  $region37: #{_lambda_.22} parent=0
    _
  %s4 = ssub.s32 1, %s2
  %s5 = scalar_select 0, %s4, %s2
  loop: start=0, step=1, limit=4
  $region2: #{_lambda_.22} parent=0 // loop_pre_header
    _
  $region3: #{_lambda_.22} parent=0 // loop_header
    %s7 = sphi 0, %s11
    %p8 = scmp.ge.s32.totalorder %s7, 4
    %s17 = sphi 0, %s19
    %s20 = sphi 0, %s17
    %s21 = sphi 0, %s20
    %s37 = sphi 0, %s21
    %s43 = sphi 0, %s45
    %s46 = sphi 0, %s43
    %s47 = sphi 0, %s46
    %s63 = sphi 0, %s47
  $region4: #{_lambda_.22} parent=0 // loop_header_branch
    %10 = sbr.rel (%p8) target = $region8
  $region5: #{_lambda_.22} parent=0 // loop_body
    %s12 = ssub.s32 %s7, 1
    %s13 = ssub.s32 %s7, 2
    %s14 = sadd.s32 %s7, 1
    %s15 = ssub.s32 %s7, %s14
    %p16 = scmp.eq.s32.totalorder %s15, 0
    %s18 = sadd.s32 %s17, 1
    %s19 = scalar_select %p16, %s17, %s18
    %p22 = pneg %p16
    %p23 = scmp.eq.s32.totalorder %s7, 1
    %p24 = por %p22, %p23
    %p25 = scmp.ne.s32.totalorder %s17, %s20
    %p26 = scmp.eq.s32.totalorder %s7, 0
    %p27 = por %p25, %p26
    %p28 = scmp.ne.s32.totalorder %s17, %s20
    %p29 = scmp.eq.s32.totalorder %s12, 1
    %p30 = por %p28, %p29
    %p31 = scmp.ne.s32.totalorder %s20, %s21
    %p32 = scmp.eq.s32.totalorder %s12, 0
    %p33 = por %p31, %p32
    %p34 = scmp.ne.s32.totalorder %s20, %s21
    %p35 = scmp.eq.s32.totalorder %s13, 1
    %p36 = por %p34, %p35
    %p38 = scmp.ne.s32.totalorder %s21, %s37
    %p39 = scmp.eq.s32.totalorder %s13, 0
    %p40 = por %p38, %p39
    %s41 = ssub.s32 %s7, %s14
    %p42 = scmp.eq.s32.totalorder %s41, 0
    %s44 = sadd.s32 %s43, 1
    %s45 = scalar_select %p42, %s43, %s44
    %p48 = pneg %p42
    %p49 = scmp.eq.s32.totalorder %s7, 1
    %p50 = por %p48, %p49
    %p51 = scmp.ne.s32.totalorder %s43, %s46
    %p52 = scmp.eq.s32.totalorder %s7, 0
    %p53 = por %p51, %p52
    %p54 = scmp.ne.s32.totalorder %s43, %s46
    %p55 = scmp.eq.s32.totalorder %s12, 1
    %p56 = por %p54, %p55
    %p57 = scmp.ne.s32.totalorder %s46, %s47
    %p58 = scmp.eq.s32.totalorder %s12, 0
    %p59 = por %p57, %p58
    %p60 = scmp.ne.s32.totalorder %s46, %s47
    %p61 = scmp.eq.s32.totalorder %s13, 1
    %p62 = por %p60, %p61
    %p64 = scmp.ne.s32.totalorder %s47, %s63
    %p65 = scmp.eq.s32.totalorder %s13, 0
    %p66 = por %p64, %p65
    %p67 = scmp.le.s32.totalorder 1, %s7
    %p68 = scmp.lt.s32.totalorder %s7, 3
    %p69 = pnand %p67, %p68
    %p70 = pneg %p69
    // Predicated region
    $region9: #{_lambda_.22} parent=5 // pred_check
      _
    $region10: #{_lambda_.22} parent=5 // pred_check_branch
      %72 = sbr.rel (%p69) target = $region12
    $region11: #{_lambda_.22} parent=5 // pred_region
      %s73 = ssub.s32 %s7, 1
    $region12: #{_lambda_.22} parent=5 // pred_fallthru
      _
    %p74 = scmp.lt.s32.totalorder %s7, 2
    // Predicated region
    $region13: #{_lambda_.22} parent=5 // pred_check
      %p75 = pneg %p74
    $region14: #{_lambda_.22} parent=5 // pred_check_branch
      %77 = sbr.rel (%p75) target = $region16
    $region15: #{_lambda_.22} parent=5 // pred_region
      // Predicated region
      $region17: #{_lambda_.22} parent=15 // pred_check
        %p78 = pneg %p27
      $region18: #{_lambda_.22} parent=15 // pred_check_branch
        %80 = sbr.rel (%p78) target = $region20
      $region19: #{_lambda_.22} parent=15 // pred_region
        %p81 = scmp.lt.s32.totalorder %s7, 1
        %s82 = scalar_select %p81, %s7, 1
        %s83 = smul.addr %s82, 4
        %s84 = smul.addr %s83, 4
        %s85 = scalar_lea.vmem %s0, %s84
      $region20: #{_lambda_.22} parent=15 // pred_fallthru
        _
    $region16: #{_lambda_.22} parent=5 // pred_fallthru
      _
    %p86 = scmp.le.s32.totalorder 1, %s7
    %p87 = scmp.lt.s32.totalorder %s7, 3
    %p88 = pnand %p86, %p87
    %p89 = pneg %p88
    // Predicated region
    $region21: #{_lambda_.22} parent=5 // pred_check
      _
    $region22: #{_lambda_.22} parent=5 // pred_check_branch
      %91 = sbr.rel (%p88) target = $region24
    $region23: #{_lambda_.22} parent=5 // pred_region
      %s92 = ssub.s32 %s7, 1
      %p93 = scmp.lt.s32.totalorder %s12, 1
      %s94 = scalar_select %p93, %s12, 1
      %s95 = smul.addr %s94, 4
      %s96 = smul.addr %s95, 4
      %s97 = scalar_lea.vmem %s0, %s96
      %p98 = pneg %p33
      %p99 = pneg %p30
      %p100 = pneg %p59
      %p101 = pneg %p56
      %p102 = scmp.lt.s32.totalorder %s12, 1
      %s103 = scalar_select %p102, %s12, 1
      %s104 = smul.addr %s103, 4
      %s105 = smul.addr %s104, 4
      %s106 = scalar_lea.vmem %s1, %s105
      %p107 = scmp.lt.s32.totalorder %s12, 1
      %s108 = scalar_select %p107, %s12, 1
      %s109 = smul.addr %s108, 4
      %s110 = smul.addr %s109, 4
      %s111 = scalar_lea.vmem %s0, %s110
      %p112 = scmp.lt.s32.totalorder %s12, 1
      %s113 = scalar_select %p112, %s12, 1
      %s114 = smul.addr %s113, 4
      %s115 = smul.addr %s114, 4
      %s116 = scalar_lea.vmem %s1, %s115
      %v118 = vld [vmem:[%s111] sm:$0xf]
      %v119 = vld [vmem:[%s111 + $0x4] sm:$0xf]
      %v120 = vld [vmem:[%s111 + $0x8] sm:$0xf]
      %v121 = vld [vmem:[%s111 + $0xc] sm:$0xf]
      %v122 = vpack.c.bf16 %v118, %v118
      %v123 = vpack.c.bf16 %v119, %v119
      %v124 = vpack.c.bf16 %v120, %v120
      %v125 = vpack.c.bf16 %v121, %v121
      %v130 = vunpack.c.l.b16 %v122
      %v131 = vunpack.c.l.b16 %v123
      %v132 = vunpack.c.l.b16 %v124
      %v133 = vunpack.c.l.b16 %v125
      %v134 = vrot.slane %v131, 7
      %vm135 = vcmask 1041409
      %v136 = vsel %vm135, %v134, %v130
      %v137 = vrot.slane %v132, 6
      %vm138 = vcmask 1042434
      %v139 = vsel %vm138, %v137, %v136
      %v140 = vrot.slane %v133, 5
      %vm141 = vcmask 1043459
      %v142 = vsel %vm141, %v140, %v139
      %v143 = vpack.c.b16 %v142, %v142
      %144 = vrot.lane.b32.xlu0 %v143, 120
      %v145 = vpop.permute.xlu0 %144
      %vm146 = vcmask 31744
      %v148 = vsel %vm146, %v143, 0
      %v151 = vsel %vm146, %v145, 0
      %153 = vmatprep.subr.bf16.mxu0 0
      %154 = vmatpush1.bf16.xpose.msra.mxu0 %v151
      %155 = vmatprep.subr.bf16.mxu0 0
      %156 = vmatpush1.bf16.xpose.msra.mxu0 0
      %157 = vmatprep.subr.bf16.mxu0 0
      %158 = vmatpush1.bf16.xpose.msra.mxu0 0
      %159 = vmatprep.subr.bf16.mxu0 0
      %160 = vmatpush1.bf16.xpose.msra.mxu0 0
      %161 = vmatprep.subr.bf16.mxu0 0
      %162 = vmatpush1.bf16.xpose.msra.mxu0 0
      %163 = vmatprep.subr.bf16.mxu0 0
      %164 = vmatpush1.bf16.xpose.msra.mxu0 0
      %165 = vmatprep.subr.bf16.mxu0 0
      %166 = vmatpush1.bf16.xpose.msra.mxu0 0
      %167 = vmatprep.subr.bf16.mxu0 0
      %168 = vmatpush1.bf16.xpose.msra.mxu0 0
      %169 = vmatprep.subr.bf16.mxu0 0
      %170 = vmatpush1.bf16.xpose.msra.mxu0 0
      %171 = vmatprep.subr.bf16.mxu0 0
      %172 = vmatpush1.bf16.xpose.msra.mxu0 0
      %173 = vmatprep.subr.bf16.mxu0 0
      %174 = vmatpush1.bf16.xpose.msra.mxu0 0
      %175 = vmatprep.subr.bf16.mxu0 0
      %176 = vmatpush1.bf16.xpose.msra.mxu0 0
      %177 = vmatprep.subr.bf16.mxu0 0
      %178 = vmatpush1.bf16.xpose.msra.mxu0 0
      %179 = vmatprep.subr.bf16.mxu0 0
      %180 = vmatpush1.bf16.xpose.msra.mxu0 0
      %181 = vmatprep.subr.bf16.mxu0 0
      %182 = vmatpush1.bf16.xpose.msra.mxu0 0
      %183 = vmatprep.subr.bf16.mxu0 0
      %184 = vmatpush1.bf16.xpose.msra.mxu0 0
      %185 = vmatprep.mubr.bf16.mxu0 0
      %186 = vmatmul.mubr.bf16.gmra.mrb[0].mxu0 %v148
      %v187 = vpop.f32.mrb[0].mxu0
      %v188 = vadd.f32 0.0, %v187
      %v189 = vpop.f32.mrb[0].mxu0
      %v190 = vpop.f32.mrb[0].mxu0
      %v191 = vpop.f32.mrb[0].mxu0
      %192 = vdwg.mxu0
      %v193 = vmul.f32 %v188, 0.5
      %vm194 = vcmask 27648
      %v195 = vsel %vm194, %v193, -inf
      %196 = vmax.xlane.f32.xlu0 %v195
      %v197 = vpop.xlane.xlu0 %196
      %v198 = vsub.f32 %v193, %v197
      %v199 = vmul.f32 %v198, 1.442695
      %v200 = vpow.pop %v199
      %v201 = vsel %vm194, %v200, 0.0
      %202 = vadd.xlane.f32.xlu0 %v201
      %v203 = vpop.xlane.xlu0 %202
      %v204 = vrcp.pop %v203
      %v205 = vmul.f32 %v200, %v204
      %v206 = vpack.c.bf16 %v205, %v205
      %207 = vrot.lane.b32.xlu0 %v143, 112
      %v208 = vpop.permute.xlu0 %207
      %v210 = vsel %vm146, %v206, 0
      %vm212 = vcmask 1041408
      %v214 = vsel %vm212, %v208, 0
      %216 = vmatprep.subr.bf16.mxu0 0
      %217 = vmatpush1.bf16.msra.mxu0 %v214
      %218 = vmatprep.subr.bf16.mxu0 0
      %219 = vmatpush1.bf16.msra.mxu0 0
      %220 = vmatprep.subr.bf16.mxu0 0
      %221 = vmatpush1.bf16.msra.mxu0 0
      %222 = vmatprep.subr.bf16.mxu0 0
      %223 = vmatpush1.bf16.msra.mxu0 0
      %224 = vmatprep.subr.bf16.mxu0 0
      %225 = vmatpush1.bf16.msra.mxu0 0
      %226 = vmatprep.subr.bf16.mxu0 0
      %227 = vmatpush1.bf16.msra.mxu0 0
      %228 = vmatprep.subr.bf16.mxu0 0
      %229 = vmatpush1.bf16.msra.mxu0 0
      %230 = vmatprep.subr.bf16.mxu0 0
      %231 = vmatpush1.bf16.msra.mxu0 0
      %232 = vmatprep.subr.bf16.mxu0 0
      %233 = vmatpush1.bf16.msra.mxu0 0
      %234 = vmatprep.subr.bf16.mxu0 0
      %235 = vmatpush1.bf16.msra.mxu0 0
      %236 = vmatprep.subr.bf16.mxu0 0
      %237 = vmatpush1.bf16.msra.mxu0 0
      %238 = vmatprep.subr.bf16.mxu0 0
      %239 = vmatpush1.bf16.msra.mxu0 0
      %240 = vmatprep.subr.bf16.mxu0 0
      %241 = vmatpush1.bf16.msra.mxu0 0
      %242 = vmatprep.subr.bf16.mxu0 0
      %243 = vmatpush1.bf16.msra.mxu0 0
      %244 = vmatprep.subr.bf16.mxu0 0
      %245 = vmatpush1.bf16.msra.mxu0 0
      %246 = vmatprep.subr.bf16.mxu0 0
      %247 = vmatpush1.bf16.msra.mxu0 0
      %248 = vmatprep.mubr.bf16.mxu0 0
      %249 = vmatmul.mubr.bf16.gmra.mrb[0].mxu0 %v210
      %v250 = vpop.f32.mrb[0].mxu0
      %v251 = vadd.f32 0.0, %v250
      %v252 = vpop.f32.mrb[0].mxu0
      %v253 = vpop.f32.mrb[0].mxu0
      %v254 = vpop.f32.mrb[0].mxu0
      %255 = vdwg.mxu0
      %256 = vrot.lane.b32.xlu0 %v143, 124
      %v257 = vpop.permute.xlu0 %256
      %258 = vrot.lane.b32.xlu0 %v143, 116
      %v259 = vpop.permute.xlu0 %258
      %v261 = vsel %vm146, %v257, 0
      %v264 = vsel %vm146, %v259, 0
      %266 = vmatprep.subr.bf16.mxu0 0
      %267 = vmatpush1.bf16.xpose.msra.mxu0 %v264
      %268 = vmatprep.subr.bf16.mxu0 0
      %269 = vmatpush1.bf16.xpose.msra.mxu0 0
      %270 = vmatprep.subr.bf16.mxu0 0
      %271 = vmatpush1.bf16.xpose.msra.mxu0 0
      %272 = vmatprep.subr.bf16.mxu0 0
      %273 = vmatpush1.bf16.xpose.msra.mxu0 0
      %274 = vmatprep.subr.bf16.mxu0 0
      %275 = vmatpush1.bf16.xpose.msra.mxu0 0
      %276 = vmatprep.subr.bf16.mxu0 0
      %277 = vmatpush1.bf16.xpose.msra.mxu0 0
      %278 = vmatprep.subr.bf16.mxu0 0
      %279 = vmatpush1.bf16.xpose.msra.mxu0 0
      %280 = vmatprep.subr.bf16.mxu0 0
      %281 = vmatpush1.bf16.xpose.msra.mxu0 0
      %282 = vmatprep.subr.bf16.mxu0 0
      %283 = vmatpush1.bf16.xpose.msra.mxu0 0
      %284 = vmatprep.subr.bf16.mxu0 0
      %285 = vmatpush1.bf16.xpose.msra.mxu0 0
      %286 = vmatprep.subr.bf16.mxu0 0
      %287 = vmatpush1.bf16.xpose.msra.mxu0 0
      %288 = vmatprep.subr.bf16.mxu0 0
      %289 = vmatpush1.bf16.xpose.msra.mxu0 0
      %290 = vmatprep.subr.bf16.mxu0 0
      %291 = vmatpush1.bf16.xpose.msra.mxu0 0
      %292 = vmatprep.subr.bf16.mxu0 0
      %293 = vmatpush1.bf16.xpose.msra.mxu0 0
      %294 = vmatprep.subr.bf16.mxu0 0
      %295 = vmatpush1.bf16.xpose.msra.mxu0 0
      %296 = vmatprep.subr.bf16.mxu0 0
      %297 = vmatpush1.bf16.xpose.msra.mxu0 0
      %298 = vmatprep.mubr.bf16.mxu0 0
      %299 = vmatmul.mubr.bf16.gmra.mrb[0].mxu0 %v261
      %v300 = vpop.f32.mrb[0].mxu0
      %v301 = vadd.f32 0.0, %v300
      %v302 = vpop.f32.mrb[0].mxu0
      %v303 = vpop.f32.mrb[0].mxu0
      %v304 = vpop.f32.mrb[0].mxu0
      %305 = vdwg.mxu0
      %v306 = vmul.f32 %v301, 0.5
      %v307 = vsel %vm194, %v306, -inf
      %308 = vmax.xlane.f32.xlu0 %v307
      %v309 = vpop.xlane.xlu0 %308
      %v310 = vsub.f32 %v306, %v309
      %v311 = vmul.f32 %v310, 1.442695
      %v312 = vpow.pop %v311
      %v313 = vsel %vm194, %v312, 0.0
      %314 = vadd.xlane.f32.xlu0 %v313
      %v315 = vpop.xlane.xlu0 %314
      %v316 = vrcp.pop %v315
      %v317 = vmul.f32 %v312, %v316
      %v318 = vpack.c.bf16 %v317, %v317
      %319 = vrot.lane.b32.xlu0 %v143, 108
      %v320 = vpop.permute.xlu0 %319
      %v322 = vsel %vm146, %v318, 0
      %v325 = vsel %vm212, %v320, 0
      %327 = vmatprep.subr.bf16.mxu0 0
      %328 = vmatpush1.bf16.msra.mxu0 %v325
      %329 = vmatprep.subr.bf16.mxu0 0
      %330 = vmatpush1.bf16.msra.mxu0 0
      %331 = vmatprep.subr.bf16.mxu0 0
      %332 = vmatpush1.bf16.msra.mxu0 0
      %333 = vmatprep.subr.bf16.mxu0 0
      %334 = vmatpush1.bf16.msra.mxu0 0
      %335 = vmatprep.subr.bf16.mxu0 0
      %336 = vmatpush1.bf16.msra.mxu0 0
      %337 = vmatprep.subr.bf16.mxu0 0
      %338 = vmatpush1.bf16.msra.mxu0 0
      %339 = vmatprep.subr.bf16.mxu0 0
      %340 = vmatpush1.bf16.msra.mxu0 0
      %341 = vmatprep.subr.bf16.mxu0 0
      %342 = vmatpush1.bf16.msra.mxu0 0
      %343 = vmatprep.subr.bf16.mxu0 0
      %344 = vmatpush1.bf16.msra.mxu0 0
      %345 = vmatprep.subr.bf16.mxu0 0
      %346 = vmatpush1.bf16.msra.mxu0 0
      %347 = vmatprep.subr.bf16.mxu0 0
      %348 = vmatpush1.bf16.msra.mxu0 0
      %349 = vmatprep.subr.bf16.mxu0 0
      %350 = vmatpush1.bf16.msra.mxu0 0
      %351 = vmatprep.subr.bf16.mxu0 0
      %352 = vmatpush1.bf16.msra.mxu0 0
      %353 = vmatprep.subr.bf16.mxu0 0
      %354 = vmatpush1.bf16.msra.mxu0 0
      %355 = vmatprep.subr.bf16.mxu0 0
      %356 = vmatpush1.bf16.msra.mxu0 0
      %357 = vmatprep.subr.bf16.mxu0 0
      %358 = vmatpush1.bf16.msra.mxu0 0
      %359 = vmatprep.mubr.bf16.mxu0 0
      %360 = vmatmul.mubr.bf16.gmra.mrb[0].mxu0 %v322
      %v361 = vpop.f32.mrb[0].mxu0
      %v362 = vadd.f32 0.0, %v361
      %v363 = vpop.f32.mrb[0].mxu0
      %v364 = vpop.f32.mrb[0].mxu0
      %v365 = vpop.f32.mrb[0].mxu0
      %366 = vdwg.mxu0
      %368 = vrot.lane.b32.xlu0 %v362, 4
      %v369 = vpop.permute.xlu0 %368
      %v371 = vsel %vm146, %v251, %v369
      %v374 = vunpack.c.l.s4 1966171168
      %v375 = vunpack.c.0.s8 %v374
      %v376 = vlaneseq
      %v377 = vshrl.u32 %v376, 7
      %v378 = vsub.s32 %v375, %v377
      %v379 = vrot.slane %v371, %v378
      %v380 = vcombine.high %v379, %v379
      %v382 = vunpack.c.l.s4 1966171168
      %v383 = vunpack.c.0.s8 %v382
      %v384 = vlaneseq
      %v385 = vshrl.u32 %v384, 7
      %v386 = vsub.s32 %v383, %v385
      %v387 = vrot.slane %v379, %v386
      %v389 = vunpack.c.l.s4 1966171168
      %v390 = vunpack.c.0.s8 %v389
      %v391 = vlaneseq
      %v392 = vshrl.u32 %v391, 7
      %v393 = vsub.s32 %v390, %v392
      %v394 = vrot.slane %v380, %v393
      %v395 = vcombine.high %v387, %v387
      %v396 = vcombine.high %v394, %v394
      %vm401 = vcmask 57344
      %402 = vst.msk [vmem:[%s116] sm:$0x1] %vm401, %v387
      %403 = vst.msk [vmem:[%s116 + $0x4] sm:$0x1] %vm401, %v394
      %404 = vst.msk [vmem:[%s116 + $0x8] sm:$0x1] %vm401, %v395
      %405 = vst.msk [vmem:[%s116 + $0xc] sm:$0x1] %vm401, %v396
      %v406 = vrot.slane %v130, 1
      %v407 = vsel %vm135, %v131, %v406
      %v408 = vrot.slane %v132, 7
      %v409 = vsel %vm138, %v408, %v407
      %v410 = vrot.slane %v133, 6
      %v411 = vsel %vm141, %v410, %v409
      %v412 = vpack.c.b16 %v411, %v411
      %413 = vrot.lane.b32.xlu0 %v412, 120
      %v414 = vpop.permute.xlu0 %413
      %v416 = vsel %vm146, %v412, 0
      %v419 = vsel %vm146, %v414, 0
      %421 = vmatprep.subr.bf16.mxu0 0
      %422 = vmatpush1.bf16.xpose.msra.mxu0 %v419
      %423 = vmatprep.subr.bf16.mxu0 0
      %424 = vmatpush1.bf16.xpose.msra.mxu0 0
      %425 = vmatprep.subr.bf16.mxu0 0
      %426 = vmatpush1.bf16.xpose.msra.mxu0 0
      %427 = vmatprep.subr.bf16.mxu0 0
      %428 = vmatpush1.bf16.xpose.msra.mxu0 0
      %429 = vmatprep.subr.bf16.mxu0 0
      %430 = vmatpush1.bf16.xpose.msra.mxu0 0
      %431 = vmatprep.subr.bf16.mxu0 0
      %432 = vmatpush1.bf16.xpose.msra.mxu0 0
      %433 = vmatprep.subr.bf16.mxu0 0
      %434 = vmatpush1.bf16.xpose.msra.mxu0 0
      %435 = vmatprep.subr.bf16.mxu0 0
      %436 = vmatpush1.bf16.xpose.msra.mxu0 0
      %437 = vmatprep.subr.bf16.mxu0 0
      %438 = vmatpush1.bf16.xpose.msra.mxu0 0
      %439 = vmatprep.subr.bf16.mxu0 0
      %440 = vmatpush1.bf16.xpose.msra.mxu0 0
      %441 = vmatprep.subr.bf16.mxu0 0
      %442 = vmatpush1.bf16.xpose.msra.mxu0 0
      %443 = vmatprep.subr.bf16.mxu0 0
      %444 = vmatpush1.bf16.xpose.msra.mxu0 0
      %445 = vmatprep.subr.bf16.mxu0 0
      %446 = vmatpush1.bf16.xpose.msra.mxu0 0
      %447 = vmatprep.subr.bf16.mxu0 0
      %448 = vmatpush1.bf16.xpose.msra.mxu0 0
      %449 = vmatprep.subr.bf16.mxu0 0
      %450 = vmatpush1.bf16.xpose.msra.mxu0 0
      %451 = vmatprep.subr.bf16.mxu0 0
      %452 = vmatpush1.bf16.xpose.msra.mxu0 0
      %453 = vmatprep.mubr.bf16.mxu0 0
      %454 = vmatmul.mubr.bf16.gmra.mrb[0].mxu0 %v416
      %v455 = vpop.f32.mrb[0].mxu0
      %v456 = vadd.f32 0.0, %v455
      %v457 = vpop.f32.mrb[0].mxu0
      %v458 = vpop.f32.mrb[0].mxu0
      %v459 = vpop.f32.mrb[0].mxu0
      %460 = vdwg.mxu0
      %v461 = vmul.f32 %v456, 0.5
      %v462 = vsel %vm194, %v461, -inf
      %463 = vmax.xlane.f32.xlu0 %v462
      %v464 = vpop.xlane.xlu0 %463
      %v465 = vsub.f32 %v461, %v464
      %v466 = vmul.f32 %v465, 1.442695
      %v467 = vpow.pop %v466
      %v468 = vsel %vm194, %v467, 0.0
      %469 = vadd.xlane.f32.xlu0 %v468
      %v470 = vpop.xlane.xlu0 %469
      %v471 = vrcp.pop %v470
      %v472 = vmul.f32 %v467, %v471
      %v473 = vpack.c.bf16 %v472, %v472
      %474 = vrot.lane.b32.xlu0 %v412, 112
      %v475 = vpop.permute.xlu0 %474
      %v477 = vsel %vm146, %v473, 0
      %v480 = vsel %vm212, %v475, 0
      %482 = vmatprep.subr.bf16.mxu0 0
      %483 = vmatpush1.bf16.msra.mxu0 %v480
      %484 = vmatprep.subr.bf16.mxu0 0
      %485 = vmatpush1.bf16.msra.mxu0 0
      %486 = vmatprep.subr.bf16.mxu0 0
      %487 = vmatpush1.bf16.msra.mxu0 0
      %488 = vmatprep.subr.bf16.mxu0 0
      %489 = vmatpush1.bf16.msra.mxu0 0
      %490 = vmatprep.subr.bf16.mxu0 0
      %491 = vmatpush1.bf16.msra.mxu0 0
      %492 = vmatprep.subr.bf16.mxu0 0
      %493 = vmatpush1.bf16.msra.mxu0 0
      %494 = vmatprep.subr.bf16.mxu0 0
      %495 = vmatpush1.bf16.msra.mxu0 0
      %496 = vmatprep.subr.bf16.mxu0 0
      %497 = vmatpush1.bf16.msra.mxu0 0
      %498 = vmatprep.subr.bf16.mxu0 0
      %499 = vmatpush1.bf16.msra.mxu0 0
      %500 = vmatprep.subr.bf16.mxu0 0
      %501 = vmatpush1.bf16.msra.mxu0 0
      %502 = vmatprep.subr.bf16.mxu0 0
      %503 = vmatpush1.bf16.msra.mxu0 0
      %504 = vmatprep.subr.bf16.mxu0 0
      %505 = vmatpush1.bf16.msra.mxu0 0
      %506 = vmatprep.subr.bf16.mxu0 0
      %507 = vmatpush1.bf16.msra.mxu0 0
      %508 = vmatprep.subr.bf16.mxu0 0
      %509 = vmatpush1.bf16.msra.mxu0 0
      %510 = vmatprep.subr.bf16.mxu0 0
      %511 = vmatpush1.bf16.msra.mxu0 0
      %512 = vmatprep.subr.bf16.mxu0 0
      %513 = vmatpush1.bf16.msra.mxu0 0
      %514 = vmatprep.mubr.bf16.mxu0 0
      %515 = vmatmul.mubr.bf16.gmra.mrb[0].mxu0 %v477
      %v516 = vpop.f32.mrb[0].mxu0
      %v517 = vadd.f32 0.0, %v516
      %v518 = vpop.f32.mrb[0].mxu0
      %v519 = vpop.f32.mrb[0].mxu0
      %v520 = vpop.f32.mrb[0].mxu0
      %521 = vdwg.mxu0
      %522 = vrot.lane.b32.xlu0 %v412, 124
      %v523 = vpop.permute.xlu0 %522
      %524 = vrot.lane.b32.xlu0 %v412, 116
      %v525 = vpop.permute.xlu0 %524
      %v527 = vsel %vm146, %v523, 0
      %v530 = vsel %vm146, %v525, 0
      %532 = vmatprep.subr.bf16.mxu0 0
      %533 = vmatpush1.bf16.xpose.msra.mxu0 %v530
      %534 = vmatprep.subr.bf16.mxu0 0
      %535 = vmatpush1.bf16.xpose.msra.mxu0 0
      %536 = vmatprep.subr.bf16.mxu0 0
      %537 = vmatpush1.bf16.xpose.msra.mxu0 0
      %538 = vmatprep.subr.bf16.mxu0 0
      %539 = vmatpush1.bf16.xpose.msra.mxu0 0
      %540 = vmatprep.subr.bf16.mxu0 0
      %541 = vmatpush1.bf16.xpose.msra.mxu0 0
      %542 = vmatprep.subr.bf16.mxu0 0
      %543 = vmatpush1.bf16.xpose.msra.mxu0 0
      %544 = vmatprep.subr.bf16.mxu0 0
      %545 = vmatpush1.bf16.xpose.msra.mxu0 0
      %546 = vmatprep.subr.bf16.mxu0 0
      %547 = vmatpush1.bf16.xpose.msra.mxu0 0
      %548 = vmatprep.subr.bf16.mxu0 0
      %549 = vmatpush1.bf16.xpose.msra.mxu0 0
      %550 = vmatprep.subr.bf16.mxu0 0
      %551 = vmatpush1.bf16.xpose.msra.mxu0 0
      %552 = vmatprep.subr.bf16.mxu0 0
      %553 = vmatpush1.bf16.xpose.msra.mxu0 0
      %554 = vmatprep.subr.bf16.mxu0 0
      %555 = vmatpush1.bf16.xpose.msra.mxu0 0
      %556 = vmatprep.subr.bf16.mxu0 0
      %557 = vmatpush1.bf16.xpose.msra.mxu0 0
      %558 = vmatprep.subr.bf16.mxu0 0
      %559 = vmatpush1.bf16.xpose.msra.mxu0 0
      %560 = vmatprep.subr.bf16.mxu0 0
      %561 = vmatpush1.bf16.xpose.msra.mxu0 0
      %562 = vmatprep.subr.bf16.mxu0 0
      %563 = vmatpush1.bf16.xpose.msra.mxu0 0
      %564 = vmatprep.mubr.bf16.mxu0 0
      %565 = vmatmul.mubr.bf16.gmra.mrb[0].mxu0 %v527
      %v566 = vpop.f32.mrb[0].mxu0
      %v567 = vadd.f32 0.0, %v566
      %v568 = vpop.f32.mrb[0].mxu0
      %v569 = vpop.f32.mrb[0].mxu0
      %v570 = vpop.f32.mrb[0].mxu0
      %571 = vdwg.mxu0
      %v572 = vmul.f32 %v567, 0.5
      %v573 = vsel %vm194, %v572, -inf
      %574 = vmax.xlane.f32.xlu0 %v573
      %v575 = vpop.xlane.xlu0 %574
      %v576 = vsub.f32 %v572, %v575
      %v577 = vmul.f32 %v576, 1.442695
      %v578 = vpow.pop %v577
      %v579 = vsel %vm194, %v578, 0.0
      %580 = vadd.xlane.f32.xlu0 %v579
      %v581 = vpop.xlane.xlu0 %580
      %v582 = vrcp.pop %v581
      %v583 = vmul.f32 %v578, %v582
      %v584 = vpack.c.bf16 %v583, %v583
      %585 = vrot.lane.b32.xlu0 %v412, 108
      %v586 = vpop.permute.xlu0 %585
      %v588 = vsel %vm146, %v584, 0
      %v591 = vsel %vm212, %v586, 0
      %593 = vmatprep.subr.bf16.mxu0 0
      %594 = vmatpush1.bf16.msra.mxu0 %v591
      %595 = vmatprep.subr.bf16.mxu0 0
      %596 = vmatpush1.bf16.msra.mxu0 0
      %597 = vmatprep.subr.bf16.mxu0 0
      %598 = vmatpush1.bf16.msra.mxu0 0
      %599 = vmatprep.subr.bf16.mxu0 0
      %600 = vmatpush1.bf16.msra.mxu0 0
      %601 = vmatprep.subr.bf16.mxu0 0
      %602 = vmatpush1.bf16.msra.mxu0 0
      %603 = vmatprep.subr.bf16.mxu0 0
      %604 = vmatpush1.bf16.msra.mxu0 0
      %605 = vmatprep.subr.bf16.mxu0 0
      %606 = vmatpush1.bf16.msra.mxu0 0
      %607 = vmatprep.subr.bf16.mxu0 0
      %608 = vmatpush1.bf16.msra.mxu0 0
      %609 = vmatprep.subr.bf16.mxu0 0
      %610 = vmatpush1.bf16.msra.mxu0 0
      %611 = vmatprep.subr.bf16.mxu0 0
      %612 = vmatpush1.bf16.msra.mxu0 0
      %613 = vmatprep.subr.bf16.mxu0 0
      %614 = vmatpush1.bf16.msra.mxu0 0
      %615 = vmatprep.subr.bf16.mxu0 0
      %616 = vmatpush1.bf16.msra.mxu0 0
      %617 = vmatprep.subr.bf16.mxu0 0
      %618 = vmatpush1.bf16.msra.mxu0 0
      %619 = vmatprep.subr.bf16.mxu0 0
      %620 = vmatpush1.bf16.msra.mxu0 0
      %621 = vmatprep.subr.bf16.mxu0 0
      %622 = vmatpush1.bf16.msra.mxu0 0
      %623 = vmatprep.subr.bf16.mxu0 0
      %624 = vmatpush1.bf16.msra.mxu0 0
      %625 = vmatprep.mubr.bf16.mxu0 0
      %626 = vmatmul.mubr.bf16.gmra.mrb[0].mxu0 %v588
      %v627 = vpop.f32.mrb[0].mxu0
      %v628 = vadd.f32 0.0, %v627
      %v629 = vpop.f32.mrb[0].mxu0
      %v630 = vpop.f32.mrb[0].mxu0
      %v631 = vpop.f32.mrb[0].mxu0
      %632 = vdwg.mxu0
      %634 = vrot.lane.b32.xlu0 %v628, 4
      %v635 = vpop.permute.xlu0 %634
      %v637 = vsel %vm146, %v517, %v635
      %v640 = vunpack.c.l.s4 1966171168
      %v641 = vunpack.c.0.s8 %v640
      %v642 = vlaneseq
      %v643 = vshrl.u32 %v642, 7
      %v644 = vsub.s32 %v641, %v643
      %v645 = vrot.slane %v637, %v644
      %v646 = vcombine.high %v645, %v645
      %v648 = vunpack.c.l.s4 1966171168
      %v649 = vunpack.c.0.s8 %v648
      %v650 = vlaneseq
      %v651 = vshrl.u32 %v650, 7
      %v652 = vsub.s32 %v649, %v651
      %v653 = vrot.slane %v645, %v652
      %v655 = vunpack.c.l.s4 1966171168
      %v656 = vunpack.c.0.s8 %v655
      %v657 = vlaneseq
      %v658 = vshrl.u32 %v657, 7
      %v659 = vsub.s32 %v656, %v658
      %v660 = vrot.slane %v646, %v659
      %v661 = vcombine.high %v653, %v653
      %v662 = vcombine.high %v660, %v660
      %667 = vst.msk [vmem:[%s116 + $0x1] sm:$0x1] %vm401, %v653
      %668 = vst.msk [vmem:[%s116 + $0x5] sm:$0x1] %vm401, %v660
      %669 = vst.msk [vmem:[%s116 + $0x9] sm:$0x1] %vm401, %v661
      %670 = vst.msk [vmem:[%s116 + $0xd] sm:$0x1] %vm401, %v662
      %v671 = vrot.slane %v130, 2
      %v672 = vrot.slane %v131, 1
      %v673 = vsel %vm135, %v672, %v671
      %v674 = vsel %vm138, %v132, %v673
      %v675 = vrot.slane %v133, 7
      %v676 = vsel %vm141, %v675, %v674
      %v677 = vpack.c.b16 %v676, %v676
      %678 = vrot.lane.b32.xlu0 %v677, 120
      %v679 = vpop.permute.xlu0 %678
      %v681 = vsel %vm146, %v677, 0
      %v684 = vsel %vm146, %v679, 0
      %686 = vmatprep.subr.bf16.mxu0 0
      %687 = vmatpush1.bf16.xpose.msra.mxu0 %v684
      %688 = vmatprep.subr.bf16.mxu0 0
      %689 = vmatpush1.bf16.xpose.msra.mxu0 0
      %690 = vmatprep.subr.bf16.mxu0 0
      %691 = vmatpush1.bf16.xpose.msra.mxu0 0
      %692 = vmatprep.subr.bf16.mxu0 0
      %693 = vmatpush1.bf16.xpose.msra.mxu0 0
      %694 = vmatprep.subr.bf16.mxu0 0
      %695 = vmatpush1.bf16.xpose.msra.mxu0 0
      %696 = vmatprep.subr.bf16.mxu0 0
      %697 = vmatpush1.bf16.xpose.msra.mxu0 0
      %698 = vmatprep.subr.bf16.mxu0 0
      %699 = vmatpush1.bf16.xpose.msra.mxu0 0
      %700 = vmatprep.subr.bf16.mxu0 0
      %701 = vmatpush1.bf16.xpose.msra.mxu0 0
      %702 = vmatprep.subr.bf16.mxu0 0
      %703 = vmatpush1.bf16.xpose.msra.mxu0 0
      %704 = vmatprep.subr.bf16.mxu0 0
      %705 = vmatpush1.bf16.xpose.msra.mxu0 0
      %706 = vmatprep.subr.bf16.mxu0 0
      %707 = vmatpush1.bf16.xpose.msra.mxu0 0
      %708 = vmatprep.subr.bf16.mxu0 0
      %709 = vmatpush1.bf16.xpose.msra.mxu0 0
      %710 = vmatprep.subr.bf16.mxu0 0
      %711 = vmatpush1.bf16.xpose.msra.mxu0 0
      %712 = vmatprep.subr.bf16.mxu0 0
      %713 = vmatpush1.bf16.xpose.msra.mxu0 0
      %714 = vmatprep.subr.bf16.mxu0 0
      %715 = vmatpush1.bf16.xpose.msra.mxu0 0
      %716 = vmatprep.subr.bf16.mxu0 0
      %717 = vmatpush1.bf16.xpose.msra.mxu0 0
      %718 = vmatprep.mubr.bf16.mxu0 0
      %719 = vmatmul.mubr.bf16.gmra.mrb[0].mxu0 %v681
      %v720 = vpop.f32.mrb[0].mxu0
      %v721 = vadd.f32 0.0, %v720
      %v722 = vpop.f32.mrb[0].mxu0
      %v723 = vpop.f32.mrb[0].mxu0
      %v724 = vpop.f32.mrb[0].mxu0
      %725 = vdwg.mxu0
      %v726 = vmul.f32 %v721, 0.5
      %v727 = vsel %vm194, %v726, -inf
      %728 = vmax.xlane.f32.xlu0 %v727
      %v729 = vpop.xlane.xlu0 %728
      %v730 = vsub.f32 %v726, %v729
      %v731 = vmul.f32 %v730, 1.442695
      %v732 = vpow.pop %v731
      %v733 = vsel %vm194, %v732, 0.0
      %734 = vadd.xlane.f32.xlu0 %v733
      %v735 = vpop.xlane.xlu0 %734
      %v736 = vrcp.pop %v735
      %v737 = vmul.f32 %v732, %v736
      %v738 = vpack.c.bf16 %v737, %v737
      %739 = vrot.lane.b32.xlu0 %v677, 112
      %v740 = vpop.permute.xlu0 %739
      %v742 = vsel %vm146, %v738, 0
      %v745 = vsel %vm212, %v740, 0
      %747 = vmatprep.subr.bf16.mxu0 0
      %748 = vmatpush1.bf16.msra.mxu0 %v745
      %749 = vmatprep.subr.bf16.mxu0 0
      %750 = vmatpush1.bf16.msra.mxu0 0
      %751 = vmatprep.subr.bf16.mxu0 0
      %752 = vmatpush1.bf16.msra.mxu0 0
      %753 = vmatprep.subr.bf16.mxu0 0
      %754 = vmatpush1.bf16.msra.mxu0 0
      %755 = vmatprep.subr.bf16.mxu0 0
      %756 = vmatpush1.bf16.msra.mxu0 0
      %757 = vmatprep.subr.bf16.mxu0 0
      %758 = vmatpush1.bf16.msra.mxu0 0
      %759 = vmatprep.subr.bf16.mxu0 0
      %760 = vmatpush1.bf16.msra.mxu0 0
      %761 = vmatprep.subr.bf16.mxu0 0
      %762 = vmatpush1.bf16.msra.mxu0 0
      %763 = vmatprep.subr.bf16.mxu0 0
      %764 = vmatpush1.bf16.msra.mxu0 0
      %765 = vmatprep.subr.bf16.mxu0 0
      %766 = vmatpush1.bf16.msra.mxu0 0
      %767 = vmatprep.subr.bf16.mxu0 0
      %768 = vmatpush1.bf16.msra.mxu0 0
      %769 = vmatprep.subr.bf16.mxu0 0
      %770 = vmatpush1.bf16.msra.mxu0 0
      %771 = vmatprep.subr.bf16.mxu0 0
      %772 = vmatpush1.bf16.msra.mxu0 0
      %773 = vmatprep.subr.bf16.mxu0 0
      %774 = vmatpush1.bf16.msra.mxu0 0
      %775 = vmatprep.subr.bf16.mxu0 0
      %776 = vmatpush1.bf16.msra.mxu0 0
      %777 = vmatprep.subr.bf16.mxu0 0
      %778 = vmatpush1.bf16.msra.mxu0 0
      %779 = vmatprep.mubr.bf16.mxu0 0
      %780 = vmatmul.mubr.bf16.gmra.mrb[0].mxu0 %v742
      %v781 = vpop.f32.mrb[0].mxu0
      %v782 = vadd.f32 0.0, %v781
      %v783 = vpop.f32.mrb[0].mxu0
      %v784 = vpop.f32.mrb[0].mxu0
      %v785 = vpop.f32.mrb[0].mxu0
      %786 = vdwg.mxu0
      %787 = vrot.lane.b32.xlu0 %v677, 124
      %v788 = vpop.permute.xlu0 %787
      %789 = vrot.lane.b32.xlu0 %v677, 116
      %v790 = vpop.permute.xlu0 %789
      %v792 = vsel %vm146, %v788, 0
      %v795 = vsel %vm146, %v790, 0
      %797 = vmatprep.subr.bf16.mxu0 0
      %798 = vmatpush1.bf16.xpose.msra.mxu0 %v795
      %799 = vmatprep.subr.bf16.mxu0 0
      %800 = vmatpush1.bf16.xpose.msra.mxu0 0
      %801 = vmatprep.subr.bf16.mxu0 0
      %802 = vmatpush1.bf16.xpose.msra.mxu0 0
      %803 = vmatprep.subr.bf16.mxu0 0
      %804 = vmatpush1.bf16.xpose.msra.mxu0 0
      %805 = vmatprep.subr.bf16.mxu0 0
      %806 = vmatpush1.bf16.xpose.msra.mxu0 0
      %807 = vmatprep.subr.bf16.mxu0 0
      %808 = vmatpush1.bf16.xpose.msra.mxu0 0
      %809 = vmatprep.subr.bf16.mxu0 0
      %810 = vmatpush1.bf16.xpose.msra.mxu0 0
      %811 = vmatprep.subr.bf16.mxu0 0
      %812 = vmatpush1.bf16.xpose.msra.mxu0 0
      %813 = vmatprep.subr.bf16.mxu0 0
      %814 = vmatpush1.bf16.xpose.msra.mxu0 0
      %815 = vmatprep.subr.bf16.mxu0 0
      %816 = vmatpush1.bf16.xpose.msra.mxu0 0
      %817 = vmatprep.subr.bf16.mxu0 0
      %818 = vmatpush1.bf16.xpose.msra.mxu0 0
      %819 = vmatprep.subr.bf16.mxu0 0
      %820 = vmatpush1.bf16.xpose.msra.mxu0 0
      %821 = vmatprep.subr.bf16.mxu0 0
      %822 = vmatpush1.bf16.xpose.msra.mxu0 0
      %823 = vmatprep.subr.bf16.mxu0 0
      %824 = vmatpush1.bf16.xpose.msra.mxu0 0
      %825 = vmatprep.subr.bf16.mxu0 0
      %826 = vmatpush1.bf16.xpose.msra.mxu0 0
      %827 = vmatprep.subr.bf16.mxu0 0
      %828 = vmatpush1.bf16.xpose.msra.mxu0 0
      %829 = vmatprep.mubr.bf16.mxu0 0
      %830 = vmatmul.mubr.bf16.gmra.mrb[0].mxu0 %v792
      %v831 = vpop.f32.mrb[0].mxu0
      %v832 = vadd.f32 0.0, %v831
      %v833 = vpop.f32.mrb[0].mxu0
      %v834 = vpop.f32.mrb[0].mxu0
      %v835 = vpop.f32.mrb[0].mxu0
      %836 = vdwg.mxu0
      %v837 = vmul.f32 %v832, 0.5
      %v838 = vsel %vm194, %v837, -inf
      %839 = vmax.xlane.f32.xlu0 %v838
      %v840 = vpop.xlane.xlu0 %839
      %v841 = vsub.f32 %v837, %v840
      %v842 = vmul.f32 %v841, 1.442695
      %v843 = vpow.pop %v842
      %v844 = vsel %vm194, %v843, 0.0
      %845 = vadd.xlane.f32.xlu0 %v844
      %v846 = vpop.xlane.xlu0 %845
      %v847 = vrcp.pop %v846
      %v848 = vmul.f32 %v843, %v847
      %v849 = vpack.c.bf16 %v848, %v848
      %850 = vrot.lane.b32.xlu0 %v677, 108
      %v851 = vpop.permute.xlu0 %850
      %v853 = vsel %vm146, %v849, 0
      %v856 = vsel %vm212, %v851, 0
      %858 = vmatprep.subr.bf16.mxu0 0
      %859 = vmatpush1.bf16.msra.mxu0 %v856
      %860 = vmatprep.subr.bf16.mxu0 0
      %861 = vmatpush1.bf16.msra.mxu0 0
      %862 = vmatprep.subr.bf16.mxu0 0
      %863 = vmatpush1.bf16.msra.mxu0 0
      %864 = vmatprep.subr.bf16.mxu0 0
      %865 = vmatpush1.bf16.msra.mxu0 0
      %866 = vmatprep.subr.bf16.mxu0 0
      %867 = vmatpush1.bf16.msra.mxu0 0
      %868 = vmatprep.subr.bf16.mxu0 0
      %869 = vmatpush1.bf16.msra.mxu0 0
      %870 = vmatprep.subr.bf16.mxu0 0
      %871 = vmatpush1.bf16.msra.mxu0 0
      %872 = vmatprep.subr.bf16.mxu0 0
      %873 = vmatpush1.bf16.msra.mxu0 0
      %874 = vmatprep.subr.bf16.mxu0 0
      %875 = vmatpush1.bf16.msra.mxu0 0
      %876 = vmatprep.subr.bf16.mxu0 0
      %877 = vmatpush1.bf16.msra.mxu0 0
      %878 = vmatprep.subr.bf16.mxu0 0
      %879 = vmatpush1.bf16.msra.mxu0 0
      %880 = vmatprep.subr.bf16.mxu0 0
      %881 = vmatpush1.bf16.msra.mxu0 0
      %882 = vmatprep.subr.bf16.mxu0 0
      %883 = vmatpush1.bf16.msra.mxu0 0
      %884 = vmatprep.subr.bf16.mxu0 0
      %885 = vmatpush1.bf16.msra.mxu0 0
      %886 = vmatprep.subr.bf16.mxu0 0
      %887 = vmatpush1.bf16.msra.mxu0 0
      %888 = vmatprep.subr.bf16.mxu0 0
      %889 = vmatpush1.bf16.msra.mxu0 0
      %890 = vmatprep.mubr.bf16.mxu0 0
      %891 = vmatmul.mubr.bf16.gmra.mrb[0].mxu0 %v853
      %v892 = vpop.f32.mrb[0].mxu0
      %v893 = vadd.f32 0.0, %v892
      %v894 = vpop.f32.mrb[0].mxu0
      %v895 = vpop.f32.mrb[0].mxu0
      %v896 = vpop.f32.mrb[0].mxu0
      %897 = vdwg.mxu0
      %899 = vrot.lane.b32.xlu0 %v893, 4
      %v900 = vpop.permute.xlu0 %899
      %v902 = vsel %vm146, %v782, %v900
      %v905 = vunpack.c.l.s4 1966171168
      %v906 = vunpack.c.0.s8 %v905
      %v907 = vlaneseq
      %v908 = vshrl.u32 %v907, 7
      %v909 = vsub.s32 %v906, %v908
      %v910 = vrot.slane %v902, %v909
      %v911 = vcombine.high %v910, %v910
      %v913 = vunpack.c.l.s4 1966171168
      %v914 = vunpack.c.0.s8 %v913
      %v915 = vlaneseq
      %v916 = vshrl.u32 %v915, 7
      %v917 = vsub.s32 %v914, %v916
      %v918 = vrot.slane %v910, %v917
      %v920 = vunpack.c.l.s4 1966171168
      %v921 = vunpack.c.0.s8 %v920
      %v922 = vlaneseq
      %v923 = vshrl.u32 %v922, 7
      %v924 = vsub.s32 %v921, %v923
      %v925 = vrot.slane %v911, %v924
      %v926 = vcombine.high %v918, %v918
      %v927 = vcombine.high %v925, %v925
      %932 = vst.msk [vmem:[%s116 + $0x2] sm:$0x1] %vm401, %v918
      %933 = vst.msk [vmem:[%s116 + $0x6] sm:$0x1] %vm401, %v925
      %934 = vst.msk [vmem:[%s116 + $0xa] sm:$0x1] %vm401, %v926
      %935 = vst.msk [vmem:[%s116 + $0xe] sm:$0x1] %vm401, %v927
      %v936 = vrot.slane %v130, 3
      %v937 = vrot.slane %v131, 2
      %v938 = vsel %vm135, %v937, %v936
      %v939 = vrot.slane %v132, 1
      %v940 = vsel %vm138, %v939, %v938
      %v941 = vsel %vm141, %v133, %v940
      %v942 = vpack.c.b16 %v941, %v941
      %943 = vrot.lane.b32.xlu0 %v942, 120
      %v944 = vpop.permute.xlu0 %943
      %v946 = vsel %vm146, %v942, 0
      %v949 = vsel %vm146, %v944, 0
      %951 = vmatprep.subr.bf16.mxu0 0
      %952 = vmatpush1.bf16.xpose.msra.mxu0 %v949
      %953 = vmatprep.subr.bf16.mxu0 0
      %954 = vmatpush1.bf16.xpose.msra.mxu0 0
      %955 = vmatprep.subr.bf16.mxu0 0
      %956 = vmatpush1.bf16.xpose.msra.mxu0 0
      %957 = vmatprep.subr.bf16.mxu0 0
      %958 = vmatpush1.bf16.xpose.msra.mxu0 0
      %959 = vmatprep.subr.bf16.mxu0 0
      %960 = vmatpush1.bf16.xpose.msra.mxu0 0
      %961 = vmatprep.subr.bf16.mxu0 0
      %962 = vmatpush1.bf16.xpose.msra.mxu0 0
      %963 = vmatprep.subr.bf16.mxu0 0
      %964 = vmatpush1.bf16.xpose.msra.mxu0 0
      %965 = vmatprep.subr.bf16.mxu0 0
      %966 = vmatpush1.bf16.xpose.msra.mxu0 0
      %967 = vmatprep.subr.bf16.mxu0 0
      %968 = vmatpush1.bf16.xpose.msra.mxu0 0
      %969 = vmatprep.subr.bf16.mxu0 0
      %970 = vmatpush1.bf16.xpose.msra.mxu0 0
      %971 = vmatprep.subr.bf16.mxu0 0
      %972 = vmatpush1.bf16.xpose.msra.mxu0 0
      %973 = vmatprep.subr.bf16.mxu0 0
      %974 = vmatpush1.bf16.xpose.msra.mxu0 0
      %975 = vmatprep.subr.bf16.mxu0 0
      %976 = vmatpush1.bf16.xpose.msra.mxu0 0
      %977 = vmatprep.subr.bf16.mxu0 0
      %978 = vmatpush1.bf16.xpose.msra.mxu0 0
      %979 = vmatprep.subr.bf16.mxu0 0
      %980 = vmatpush1.bf16.xpose.msra.mxu0 0
      %981 = vmatprep.subr.bf16.mxu0 0
      %982 = vmatpush1.bf16.xpose.msra.mxu0 0
      %983 = vmatprep.mubr.bf16.mxu0 0
      %984 = vmatmul.mubr.bf16.gmra.mrb[0].mxu0 %v946
      %v985 = vpop.f32.mrb[0].mxu0
      %v986 = vadd.f32 0.0, %v985
      %v987 = vpop.f32.mrb[0].mxu0
      %v988 = vpop.f32.mrb[0].mxu0
      %v989 = vpop.f32.mrb[0].mxu0
      %990 = vdwg.mxu0
      %v991 = vmul.f32 %v986, 0.5
      %v992 = vsel %vm194, %v991, -inf
      %993 = vmax.xlane.f32.xlu0 %v992
      %v994 = vpop.xlane.xlu0 %993
      %v995 = vsub.f32 %v991, %v994
      %v996 = vmul.f32 %v995, 1.442695
      %v997 = vpow.pop %v996
      %v998 = vsel %vm194, %v997, 0.0
      %999 = vadd.xlane.f32.xlu0 %v998
      %v1000 = vpop.xlane.xlu0 %999
      %v1001 = vrcp.pop %v1000
      %v1002 = vmul.f32 %v997, %v1001
      %v1003 = vpack.c.bf16 %v1002, %v1002
      %1004 = vrot.lane.b32.xlu0 %v942, 112
      %v1005 = vpop.permute.xlu0 %1004
      %v1007 = vsel %vm146, %v1003, 0
      %v1010 = vsel %vm212, %v1005, 0
      %1012 = vmatprep.subr.bf16.mxu0 0
      %1013 = vmatpush1.bf16.msra.mxu0 %v1010
      %1014 = vmatprep.subr.bf16.mxu0 0
      %1015 = vmatpush1.bf16.msra.mxu0 0
      %1016 = vmatprep.subr.bf16.mxu0 0
      %1017 = vmatpush1.bf16.msra.mxu0 0
      %1018 = vmatprep.subr.bf16.mxu0 0
      %1019 = vmatpush1.bf16.msra.mxu0 0
      %1020 = vmatprep.subr.bf16.mxu0 0
      %1021 = vmatpush1.bf16.msra.mxu0 0
      %1022 = vmatprep.subr.bf16.mxu0 0
      %1023 = vmatpush1.bf16.msra.mxu0 0
      %1024 = vmatprep.subr.bf16.mxu0 0
      %1025 = vmatpush1.bf16.msra.mxu0 0
      %1026 = vmatprep.subr.bf16.mxu0 0
      %1027 = vmatpush1.bf16.msra.mxu0 0
      %1028 = vmatprep.subr.bf16.mxu0 0
      %1029 = vmatpush1.bf16.msra.mxu0 0
      %1030 = vmatprep.subr.bf16.mxu0 0
      %1031 = vmatpush1.bf16.msra.mxu0 0
      %1032 = vmatprep.subr.bf16.mxu0 0
      %1033 = vmatpush1.bf16.msra.mxu0 0
      %1034 = vmatprep.subr.bf16.mxu0 0
      %1035 = vmatpush1.bf16.msra.mxu0 0
      %1036 = vmatprep.subr.bf16.mxu0 0
      %1037 = vmatpush1.bf16.msra.mxu0 0
      %1038 = vmatprep.subr.bf16.mxu0 0
      %1039 = vmatpush1.bf16.msra.mxu0 0
      %1040 = vmatprep.subr.bf16.mxu0 0
      %1041 = vmatpush1.bf16.msra.mxu0 0
      %1042 = vmatprep.subr.bf16.mxu0 0
      %1043 = vmatpush1.bf16.msra.mxu0 0
      %1044 = vmatprep.mubr.bf16.mxu0 0
      %1045 = vmatmul.mubr.bf16.gmra.mrb[0].mxu0 %v1007
      %v1046 = vpop.f32.mrb[0].mxu0
      %v1047 = vadd.f32 0.0, %v1046
      %v1048 = vpop.f32.mrb[0].mxu0
      %v1049 = vpop.f32.mrb[0].mxu0
      %v1050 = vpop.f32.mrb[0].mxu0
      %1051 = vdwg.mxu0
      %1052 = vrot.lane.b32.xlu0 %v942, 124
      %v1053 = vpop.permute.xlu0 %1052
      %1054 = vrot.lane.b32.xlu0 %v942, 116
      %v1055 = vpop.permute.xlu0 %1054
      %v1057 = vsel %vm146, %v1053, 0
      %v1060 = vsel %vm146, %v1055, 0
      %1062 = vmatprep.subr.bf16.mxu0 0
      %1063 = vmatpush1.bf16.xpose.msra.mxu0 %v1060
      %1064 = vmatprep.subr.bf16.mxu0 0
      %1065 = vmatpush1.bf16.xpose.msra.mxu0 0
      %1066 = vmatprep.subr.bf16.mxu0 0
      %1067 = vmatpush1.bf16.xpose.msra.mxu0 0
      %1068 = vmatprep.subr.bf16.mxu0 0
      %1069 = vmatpush1.bf16.xpose.msra.mxu0 0
      %1070 = vmatprep.subr.bf16.mxu0 0
      %1071 = vmatpush1.bf16.xpose.msra.mxu0 0
      %1072 = vmatprep.subr.bf16.mxu0 0
      %1073 = vmatpush1.bf16.xpose.msra.mxu0 0
      %1074 = vmatprep.subr.bf16.mxu0 0
      %1075 = vmatpush1.bf16.xpose.msra.mxu0 0
      %1076 = vmatprep.subr.bf16.mxu0 0
      %1077 = vmatpush1.bf16.xpose.msra.mxu0 0
      %1078 = vmatprep.subr.bf16.mxu0 0
      %1079 = vmatpush1.bf16.xpose.msra.mxu0 0
      %1080 = vmatprep.subr.bf16.mxu0 0
      %1081 = vmatpush1.bf16.xpose.msra.mxu0 0
      %1082 = vmatprep.subr.bf16.mxu0 0
      %1083 = vmatpush1.bf16.xpose.msra.mxu0 0
      %1084 = vmatprep.subr.bf16.mxu0 0
      %1085 = vmatpush1.bf16.xpose.msra.mxu0 0
      %1086 = vmatprep.subr.bf16.mxu0 0
      %1087 = vmatpush1.bf16.xpose.msra.mxu0 0
      %1088 = vmatprep.subr.bf16.mxu0 0
      %1089 = vmatpush1.bf16.xpose.msra.mxu0 0
      %1090 = vmatprep.subr.bf16.mxu0 0
      %1091 = vmatpush1.bf16.xpose.msra.mxu0 0
      %1092 = vmatprep.subr.bf16.mxu0 0
      %1093 = vmatpush1.bf16.xpose.msra.mxu0 0
      %1094 = vmatprep.mubr.bf16.mxu0 0
      %1095 = vmatmul.mubr.bf16.gmra.mrb[0].mxu0 %v1057
      %v1096 = vpop.f32.mrb[0].mxu0
      %v1097 = vadd.f32 0.0, %v1096
      %v1098 = vpop.f32.mrb[0].mxu0
      %v1099 = vpop.f32.mrb[0].mxu0
      %v1100 = vpop.f32.mrb[0].mxu0
      %1101 = vdwg.mxu0
      %v1102 = vmul.f32 %v1097, 0.5
      %v1103 = vsel %vm194, %v1102, -inf
      %1104 = vmax.xlane.f32.xlu0 %v1103
      %v1105 = vpop.xlane.xlu0 %1104
      %v1106 = vsub.f32 %v1102, %v1105
      %v1107 = vmul.f32 %v1106, 1.442695
      %v1108 = vpow.pop %v1107
      %v1109 = vsel %vm194, %v1108, 0.0
      %1110 = vadd.xlane.f32.xlu0 %v1109
      %v1111 = vpop.xlane.xlu0 %1110
      %v1112 = vrcp.pop %v1111
      %v1113 = vmul.f32 %v1108, %v1112
      %v1114 = vpack.c.bf16 %v1113, %v1113
      %1115 = vrot.lane.b32.xlu0 %v942, 108
      %v1116 = vpop.permute.xlu0 %1115
      %v1118 = vsel %vm146, %v1114, 0
      %v1121 = vsel %vm212, %v1116, 0
      %1123 = vmatprep.subr.bf16.mxu0 0
      %1124 = vmatpush1.bf16.msra.mxu0 %v1121
      %1125 = vmatprep.subr.bf16.mxu0 0
      %1126 = vmatpush1.bf16.msra.mxu0 0
      %1127 = vmatprep.subr.bf16.mxu0 0
      %1128 = vmatpush1.bf16.msra.mxu0 0
      %1129 = vmatprep.subr.bf16.mxu0 0
      %1130 = vmatpush1.bf16.msra.mxu0 0
      %1131 = vmatprep.subr.bf16.mxu0 0
      %1132 = vmatpush1.bf16.msra.mxu0 0
      %1133 = vmatprep.subr.bf16.mxu0 0
      %1134 = vmatpush1.bf16.msra.mxu0 0
      %1135 = vmatprep.subr.bf16.mxu0 0
      %1136 = vmatpush1.bf16.msra.mxu0 0
      %1137 = vmatprep.subr.bf16.mxu0 0
      %1138 = vmatpush1.bf16.msra.mxu0 0
      %1139 = vmatprep.subr.bf16.mxu0 0
      %1140 = vmatpush1.bf16.msra.mxu0 0
      %1141 = vmatprep.subr.bf16.mxu0 0
      %1142 = vmatpush1.bf16.msra.mxu0 0
      %1143 = vmatprep.subr.bf16.mxu0 0
      %1144 = vmatpush1.bf16.msra.mxu0 0
      %1145 = vmatprep.subr.bf16.mxu0 0
      %1146 = vmatpush1.bf16.msra.mxu0 0
      %1147 = vmatprep.subr.bf16.mxu0 0
      %1148 = vmatpush1.bf16.msra.mxu0 0
      %1149 = vmatprep.subr.bf16.mxu0 0
      %1150 = vmatpush1.bf16.msra.mxu0 0
      %1151 = vmatprep.subr.bf16.mxu0 0
      %1152 = vmatpush1.bf16.msra.mxu0 0
      %1153 = vmatprep.subr.bf16.mxu0 0
      %1154 = vmatpush1.bf16.msra.mxu0 0
      %1155 = vmatprep.mubr.bf16.mxu0 0
      %1156 = vmatmul.mubr.bf16.gmra.mrb[0].mxu0 %v1118
      %v1157 = vpop.f32.mrb[0].mxu0
      %v1158 = vadd.f32 0.0, %v1157
      %v1159 = vpop.f32.mrb[0].mxu0
      %v1160 = vpop.f32.mrb[0].mxu0
      %v1161 = vpop.f32.mrb[0].mxu0
      %1162 = vdwg.mxu0
      %1164 = vrot.lane.b32.xlu0 %v1158, 4
      %v1165 = vpop.permute.xlu0 %1164
      %v1167 = vsel %vm146, %v1047, %v1165
      %v1170 = vunpack.c.l.s4 1966171168
      %v1171 = vunpack.c.0.s8 %v1170
      %v1172 = vlaneseq
      %v1173 = vshrl.u32 %v1172, 7
      %v1174 = vsub.s32 %v1171, %v1173
      %v1175 = vrot.slane %v1167, %v1174
      %v1176 = vcombine.high %v1175, %v1175
      %v1178 = vunpack.c.l.s4 1966171168
      %v1179 = vunpack.c.0.s8 %v1178
      %v1180 = vlaneseq
      %v1181 = vshrl.u32 %v1180, 7
      %v1182 = vsub.s32 %v1179, %v1181
      %v1183 = vrot.slane %v1175, %v1182
      %v1185 = vunpack.c.l.s4 1966171168
      %v1186 = vunpack.c.0.s8 %v1185
      %v1187 = vlaneseq
      %v1188 = vshrl.u32 %v1187, 7
      %v1189 = vsub.s32 %v1186, %v1188
      %v1190 = vrot.slane %v1176, %v1189
      %v1191 = vcombine.high %v1183, %v1183
      %v1192 = vcombine.high %v1190, %v1190
      %1197 = vst.msk [vmem:[%s116 + $0x3] sm:$0x1] %vm401, %v1183
      %1198 = vst.msk [vmem:[%s116 + $0x7] sm:$0x1] %vm401, %v1190
      %1199 = vst.msk [vmem:[%s116 + $0xb] sm:$0x1] %vm401, %v1191
      %1200 = vst.msk [vmem:[%s116 + $0xf] sm:$0x1] %vm401, %v1192
      %p1201 = scmp.lt.s32.totalorder %s12, 1
      %s1202 = scalar_select %p1201, %s12, 1
      %s1203 = smul.addr %s1202, 4
      %s1204 = smul.addr %s1203, 4
      %s1205 = scalar_lea.vmem %s1, %s1204
      // Predicated region
      $region25: #{_lambda_.22} parent=23 // pred_check
        %p1206 = pneg %p56
      $region26: #{_lambda_.22} parent=23 // pred_check_branch
        %1208 = sbr.rel (%p1206) target = $region28
      $region27: #{_lambda_.22} parent=23 // pred_region
        _
      $region28: #{_lambda_.22} parent=23 // pred_fallthru
        _
    $region24: #{_lambda_.22} parent=5 // pred_fallthru
      _
    %p1209 = scmp.le.s32.totalorder 2, %s7
    // Predicated region
    $region29: #{_lambda_.22} parent=5 // pred_check
      %p1210 = pneg %p1209
    $region30: #{_lambda_.22} parent=5 // pred_check_branch
      %1212 = sbr.rel (%p1210) target = $region32
    $region31: #{_lambda_.22} parent=5 // pred_region
      %s1213 = ssub.s32 %s7, 2
      // Predicated region
      $region33: #{_lambda_.22} parent=31 // pred_check
        %p1214 = pneg %p62
      $region34: #{_lambda_.22} parent=31 // pred_check_branch
        %1216 = sbr.rel (%p1214) target = $region36
      $region35: #{_lambda_.22} parent=31 // pred_region
        %p1217 = scmp.lt.s32.totalorder %s13, 1
        %s1218 = scalar_select %p1217, %s13, 1
        %s1219 = smul.addr %s1218, 4
        %s1220 = smul.addr %s1219, 4
        %s1221 = scalar_lea.vmem %s1, %s1220
      $region36: #{_lambda_.22} parent=31 // pred_fallthru
        _
    $region32: #{_lambda_.22} parent=5 // pred_fallthru
      _
  $region6: #{_lambda_.22} parent=0 // loop_footer
    %s11 = sadd.s32 1, %s7
  $region7: #{_lambda_.22} parent=0 // loop_footer_branch
    %6 = sbr.rel target = $region3
  $region8: #{_lambda_.22} parent=0 // loop_exit
    _

// kernel: _lambda_.33
$region0: #{_lambda_.33}
  #allocation0 [shape = 'u32[]', space=smem, size = 0x4, offset = 0x4, fixed_abs, tag = 'smem constant byte address 0x4 - core index']
  #allocation1 [shape = 'u32[144,128]{1,0:T(1,128)}', space=vmem, size = 0x12000, scoped, tag = 'internal scratch']
  #allocation2 [shape = 'f32[1,1]{1,0:T(1,128)S(6)}', space=smem, size = 0x200, scoped, tag = 'scoped memory for _lambda_.33']
  %s0 = inlined_call_operand.vmem [shape: bf16[36,8], index: 0, kind: input, shape index: {}]
  %s1 = inlined_call_operand.vmem [shape: f32[2,8,8], index: 1, kind: input, shape index: {}]
  %s2 = inlined_call_operand.vmem [shape: f32[2,8], index: 2, kind: input, shape index: {}]
  %s3 = inlined_call_operand.vmem [shape: bf16[8,8], index: 3, kind: input, shape index: {}]
  %s4 = inlined_call_operand.vmem [shape: f32[1,8], index: 4, kind: input, shape index: {}]
  %s5 = inlined_call_operand.vmem [shape: bf16[8,8], index: 5, kind: input, shape index: {}]
  %s6 = inlined_call_operand.vmem [shape: f32[1,8], index: 6, kind: input, shape index: {}]
  %s7 = inlined_call_operand.<no memory space> [shape: f32[1,1], index: 7, kind: input, shape index: {}]
  %s8 = inlined_call_operand.vmem [shape: f32[36,2,8], index: 8, kind: output, shape index: {}]
  %s9 = sld [smem:[#allocation0]]
  $region42: #{_lambda_.33} parent=0
    _
  %s11 = ssub.s32 1, %s9
  %s12 = scalar_select 0, %s11, %s9
  %13 = sst [smem:[#allocation2]] %s7
  // Predicated region
  $region2: #{_lambda_.33} parent=0 // pred_check
    _
  $region3: #{_lambda_.33} parent=0 // pred_check_branch
    %15 = sbr.rel (0) target = $region5
  $region4: #{_lambda_.33} parent=0 // pred_region
    _
  $region5: #{_lambda_.33} parent=0 // pred_fallthru
    _
  // Predicated region
  $region6: #{_lambda_.33} parent=0 // pred_check
    _
  $region7: #{_lambda_.33} parent=0 // pred_check_branch
    %17 = sbr.rel (0) target = $region9
  $region8: #{_lambda_.33} parent=0 // pred_region
    _
  $region9: #{_lambda_.33} parent=0 // pred_fallthru
    _
  // Predicated region
  $region10: #{_lambda_.33} parent=0 // pred_check
    _
  $region11: #{_lambda_.33} parent=0 // pred_check_branch
    %19 = sbr.rel (0) target = $region13
  $region12: #{_lambda_.33} parent=0 // pred_region
    _
  $region13: #{_lambda_.33} parent=0 // pred_fallthru
    _
  // Predicated region
  $region14: #{_lambda_.33} parent=0 // pred_check
    _
  $region15: #{_lambda_.33} parent=0 // pred_check_branch
    %21 = sbr.rel (0) target = $region17
  $region16: #{_lambda_.33} parent=0 // pred_region
    _
  $region17: #{_lambda_.33} parent=0 // pred_fallthru
    _
  // Predicated region
  $region18: #{_lambda_.33} parent=0 // pred_check
    _
  $region19: #{_lambda_.33} parent=0 // pred_check_branch
    %23 = sbr.rel (0) target = $region21
  $region20: #{_lambda_.33} parent=0 // pred_region
    _
  $region21: #{_lambda_.33} parent=0 // pred_fallthru
    _
  // Predicated region
  $region22: #{_lambda_.33} parent=0 // pred_check
    _
  $region23: #{_lambda_.33} parent=0 // pred_check_branch
    %25 = sbr.rel (0) target = $region25
  $region24: #{_lambda_.33} parent=0 // pred_region
    _
  $region25: #{_lambda_.33} parent=0 // pred_fallthru
    _
  // Predicated region
  $region26: #{_lambda_.33} parent=0 // pred_check
    _
  $region27: #{_lambda_.33} parent=0 // pred_check_branch
    %27 = sbr.rel (0) target = $region29
  $region28: #{_lambda_.33} parent=0 // pred_region
    _
  $region29: #{_lambda_.33} parent=0 // pred_fallthru
    _
  // Predicated region
  $region30: #{_lambda_.33} parent=0 // pred_check
    _
  $region31: #{_lambda_.33} parent=0 // pred_check_branch
    %29 = sbr.rel (0) target = $region33
  $region32: #{_lambda_.33} parent=0 // pred_region
    _
  $region33: #{_lambda_.33} parent=0 // pred_fallthru
    _
  %s31 = sld [smem:[#allocation2]]
  %v32 = vld [vmem:[%s0] sm:$0xf]
  %v33 = vld [vmem:[%s0 + $0x4] sm:$0xf]
  %v34 = vld [vmem:[%s0 + $0x8] sm:$0xf]
  %v35 = vld [vmem:[%s0 + $0xc] sm:$0xf]
  %v36 = vld [vmem:[%s0 + $0x10] sm:$0x3]
  %v37 = vunpack.c.l.bf16 %v32
  %v38 = vunpack.c.l.bf16 %v33
  %v39 = vunpack.c.l.bf16 %v34
  %v40 = vunpack.c.l.bf16 %v35
  %v41 = vunpack.c.l.bf16 %v36
  %vm42 = vcmp.ge.f32.partialorder %v37, 0.0
  %vm43 = vcmp.ge.f32.partialorder %v38, 0.0
  %vm44 = vcmp.ge.f32.partialorder %v39, 0.0
  %vm45 = vcmp.ge.f32.partialorder %v40, 0.0
  %vm46 = vcmp.ge.f32.partialorder %v41, 0.0
  %v47 = vstv %s31
  %v48 = vmul.f32 %v47, %v37
  %v49 = vmul.f32 %v47, %v38
  %v50 = vmul.f32 %v47, %v39
  %v51 = vmul.f32 %v47, %v40
  %v52 = vmul.f32 %v47, %v41
  %v53 = vsel %vm42, %v37, %v48
  %v54 = vsel %vm43, %v38, %v49
  %v55 = vsel %vm44, %v39, %v50
  %v56 = vsel %vm45, %v40, %v51
  %v57 = vsel %vm46, %v41, %v52
  %v58 = vpack.c.bf16 %v54, %v53
  %v59 = vpack.c.bf16 %v56, %v55
  %v60 = vpack.c.bf16 %v57, %v57
  %v61 = vld [vmem:[%s1] sm:$0xff]
  %v62 = vpack.c.bf16 %v61, %v61
  %v63 = vld [vmem:[%s2] sm:$0x1]
  %v64 = vlaneseq
  %v65 = vshrl.u32 %v64, 7
  %v66 = vsub.s32 0, %v65
  %v67 = vrot.slane %v63, %v66
  %vm68 = vcmask 64512
  %v70 = vsel %vm68, %v58, 0
  %v73 = vsel %vm68, %v59, 0
  %v76 = vsel %vm68, %v60, 0
  %vm78 = vcmask 1043456
  %v80 = vsel %vm78, %v62, 0
  %82 = vmatprep.subr.bf16.mxu0 0
  %83 = vmatpush1.bf16.msra.mxu0 %v80
  %84 = vmatprep.subr.bf16.mxu0 0
  %85 = vmatpush1.bf16.msra.mxu0 0
  %86 = vmatprep.subr.bf16.mxu0 0
  %87 = vmatpush1.bf16.msra.mxu0 0
  %88 = vmatprep.subr.bf16.mxu0 0
  %89 = vmatpush1.bf16.msra.mxu0 0
  %90 = vmatprep.subr.bf16.mxu0 0
  %91 = vmatpush1.bf16.msra.mxu0 0
  %92 = vmatprep.subr.bf16.mxu0 0
  %93 = vmatpush1.bf16.msra.mxu0 0
  %94 = vmatprep.subr.bf16.mxu0 0
  %95 = vmatpush1.bf16.msra.mxu0 0
  %96 = vmatprep.subr.bf16.mxu0 0
  %97 = vmatpush1.bf16.msra.mxu0 0
  %98 = vmatprep.subr.bf16.mxu0 0
  %99 = vmatpush1.bf16.msra.mxu0 0
  %100 = vmatprep.subr.bf16.mxu0 0
  %101 = vmatpush1.bf16.msra.mxu0 0
  %102 = vmatprep.subr.bf16.mxu0 0
  %103 = vmatpush1.bf16.msra.mxu0 0
  %104 = vmatprep.subr.bf16.mxu0 0
  %105 = vmatpush1.bf16.msra.mxu0 0
  %106 = vmatprep.subr.bf16.mxu0 0
  %107 = vmatpush1.bf16.msra.mxu0 0
  %108 = vmatprep.subr.bf16.mxu0 0
  %109 = vmatpush1.bf16.msra.mxu0 0
  %110 = vmatprep.subr.bf16.mxu0 0
  %111 = vmatpush1.bf16.msra.mxu0 0
  %112 = vmatprep.subr.bf16.mxu0 0
  %113 = vmatpush1.bf16.msra.mxu0 0
  %114 = vmatprep.mubr.bf16.mxu0 0
  %115 = vmatmul.mubr.bf16.gmra.mrb[0].mxu0 %v70
  %v116 = vpop.f32.mrb[0].mxu0
  %v117 = vadd.f32 %v67, %v116
  %v118 = vpop.f32.mrb[0].mxu0
  %v119 = vpop.f32.mrb[0].mxu0
  %v120 = vadd.f32 %v67, %v119
  %v121 = vpop.f32.mrb[0].mxu0
  %122 = vmatprep.mubr.bf16.mxu0 0
  %123 = vmatmul.mubr.bf16.gmra.mrb[0].mxu0 %v73
  %v124 = vpop.f32.mrb[0].mxu0
  %v125 = vadd.f32 %v67, %v124
  %v126 = vpop.f32.mrb[0].mxu0
  %v127 = vpop.f32.mrb[0].mxu0
  %v128 = vadd.f32 %v67, %v127
  %v129 = vpop.f32.mrb[0].mxu0
  %130 = vmatprep.mubr.bf16.mxu0 0
  %131 = vmatmul.mubr.bf16.gmra.mrb[0].mxu0 %v76
  %v132 = vpop.f32.mrb[0].mxu0
  %v133 = vadd.f32 %v67, %v132
  %v134 = vpop.f32.mrb[0].mxu0
  %v135 = vpop.f32.mrb[0].mxu0
  %v136 = vpop.f32.mrb[0].mxu0
  %137 = vdwg.mxu0
  %v138 = vpack.c.bf16 %v120, %v117
  %v139 = vpack.c.bf16 %v128, %v125
  %v140 = vpack.c.bf16 %v133, %v133
  %v141 = vld [vmem:[%s3] sm:$0xf]
  %v142 = vld [vmem:[%s4] sm:$0x1]
  %v144 = vlaneseq
  %v145 = vshrl.u32 %v144, 7
  %v146 = vsub.s32 0, %v145
  %v147 = vrot.slane %v142, %v146
  %v150 = vsel %vm68, %v138, 0
  %v153 = vsel %vm68, %v139, 0
  %v156 = vsel %vm68, %v140, 0
  %v159 = vsel %vm78, %v141, 0
  %161 = vmatprep.subr.bf16.mxu0 0
  %162 = vmatpush1.bf16.msra.mxu0 %v159
  %163 = vmatprep.subr.bf16.mxu0 0
  %164 = vmatpush1.bf16.msra.mxu0 0
  %165 = vmatprep.subr.bf16.mxu0 0
  %166 = vmatpush1.bf16.msra.mxu0 0
  %167 = vmatprep.subr.bf16.mxu0 0
  %168 = vmatpush1.bf16.msra.mxu0 0
  %169 = vmatprep.subr.bf16.mxu0 0
  %170 = vmatpush1.bf16.msra.mxu0 0
  %171 = vmatprep.subr.bf16.mxu0 0
  %172 = vmatpush1.bf16.msra.mxu0 0
  %173 = vmatprep.subr.bf16.mxu0 0
  %174 = vmatpush1.bf16.msra.mxu0 0
  %175 = vmatprep.subr.bf16.mxu0 0
  %176 = vmatpush1.bf16.msra.mxu0 0
  %177 = vmatprep.subr.bf16.mxu0 0
  %178 = vmatpush1.bf16.msra.mxu0 0
  %179 = vmatprep.subr.bf16.mxu0 0
  %180 = vmatpush1.bf16.msra.mxu0 0
  %181 = vmatprep.subr.bf16.mxu0 0
  %182 = vmatpush1.bf16.msra.mxu0 0
  %183 = vmatprep.subr.bf16.mxu0 0
  %184 = vmatpush1.bf16.msra.mxu0 0
  %185 = vmatprep.subr.bf16.mxu0 0
  %186 = vmatpush1.bf16.msra.mxu0 0
  %187 = vmatprep.subr.bf16.mxu0 0
  %188 = vmatpush1.bf16.msra.mxu0 0
  %189 = vmatprep.subr.bf16.mxu0 0
  %190 = vmatpush1.bf16.msra.mxu0 0
  %191 = vmatprep.subr.bf16.mxu0 0
  %192 = vmatpush1.bf16.msra.mxu0 0
  %193 = vmatprep.mubr.bf16.mxu0 0
  %194 = vmatmul.mubr.bf16.gmra.mrb[0].mxu0 %v150
  %v195 = vpop.f32.mrb[0].mxu0
  %v196 = vadd.f32 %v147, %v195
  %v197 = vpop.f32.mrb[0].mxu0
  %v198 = vpop.f32.mrb[0].mxu0
  %v199 = vadd.f32 %v147, %v198
  %v200 = vpop.f32.mrb[0].mxu0
  %201 = vmatprep.mubr.bf16.mxu0 0
  %202 = vmatmul.mubr.bf16.gmra.mrb[0].mxu0 %v153
  %v203 = vpop.f32.mrb[0].mxu0
  %v204 = vadd.f32 %v147, %v203
  %v205 = vpop.f32.mrb[0].mxu0
  %v206 = vpop.f32.mrb[0].mxu0
  %v207 = vadd.f32 %v147, %v206
  %v208 = vpop.f32.mrb[0].mxu0
  %209 = vmatprep.mubr.bf16.mxu0 0
  %210 = vmatmul.mubr.bf16.gmra.mrb[0].mxu0 %v156
  %v211 = vpop.f32.mrb[0].mxu0
  %v212 = vadd.f32 %v147, %v211
  %v213 = vpop.f32.mrb[0].mxu0
  %v214 = vpop.f32.mrb[0].mxu0
  %v215 = vpop.f32.mrb[0].mxu0
  %216 = vdwg.mxu0
  %v217 = vld [vmem:[%s5] sm:$0xf]
  %v218 = vld [vmem:[%s6] sm:$0x1]
  %v220 = vlaneseq
  %v221 = vshrl.u32 %v220, 7
  %v222 = vsub.s32 0, %v221
  %v223 = vrot.slane %v218, %v222
  %v226 = vsel %vm78, %v217, 0
  %228 = vmatprep.subr.bf16.mxu0 0
  %229 = vmatpush1.bf16.msra.mxu0 %v226
  %230 = vmatprep.subr.bf16.mxu0 0
  %231 = vmatpush1.bf16.msra.mxu0 0
  %232 = vmatprep.subr.bf16.mxu0 0
  %233 = vmatpush1.bf16.msra.mxu0 0
  %234 = vmatprep.subr.bf16.mxu0 0
  %235 = vmatpush1.bf16.msra.mxu0 0
  %236 = vmatprep.subr.bf16.mxu0 0
  %237 = vmatpush1.bf16.msra.mxu0 0
  %238 = vmatprep.subr.bf16.mxu0 0
  %239 = vmatpush1.bf16.msra.mxu0 0
  %240 = vmatprep.subr.bf16.mxu0 0
  %241 = vmatpush1.bf16.msra.mxu0 0
  %242 = vmatprep.subr.bf16.mxu0 0
  %243 = vmatpush1.bf16.msra.mxu0 0
  %244 = vmatprep.subr.bf16.mxu0 0
  %245 = vmatpush1.bf16.msra.mxu0 0
  %246 = vmatprep.subr.bf16.mxu0 0
  %247 = vmatpush1.bf16.msra.mxu0 0
  %248 = vmatprep.subr.bf16.mxu0 0
  %249 = vmatpush1.bf16.msra.mxu0 0
  %250 = vmatprep.subr.bf16.mxu0 0
  %251 = vmatpush1.bf16.msra.mxu0 0
  %252 = vmatprep.subr.bf16.mxu0 0
  %253 = vmatpush1.bf16.msra.mxu0 0
  %254 = vmatprep.subr.bf16.mxu0 0
  %255 = vmatpush1.bf16.msra.mxu0 0
  %256 = vmatprep.subr.bf16.mxu0 0
  %257 = vmatpush1.bf16.msra.mxu0 0
  %258 = vmatprep.subr.bf16.mxu0 0
  %259 = vmatpush1.bf16.msra.mxu0 0
  %260 = vmatprep.mubr.bf16.mxu0 0
  %261 = vmatmul.mubr.bf16.gmra.mrb[0].mxu0 %v150
  %v262 = vpop.f32.mrb[0].mxu0
  %v263 = vadd.f32 %v223, %v262
  %v264 = vpop.f32.mrb[0].mxu0
  %v265 = vpop.f32.mrb[0].mxu0
  %v266 = vadd.f32 %v223, %v265
  %v267 = vpop.f32.mrb[0].mxu0
  %268 = vmatprep.mubr.bf16.mxu0 0
  %269 = vmatmul.mubr.bf16.gmra.mrb[0].mxu0 %v153
  %v270 = vpop.f32.mrb[0].mxu0
  %v271 = vadd.f32 %v223, %v270
  %v272 = vpop.f32.mrb[0].mxu0
  %v273 = vpop.f32.mrb[0].mxu0
  %v274 = vadd.f32 %v223, %v273
  %v275 = vpop.f32.mrb[0].mxu0
  %276 = vmatprep.mubr.bf16.mxu0 0
  %277 = vmatmul.mubr.bf16.gmra.mrb[0].mxu0 %v156
  %v278 = vpop.f32.mrb[0].mxu0
  %v279 = vadd.f32 %v223, %v278
  %v280 = vpop.f32.mrb[0].mxu0
  %v281 = vpop.f32.mrb[0].mxu0
  %v282 = vpop.f32.mrb[0].mxu0
  %283 = vdwg.mxu0
  %v284 = vsub.f32 0.0, %v263
  %v285 = vsub.f32 0.0, %v266
  %v286 = vsub.f32 0.0, %v271
  %v287 = vsub.f32 0.0, %v274
  %v288 = vsub.f32 0.0, %v279
  %v289 = vmul.f32 %v284, 1.442695
  %v290 = vpow.pop %v289
  %v291 = vmul.f32 %v285, 1.442695
  %v292 = vpow.pop %v291
  %v293 = vmul.f32 %v286, 1.442695
  %v294 = vpow.pop %v293
  %v295 = vmul.f32 %v287, 1.442695
  %v296 = vpow.pop %v295
  %v297 = vmul.f32 %v288, 1.442695
  %v298 = vpow.pop %v297
  %v299 = vadd.f32 %v290, 1.0
  %v300 = vadd.f32 %v292, 1.0
  %v301 = vadd.f32 %v294, 1.0
  %v302 = vadd.f32 %v296, 1.0
  %v303 = vadd.f32 %v298, 1.0
  %v304 = vrcp.pop %v299
  %v305 = vrcp.pop %v300
  %v306 = vrcp.pop %v301
  %v307 = vrcp.pop %v302
  %v308 = vrcp.pop %v303
  %v309 = vtanh.pop %v196
  %v310 = vtanh.pop %v199
  %v311 = vtanh.pop %v204
  %v312 = vtanh.pop %v207
  %v313 = vtanh.pop %v212
  %v314 = vmul.f32 %v309, %v304
  %v315 = vmul.f32 %v310, %v305
  %v316 = vmul.f32 %v311, %v306
  %v317 = vmul.f32 %v312, %v307
  %v318 = vmul.f32 %v313, %v308
  %v319 = vmax.f32 %v314, 0.0
  %v320 = vmax.f32 %v315, 0.0
  %v321 = vmax.f32 %v316, 0.0
  %v322 = vmax.f32 %v317, 0.0
  %v323 = vmax.f32 %v318, 0.0
  %v329 = vcombine.high %v319, %v319
  %v331 = vunpack.c.l.s4 1966171168
  %v332 = vunpack.c.0.s8 %v331
  %v333 = vlaneseq
  %v334 = vshrl.u32 %v333, 7
  %v335 = vsub.s32 %v332, %v334
  %v336 = vrot.slane %v319, %v335
  %v338 = vunpack.c.l.s4 1966171168
  %v339 = vunpack.c.0.s8 %v338
  %v340 = vlaneseq
  %v341 = vshrl.u32 %v340, 7
  %v342 = vsub.s32 %v339, %v341
  %v343 = vrot.slane %v329, %v342
  %v344 = vcombine.high %v336, %v336
  %v345 = vcombine.high %v343, %v343
  %v347 = vunpack.c.l.s4 1966171168
  %v348 = vunpack.c.0.s8 %v347
  %v349 = vlaneseq
  %v350 = vshrl.u32 %v349, 7
  %v351 = vsub.s32 %v348, %v350
  %v352 = vrot.slane %v336, %v351
  %v354 = vunpack.c.l.s4 1966171168
  %v355 = vunpack.c.0.s8 %v354
  %v356 = vlaneseq
  %v357 = vshrl.u32 %v356, 7
  %v358 = vsub.s32 %v355, %v357
  %v359 = vrot.slane %v343, %v358
  %v361 = vunpack.c.l.s4 1966171168
  %v362 = vunpack.c.0.s8 %v361
  %v363 = vlaneseq
  %v364 = vshrl.u32 %v363, 7
  %v365 = vsub.s32 %v362, %v364
  %v366 = vrot.slane %v344, %v365
  %v368 = vunpack.c.l.s4 1966171168
  %v369 = vunpack.c.0.s8 %v368
  %v370 = vlaneseq
  %v371 = vshrl.u32 %v370, 7
  %v372 = vsub.s32 %v369, %v371
  %v373 = vrot.slane %v345, %v372
  %v374 = vcombine.high %v352, %v352
  %v375 = vcombine.high %v359, %v359
  %v376 = vcombine.high %v366, %v366
  %v377 = vcombine.high %v373, %v373
  %v378 = vcombine.high %v320, %v320
  %v380 = vunpack.c.l.s4 1966171168
  %v381 = vunpack.c.0.s8 %v380
  %v382 = vlaneseq
  %v383 = vshrl.u32 %v382, 7
  %v384 = vsub.s32 %v381, %v383
  %v385 = vrot.slane %v320, %v384
  %v387 = vunpack.c.l.s4 1966171168
  %v388 = vunpack.c.0.s8 %v387
  %v389 = vlaneseq
  %v390 = vshrl.u32 %v389, 7
  %v391 = vsub.s32 %v388, %v390
  %v392 = vrot.slane %v378, %v391
  %v393 = vcombine.high %v385, %v385
  %v394 = vcombine.high %v392, %v392
  %v396 = vunpack.c.l.s4 1966171168
  %v397 = vunpack.c.0.s8 %v396
  %v398 = vlaneseq
  %v399 = vshrl.u32 %v398, 7
  %v400 = vsub.s32 %v397, %v399
  %v401 = vrot.slane %v385, %v400
  %v403 = vunpack.c.l.s4 1966171168
  %v404 = vunpack.c.0.s8 %v403
  %v405 = vlaneseq
  %v406 = vshrl.u32 %v405, 7
  %v407 = vsub.s32 %v404, %v406
  %v408 = vrot.slane %v392, %v407
  %v410 = vunpack.c.l.s4 1966171168
  %v411 = vunpack.c.0.s8 %v410
  %v412 = vlaneseq
  %v413 = vshrl.u32 %v412, 7
  %v414 = vsub.s32 %v411, %v413
  %v415 = vrot.slane %v393, %v414
  %v417 = vunpack.c.l.s4 1966171168
  %v418 = vunpack.c.0.s8 %v417
  %v419 = vlaneseq
  %v420 = vshrl.u32 %v419, 7
  %v421 = vsub.s32 %v418, %v420
  %v422 = vrot.slane %v394, %v421
  %v423 = vcombine.high %v401, %v401
  %v424 = vcombine.high %v408, %v408
  %v425 = vcombine.high %v415, %v415
  %v426 = vcombine.high %v422, %v422
  %v427 = vcombine.high %v321, %v321
  %v429 = vunpack.c.l.s4 1966171168
  %v430 = vunpack.c.0.s8 %v429
  %v431 = vlaneseq
  %v432 = vshrl.u32 %v431, 7
  %v433 = vsub.s32 %v430, %v432
  %v434 = vrot.slane %v321, %v433
  %v436 = vunpack.c.l.s4 1966171168
  %v437 = vunpack.c.0.s8 %v436
  %v438 = vlaneseq
  %v439 = vshrl.u32 %v438, 7
  %v440 = vsub.s32 %v437, %v439
  %v441 = vrot.slane %v427, %v440
  %v442 = vcombine.high %v434, %v434
  %v443 = vcombine.high %v441, %v441
  %v445 = vunpack.c.l.s4 1966171168
  %v446 = vunpack.c.0.s8 %v445
  %v447 = vlaneseq
  %v448 = vshrl.u32 %v447, 7
  %v449 = vsub.s32 %v446, %v448
  %v450 = vrot.slane %v434, %v449
  %v452 = vunpack.c.l.s4 1966171168
  %v453 = vunpack.c.0.s8 %v452
  %v454 = vlaneseq
  %v455 = vshrl.u32 %v454, 7
  %v456 = vsub.s32 %v453, %v455
  %v457 = vrot.slane %v441, %v456
  %v459 = vunpack.c.l.s4 1966171168
  %v460 = vunpack.c.0.s8 %v459
  %v461 = vlaneseq
  %v462 = vshrl.u32 %v461, 7
  %v463 = vsub.s32 %v460, %v462
  %v464 = vrot.slane %v442, %v463
  %v466 = vunpack.c.l.s4 1966171168
  %v467 = vunpack.c.0.s8 %v466
  %v468 = vlaneseq
  %v469 = vshrl.u32 %v468, 7
  %v470 = vsub.s32 %v467, %v469
  %v471 = vrot.slane %v443, %v470
  %v472 = vcombine.high %v450, %v450
  %v473 = vcombine.high %v457, %v457
  %v474 = vcombine.high %v464, %v464
  %v475 = vcombine.high %v471, %v471
  %v476 = vcombine.high %v322, %v322
  %v478 = vunpack.c.l.s4 1966171168
  %v479 = vunpack.c.0.s8 %v478
  %v480 = vlaneseq
  %v481 = vshrl.u32 %v480, 7
  %v482 = vsub.s32 %v479, %v481
  %v483 = vrot.slane %v322, %v482
  %v485 = vunpack.c.l.s4 1966171168
  %v486 = vunpack.c.0.s8 %v485
  %v487 = vlaneseq
  %v488 = vshrl.u32 %v487, 7
  %v489 = vsub.s32 %v486, %v488
  %v490 = vrot.slane %v476, %v489
  %v491 = vcombine.high %v483, %v483
  %v492 = vcombine.high %v490, %v490
  %v494 = vunpack.c.l.s4 1966171168
  %v495 = vunpack.c.0.s8 %v494
  %v496 = vlaneseq
  %v497 = vshrl.u32 %v496, 7
  %v498 = vsub.s32 %v495, %v497
  %v499 = vrot.slane %v483, %v498
  %v501 = vunpack.c.l.s4 1966171168
  %v502 = vunpack.c.0.s8 %v501
  %v503 = vlaneseq
  %v504 = vshrl.u32 %v503, 7
  %v505 = vsub.s32 %v502, %v504
  %v506 = vrot.slane %v490, %v505
  %v508 = vunpack.c.l.s4 1966171168
  %v509 = vunpack.c.0.s8 %v508
  %v510 = vlaneseq
  %v511 = vshrl.u32 %v510, 7
  %v512 = vsub.s32 %v509, %v511
  %v513 = vrot.slane %v491, %v512
  %v515 = vunpack.c.l.s4 1966171168
  %v516 = vunpack.c.0.s8 %v515
  %v517 = vlaneseq
  %v518 = vshrl.u32 %v517, 7
  %v519 = vsub.s32 %v516, %v518
  %v520 = vrot.slane %v492, %v519
  %v521 = vcombine.high %v499, %v499
  %v522 = vcombine.high %v506, %v506
  %v523 = vcombine.high %v513, %v513
  %v524 = vcombine.high %v520, %v520
  %v526 = vunpack.c.l.s4 1966171168
  %v527 = vunpack.c.0.s8 %v526
  %v528 = vlaneseq
  %v529 = vshrl.u32 %v528, 7
  %v530 = vsub.s32 %v527, %v529
  %v531 = vrot.slane %v323, %v530
  %v532 = vcombine.high %v531, %v531
  %v534 = vunpack.c.l.s4 1966171168
  %v535 = vunpack.c.0.s8 %v534
  %v536 = vlaneseq
  %v537 = vshrl.u32 %v536, 7
  %v538 = vsub.s32 %v535, %v537
  %v539 = vrot.slane %v531, %v538
  %v541 = vunpack.c.l.s4 1966171168
  %v542 = vunpack.c.0.s8 %v541
  %v543 = vlaneseq
  %v544 = vshrl.u32 %v543, 7
  %v545 = vsub.s32 %v542, %v544
  %v546 = vrot.slane %v532, %v545
  %v547 = vcombine.high %v539, %v539
  %v548 = vcombine.high %v546, %v546
  %vm585 = vcmask 57344
  %586 = vst.msk [vmem:[%s8] sm:$0x1] %vm585, %v352
  %587 = vst.msk [vmem:[%s8 + $0x2] sm:$0x1] %vm585, %v366
  %588 = vst.msk [vmem:[%s8 + $0x4] sm:$0x1] %vm585, %v374
  %589 = vst.msk [vmem:[%s8 + $0x6] sm:$0x1] %vm585, %v376
  %590 = vst.msk [vmem:[%s8 + $0x8] sm:$0x1] %vm585, %v359
  %591 = vst.msk [vmem:[%s8 + $0xa] sm:$0x1] %vm585, %v373
  %592 = vst.msk [vmem:[%s8 + $0xc] sm:$0x1] %vm585, %v375
  %593 = vst.msk [vmem:[%s8 + $0xe] sm:$0x1] %vm585, %v377
  %594 = vst.msk [vmem:[%s8 + $0x10] sm:$0x1] %vm585, %v401
  %595 = vst.msk [vmem:[%s8 + $0x12] sm:$0x1] %vm585, %v415
  %596 = vst.msk [vmem:[%s8 + $0x14] sm:$0x1] %vm585, %v423
  %597 = vst.msk [vmem:[%s8 + $0x16] sm:$0x1] %vm585, %v425
  %598 = vst.msk [vmem:[%s8 + $0x18] sm:$0x1] %vm585, %v408
  %599 = vst.msk [vmem:[%s8 + $0x1a] sm:$0x1] %vm585, %v422
  %600 = vst.msk [vmem:[%s8 + $0x1c] sm:$0x1] %vm585, %v424
  %601 = vst.msk [vmem:[%s8 + $0x1e] sm:$0x1] %vm585, %v426
  %602 = vst.msk [vmem:[%s8 + $0x20] sm:$0x1] %vm585, %v450
  %603 = vst.msk [vmem:[%s8 + $0x22] sm:$0x1] %vm585, %v464
  %604 = vst.msk [vmem:[%s8 + $0x24] sm:$0x1] %vm585, %v472
  %605 = vst.msk [vmem:[%s8 + $0x26] sm:$0x1] %vm585, %v474
  %606 = vst.msk [vmem:[%s8 + $0x28] sm:$0x1] %vm585, %v457
  %607 = vst.msk [vmem:[%s8 + $0x2a] sm:$0x1] %vm585, %v471
  %608 = vst.msk [vmem:[%s8 + $0x2c] sm:$0x1] %vm585, %v473
  %609 = vst.msk [vmem:[%s8 + $0x2e] sm:$0x1] %vm585, %v475
  %610 = vst.msk [vmem:[%s8 + $0x30] sm:$0x1] %vm585, %v499
  %611 = vst.msk [vmem:[%s8 + $0x32] sm:$0x1] %vm585, %v513
  %612 = vst.msk [vmem:[%s8 + $0x34] sm:$0x1] %vm585, %v521
  %613 = vst.msk [vmem:[%s8 + $0x36] sm:$0x1] %vm585, %v523
  %614 = vst.msk [vmem:[%s8 + $0x38] sm:$0x1] %vm585, %v506
  %615 = vst.msk [vmem:[%s8 + $0x3a] sm:$0x1] %vm585, %v520
  %616 = vst.msk [vmem:[%s8 + $0x3c] sm:$0x1] %vm585, %v522
  %617 = vst.msk [vmem:[%s8 + $0x3e] sm:$0x1] %vm585, %v524
  %618 = vst.msk [vmem:[%s8 + $0x40] sm:$0x1] %vm585, %v539
  %619 = vst.msk [vmem:[%s8 + $0x42] sm:$0x1] %vm585, %v546
  %620 = vst.msk [vmem:[%s8 + $0x44] sm:$0x1] %vm585, %v547
  %621 = vst.msk [vmem:[%s8 + $0x46] sm:$0x1] %vm585, %v548
  %s622 = scalar_lea.vmem %s1, 8
  %v623 = vld [vmem:[%s622] sm:$0xff]
  %v624 = vpack.c.bf16 %v623, %v623
  %v625 = vld [vmem:[%s2 + $0x1] sm:$0x1]
  %v626 = vlaneseq
  %v627 = vshrl.u32 %v626, 7
  %v628 = vsub.s32 0, %v627
  %v629 = vrot.slane %v625, %v628
  %v631 = vsel %vm78, %v624, 0
  %633 = vmatprep.subr.bf16.mxu0 0
  %634 = vmatpush1.bf16.msra.mxu0 %v631
  %635 = vmatprep.subr.bf16.mxu0 0
  %636 = vmatpush1.bf16.msra.mxu0 0
  %637 = vmatprep.subr.bf16.mxu0 0
  %638 = vmatpush1.bf16.msra.mxu0 0
  %639 = vmatprep.subr.bf16.mxu0 0
  %640 = vmatpush1.bf16.msra.mxu0 0
  %641 = vmatprep.subr.bf16.mxu0 0
  %642 = vmatpush1.bf16.msra.mxu0 0
  %643 = vmatprep.subr.bf16.mxu0 0
  %644 = vmatpush1.bf16.msra.mxu0 0
  %645 = vmatprep.subr.bf16.mxu0 0
  %646 = vmatpush1.bf16.msra.mxu0 0
  %647 = vmatprep.subr.bf16.mxu0 0
  %648 = vmatpush1.bf16.msra.mxu0 0
  %649 = vmatprep.subr.bf16.mxu0 0
  %650 = vmatpush1.bf16.msra.mxu0 0
  %651 = vmatprep.subr.bf16.mxu0 0
  %652 = vmatpush1.bf16.msra.mxu0 0
  %653 = vmatprep.subr.bf16.mxu0 0
  %654 = vmatpush1.bf16.msra.mxu0 0
  %655 = vmatprep.subr.bf16.mxu0 0
  %656 = vmatpush1.bf16.msra.mxu0 0
  %657 = vmatprep.subr.bf16.mxu0 0
  %658 = vmatpush1.bf16.msra.mxu0 0
  %659 = vmatprep.subr.bf16.mxu0 0
  %660 = vmatpush1.bf16.msra.mxu0 0
  %661 = vmatprep.subr.bf16.mxu0 0
  %662 = vmatpush1.bf16.msra.mxu0 0
  %663 = vmatprep.subr.bf16.mxu0 0
  %664 = vmatpush1.bf16.msra.mxu0 0
  %665 = vmatprep.mubr.bf16.mxu0 0
  %666 = vmatmul.mubr.bf16.gmra.mrb[0].mxu0 %v70
  %v667 = vpop.f32.mrb[0].mxu0
  %v668 = vadd.f32 %v629, %v667
  %v669 = vpop.f32.mrb[0].mxu0
  %v670 = vpop.f32.mrb[0].mxu0
  %v671 = vadd.f32 %v629, %v670
  %v672 = vpop.f32.mrb[0].mxu0
  %673 = vmatprep.mubr.bf16.mxu0 0
  %674 = vmatmul.mubr.bf16.gmra.mrb[0].mxu0 %v73
  %v675 = vpop.f32.mrb[0].mxu0
  %v676 = vadd.f32 %v629, %v675
  %v677 = vpop.f32.mrb[0].mxu0
  %v678 = vpop.f32.mrb[0].mxu0
  %v679 = vadd.f32 %v629, %v678
  %v680 = vpop.f32.mrb[0].mxu0
  %681 = vmatprep.mubr.bf16.mxu0 0
  %682 = vmatmul.mubr.bf16.gmra.mrb[0].mxu0 %v76
  %v683 = vpop.f32.mrb[0].mxu0
  %v684 = vadd.f32 %v629, %v683
  %v685 = vpop.f32.mrb[0].mxu0
  %v686 = vpop.f32.mrb[0].mxu0
  %v687 = vpop.f32.mrb[0].mxu0
  %688 = vdwg.mxu0
  %v689 = vpack.c.bf16 %v671, %v668
  %v690 = vpack.c.bf16 %v679, %v676
  %v691 = vpack.c.bf16 %v684, %v684
  %v692 = vld [vmem:[%s3] sm:$0xf]
  %v693 = vld [vmem:[%s4] sm:$0x1]
  %v695 = vlaneseq
  %v696 = vshrl.u32 %v695, 7
  %v697 = vsub.s32 0, %v696
  %v698 = vrot.slane %v693, %v697
  %v701 = vsel %vm68, %v689, 0
  %v704 = vsel %vm68, %v690, 0
  %v707 = vsel %vm68, %v691, 0
  %v710 = vsel %vm78, %v692, 0
  %712 = vmatprep.subr.bf16.mxu0 0
  %713 = vmatpush1.bf16.msra.mxu0 %v710
  %714 = vmatprep.subr.bf16.mxu0 0
  %715 = vmatpush1.bf16.msra.mxu0 0
  %716 = vmatprep.subr.bf16.mxu0 0
  %717 = vmatpush1.bf16.msra.mxu0 0
  %718 = vmatprep.subr.bf16.mxu0 0
  %719 = vmatpush1.bf16.msra.mxu0 0
  %720 = vmatprep.subr.bf16.mxu0 0
  %721 = vmatpush1.bf16.msra.mxu0 0
  %722 = vmatprep.subr.bf16.mxu0 0
  %723 = vmatpush1.bf16.msra.mxu0 0
  %724 = vmatprep.subr.bf16.mxu0 0
  %725 = vmatpush1.bf16.msra.mxu0 0
  %726 = vmatprep.subr.bf16.mxu0 0
  %727 = vmatpush1.bf16.msra.mxu0 0
  %728 = vmatprep.subr.bf16.mxu0 0
  %729 = vmatpush1.bf16.msra.mxu0 0
  %730 = vmatprep.subr.bf16.mxu0 0
  %731 = vmatpush1.bf16.msra.mxu0 0
  %732 = vmatprep.subr.bf16.mxu0 0
  %733 = vmatpush1.bf16.msra.mxu0 0
  %734 = vmatprep.subr.bf16.mxu0 0
  %735 = vmatpush1.bf16.msra.mxu0 0
  %736 = vmatprep.subr.bf16.mxu0 0
  %737 = vmatpush1.bf16.msra.mxu0 0
  %738 = vmatprep.subr.bf16.mxu0 0
  %739 = vmatpush1.bf16.msra.mxu0 0
  %740 = vmatprep.subr.bf16.mxu0 0
  %741 = vmatpush1.bf16.msra.mxu0 0
  %742 = vmatprep.subr.bf16.mxu0 0
  %743 = vmatpush1.bf16.msra.mxu0 0
  %744 = vmatprep.mubr.bf16.mxu0 0
  %745 = vmatmul.mubr.bf16.gmra.mrb[0].mxu0 %v701
  %v746 = vpop.f32.mrb[0].mxu0
  %v747 = vadd.f32 %v698, %v746
  %v748 = vpop.f32.mrb[0].mxu0
  %v749 = vpop.f32.mrb[0].mxu0
  %v750 = vadd.f32 %v698, %v749
  %v751 = vpop.f32.mrb[0].mxu0
  %752 = vmatprep.mubr.bf16.mxu0 0
  %753 = vmatmul.mubr.bf16.gmra.mrb[0].mxu0 %v704
  %v754 = vpop.f32.mrb[0].mxu0
  %v755 = vadd.f32 %v698, %v754
  %v756 = vpop.f32.mrb[0].mxu0
  %v757 = vpop.f32.mrb[0].mxu0
  %v758 = vadd.f32 %v698, %v757
  %v759 = vpop.f32.mrb[0].mxu0
  %760 = vmatprep.mubr.bf16.mxu0 0
  %761 = vmatmul.mubr.bf16.gmra.mrb[0].mxu0 %v707
  %v762 = vpop.f32.mrb[0].mxu0
  %v763 = vadd.f32 %v698, %v762
  %v764 = vpop.f32.mrb[0].mxu0
  %v765 = vpop.f32.mrb[0].mxu0
  %v766 = vpop.f32.mrb[0].mxu0
  %767 = vdwg.mxu0
  %v768 = vld [vmem:[%s5] sm:$0xf]
  %v769 = vld [vmem:[%s6] sm:$0x1]
  %v771 = vlaneseq
  %v772 = vshrl.u32 %v771, 7
  %v773 = vsub.s32 0, %v772
  %v774 = vrot.slane %v769, %v773
  %v777 = vsel %vm78, %v768, 0
  %779 = vmatprep.subr.bf16.mxu0 0
  %780 = vmatpush1.bf16.msra.mxu0 %v777
  %781 = vmatprep.subr.bf16.mxu0 0
  %782 = vmatpush1.bf16.msra.mxu0 0
  %783 = vmatprep.subr.bf16.mxu0 0
  %784 = vmatpush1.bf16.msra.mxu0 0
  %785 = vmatprep.subr.bf16.mxu0 0
  %786 = vmatpush1.bf16.msra.mxu0 0
  %787 = vmatprep.subr.bf16.mxu0 0
  %788 = vmatpush1.bf16.msra.mxu0 0
  %789 = vmatprep.subr.bf16.mxu0 0
  %790 = vmatpush1.bf16.msra.mxu0 0
  %791 = vmatprep.subr.bf16.mxu0 0
  %792 = vmatpush1.bf16.msra.mxu0 0
  %793 = vmatprep.subr.bf16.mxu0 0
  %794 = vmatpush1.bf16.msra.mxu0 0
  %795 = vmatprep.subr.bf16.mxu0 0
  %796 = vmatpush1.bf16.msra.mxu0 0
  %797 = vmatprep.subr.bf16.mxu0 0
  %798 = vmatpush1.bf16.msra.mxu0 0
  %799 = vmatprep.subr.bf16.mxu0 0
  %800 = vmatpush1.bf16.msra.mxu0 0
  %801 = vmatprep.subr.bf16.mxu0 0
  %802 = vmatpush1.bf16.msra.mxu0 0
  %803 = vmatprep.subr.bf16.mxu0 0
  %804 = vmatpush1.bf16.msra.mxu0 0
  %805 = vmatprep.subr.bf16.mxu0 0
  %806 = vmatpush1.bf16.msra.mxu0 0
  %807 = vmatprep.subr.bf16.mxu0 0
  %808 = vmatpush1.bf16.msra.mxu0 0
  %809 = vmatprep.subr.bf16.mxu0 0
  %810 = vmatpush1.bf16.msra.mxu0 0
  %811 = vmatprep.mubr.bf16.mxu0 0
  %812 = vmatmul.mubr.bf16.gmra.mrb[0].mxu0 %v701
  %v813 = vpop.f32.mrb[0].mxu0
  %v814 = vadd.f32 %v774, %v813
  %v815 = vpop.f32.mrb[0].mxu0
  %v816 = vpop.f32.mrb[0].mxu0
  %v817 = vadd.f32 %v774, %v816
  %v818 = vpop.f32.mrb[0].mxu0
  %819 = vmatprep.mubr.bf16.mxu0 0
  %820 = vmatmul.mubr.bf16.gmra.mrb[0].mxu0 %v704
  %v821 = vpop.f32.mrb[0].mxu0
  %v822 = vadd.f32 %v774, %v821
  %v823 = vpop.f32.mrb[0].mxu0
  %v824 = vpop.f32.mrb[0].mxu0
  %v825 = vadd.f32 %v774, %v824
  %v826 = vpop.f32.mrb[0].mxu0
  %827 = vmatprep.mubr.bf16.mxu0 0
  %828 = vmatmul.mubr.bf16.gmra.mrb[0].mxu0 %v707
  %v829 = vpop.f32.mrb[0].mxu0
  %v830 = vadd.f32 %v774, %v829
  %v831 = vpop.f32.mrb[0].mxu0
  %v832 = vpop.f32.mrb[0].mxu0
  %v833 = vpop.f32.mrb[0].mxu0
  %834 = vdwg.mxu0
  %v835 = vsub.f32 0.0, %v814
  %v836 = vsub.f32 0.0, %v817
  %v837 = vsub.f32 0.0, %v822
  %v838 = vsub.f32 0.0, %v825
  %v839 = vsub.f32 0.0, %v830
  %v840 = vmul.f32 %v835, 1.442695
  %v841 = vpow.pop %v840
  %v842 = vmul.f32 %v836, 1.442695
  %v843 = vpow.pop %v842
  %v844 = vmul.f32 %v837, 1.442695
  %v845 = vpow.pop %v844
  %v846 = vmul.f32 %v838, 1.442695
  %v847 = vpow.pop %v846
  %v848 = vmul.f32 %v839, 1.442695
  %v849 = vpow.pop %v848
  %v850 = vadd.f32 %v841, 1.0
  %v851 = vadd.f32 %v843, 1.0
  %v852 = vadd.f32 %v845, 1.0
  %v853 = vadd.f32 %v847, 1.0
  %v854 = vadd.f32 %v849, 1.0
  %v855 = vrcp.pop %v850
  %v856 = vrcp.pop %v851
  %v857 = vrcp.pop %v852
  %v858 = vrcp.pop %v853
  %v859 = vrcp.pop %v854
  %v860 = vtanh.pop %v747
  %v861 = vtanh.pop %v750
  %v862 = vtanh.pop %v755
  %v863 = vtanh.pop %v758
  %v864 = vtanh.pop %v763
  %v865 = vmul.f32 %v860, %v855
  %v866 = vmul.f32 %v861, %v856
  %v867 = vmul.f32 %v862, %v857
  %v868 = vmul.f32 %v863, %v858
  %v869 = vmul.f32 %v864, %v859
  %v870 = vmax.f32 %v865, 0.0
  %v871 = vmax.f32 %v866, 0.0
  %v872 = vmax.f32 %v867, 0.0
  %v873 = vmax.f32 %v868, 0.0
  %v874 = vmax.f32 %v869, 0.0
  %v880 = vcombine.high %v870, %v870
  %v882 = vunpack.c.l.s4 1966171168
  %v883 = vunpack.c.0.s8 %v882
  %v884 = vlaneseq
  %v885 = vshrl.u32 %v884, 7
  %v886 = vsub.s32 %v883, %v885
  %v887 = vrot.slane %v870, %v886
  %v889 = vunpack.c.l.s4 1966171168
  %v890 = vunpack.c.0.s8 %v889
  %v891 = vlaneseq
  %v892 = vshrl.u32 %v891, 7
  %v893 = vsub.s32 %v890, %v892
  %v894 = vrot.slane %v880, %v893
  %v895 = vcombine.high %v887, %v887
  %v896 = vcombine.high %v894, %v894
  %v898 = vunpack.c.l.s4 1966171168
  %v899 = vunpack.c.0.s8 %v898
  %v900 = vlaneseq
  %v901 = vshrl.u32 %v900, 7
  %v902 = vsub.s32 %v899, %v901
  %v903 = vrot.slane %v887, %v902
  %v905 = vunpack.c.l.s4 1966171168
  %v906 = vunpack.c.0.s8 %v905
  %v907 = vlaneseq
  %v908 = vshrl.u32 %v907, 7
  %v909 = vsub.s32 %v906, %v908
  %v910 = vrot.slane %v894, %v909
  %v912 = vunpack.c.l.s4 1966171168
  %v913 = vunpack.c.0.s8 %v912
  %v914 = vlaneseq
  %v915 = vshrl.u32 %v914, 7
  %v916 = vsub.s32 %v913, %v915
  %v917 = vrot.slane %v895, %v916
  %v919 = vunpack.c.l.s4 1966171168
  %v920 = vunpack.c.0.s8 %v919
  %v921 = vlaneseq
  %v922 = vshrl.u32 %v921, 7
  %v923 = vsub.s32 %v920, %v922
  %v924 = vrot.slane %v896, %v923
  %v925 = vcombine.high %v903, %v903
  %v926 = vcombine.high %v910, %v910
  %v927 = vcombine.high %v917, %v917
  %v928 = vcombine.high %v924, %v924
  %v929 = vcombine.high %v871, %v871
  %v931 = vunpack.c.l.s4 1966171168
  %v932 = vunpack.c.0.s8 %v931
  %v933 = vlaneseq
  %v934 = vshrl.u32 %v933, 7
  %v935 = vsub.s32 %v932, %v934
  %v936 = vrot.slane %v871, %v935
  %v938 = vunpack.c.l.s4 1966171168
  %v939 = vunpack.c.0.s8 %v938
  %v940 = vlaneseq
  %v941 = vshrl.u32 %v940, 7
  %v942 = vsub.s32 %v939, %v941
  %v943 = vrot.slane %v929, %v942
  %v944 = vcombine.high %v936, %v936
  %v945 = vcombine.high %v943, %v943
  %v947 = vunpack.c.l.s4 1966171168
  %v948 = vunpack.c.0.s8 %v947
  %v949 = vlaneseq
  %v950 = vshrl.u32 %v949, 7
  %v951 = vsub.s32 %v948, %v950
  %v952 = vrot.slane %v936, %v951
  %v954 = vunpack.c.l.s4 1966171168
  %v955 = vunpack.c.0.s8 %v954
  %v956 = vlaneseq
  %v957 = vshrl.u32 %v956, 7
  %v958 = vsub.s32 %v955, %v957
  %v959 = vrot.slane %v943, %v958
  %v961 = vunpack.c.l.s4 1966171168
  %v962 = vunpack.c.0.s8 %v961
  %v963 = vlaneseq
  %v964 = vshrl.u32 %v963, 7
  %v965 = vsub.s32 %v962, %v964
  %v966 = vrot.slane %v944, %v965
  %v968 = vunpack.c.l.s4 1966171168
  %v969 = vunpack.c.0.s8 %v968
  %v970 = vlaneseq
  %v971 = vshrl.u32 %v970, 7
  %v972 = vsub.s32 %v969, %v971
  %v973 = vrot.slane %v945, %v972
  %v974 = vcombine.high %v952, %v952
  %v975 = vcombine.high %v959, %v959
  %v976 = vcombine.high %v966, %v966
  %v977 = vcombine.high %v973, %v973
  %v978 = vcombine.high %v872, %v872
  %v980 = vunpack.c.l.s4 1966171168
  %v981 = vunpack.c.0.s8 %v980
  %v982 = vlaneseq
  %v983 = vshrl.u32 %v982, 7
  %v984 = vsub.s32 %v981, %v983
  %v985 = vrot.slane %v872, %v984
  %v987 = vunpack.c.l.s4 1966171168
  %v988 = vunpack.c.0.s8 %v987
  %v989 = vlaneseq
  %v990 = vshrl.u32 %v989, 7
  %v991 = vsub.s32 %v988, %v990
  %v992 = vrot.slane %v978, %v991
  %v993 = vcombine.high %v985, %v985
  %v994 = vcombine.high %v992, %v992
  %v996 = vunpack.c.l.s4 1966171168
  %v997 = vunpack.c.0.s8 %v996
  %v998 = vlaneseq
  %v999 = vshrl.u32 %v998, 7
  %v1000 = vsub.s32 %v997, %v999
  %v1001 = vrot.slane %v985, %v1000
  %v1003 = vunpack.c.l.s4 1966171168
  %v1004 = vunpack.c.0.s8 %v1003
  %v1005 = vlaneseq
  %v1006 = vshrl.u32 %v1005, 7
  %v1007 = vsub.s32 %v1004, %v1006
  %v1008 = vrot.slane %v992, %v1007
  %v1010 = vunpack.c.l.s4 1966171168
  %v1011 = vunpack.c.0.s8 %v1010
  %v1012 = vlaneseq
  %v1013 = vshrl.u32 %v1012, 7
  %v1014 = vsub.s32 %v1011, %v1013
  %v1015 = vrot.slane %v993, %v1014
  %v1017 = vunpack.c.l.s4 1966171168
  %v1018 = vunpack.c.0.s8 %v1017
  %v1019 = vlaneseq
  %v1020 = vshrl.u32 %v1019, 7
  %v1021 = vsub.s32 %v1018, %v1020
  %v1022 = vrot.slane %v994, %v1021
  %v1023 = vcombine.high %v1001, %v1001
  %v1024 = vcombine.high %v1008, %v1008
  %v1025 = vcombine.high %v1015, %v1015
  %v1026 = vcombine.high %v1022, %v1022
  %v1027 = vcombine.high %v873, %v873
  %v1029 = vunpack.c.l.s4 1966171168
  %v1030 = vunpack.c.0.s8 %v1029
  %v1031 = vlaneseq
  %v1032 = vshrl.u32 %v1031, 7
  %v1033 = vsub.s32 %v1030, %v1032
  %v1034 = vrot.slane %v873, %v1033
  %v1036 = vunpack.c.l.s4 1966171168
  %v1037 = vunpack.c.0.s8 %v1036
  %v1038 = vlaneseq
  %v1039 = vshrl.u32 %v1038, 7
  %v1040 = vsub.s32 %v1037, %v1039
  %v1041 = vrot.slane %v1027, %v1040
  %v1042 = vcombine.high %v1034, %v1034
  %v1043 = vcombine.high %v1041, %v1041
  %v1045 = vunpack.c.l.s4 1966171168
  %v1046 = vunpack.c.0.s8 %v1045
  %v1047 = vlaneseq
  %v1048 = vshrl.u32 %v1047, 7
  %v1049 = vsub.s32 %v1046, %v1048
  %v1050 = vrot.slane %v1034, %v1049
  %v1052 = vunpack.c.l.s4 1966171168
  %v1053 = vunpack.c.0.s8 %v1052
  %v1054 = vlaneseq
  %v1055 = vshrl.u32 %v1054, 7
  %v1056 = vsub.s32 %v1053, %v1055
  %v1057 = vrot.slane %v1041, %v1056
  %v1059 = vunpack.c.l.s4 1966171168
  %v1060 = vunpack.c.0.s8 %v1059
  %v1061 = vlaneseq
  %v1062 = vshrl.u32 %v1061, 7
  %v1063 = vsub.s32 %v1060, %v1062
  %v1064 = vrot.slane %v1042, %v1063
  %v1066 = vunpack.c.l.s4 1966171168
  %v1067 = vunpack.c.0.s8 %v1066
  %v1068 = vlaneseq
  %v1069 = vshrl.u32 %v1068, 7
  %v1070 = vsub.s32 %v1067, %v1069
  %v1071 = vrot.slane %v1043, %v1070
  %v1072 = vcombine.high %v1050, %v1050
  %v1073 = vcombine.high %v1057, %v1057
  %v1074 = vcombine.high %v1064, %v1064
  %v1075 = vcombine.high %v1071, %v1071
  %v1077 = vunpack.c.l.s4 1966171168
  %v1078 = vunpack.c.0.s8 %v1077
  %v1079 = vlaneseq
  %v1080 = vshrl.u32 %v1079, 7
  %v1081 = vsub.s32 %v1078, %v1080
  %v1082 = vrot.slane %v874, %v1081
  %v1083 = vcombine.high %v1082, %v1082
  %v1085 = vunpack.c.l.s4 1966171168
  %v1086 = vunpack.c.0.s8 %v1085
  %v1087 = vlaneseq
  %v1088 = vshrl.u32 %v1087, 7
  %v1089 = vsub.s32 %v1086, %v1088
  %v1090 = vrot.slane %v1082, %v1089
  %v1092 = vunpack.c.l.s4 1966171168
  %v1093 = vunpack.c.0.s8 %v1092
  %v1094 = vlaneseq
  %v1095 = vshrl.u32 %v1094, 7
  %v1096 = vsub.s32 %v1093, %v1095
  %v1097 = vrot.slane %v1083, %v1096
  %v1098 = vcombine.high %v1090, %v1090
  %v1099 = vcombine.high %v1097, %v1097
  %1136 = vst.msk [vmem:[%s8 + $0x1] sm:$0x1] %vm585, %v903
  %1137 = vst.msk [vmem:[%s8 + $0x3] sm:$0x1] %vm585, %v917
  %1138 = vst.msk [vmem:[%s8 + $0x5] sm:$0x1] %vm585, %v925
  %1139 = vst.msk [vmem:[%s8 + $0x7] sm:$0x1] %vm585, %v927
  %1140 = vst.msk [vmem:[%s8 + $0x9] sm:$0x1] %vm585, %v910
  %1141 = vst.msk [vmem:[%s8 + $0xb] sm:$0x1] %vm585, %v924
  %1142 = vst.msk [vmem:[%s8 + $0xd] sm:$0x1] %vm585, %v926
  %1143 = vst.msk [vmem:[%s8 + $0xf] sm:$0x1] %vm585, %v928
  %1144 = vst.msk [vmem:[%s8 + $0x11] sm:$0x1] %vm585, %v952
  %1145 = vst.msk [vmem:[%s8 + $0x13] sm:$0x1] %vm585, %v966
  %1146 = vst.msk [vmem:[%s8 + $0x15] sm:$0x1] %vm585, %v974
  %1147 = vst.msk [vmem:[%s8 + $0x17] sm:$0x1] %vm585, %v976
  %1148 = vst.msk [vmem:[%s8 + $0x19] sm:$0x1] %vm585, %v959
  %1149 = vst.msk [vmem:[%s8 + $0x1b] sm:$0x1] %vm585, %v973
  %1150 = vst.msk [vmem:[%s8 + $0x1d] sm:$0x1] %vm585, %v975
  %1151 = vst.msk [vmem:[%s8 + $0x1f] sm:$0x1] %vm585, %v977
  %1152 = vst.msk [vmem:[%s8 + $0x21] sm:$0x1] %vm585, %v1001
  %1153 = vst.msk [vmem:[%s8 + $0x23] sm:$0x1] %vm585, %v1015
  %1154 = vst.msk [vmem:[%s8 + $0x25] sm:$0x1] %vm585, %v1023
  %1155 = vst.msk [vmem:[%s8 + $0x27] sm:$0x1] %vm585, %v1025
  %1156 = vst.msk [vmem:[%s8 + $0x29] sm:$0x1] %vm585, %v1008
  %1157 = vst.msk [vmem:[%s8 + $0x2b] sm:$0x1] %vm585, %v1022
  %1158 = vst.msk [vmem:[%s8 + $0x2d] sm:$0x1] %vm585, %v1024
  %1159 = vst.msk [vmem:[%s8 + $0x2f] sm:$0x1] %vm585, %v1026
  %1160 = vst.msk [vmem:[%s8 + $0x31] sm:$0x1] %vm585, %v1050
  %1161 = vst.msk [vmem:[%s8 + $0x33] sm:$0x1] %vm585, %v1064
  %1162 = vst.msk [vmem:[%s8 + $0x35] sm:$0x1] %vm585, %v1072
  %1163 = vst.msk [vmem:[%s8 + $0x37] sm:$0x1] %vm585, %v1074
  %1164 = vst.msk [vmem:[%s8 + $0x39] sm:$0x1] %vm585, %v1057
  %1165 = vst.msk [vmem:[%s8 + $0x3b] sm:$0x1] %vm585, %v1071
  %1166 = vst.msk [vmem:[%s8 + $0x3d] sm:$0x1] %vm585, %v1073
  %1167 = vst.msk [vmem:[%s8 + $0x3f] sm:$0x1] %vm585, %v1075
  %1168 = vst.msk [vmem:[%s8 + $0x41] sm:$0x1] %vm585, %v1090
  %1169 = vst.msk [vmem:[%s8 + $0x43] sm:$0x1] %vm585, %v1097
  %1170 = vst.msk [vmem:[%s8 + $0x45] sm:$0x1] %vm585, %v1098
  %1171 = vst.msk [vmem:[%s8 + $0x47] sm:$0x1] %vm585, %v1099
  // Predicated region
  $region34: #{_lambda_.33} parent=0 // pred_check
    _
  $region35: #{_lambda_.33} parent=0 // pred_check_branch
    %1173 = sbr.rel (0) target = $region37
  $region36: #{_lambda_.33} parent=0 // pred_region
    _
  $region37: #{_lambda_.33} parent=0 // pred_fallthru
    _
  // Predicated region
  $region38: #{_lambda_.33} parent=0 // pred_check
    _
  $region39: #{_lambda_.33} parent=0 // pred_check_branch
    %1175 = sbr.rel (0) target = $region41
  $region40: #{_lambda_.33} parent=0 // pred_region
    _
  $region41: #{_lambda_.33} parent=0 // pred_fallthru
    _

</llo_original>
